<compile_context>
chip_gen: v5e
topology: v5e:2x2
jax: 0.10.0
libtpu: 0.0.40
codegen_flags: <defaults>
</compile_context>

<pallas_src>
import numpy as np
import jax
import jax.numpy as jnp
from jax.experimental import pallas as pl
from jax.experimental.pallas import tpu as pltpu

BN_EPS = 1e-5


# ----------------------------------------------------------------------------
# Fused kernel
# ----------------------------------------------------------------------------
def _make_fused_kernel(layer_channels, F, Hf, Wf):
    """Build the fused DownsampleBlock kernel.

    layer_channels : tuple of (C_in, C_out) per DSConvBNAct layer.
    F              : 2 ** num_block (total spatial downsample factor).
    Hf, Wf         : per-plane spatial size = H // F, W // F (constant across
                     layers in the plane representation).

    Plane representation: at the input of layer l, the activation
    A (C_l, H_l, W_l) with H_l = P*Hf, P = 2**(num_block - l), is stored in a
    haloed VMEM scratch of shape (P*P*C_l, Hf+1, Wf+1) such that
        scratch[(fh*P + fw)*C_l + c, 1+u, 1+v] == A[c, P*u + fh, P*v + fw]
    with a zero halo at row 0 / column 0 of every plane.  A pad-1 / stride-2
    3x3 tap then reduces to an elementwise FMA against a plane slice that is
    either aligned (offset 1) or shifted by one into the zero halo (offset 0).
    """
    L = len(layer_channels)

    def kernel(x_ref, *args):
        param_refs = args[:4 * L]
        o_ref = args[4 * L]
        scratch = args[4 * L + 1:]

        zero_plane = jnp.zeros((Hf + 1, Wf + 1), jnp.float32)
        zero_slab = jnp.zeros((Hf, Wf), jnp.float32)

        # ---- stage the space-to-depth input into the haloed level-0 scratch ----
        s0 = scratch[0]
        for i in range(s0.shape[0]):
            s0[i] = zero_plane                       # zero halo (and interior)
            s0[i, 1:, 1:] = x_ref[0, i].astype(jnp.float32)

        P = F
        for l in range(L):
            Cin, Cout = layer_channels[l]
            dw_w = param_refs[4 * l + 0]   # SMEM (9*Cin,)   BN scale folded in
            dw_b = param_refs[4 * l + 1]   # SMEM (Cin,)
            pw_w = param_refs[4 * l + 2]   # SMEM (Cin*Cout,) BN scale folded in
            pw_b = param_refs[4 * l + 3]   # SMEM (Cout,)
            scr_in = scratch[l]
            Q = P // 2
            last = (l == L - 1)

            for gh in range(Q):            # output plane row
                for gw in range(Q):        # output plane col
                    # ---- depthwise 3x3 / stride 2 + bias + ReLU (per channel) ----
                    y = []
                    for c in range(Cin):
                        acc = zero_slab
                        for kh in range(3):
                            sh = 2 * gh + kh - 1      # source plane row; -1 => halo shift
                            fh, rofs = (P - 1, 0) if sh < 0 else (sh, 1)
                            for kw in range(3):
                                sw = 2 * gw + kw - 1
                                fw, cofs = (P - 1, 0) if sw < 0 else (sw, 1)
                                tap = dw_w[(kh * 3 + kw) * Cin + c]
                                slab = scr_in[(fh * P + fw) * Cin + c,
                                              rofs:rofs + Hf, cofs:cofs + Wf]
                                acc = acc + tap * slab
                        # TODO(synk): only act_type='relu' is implemented.
                        y.append(jnp.maximum(acc + dw_b[c], 0.0))

                    # ---- pointwise 1x1 + bias + ReLU as VPU broadcast-FMAs ----
                    for oc in range(Cout):
                        z = zero_slab
                        for c in range(Cin):
                            z = z + pw_w[c * Cout + oc] * y[c]
                        z = jnp.maximum(z + pw_b[oc], 0.0)
                        if last:
                            # final level has a single plane -> directly NCHW
                            o_ref[0, oc] = z.astype(o_ref.dtype)
                        else:
                            idx = (gh * Q + gw) * Cout + oc
                            scr_next = scratch[l + 1]
                            scr_next[idx] = zero_plane
                            scr_next[idx, 1:, 1:] = z
            P = Q

    return kernel


# ----------------------------------------------------------------------------
# Wrapper
# ----------------------------------------------------------------------------
def downsample_block_apply(params, x_nchw):
    """params: list of per-layer dicts; x_nchw: (N, C, H, W) -> NCHW output."""
    N, C, H, W = x_nchw.shape
    L = len(params)
    F = 2 ** L
    assert H % F == 0 and W % F == 0, "spatial dims must be divisible by 2**num_block"
    Hf, Wf = H // F, W // F

    layer_channels = []
    flat_params = []
    for p in params:
        Cin = p["dw_w"].shape[-1]
        Cout = p["pw_w"].shape[-1]
        layer_channels.append((Cin, Cout))
        # Fold the BatchNorm scale into the conv weights (bias stays separate).
        dw_wf = (p["dw_w"] * p["dw_scale"].reshape(1, 1, -1)).reshape(-1)   # (9*Cin,)
        pw_wf = (p["pw_w"] * p["pw_scale"].reshape(1, -1)).reshape(-1)      # (Cin*Cout,)
        flat_params += [dw_wf, p["dw_bias"].reshape(-1),
                        pw_wf, p["pw_bias"].reshape(-1)]
    assert all(layer_channels[i][1] == layer_channels[i + 1][0] for i in range(L - 1))
    assert layer_channels[0][0] == C
    Cout_final = layer_channels[-1][1]

    # One space-to-depth layout pass over the input (replaces per-layer
    # pad + pixel-unshuffle + NHWC transposes of the unfused version).
    # xs[n, (fh*F+fw)*C + c, u, v] = x[n, c, F*u + fh, F*v + fw]
    xs = x_nchw.reshape(N, C, Hf, F, Wf, F).transpose(0, 3, 5, 1, 2, 4)
    xs = xs.reshape(N, F * F * C, Hf, Wf)

    smem_spec = pl.BlockSpec(memory_space=pltpu.MemorySpace.SMEM)
    in_specs = [pl.BlockSpec((1, F * F * C, Hf, Wf), lambda n: (n, 0, 0, 0))]
    in_specs += [smem_spec] * (4 * L)

    # Haloed plane scratch per layer input; intermediates never touch HBM.
    scratch_shapes = []
    for l in range(L):
        P = 2 ** (L - l)
        scratch_shapes.append(
            pltpu.VMEM((P * P * layer_channels[l][0], Hf + 1, Wf + 1), jnp.float32))

    kernel = _make_fused_kernel(tuple(layer_channels), F, Hf, Wf)

    return pl.pallas_call(
        kernel,
        out_shape=jax.ShapeDtypeStruct((N, Cout_final, Hf, Wf), x_nchw.dtype),
        grid=(N,),
        in_specs=in_specs,
        out_specs=pl.BlockSpec((1, Cout_final, Hf, Wf), lambda n: (n, 0, 0, 0)),
        scratch_shapes=scratch_shapes,
        compiler_params=pltpu.CompilerParams(
            dimension_semantics=("parallel",),
            vmem_limit_bytes=32 * 1024 * 1024),
    )(xs, *flat_params)


# ----------------------------------------------------------------------------
# Deterministic parameter construction (mirrors the module's __init__)
# ----------------------------------------------------------------------------
def _fold_bn(gamma, beta, mean, var):
    scale = gamma / jnp.sqrt(var + BN_EPS)
    bias = beta - mean * scale
    return scale, bias


def init_dsconv_params(key, in_c, out_c):
    ks = jax.random.split(key, 10)
    dw_w = 0.3 * jax.random.normal(ks[0], (3, 3, in_c), jnp.float32)
    dw_gamma = 1.0 + 0.1 * jax.random.normal(ks[1], (in_c,), jnp.float32)
    dw_beta = 0.1 * jax.random.normal(ks[2], (in_c,), jnp.float32)
    dw_mean = 0.1 * jax.random.normal(ks[3], (in_c,), jnp.float32)
    dw_var = 1.0 + 0.2 * jnp.abs(jax.random.normal(ks[4], (in_c,), jnp.float32))
    pw_w = 0.3 * jax.random.normal(ks[5], (in_c, out_c), jnp.float32)
    pw_gamma = 1.0 + 0.1 * jax.random.normal(ks[6], (out_c,), jnp.float32)
    pw_beta = 0.1 * jax.random.normal(ks[7], (out_c,), jnp.float32)
    pw_mean = 0.1 * jax.random.normal(ks[8], (out_c,), jnp.float32)
    pw_var = 1.0 + 0.2 * jnp.abs(jax.random.normal(ks[9], (out_c,), jnp.float32))
    dw_scale, dw_bias = _fold_bn(dw_gamma, dw_beta, dw_mean, dw_var)
    pw_scale, pw_bias = _fold_bn(pw_gamma, pw_beta, pw_mean, pw_var)
    return dict(dw_w=dw_w, dw_scale=dw_scale, dw_bias=dw_bias,
                pw_w=pw_w, pw_scale=pw_scale, pw_bias=pw_bias)


def init_downsample_block(key, in_ch, out_ch, num_block):
    assert num_block >= 1
    params = []
    if num_block > 1:
        for i in range(num_block):
            hid_ch = in_ch if i != num_block - 1 else out_ch
            key, sub = jax.random.split(key)
            params.append(init_dsconv_params(sub, in_ch, hid_ch))
    else:
        key, sub = jax.random.split(key)
        params.append(init_dsconv_params(sub, in_ch, out_ch))
    return params


# ----------------------------------------------------------------------------
# Pure-JAX reference (for correctness check)
# ----------------------------------------------------------------------------
def ref_ds_conv_bn_act(p, x_nhwc):
    C = x_nhwc.shape[-1]
    w = p["dw_w"].reshape(3, 3, 1, C)            # HWIO, groups=C
    y = jax.lax.conv_general_dilated(
        x_nhwc, w, window_strides=(2, 2), padding=((1, 1), (1, 1)),
        dimension_numbers=("NHWC", "HWIO", "NHWC"), feature_group_count=C)
    y = y * p["dw_scale"].reshape(1, 1, 1, -1) + p["dw_bias"].reshape(1, 1, 1, -1)
    y = jnp.maximum(y, 0.0)
    z = jnp.einsum("nhwc,cd->nhwd", y, p["pw_w"])
    z = z * p["pw_scale"].reshape(1, 1, 1, -1) + p["pw_bias"].reshape(1, 1, 1, -1)
    return jnp.maximum(z, 0.0)


def ref_downsample_block(params, x_nchw):
    x = jnp.transpose(x_nchw, (0, 2, 3, 1))
    for p in params:
        x = ref_ds_conv_bn_act(p, x)
    return jnp.transpose(x, (0, 3, 1, 2))


# ----------------------------------------------------------------------------
if __name__ == "__main__":
    key = jax.random.PRNGKey(0)
    in_ch, out_ch, num_block = 4, 8, 2          # act_type='relu'
    kp, kx = jax.random.split(key)
    params = init_downsample_block(kp, in_ch, out_ch, num_block)

    x = jax.random.normal(kx, (2, in_ch, 16, 16), jnp.float32)   # NCHW like PyTorch

    fwd = jax.jit(lambda inp: downsample_block_apply(params, inp))
    y = fwd(x)
    jax.block_until_ready(y)

    assert y.shape == (2, out_ch, 16 // 2 ** num_block, 16 // 2 ** num_block), y.shape

    y_ref = ref_downsample_block(params, x)
    np.testing.assert_allclose(np.asarray(y), np.asarray(y_ref), rtol=1e-4, atol=1e-4)

    print("KERNEL_OK")
</pallas_src>

<mosaic_0001>
module attributes {stable_mosaic.version = 11 : i64} {
  func.func @kernel(%arg0: i32, %arg1: memref<1x64x4x4xf32, #tpu.memory_space<vmem>>, %arg2: memref<36xf32, #tpu.memory_space<smem>>, %arg3: memref<4xf32, #tpu.memory_space<smem>>, %arg4: memref<16xf32, #tpu.memory_space<smem>>, %arg5: memref<4xf32, #tpu.memory_space<smem>>, %arg6: memref<36xf32, #tpu.memory_space<smem>>, %arg7: memref<4xf32, #tpu.memory_space<smem>>, %arg8: memref<32xf32, #tpu.memory_space<smem>>, %arg9: memref<8xf32, #tpu.memory_space<smem>>, %arg10: memref<1x8x4x4xf32, #tpu.memory_space<vmem>>, %arg11: memref<64x5x5xf32, #tpu.memory_space<vmem>>, %arg12: memref<16x5x5xf32, #tpu.memory_space<vmem>>) attributes {dimension_semantics = [#tpu.dimension_semantics<parallel>], iteration_bounds = array<i64: 2>, scalar_prefetch = 0 : i64, scratch_operands = 2 : i64, tpu.core_type = #tpu.core_type<tc>, window_params = [{transform_indices = @transform_0, window_bounds = array<i64: 1, 64, 4, 4>}, {transform_indices = @transform_1, window_bounds = array<i64: 36>}, {transform_indices = @transform_2, window_bounds = array<i64: 4>}, {transform_indices = @transform_3, window_bounds = array<i64: 16>}, {transform_indices = @transform_4, window_bounds = array<i64: 4>}, {transform_indices = @transform_5, window_bounds = array<i64: 36>}, {transform_indices = @transform_6, window_bounds = array<i64: 4>}, {transform_indices = @transform_7, window_bounds = array<i64: 32>}, {transform_indices = @transform_8, window_bounds = array<i64: 8>}, {transform_indices = @transform_9, window_bounds = array<i64: 1, 8, 4, 4>}]} {
    %cst = arith.constant 0.000000e+00 : f32
    %0 = vector.broadcast %cst : f32 to vector<5x5xf32>
    %cst_0 = arith.constant 0.000000e+00 : f32
    %1 = vector.broadcast %cst_0 : f32 to vector<4x4xf32>
    %c0 = arith.constant 0 : index
    %c0_1 = arith.constant 0 : index
    %c0_2 = arith.constant 0 : index
    %2 = vector.load %arg11[%c0, %c0_1, %c0_2] : memref<64x5x5xf32, #tpu.memory_space<vmem>>, vector<1x5x5xf32>
    %3 = vector.shape_cast %2 : vector<1x5x5xf32> to vector<5x5xf32>
    %4 = vector.shape_cast %0 : vector<5x5xf32> to vector<1x5x5xf32>
    tpu.vector_store %arg11[%c0, %c0_1, %c0_2], %4 {strides = array<i32>} : memref<64x5x5xf32, #tpu.memory_space<vmem>>, vector<1x5x5xf32>,
    %c0_3 = arith.constant 0 : index
    %c0_4 = arith.constant 0 : index
    %c0_5 = arith.constant 0 : index
    %c0_6 = arith.constant 0 : index
    %5 = vector.load %arg1[%c0_3, %c0_4, %c0_5, %c0_6] : memref<1x64x4x4xf32, #tpu.memory_space<vmem>>, vector<1x1x4x4xf32>
    %6 = vector.shape_cast %5 : vector<1x1x4x4xf32> to vector<4x4xf32>
    %c0_7 = arith.constant 0 : index
    %c1 = arith.constant 1 : index
    %c1_8 = arith.constant 1 : index
    %7 = vector.load %arg11[%c0_7, %c1, %c1_8] : memref<64x5x5xf32, #tpu.memory_space<vmem>>, vector<1x4x4xf32>
    %8 = vector.shape_cast %7 : vector<1x4x4xf32> to vector<4x4xf32>
    %9 = vector.shape_cast %6 : vector<4x4xf32> to vector<1x4x4xf32>
    tpu.vector_store %arg11[%c0_7, %c1, %c1_8], %9 {strides = array<i32>} : memref<64x5x5xf32, #tpu.memory_space<vmem>>, vector<1x4x4xf32>,
    %c1_9 = arith.constant 1 : index
    %c0_10 = arith.constant 0 : index
    %c0_11 = arith.constant 0 : index
    %10 = vector.load %arg11[%c1_9, %c0_10, %c0_11] : memref<64x5x5xf32, #tpu.memory_space<vmem>>, vector<1x5x5xf32>
    %11 = vector.shape_cast %10 : vector<1x5x5xf32> to vector<5x5xf32>
    %12 = vector.shape_cast %0 : vector<5x5xf32> to vector<1x5x5xf32>
    tpu.vector_store %arg11[%c1_9, %c0_10, %c0_11], %12 {strides = array<i32>} : memref<64x5x5xf32, #tpu.memory_space<vmem>>, vector<1x5x5xf32>,
    %c0_12 = arith.constant 0 : index
    %c1_13 = arith.constant 1 : index
    %c0_14 = arith.constant 0 : index
    %c0_15 = arith.constant 0 : index
    %13 = vector.load %arg1[%c0_12, %c1_13, %c0_14, %c0_15] : memref<1x64x4x4xf32, #tpu.memory_space<vmem>>, vector<1x1x4x4xf32>
    %14 = vector.shape_cast %13 : vector<1x1x4x4xf32> to vector<4x4xf32>
    %c1_16 = arith.constant 1 : index
    %c1_17 = arith.constant 1 : index
    %c1_18 = arith.constant 1 : index
    %15 = vector.load %arg11[%c1_16, %c1_17, %c1_18] : memref<64x5x5xf32, #tpu.memory_space<vmem>>, vector<1x4x4xf32>
    %16 = vector.shape_cast %15 : vector<1x4x4xf32> to vector<4x4xf32>
    %17 = vector.shape_cast %14 : vector<4x4xf32> to vector<1x4x4xf32>
    tpu.vector_store %arg11[%c1_16, %c1_17, %c1_18], %17 {strides = array<i32>} : memref<64x5x5xf32, #tpu.memory_space<vmem>>, vector<1x4x4xf32>,
    %c2 = arith.constant 2 : index
    %c0_19 = arith.constant 0 : index
    %c0_20 = arith.constant 0 : index
    %18 = vector.load %arg11[%c2, %c0_19, %c0_20] : memref<64x5x5xf32, #tpu.memory_space<vmem>>, vector<1x5x5xf32>
    %19 = vector.shape_cast %18 : vector<1x5x5xf32> to vector<5x5xf32>
    %20 = vector.shape_cast %0 : vector<5x5xf32> to vector<1x5x5xf32>
    tpu.vector_store %arg11[%c2, %c0_19, %c0_20], %20 {strides = array<i32>} : memref<64x5x5xf32, #tpu.memory_space<vmem>>, vector<1x5x5xf32>,
    %c0_21 = arith.constant 0 : index
    %c2_22 = arith.constant 2 : index
    %c0_23 = arith.constant 0 : index
    %c0_24 = arith.constant 0 : index
    %21 = vector.load %arg1[%c0_21, %c2_22, %c0_23, %c0_24] : memref<1x64x4x4xf32, #tpu.memory_space<vmem>>, vector<1x1x4x4xf32>
    %22 = vector.shape_cast %21 : vector<1x1x4x4xf32> to vector<4x4xf32>
    %c2_25 = arith.constant 2 : index
    %c1_26 = arith.constant 1 : index
    %c1_27 = arith.constant 1 : index
    %23 = vector.load %arg11[%c2_25, %c1_26, %c1_27] : memref<64x5x5xf32, #tpu.memory_space<vmem>>, vector<1x4x4xf32>
    %24 = vector.shape_cast %23 : vector<1x4x4xf32> to vector<4x4xf32>
    %25 = vector.shape_cast %22 : vector<4x4xf32> to vector<1x4x4xf32>
    tpu.vector_store %arg11[%c2_25, %c1_26, %c1_27], %25 {strides = array<i32>} : memref<64x5x5xf32, #tpu.memory_space<vmem>>, vector<1x4x4xf32>,
    %c3 = arith.constant 3 : index
    %c0_28 = arith.constant 0 : index
    %c0_29 = arith.constant 0 : index
    %26 = vector.load %arg11[%c3, %c0_28, %c0_29] : memref<64x5x5xf32, #tpu.memory_space<vmem>>, vector<1x5x5xf32>
    %27 = vector.shape_cast %26 : vector<1x5x5xf32> to vector<5x5xf32>
    %28 = vector.shape_cast %0 : vector<5x5xf32> to vector<1x5x5xf32>
    tpu.vector_store %arg11[%c3, %c0_28, %c0_29], %28 {strides = array<i32>} : memref<64x5x5xf32, #tpu.memory_space<vmem>>, vector<1x5x5xf32>,
    %c0_30 = arith.constant 0 : index
    %c3_31 = arith.constant 3 : index
    %c0_32 = arith.constant 0 : index
    %c0_33 = arith.constant 0 : index
    %29 = vector.load %arg1[%c0_30, %c3_31, %c0_32, %c0_33] : memref<1x64x4x4xf32, #tpu.memory_space<vmem>>, vector<1x1x4x4xf32>
    %30 = vector.shape_cast %29 : vector<1x1x4x4xf32> to vector<4x4xf32>
    %c3_34 = arith.constant 3 : index
    %c1_35 = arith.constant 1 : index
    %c1_36 = arith.constant 1 : index
    %31 = vector.load %arg11[%c3_34, %c1_35, %c1_36] : memref<64x5x5xf32, #tpu.memory_space<vmem>>, vector<1x4x4xf32>
    %32 = vector.shape_cast %31 : vector<1x4x4xf32> to vector<4x4xf32>
    %33 = vector.shape_cast %30 : vector<4x4xf32> to vector<1x4x4xf32>
    tpu.vector_store %arg11[%c3_34, %c1_35, %c1_36], %33 {strides = array<i32>} : memref<64x5x5xf32, #tpu.memory_space<vmem>>, vector<1x4x4xf32>,
    %c4 = arith.constant 4 : index
    %c0_37 = arith.constant 0 : index
    %c0_38 = arith.constant 0 : index
    %34 = vector.load %arg11[%c4, %c0_37, %c0_38] : memref<64x5x5xf32, #tpu.memory_space<vmem>>, vector<1x5x5xf32>
    %35 = vector.shape_cast %34 : vector<1x5x5xf32> to vector<5x5xf32>
    %36 = vector.shape_cast %0 : vector<5x5xf32> to vector<1x5x5xf32>
    tpu.vector_store %arg11[%c4, %c0_37, %c0_38], %36 {strides = array<i32>} : memref<64x5x5xf32, #tpu.memory_space<vmem>>, vector<1x5x5xf32>,
    %c0_39 = arith.constant 0 : index
    %c4_40 = arith.constant 4 : index
    %c0_41 = arith.constant 0 : index
    %c0_42 = arith.constant 0 : index
    %37 = vector.load %arg1[%c0_39, %c4_40, %c0_41, %c0_42] : memref<1x64x4x4xf32, #tpu.memory_space<vmem>>, vector<1x1x4x4xf32>
    %38 = vector.shape_cast %37 : vector<1x1x4x4xf32> to vector<4x4xf32>
    %c4_43 = arith.constant 4 : index
    %c1_44 = arith.constant 1 : index
    %c1_45 = arith.constant 1 : index
    %39 = vector.load %arg11[%c4_43, %c1_44, %c1_45] : memref<64x5x5xf32, #tpu.memory_space<vmem>>, vector<1x4x4xf32>
    %40 = vector.shape_cast %39 : vector<1x4x4xf32> to vector<4x4xf32>
    %41 = vector.shape_cast %38 : vector<4x4xf32> to vector<1x4x4xf32>
    tpu.vector_store %arg11[%c4_43, %c1_44, %c1_45], %41 {strides = array<i32>} : memref<64x5x5xf32, #tpu.memory_space<vmem>>, vector<1x4x4xf32>,
    %c5 = arith.constant 5 : index
    %c0_46 = arith.constant 0 : index
    %c0_47 = arith.constant 0 : index
    %42 = vector.load %arg11[%c5, %c0_46, %c0_47] : memref<64x5x5xf32, #tpu.memory_space<vmem>>, vector<1x5x5xf32>
    %43 = vector.shape_cast %42 : vector<1x5x5xf32> to vector<5x5xf32>
    %44 = vector.shape_cast %0 : vector<5x5xf32> to vector<1x5x5xf32>
    tpu.vector_store %arg11[%c5, %c0_46, %c0_47], %44 {strides = array<i32>} : memref<64x5x5xf32, #tpu.memory_space<vmem>>, vector<1x5x5xf32>,
    %c0_48 = arith.constant 0 : index
    %c5_49 = arith.constant 5 : index
    %c0_50 = arith.constant 0 : index
    %c0_51 = arith.constant 0 : index
    %45 = vector.load %arg1[%c0_48, %c5_49, %c0_50, %c0_51] : memref<1x64x4x4xf32, #tpu.memory_space<vmem>>, vector<1x1x4x4xf32>
    %46 = vector.shape_cast %45 : vector<1x1x4x4xf32> to vector<4x4xf32>
    %c5_52 = arith.constant 5 : index
    %c1_53 = arith.constant 1 : index
    %c1_54 = arith.constant 1 : index
    %47 = vector.load %arg11[%c5_52, %c1_53, %c1_54] : memref<64x5x5xf32, #tpu.memory_space<vmem>>, vector<1x4x4xf32>
    %48 = vector.shape_cast %47 : vector<1x4x4xf32> to vector<4x4xf32>
    %49 = vector.shape_cast %46 : vector<4x4xf32> to vector<1x4x4xf32>
    tpu.vector_store %arg11[%c5_52, %c1_53, %c1_54], %49 {strides = array<i32>} : memref<64x5x5xf32, #tpu.memory_space<vmem>>, vector<1x4x4xf32>,
    %c6 = arith.constant 6 : index
    %c0_55 = arith.constant 0 : index
    %c0_56 = arith.constant 0 : index
    %50 = vector.load %arg11[%c6, %c0_55, %c0_56] : memref<64x5x5xf32, #tpu.memory_space<vmem>>, vector<1x5x5xf32>
    %51 = vector.shape_cast %50 : vector<1x5x5xf32> to vector<5x5xf32>
    %52 = vector.shape_cast %0 : vector<5x5xf32> to vector<1x5x5xf32>
    tpu.vector_store %arg11[%c6, %c0_55, %c0_56], %52 {strides = array<i32>} : memref<64x5x5xf32, #tpu.memory_space<vmem>>, vector<1x5x5xf32>,
    %c0_57 = arith.constant 0 : index
    %c6_58 = arith.constant 6 : index
    %c0_59 = arith.constant 0 : index
    %c0_60 = arith.constant 0 : index
    %53 = vector.load %arg1[%c0_57, %c6_58, %c0_59, %c0_60] : memref<1x64x4x4xf32, #tpu.memory_space<vmem>>, vector<1x1x4x4xf32>
    %54 = vector.shape_cast %53 : vector<1x1x4x4xf32> to vector<4x4xf32>
    %c6_61 = arith.constant 6 : index
    %c1_62 = arith.constant 1 : index
    %c1_63 = arith.constant 1 : index
    %55 = vector.load %arg11[%c6_61, %c1_62, %c1_63] : memref<64x5x5xf32, #tpu.memory_space<vmem>>, vector<1x4x4xf32>
    %56 = vector.shape_cast %55 : vector<1x4x4xf32> to vector<4x4xf32>
    %57 = vector.shape_cast %54 : vector<4x4xf32> to vector<1x4x4xf32>
    tpu.vector_store %arg11[%c6_61, %c1_62, %c1_63], %57 {strides = array<i32>} : memref<64x5x5xf32, #tpu.memory_space<vmem>>, vector<1x4x4xf32>,
    %c7 = arith.constant 7 : index
    %c0_64 = arith.constant 0 : index
    %c0_65 = arith.constant 0 : index
    %58 = vector.load %arg11[%c7, %c0_64, %c0_65] : memref<64x5x5xf32, #tpu.memory_space<vmem>>, vector<1x5x5xf32>
    %59 = vector.shape_cast %58 : vector<1x5x5xf32> to vector<5x5xf32>
    %60 = vector.shape_cast %0 : vector<5x5xf32> to vector<1x5x5xf32>
    tpu.vector_store %arg11[%c7, %c0_64, %c0_65], %60 {strides = array<i32>} : memref<64x5x5xf32, #tpu.memory_space<vmem>>, vector<1x5x5xf32>,
    %c0_66 = arith.constant 0 : index
    %c7_67 = arith.constant 7 : index
    %c0_68 = arith.constant 0 : index
    %c0_69 = arith.constant 0 : index
    %61 = vector.load %arg1[%c0_66, %c7_67, %c0_68, %c0_69] : memref<1x64x4x4xf32, #tpu.memory_space<vmem>>, vector<1x1x4x4xf32>
    %62 = vector.shape_cast %61 : vector<1x1x4x4xf32> to vector<4x4xf32>
    %c7_70 = arith.constant 7 : index
    %c1_71 = arith.constant 1 : index
    %c1_72 = arith.constant 1 : index
    %63 = vector.load %arg11[%c7_70, %c1_71, %c1_72] : memref<64x5x5xf32, #tpu.memory_space<vmem>>, vector<1x4x4xf32>
    %64 = vector.shape_cast %63 : vector<1x4x4xf32> to vector<4x4xf32>
    %65 = vector.shape_cast %62 : vector<4x4xf32> to vector<1x4x4xf32>
    tpu.vector_store %arg11[%c7_70, %c1_71, %c1_72], %65 {strides = array<i32>} : memref<64x5x5xf32, #tpu.memory_space<vmem>>, vector<1x4x4xf32>,
    %c8 = arith.constant 8 : index
    %c0_73 = arith.constant 0 : index
    %c0_74 = arith.constant 0 : index
    %66 = vector.load %arg11[%c8, %c0_73, %c0_74] : memref<64x5x5xf32, #tpu.memory_space<vmem>>, vector<1x5x5xf32>
    %67 = vector.shape_cast %66 : vector<1x5x5xf32> to vector<5x5xf32>
    %68 = vector.shape_cast %0 : vector<5x5xf32> to vector<1x5x5xf32>
    tpu.vector_store %arg11[%c8, %c0_73, %c0_74], %68 {strides = array<i32>} : memref<64x5x5xf32, #tpu.memory_space<vmem>>, vector<1x5x5xf32>,
    %c0_75 = arith.constant 0 : index
    %c8_76 = arith.constant 8 : index
    %c0_77 = arith.constant 0 : index
    %c0_78 = arith.constant 0 : index
    %69 = vector.load %arg1[%c0_75, %c8_76, %c0_77, %c0_78] : memref<1x64x4x4xf32, #tpu.memory_space<vmem>>, vector<1x1x4x4xf32>
    %70 = vector.shape_cast %69 : vector<1x1x4x4xf32> to vector<4x4xf32>
    %c8_79 = arith.constant 8 : index
    %c1_80 = arith.constant 1 : index
    %c1_81 = arith.constant 1 : index
    %71 = vector.load %arg11[%c8_79, %c1_80, %c1_81] : memref<64x5x5xf32, #tpu.memory_space<vmem>>, vector<1x4x4xf32>
    %72 = vector.shape_cast %71 : vector<1x4x4xf32> to vector<4x4xf32>
    %73 = vector.shape_cast %70 : vector<4x4xf32> to vector<1x4x4xf32>
    tpu.vector_store %arg11[%c8_79, %c1_80, %c1_81], %73 {strides = array<i32>} : memref<64x5x5xf32, #tpu.memory_space<vmem>>, vector<1x4x4xf32>,
    %c9 = arith.constant 9 : index
    %c0_82 = arith.constant 0 : index
    %c0_83 = arith.constant 0 : index
    %74 = vector.load %arg11[%c9, %c0_82, %c0_83] : memref<64x5x5xf32, #tpu.memory_space<vmem>>, vector<1x5x5xf32>
    %75 = vector.shape_cast %74 : vector<1x5x5xf32> to vector<5x5xf32>
    %76 = vector.shape_cast %0 : vector<5x5xf32> to vector<1x5x5xf32>
    tpu.vector_store %arg11[%c9, %c0_82, %c0_83], %76 {strides = array<i32>} : memref<64x5x5xf32, #tpu.memory_space<vmem>>, vector<1x5x5xf32>,
    %c0_84 = arith.constant 0 : index
    %c9_85 = arith.constant 9 : index
    %c0_86 = arith.constant 0 : index
    %c0_87 = arith.constant 0 : index
    %77 = vector.load %arg1[%c0_84, %c9_85, %c0_86, %c0_87] : memref<1x64x4x4xf32, #tpu.memory_space<vmem>>, vector<1x1x4x4xf32>
    %78 = vector.shape_cast %77 : vector<1x1x4x4xf32> to vector<4x4xf32>
    %c9_88 = arith.constant 9 : index
    %c1_89 = arith.constant 1 : index
    %c1_90 = arith.constant 1 : index
    %79 = vector.load %arg11[%c9_88, %c1_89, %c1_90] : memref<64x5x5xf32, #tpu.memory_space<vmem>>, vector<1x4x4xf32>
    %80 = vector.shape_cast %79 : vector<1x4x4xf32> to vector<4x4xf32>
    %81 = vector.shape_cast %78 : vector<4x4xf32> to vector<1x4x4xf32>
    tpu.vector_store %arg11[%c9_88, %c1_89, %c1_90], %81 {strides = array<i32>} : memref<64x5x5xf32, #tpu.memory_space<vmem>>, vector<1x4x4xf32>,
    %c10 = arith.constant 10 : index
    %c0_91 = arith.constant 0 : index
    %c0_92 = arith.constant 0 : index
    %82 = vector.load %arg11[%c10, %c0_91, %c0_92] : memref<64x5x5xf32, #tpu.memory_space<vmem>>, vector<1x5x5xf32>
    %83 = vector.shape_cast %82 : vector<1x5x5xf32> to vector<5x5xf32>
    %84 = vector.shape_cast %0 : vector<5x5xf32> to vector<1x5x5xf32>
    tpu.vector_store %arg11[%c10, %c0_91, %c0_92], %84 {strides = array<i32>} : memref<64x5x5xf32, #tpu.memory_space<vmem>>, vector<1x5x5xf32>,
    %c0_93 = arith.constant 0 : index
    %c10_94 = arith.constant 10 : index
    %c0_95 = arith.constant 0 : index
    %c0_96 = arith.constant 0 : index
    %85 = vector.load %arg1[%c0_93, %c10_94, %c0_95, %c0_96] : memref<1x64x4x4xf32, #tpu.memory_space<vmem>>, vector<1x1x4x4xf32>
    %86 = vector.shape_cast %85 : vector<1x1x4x4xf32> to vector<4x4xf32>
    %c10_97 = arith.constant 10 : index
    %c1_98 = arith.constant 1 : index
    %c1_99 = arith.constant 1 : index
    %87 = vector.load %arg11[%c10_97, %c1_98, %c1_99] : memref<64x5x5xf32, #tpu.memory_space<vmem>>, vector<1x4x4xf32>
    %88 = vector.shape_cast %87 : vector<1x4x4xf32> to vector<4x4xf32>
    %89 = vector.shape_cast %86 : vector<4x4xf32> to vector<1x4x4xf32>
    tpu.vector_store %arg11[%c10_97, %c1_98, %c1_99], %89 {strides = array<i32>} : memref<64x5x5xf32, #tpu.memory_space<vmem>>, vector<1x4x4xf32>,
    %c11 = arith.constant 11 : index
    %c0_100 = arith.constant 0 : index
    %c0_101 = arith.constant 0 : index
    %90 = vector.load %arg11[%c11, %c0_100, %c0_101] : memref<64x5x5xf32, #tpu.memory_space<vmem>>, vector<1x5x5xf32>
    %91 = vector.shape_cast %90 : vector<1x5x5xf32> to vector<5x5xf32>
    %92 = vector.shape_cast %0 : vector<5x5xf32> to vector<1x5x5xf32>
    tpu.vector_store %arg11[%c11, %c0_100, %c0_101], %92 {strides = array<i32>} : memref<64x5x5xf32, #tpu.memory_space<vmem>>, vector<1x5x5xf32>,
    %c0_102 = arith.constant 0 : index
    %c11_103 = arith.constant 11 : index
    %c0_104 = arith.constant 0 : index
    %c0_105 = arith.constant 0 : index
    %93 = vector.load %arg1[%c0_102, %c11_103, %c0_104, %c0_105] : memref<1x64x4x4xf32, #tpu.memory_space<vmem>>, vector<1x1x4x4xf32>
    %94 = vector.shape_cast %93 : vector<1x1x4x4xf32> to vector<4x4xf32>
    %c11_106 = arith.constant 11 : index
    %c1_107 = arith.constant 1 : index
    %c1_108 = arith.constant 1 : index
    %95 = vector.load %arg11[%c11_106, %c1_107, %c1_108] : memref<64x5x5xf32, #tpu.memory_space<vmem>>, vector<1x4x4xf32>
    %96 = vector.shape_cast %95 : vector<1x4x4xf32> to vector<4x4xf32>
    %97 = vector.shape_cast %94 : vector<4x4xf32> to vector<1x4x4xf32>
    tpu.vector_store %arg11[%c11_106, %c1_107, %c1_108], %97 {strides = array<i32>} : memref<64x5x5xf32, #tpu.memory_space<vmem>>, vector<1x4x4xf32>,
    %c12 = arith.constant 12 : index
    %c0_109 = arith.constant 0 : index
    %c0_110 = arith.constant 0 : index
    %98 = vector.load %arg11[%c12, %c0_109, %c0_110] : memref<64x5x5xf32, #tpu.memory_space<vmem>>, vector<1x5x5xf32>
    %99 = vector.shape_cast %98 : vector<1x5x5xf32> to vector<5x5xf32>
    %100 = vector.shape_cast %0 : vector<5x5xf32> to vector<1x5x5xf32>
    tpu.vector_store %arg11[%c12, %c0_109, %c0_110], %100 {strides = array<i32>} : memref<64x5x5xf32, #tpu.memory_space<vmem>>, vector<1x5x5xf32>,
    %c0_111 = arith.constant 0 : index
    %c12_112 = arith.constant 12 : index
    %c0_113 = arith.constant 0 : index
    %c0_114 = arith.constant 0 : index
    %101 = vector.load %arg1[%c0_111, %c12_112, %c0_113, %c0_114] : memref<1x64x4x4xf32, #tpu.memory_space<vmem>>, vector<1x1x4x4xf32>
    %102 = vector.shape_cast %101 : vector<1x1x4x4xf32> to vector<4x4xf32>
    %c12_115 = arith.constant 12 : index
    %c1_116 = arith.constant 1 : index
    %c1_117 = arith.constant 1 : index
    %103 = vector.load %arg11[%c12_115, %c1_116, %c1_117] : memref<64x5x5xf32, #tpu.memory_space<vmem>>, vector<1x4x4xf32>
    %104 = vector.shape_cast %103 : vector<1x4x4xf32> to vector<4x4xf32>
    %105 = vector.shape_cast %102 : vector<4x4xf32> to vector<1x4x4xf32>
    tpu.vector_store %arg11[%c12_115, %c1_116, %c1_117], %105 {strides = array<i32>} : memref<64x5x5xf32, #tpu.memory_space<vmem>>, vector<1x4x4xf32>,
    %c13 = arith.constant 13 : index
    %c0_118 = arith.constant 0 : index
    %c0_119 = arith.constant 0 : index
    %106 = vector.load %arg11[%c13, %c0_118, %c0_119] : memref<64x5x5xf32, #tpu.memory_space<vmem>>, vector<1x5x5xf32>
    %107 = vector.shape_cast %106 : vector<1x5x5xf32> to vector<5x5xf32>
    %108 = vector.shape_cast %0 : vector<5x5xf32> to vector<1x5x5xf32>
    tpu.vector_store %arg11[%c13, %c0_118, %c0_119], %108 {strides = array<i32>} : memref<64x5x5xf32, #tpu.memory_space<vmem>>, vector<1x5x5xf32>,
    %c0_120 = arith.constant 0 : index
    %c13_121 = arith.constant 13 : index
    %c0_122 = arith.constant 0 : index
    %c0_123 = arith.constant 0 : index
    %109 = vector.load %arg1[%c0_120, %c13_121, %c0_122, %c0_123] : memref<1x64x4x4xf32, #tpu.memory_space<vmem>>, vector<1x1x4x4xf32>
    %110 = vector.shape_cast %109 : vector<1x1x4x4xf32> to vector<4x4xf32>
    %c13_124 = arith.constant 13 : index
    %c1_125 = arith.constant 1 : index
    %c1_126 = arith.constant 1 : index
    %111 = vector.load %arg11[%c13_124, %c1_125, %c1_126] : memref<64x5x5xf32, #tpu.memory_space<vmem>>, vector<1x4x4xf32>
    %112 = vector.shape_cast %111 : vector<1x4x4xf32> to vector<4x4xf32>
    %113 = vector.shape_cast %110 : vector<4x4xf32> to vector<1x4x4xf32>
    tpu.vector_store %arg11[%c13_124, %c1_125, %c1_126], %113 {strides = array<i32>} : memref<64x5x5xf32, #tpu.memory_space<vmem>>, vector<1x4x4xf32>,
    %c14 = arith.constant 14 : index
    %c0_127 = arith.constant 0 : index
    %c0_128 = arith.constant 0 : index
    %114 = vector.load %arg11[%c14, %c0_127, %c0_128] : memref<64x5x5xf32, #tpu.memory_space<vmem>>, vector<1x5x5xf32>
    %115 = vector.shape_cast %114 : vector<1x5x5xf32> to vector<5x5xf32>
    %116 = vector.shape_cast %0 : vector<5x5xf32> to vector<1x5x5xf32>
    tpu.vector_store %arg11[%c14, %c0_127, %c0_128], %116 {strides = array<i32>} : memref<64x5x5xf32, #tpu.memory_space<vmem>>, vector<1x5x5xf32>,
    %c0_129 = arith.constant 0 : index
    %c14_130 = arith.constant 14 : index
    %c0_131 = arith.constant 0 : index
    %c0_132 = arith.constant 0 : index
    %117 = vector.load %arg1[%c0_129, %c14_130, %c0_131, %c0_132] : memref<1x64x4x4xf32, #tpu.memory_space<vmem>>, vector<1x1x4x4xf32>
    %118 = vector.shape_cast %117 : vector<1x1x4x4xf32> to vector<4x4xf32>
    %c14_133 = arith.constant 14 : index
    %c1_134 = arith.constant 1 : index
    %c1_135 = arith.constant 1 : index
    %119 = vector.load %arg11[%c14_133, %c1_134, %c1_135] : memref<64x5x5xf32, #tpu.memory_space<vmem>>, vector<1x4x4xf32>
    %120 = vector.shape_cast %119 : vector<1x4x4xf32> to vector<4x4xf32>
    %121 = vector.shape_cast %118 : vector<4x4xf32> to vector<1x4x4xf32>
    tpu.vector_store %arg11[%c14_133, %c1_134, %c1_135], %121 {strides = array<i32>} : memref<64x5x5xf32, #tpu.memory_space<vmem>>, vector<1x4x4xf32>,
    %c15 = arith.constant 15 : index
    %c0_136 = arith.constant 0 : index
    %c0_137 = arith.constant 0 : index
    %122 = vector.load %arg11[%c15, %c0_136, %c0_137] : memref<64x5x5xf32, #tpu.memory_space<vmem>>, vector<1x5x5xf32>
    %123 = vector.shape_cast %122 : vector<1x5x5xf32> to vector<5x5xf32>
    %124 = vector.shape_cast %0 : vector<5x5xf32> to vector<1x5x5xf32>
    tpu.vector_store %arg11[%c15, %c0_136, %c0_137], %124 {strides = array<i32>} : memref<64x5x5xf32, #tpu.memory_space<vmem>>, vector<1x5x5xf32>,
    %c0_138 = arith.constant 0 : index
    %c15_139 = arith.constant 15 : index
    %c0_140 = arith.constant 0 : index
    %c0_141 = arith.constant 0 : index
    %125 = vector.load %arg1[%c0_138, %c15_139, %c0_140, %c0_141] : memref<1x64x4x4xf32, #tpu.memory_space<vmem>>, vector<1x1x4x4xf32>
    %126 = vector.shape_cast %125 : vector<1x1x4x4xf32> to vector<4x4xf32>
    %c15_142 = arith.constant 15 : index
    %c1_143 = arith.constant 1 : index
    %c1_144 = arith.constant 1 : index
    %127 = vector.load %arg11[%c15_142, %c1_143, %c1_144] : memref<64x5x5xf32, #tpu.memory_space<vmem>>, vector<1x4x4xf32>
    %128 = vector.shape_cast %127 : vector<1x4x4xf32> to vector<4x4xf32>
    %129 = vector.shape_cast %126 : vector<4x4xf32> to vector<1x4x4xf32>
    tpu.vector_store %arg11[%c15_142, %c1_143, %c1_144], %129 {strides = array<i32>} : memref<64x5x5xf32, #tpu.memory_space<vmem>>, vector<1x4x4xf32>,
    %c16 = arith.constant 16 : index
    %c0_145 = arith.constant 0 : index
    %c0_146 = arith.constant 0 : index
    %130 = vector.load %arg11[%c16, %c0_145, %c0_146] : memref<64x5x5xf32, #tpu.memory_space<vmem>>, vector<1x5x5xf32>
    %131 = vector.shape_cast %130 : vector<1x5x5xf32> to vector<5x5xf32>
    %132 = vector.shape_cast %0 : vector<5x5xf32> to vector<1x5x5xf32>
    tpu.vector_store %arg11[%c16, %c0_145, %c0_146], %132 {strides = array<i32>} : memref<64x5x5xf32, #tpu.memory_space<vmem>>, vector<1x5x5xf32>,
    %c0_147 = arith.constant 0 : index
    %c16_148 = arith.constant 16 : index
    %c0_149 = arith.constant 0 : index
    %c0_150 = arith.constant 0 : index
    %133 = vector.load %arg1[%c0_147, %c16_148, %c0_149, %c0_150] : memref<1x64x4x4xf32, #tpu.memory_space<vmem>>, vector<1x1x4x4xf32>
    %134 = vector.shape_cast %133 : vector<1x1x4x4xf32> to vector<4x4xf32>
    %c16_151 = arith.constant 16 : index
    %c1_152 = arith.constant 1 : index
    %c1_153 = arith.constant 1 : index
    %135 = vector.load %arg11[%c16_151, %c1_152, %c1_153] : memref<64x5x5xf32, #tpu.memory_space<vmem>>, vector<1x4x4xf32>
    %136 = vector.shape_cast %135 : vector<1x4x4xf32> to vector<4x4xf32>
    %137 = vector.shape_cast %134 : vector<4x4xf32> to vector<1x4x4xf32>
    tpu.vector_store %arg11[%c16_151, %c1_152, %c1_153], %137 {strides = array<i32>} : memref<64x5x5xf32, #tpu.memory_space<vmem>>, vector<1x4x4xf32>,
    %c17 = arith.constant 17 : index
    %c0_154 = arith.constant 0 : index
    %c0_155 = arith.constant 0 : index
    %138 = vector.load %arg11[%c17, %c0_154, %c0_155] : memref<64x5x5xf32, #tpu.memory_space<vmem>>, vector<1x5x5xf32>
    %139 = vector.shape_cast %138 : vector<1x5x5xf32> to vector<5x5xf32>
    %140 = vector.shape_cast %0 : vector<5x5xf32> to vector<1x5x5xf32>
    tpu.vector_store %arg11[%c17, %c0_154, %c0_155], %140 {strides = array<i32>} : memref<64x5x5xf32, #tpu.memory_space<vmem>>, vector<1x5x5xf32>,
    %c0_156 = arith.constant 0 : index
    %c17_157 = arith.constant 17 : index
    %c0_158 = arith.constant 0 : index
    %c0_159 = arith.constant 0 : index
    %141 = vector.load %arg1[%c0_156, %c17_157, %c0_158, %c0_159] : memref<1x64x4x4xf32, #tpu.memory_space<vmem>>, vector<1x1x4x4xf32>
    %142 = vector.shape_cast %141 : vector<1x1x4x4xf32> to vector<4x4xf32>
    %c17_160 = arith.constant 17 : index
    %c1_161 = arith.constant 1 : index
    %c1_162 = arith.constant 1 : index
    %143 = vector.load %arg11[%c17_160, %c1_161, %c1_162] : memref<64x5x5xf32, #tpu.memory_space<vmem>>, vector<1x4x4xf32>
    %144 = vector.shape_cast %143 : vector<1x4x4xf32> to vector<4x4xf32>
    %145 = vector.shape_cast %142 : vector<4x4xf32> to vector<1x4x4xf32>
    tpu.vector_store %arg11[%c17_160, %c1_161, %c1_162], %145 {strides = array<i32>} : memref<64x5x5xf32, #tpu.memory_space<vmem>>, vector<1x4x4xf32>,
    %c18 = arith.constant 18 : index
    %c0_163 = arith.constant 0 : index
    %c0_164 = arith.constant 0 : index
    %146 = vector.load %arg11[%c18, %c0_163, %c0_164] : memref<64x5x5xf32, #tpu.memory_space<vmem>>, vector<1x5x5xf32>
    %147 = vector.shape_cast %146 : vector<1x5x5xf32> to vector<5x5xf32>
    %148 = vector.shape_cast %0 : vector<5x5xf32> to vector<1x5x5xf32>
    tpu.vector_store %arg11[%c18, %c0_163, %c0_164], %148 {strides = array<i32>} : memref<64x5x5xf32, #tpu.memory_space<vmem>>, vector<1x5x5xf32>,
    %c0_165 = arith.constant 0 : index
    %c18_166 = arith.constant 18 : index
    %c0_167 = arith.constant 0 : index
    %c0_168 = arith.constant 0 : index
    %149 = vector.load %arg1[%c0_165, %c18_166, %c0_167, %c0_168] : memref<1x64x4x4xf32, #tpu.memory_space<vmem>>, vector<1x1x4x4xf32>
    %150 = vector.shape_cast %149 : vector<1x1x4x4xf32> to vector<4x4xf32>
    %c18_169 = arith.constant 18 : index
    %c1_170 = arith.constant 1 : index
    %c1_171 = arith.constant 1 : index
    %151 = vector.load %arg11[%c18_169, %c1_170, %c1_171] : memref<64x5x5xf32, #tpu.memory_space<vmem>>, vector<1x4x4xf32>
    %152 = vector.shape_cast %151 : vector<1x4x4xf32> to vector<4x4xf32>
    %153 = vector.shape_cast %150 : vector<4x4xf32> to vector<1x4x4xf32>
    tpu.vector_store %arg11[%c18_169, %c1_170, %c1_171], %153 {strides = array<i32>} : memref<64x5x5xf32, #tpu.memory_space<vmem>>, vector<1x4x4xf32>,
    %c19 = arith.constant 19 : index
    %c0_172 = arith.constant 0 : index
    %c0_173 = arith.constant 0 : index
    %154 = vector.load %arg11[%c19, %c0_172, %c0_173] : memref<64x5x5xf32, #tpu.memory_space<vmem>>, vector<1x5x5xf32>
    %155 = vector.shape_cast %154 : vector<1x5x5xf32> to vector<5x5xf32>
    %156 = vector.shape_cast %0 : vector<5x5xf32> to vector<1x5x5xf32>
    tpu.vector_store %arg11[%c19, %c0_172, %c0_173], %156 {strides = array<i32>} : memref<64x5x5xf32, #tpu.memory_space<vmem>>, vector<1x5x5xf32>,
    %c0_174 = arith.constant 0 : index
    %c19_175 = arith.constant 19 : index
    %c0_176 = arith.constant 0 : index
    %c0_177 = arith.constant 0 : index
    %157 = vector.load %arg1[%c0_174, %c19_175, %c0_176, %c0_177] : memref<1x64x4x4xf32, #tpu.memory_space<vmem>>, vector<1x1x4x4xf32>
    %158 = vector.shape_cast %157 : vector<1x1x4x4xf32> to vector<4x4xf32>
    %c19_178 = arith.constant 19 : index
    %c1_179 = arith.constant 1 : index
    %c1_180 = arith.constant 1 : index
    %159 = vector.load %arg11[%c19_178, %c1_179, %c1_180] : memref<64x5x5xf32, #tpu.memory_space<vmem>>, vector<1x4x4xf32>
    %160 = vector.shape_cast %159 : vector<1x4x4xf32> to vector<4x4xf32>
    %161 = vector.shape_cast %158 : vector<4x4xf32> to vector<1x4x4xf32>
    tpu.vector_store %arg11[%c19_178, %c1_179, %c1_180], %161 {strides = array<i32>} : memref<64x5x5xf32, #tpu.memory_space<vmem>>, vector<1x4x4xf32>,
    %c20 = arith.constant 20 : index
    %c0_181 = arith.constant 0 : index
    %c0_182 = arith.constant 0 : index
    %162 = vector.load %arg11[%c20, %c0_181, %c0_182] : memref<64x5x5xf32, #tpu.memory_space<vmem>>, vector<1x5x5xf32>
    %163 = vector.shape_cast %162 : vector<1x5x5xf32> to vector<5x5xf32>
    %164 = vector.shape_cast %0 : vector<5x5xf32> to vector<1x5x5xf32>
    tpu.vector_store %arg11[%c20, %c0_181, %c0_182], %164 {strides = array<i32>} : memref<64x5x5xf32, #tpu.memory_space<vmem>>, vector<1x5x5xf32>,
    %c0_183 = arith.constant 0 : index
    %c20_184 = arith.constant 20 : index
    %c0_185 = arith.constant 0 : index
    %c0_186 = arith.constant 0 : index
    %165 = vector.load %arg1[%c0_183, %c20_184, %c0_185, %c0_186] : memref<1x64x4x4xf32, #tpu.memory_space<vmem>>, vector<1x1x4x4xf32>
    %166 = vector.shape_cast %165 : vector<1x1x4x4xf32> to vector<4x4xf32>
    %c20_187 = arith.constant 20 : index
    %c1_188 = arith.constant 1 : index
    %c1_189 = arith.constant 1 : index
    %167 = vector.load %arg11[%c20_187, %c1_188, %c1_189] : memref<64x5x5xf32, #tpu.memory_space<vmem>>, vector<1x4x4xf32>
    %168 = vector.shape_cast %167 : vector<1x4x4xf32> to vector<4x4xf32>
    %169 = vector.shape_cast %166 : vector<4x4xf32> to vector<1x4x4xf32>
    tpu.vector_store %arg11[%c20_187, %c1_188, %c1_189], %169 {strides = array<i32>} : memref<64x5x5xf32, #tpu.memory_space<vmem>>, vector<1x4x4xf32>,
    %c21 = arith.constant 21 : index
    %c0_190 = arith.constant 0 : index
    %c0_191 = arith.constant 0 : index
    %170 = vector.load %arg11[%c21, %c0_190, %c0_191] : memref<64x5x5xf32, #tpu.memory_space<vmem>>, vector<1x5x5xf32>
    %171 = vector.shape_cast %170 : vector<1x5x5xf32> to vector<5x5xf32>
    %172 = vector.shape_cast %0 : vector<5x5xf32> to vector<1x5x5xf32>
    tpu.vector_store %arg11[%c21, %c0_190, %c0_191], %172 {strides = array<i32>} : memref<64x5x5xf32, #tpu.memory_space<vmem>>, vector<1x5x5xf32>,
    %c0_192 = arith.constant 0 : index
    %c21_193 = arith.constant 21 : index
    %c0_194 = arith.constant 0 : index
    %c0_195 = arith.constant 0 : index
    %173 = vector.load %arg1[%c0_192, %c21_193, %c0_194, %c0_195] : memref<1x64x4x4xf32, #tpu.memory_space<vmem>>, vector<1x1x4x4xf32>
    %174 = vector.shape_cast %173 : vector<1x1x4x4xf32> to vector<4x4xf32>
    %c21_196 = arith.constant 21 : index
    %c1_197 = arith.constant 1 : index
    %c1_198 = arith.constant 1 : index
    %175 = vector.load %arg11[%c21_196, %c1_197, %c1_198] : memref<64x5x5xf32, #tpu.memory_space<vmem>>, vector<1x4x4xf32>
    %176 = vector.shape_cast %175 : vector<1x4x4xf32> to vector<4x4xf32>
    %177 = vector.shape_cast %174 : vector<4x4xf32> to vector<1x4x4xf32>
    tpu.vector_store %arg11[%c21_196, %c1_197, %c1_198], %177 {strides = array<i32>} : memref<64x5x5xf32, #tpu.memory_space<vmem>>, vector<1x4x4xf32>,
    %c22 = arith.constant 22 : index
    %c0_199 = arith.constant 0 : index
    %c0_200 = arith.constant 0 : index
    %178 = vector.load %arg11[%c22, %c0_199, %c0_200] : memref<64x5x5xf32, #tpu.memory_space<vmem>>, vector<1x5x5xf32>
    %179 = vector.shape_cast %178 : vector<1x5x5xf32> to vector<5x5xf32>
    %180 = vector.shape_cast %0 : vector<5x5xf32> to vector<1x5x5xf32>
    tpu.vector_store %arg11[%c22, %c0_199, %c0_200], %180 {strides = array<i32>} : memref<64x5x5xf32, #tpu.memory_space<vmem>>, vector<1x5x5xf32>,
    %c0_201 = arith.constant 0 : index
    %c22_202 = arith.constant 22 : index
    %c0_203 = arith.constant 0 : index
    %c0_204 = arith.constant 0 : index
    %181 = vector.load %arg1[%c0_201, %c22_202, %c0_203, %c0_204] : memref<1x64x4x4xf32, #tpu.memory_space<vmem>>, vector<1x1x4x4xf32>
    %182 = vector.shape_cast %181 : vector<1x1x4x4xf32> to vector<4x4xf32>
    %c22_205 = arith.constant 22 : index
    %c1_206 = arith.constant 1 : index
    %c1_207 = arith.constant 1 : index
    %183 = vector.load %arg11[%c22_205, %c1_206, %c1_207] : memref<64x5x5xf32, #tpu.memory_space<vmem>>, vector<1x4x4xf32>
    %184 = vector.shape_cast %183 : vector<1x4x4xf32> to vector<4x4xf32>
    %185 = vector.shape_cast %182 : vector<4x4xf32> to vector<1x4x4xf32>
    tpu.vector_store %arg11[%c22_205, %c1_206, %c1_207], %185 {strides = array<i32>} : memref<64x5x5xf32, #tpu.memory_space<vmem>>, vector<1x4x4xf32>,
    %c23 = arith.constant 23 : index
    %c0_208 = arith.constant 0 : index
    %c0_209 = arith.constant 0 : index
    %186 = vector.load %arg11[%c23, %c0_208, %c0_209] : memref<64x5x5xf32, #tpu.memory_space<vmem>>, vector<1x5x5xf32>
    %187 = vector.shape_cast %186 : vector<1x5x5xf32> to vector<5x5xf32>
    %188 = vector.shape_cast %0 : vector<5x5xf32> to vector<1x5x5xf32>
    tpu.vector_store %arg11[%c23, %c0_208, %c0_209], %188 {strides = array<i32>} : memref<64x5x5xf32, #tpu.memory_space<vmem>>, vector<1x5x5xf32>,
    %c0_210 = arith.constant 0 : index
    %c23_211 = arith.constant 23 : index
    %c0_212 = arith.constant 0 : index
    %c0_213 = arith.constant 0 : index
    %189 = vector.load %arg1[%c0_210, %c23_211, %c0_212, %c0_213] : memref<1x64x4x4xf32, #tpu.memory_space<vmem>>, vector<1x1x4x4xf32>
    %190 = vector.shape_cast %189 : vector<1x1x4x4xf32> to vector<4x4xf32>
    %c23_214 = arith.constant 23 : index
    %c1_215 = arith.constant 1 : index
    %c1_216 = arith.constant 1 : index
    %191 = vector.load %arg11[%c23_214, %c1_215, %c1_216] : memref<64x5x5xf32, #tpu.memory_space<vmem>>, vector<1x4x4xf32>
    %192 = vector.shape_cast %191 : vector<1x4x4xf32> to vector<4x4xf32>
    %193 = vector.shape_cast %190 : vector<4x4xf32> to vector<1x4x4xf32>
    tpu.vector_store %arg11[%c23_214, %c1_215, %c1_216], %193 {strides = array<i32>} : memref<64x5x5xf32, #tpu.memory_space<vmem>>, vector<1x4x4xf32>,
    %c24 = arith.constant 24 : index
    %c0_217 = arith.constant 0 : index
    %c0_218 = arith.constant 0 : index
    %194 = vector.load %arg11[%c24, %c0_217, %c0_218] : memref<64x5x5xf32, #tpu.memory_space<vmem>>, vector<1x5x5xf32>
    %195 = vector.shape_cast %194 : vector<1x5x5xf32> to vector<5x5xf32>
    %196 = vector.shape_cast %0 : vector<5x5xf32> to vector<1x5x5xf32>
    tpu.vector_store %arg11[%c24, %c0_217, %c0_218], %196 {strides = array<i32>} : memref<64x5x5xf32, #tpu.memory_space<vmem>>, vector<1x5x5xf32>,
    %c0_219 = arith.constant 0 : index
    %c24_220 = arith.constant 24 : index
    %c0_221 = arith.constant 0 : index
    %c0_222 = arith.constant 0 : index
    %197 = vector.load %arg1[%c0_219, %c24_220, %c0_221, %c0_222] : memref<1x64x4x4xf32, #tpu.memory_space<vmem>>, vector<1x1x4x4xf32>
    %198 = vector.shape_cast %197 : vector<1x1x4x4xf32> to vector<4x4xf32>
    %c24_223 = arith.constant 24 : index
    %c1_224 = arith.constant 1 : index
    %c1_225 = arith.constant 1 : index
    %199 = vector.load %arg11[%c24_223, %c1_224, %c1_225] : memref<64x5x5xf32, #tpu.memory_space<vmem>>, vector<1x4x4xf32>
    %200 = vector.shape_cast %199 : vector<1x4x4xf32> to vector<4x4xf32>
    %201 = vector.shape_cast %198 : vector<4x4xf32> to vector<1x4x4xf32>
    tpu.vector_store %arg11[%c24_223, %c1_224, %c1_225], %201 {strides = array<i32>} : memref<64x5x5xf32, #tpu.memory_space<vmem>>, vector<1x4x4xf32>,
    %c25 = arith.constant 25 : index
    %c0_226 = arith.constant 0 : index
    %c0_227 = arith.constant 0 : index
    %202 = vector.load %arg11[%c25, %c0_226, %c0_227] : memref<64x5x5xf32, #tpu.memory_space<vmem>>, vector<1x5x5xf32>
    %203 = vector.shape_cast %202 : vector<1x5x5xf32> to vector<5x5xf32>
    %204 = vector.shape_cast %0 : vector<5x5xf32> to vector<1x5x5xf32>
    tpu.vector_store %arg11[%c25, %c0_226, %c0_227], %204 {strides = array<i32>} : memref<64x5x5xf32, #tpu.memory_space<vmem>>, vector<1x5x5xf32>,
    %c0_228 = arith.constant 0 : index
    %c25_229 = arith.constant 25 : index
    %c0_230 = arith.constant 0 : index
    %c0_231 = arith.constant 0 : index
    %205 = vector.load %arg1[%c0_228, %c25_229, %c0_230, %c0_231] : memref<1x64x4x4xf32, #tpu.memory_space<vmem>>, vector<1x1x4x4xf32>
    %206 = vector.shape_cast %205 : vector<1x1x4x4xf32> to vector<4x4xf32>
    %c25_232 = arith.constant 25 : index
    %c1_233 = arith.constant 1 : index
    %c1_234 = arith.constant 1 : index
    %207 = vector.load %arg11[%c25_232, %c1_233, %c1_234] : memref<64x5x5xf32, #tpu.memory_space<vmem>>, vector<1x4x4xf32>
    %208 = vector.shape_cast %207 : vector<1x4x4xf32> to vector<4x4xf32>
    %209 = vector.shape_cast %206 : vector<4x4xf32> to vector<1x4x4xf32>
    tpu.vector_store %arg11[%c25_232, %c1_233, %c1_234], %209 {strides = array<i32>} : memref<64x5x5xf32, #tpu.memory_space<vmem>>, vector<1x4x4xf32>,
    %c26 = arith.constant 26 : index
    %c0_235 = arith.constant 0 : index
    %c0_236 = arith.constant 0 : index
    %210 = vector.load %arg11[%c26, %c0_235, %c0_236] : memref<64x5x5xf32, #tpu.memory_space<vmem>>, vector<1x5x5xf32>
    %211 = vector.shape_cast %210 : vector<1x5x5xf32> to vector<5x5xf32>
    %212 = vector.shape_cast %0 : vector<5x5xf32> to vector<1x5x5xf32>
    tpu.vector_store %arg11[%c26, %c0_235, %c0_236], %212 {strides = array<i32>} : memref<64x5x5xf32, #tpu.memory_space<vmem>>, vector<1x5x5xf32>,
    %c0_237 = arith.constant 0 : index
    %c26_238 = arith.constant 26 : index
    %c0_239 = arith.constant 0 : index
    %c0_240 = arith.constant 0 : index
    %213 = vector.load %arg1[%c0_237, %c26_238, %c0_239, %c0_240] : memref<1x64x4x4xf32, #tpu.memory_space<vmem>>, vector<1x1x4x4xf32>
    %214 = vector.shape_cast %213 : vector<1x1x4x4xf32> to vector<4x4xf32>
    %c26_241 = arith.constant 26 : index
    %c1_242 = arith.constant 1 : index
    %c1_243 = arith.constant 1 : index
    %215 = vector.load %arg11[%c26_241, %c1_242, %c1_243] : memref<64x5x5xf32, #tpu.memory_space<vmem>>, vector<1x4x4xf32>
    %216 = vector.shape_cast %215 : vector<1x4x4xf32> to vector<4x4xf32>
    %217 = vector.shape_cast %214 : vector<4x4xf32> to vector<1x4x4xf32>
    tpu.vector_store %arg11[%c26_241, %c1_242, %c1_243], %217 {strides = array<i32>} : memref<64x5x5xf32, #tpu.memory_space<vmem>>, vector<1x4x4xf32>,
    %c27 = arith.constant 27 : index
    %c0_244 = arith.constant 0 : index
    %c0_245 = arith.constant 0 : index
    %218 = vector.load %arg11[%c27, %c0_244, %c0_245] : memref<64x5x5xf32, #tpu.memory_space<vmem>>, vector<1x5x5xf32>
    %219 = vector.shape_cast %218 : vector<1x5x5xf32> to vector<5x5xf32>
    %220 = vector.shape_cast %0 : vector<5x5xf32> to vector<1x5x5xf32>
    tpu.vector_store %arg11[%c27, %c0_244, %c0_245], %220 {strides = array<i32>} : memref<64x5x5xf32, #tpu.memory_space<vmem>>, vector<1x5x5xf32>,
    %c0_246 = arith.constant 0 : index
    %c27_247 = arith.constant 27 : index
    %c0_248 = arith.constant 0 : index
    %c0_249 = arith.constant 0 : index
    %221 = vector.load %arg1[%c0_246, %c27_247, %c0_248, %c0_249] : memref<1x64x4x4xf32, #tpu.memory_space<vmem>>, vector<1x1x4x4xf32>
    %222 = vector.shape_cast %221 : vector<1x1x4x4xf32> to vector<4x4xf32>
    %c27_250 = arith.constant 27 : index
    %c1_251 = arith.constant 1 : index
    %c1_252 = arith.constant 1 : index
    %223 = vector.load %arg11[%c27_250, %c1_251, %c1_252] : memref<64x5x5xf32, #tpu.memory_space<vmem>>, vector<1x4x4xf32>
    %224 = vector.shape_cast %223 : vector<1x4x4xf32> to vector<4x4xf32>
    %225 = vector.shape_cast %222 : vector<4x4xf32> to vector<1x4x4xf32>
    tpu.vector_store %arg11[%c27_250, %c1_251, %c1_252], %225 {strides = array<i32>} : memref<64x5x5xf32, #tpu.memory_space<vmem>>, vector<1x4x4xf32>,
    %c28 = arith.constant 28 : index
    %c0_253 = arith.constant 0 : index
    %c0_254 = arith.constant 0 : index
    %226 = vector.load %arg11[%c28, %c0_253, %c0_254] : memref<64x5x5xf32, #tpu.memory_space<vmem>>, vector<1x5x5xf32>
    %227 = vector.shape_cast %226 : vector<1x5x5xf32> to vector<5x5xf32>
    %228 = vector.shape_cast %0 : vector<5x5xf32> to vector<1x5x5xf32>
    tpu.vector_store %arg11[%c28, %c0_253, %c0_254], %228 {strides = array<i32>} : memref<64x5x5xf32, #tpu.memory_space<vmem>>, vector<1x5x5xf32>,
    %c0_255 = arith.constant 0 : index
    %c28_256 = arith.constant 28 : index
    %c0_257 = arith.constant 0 : index
    %c0_258 = arith.constant 0 : index
    %229 = vector.load %arg1[%c0_255, %c28_256, %c0_257, %c0_258] : memref<1x64x4x4xf32, #tpu.memory_space<vmem>>, vector<1x1x4x4xf32>
    %230 = vector.shape_cast %229 : vector<1x1x4x4xf32> to vector<4x4xf32>
    %c28_259 = arith.constant 28 : index
    %c1_260 = arith.constant 1 : index
    %c1_261 = arith.constant 1 : index
    %231 = vector.load %arg11[%c28_259, %c1_260, %c1_261] : memref<64x5x5xf32, #tpu.memory_space<vmem>>, vector<1x4x4xf32>
    %232 = vector.shape_cast %231 : vector<1x4x4xf32> to vector<4x4xf32>
    %233 = vector.shape_cast %230 : vector<4x4xf32> to vector<1x4x4xf32>
    tpu.vector_store %arg11[%c28_259, %c1_260, %c1_261], %233 {strides = array<i32>} : memref<64x5x5xf32, #tpu.memory_space<vmem>>, vector<1x4x4xf32>,
    %c29 = arith.constant 29 : index
    %c0_262 = arith.constant 0 : index
    %c0_263 = arith.constant 0 : index
    %234 = vector.load %arg11[%c29, %c0_262, %c0_263] : memref<64x5x5xf32, #tpu.memory_space<vmem>>, vector<1x5x5xf32>
    %235 = vector.shape_cast %234 : vector<1x5x5xf32> to vector<5x5xf32>
    %236 = vector.shape_cast %0 : vector<5x5xf32> to vector<1x5x5xf32>
    tpu.vector_store %arg11[%c29, %c0_262, %c0_263], %236 {strides = array<i32>} : memref<64x5x5xf32, #tpu.memory_space<vmem>>, vector<1x5x5xf32>,
    %c0_264 = arith.constant 0 : index
    %c29_265 = arith.constant 29 : index
    %c0_266 = arith.constant 0 : index
    %c0_267 = arith.constant 0 : index
    %237 = vector.load %arg1[%c0_264, %c29_265, %c0_266, %c0_267] : memref<1x64x4x4xf32, #tpu.memory_space<vmem>>, vector<1x1x4x4xf32>
    %238 = vector.shape_cast %237 : vector<1x1x4x4xf32> to vector<4x4xf32>
    %c29_268 = arith.constant 29 : index
    %c1_269 = arith.constant 1 : index
    %c1_270 = arith.constant 1 : index
    %239 = vector.load %arg11[%c29_268, %c1_269, %c1_270] : memref<64x5x5xf32, #tpu.memory_space<vmem>>, vector<1x4x4xf32>
    %240 = vector.shape_cast %239 : vector<1x4x4xf32> to vector<4x4xf32>
    %241 = vector.shape_cast %238 : vector<4x4xf32> to vector<1x4x4xf32>
    tpu.vector_store %arg11[%c29_268, %c1_269, %c1_270], %241 {strides = array<i32>} : memref<64x5x5xf32, #tpu.memory_space<vmem>>, vector<1x4x4xf32>,
    %c30 = arith.constant 30 : index
    %c0_271 = arith.constant 0 : index
    %c0_272 = arith.constant 0 : index
    %242 = vector.load %arg11[%c30, %c0_271, %c0_272] : memref<64x5x5xf32, #tpu.memory_space<vmem>>, vector<1x5x5xf32>
    %243 = vector.shape_cast %242 : vector<1x5x5xf32> to vector<5x5xf32>
    %244 = vector.shape_cast %0 : vector<5x5xf32> to vector<1x5x5xf32>
    tpu.vector_store %arg11[%c30, %c0_271, %c0_272], %244 {strides = array<i32>} : memref<64x5x5xf32, #tpu.memory_space<vmem>>, vector<1x5x5xf32>,
    %c0_273 = arith.constant 0 : index
    %c30_274 = arith.constant 30 : index
    %c0_275 = arith.constant 0 : index
    %c0_276 = arith.constant 0 : index
    %245 = vector.load %arg1[%c0_273, %c30_274, %c0_275, %c0_276] : memref<1x64x4x4xf32, #tpu.memory_space<vmem>>, vector<1x1x4x4xf32>
    %246 = vector.shape_cast %245 : vector<1x1x4x4xf32> to vector<4x4xf32>
    %c30_277 = arith.constant 30 : index
    %c1_278 = arith.constant 1 : index
    %c1_279 = arith.constant 1 : index
    %247 = vector.load %arg11[%c30_277, %c1_278, %c1_279] : memref<64x5x5xf32, #tpu.memory_space<vmem>>, vector<1x4x4xf32>
    %248 = vector.shape_cast %247 : vector<1x4x4xf32> to vector<4x4xf32>
    %249 = vector.shape_cast %246 : vector<4x4xf32> to vector<1x4x4xf32>
    tpu.vector_store %arg11[%c30_277, %c1_278, %c1_279], %249 {strides = array<i32>} : memref<64x5x5xf32, #tpu.memory_space<vmem>>, vector<1x4x4xf32>,
    %c31 = arith.constant 31 : index
    %c0_280 = arith.constant 0 : index
    %c0_281 = arith.constant 0 : index
    %250 = vector.load %arg11[%c31, %c0_280, %c0_281] : memref<64x5x5xf32, #tpu.memory_space<vmem>>, vector<1x5x5xf32>
    %251 = vector.shape_cast %250 : vector<1x5x5xf32> to vector<5x5xf32>
    %252 = vector.shape_cast %0 : vector<5x5xf32> to vector<1x5x5xf32>
    tpu.vector_store %arg11[%c31, %c0_280, %c0_281], %252 {strides = array<i32>} : memref<64x5x5xf32, #tpu.memory_space<vmem>>, vector<1x5x5xf32>,
    %c0_282 = arith.constant 0 : index
    %c31_283 = arith.constant 31 : index
    %c0_284 = arith.constant 0 : index
    %c0_285 = arith.constant 0 : index
    %253 = vector.load %arg1[%c0_282, %c31_283, %c0_284, %c0_285] : memref<1x64x4x4xf32, #tpu.memory_space<vmem>>, vector<1x1x4x4xf32>
    %254 = vector.shape_cast %253 : vector<1x1x4x4xf32> to vector<4x4xf32>
    %c31_286 = arith.constant 31 : index
    %c1_287 = arith.constant 1 : index
    %c1_288 = arith.constant 1 : index
    %255 = vector.load %arg11[%c31_286, %c1_287, %c1_288] : memref<64x5x5xf32, #tpu.memory_space<vmem>>, vector<1x4x4xf32>
    %256 = vector.shape_cast %255 : vector<1x4x4xf32> to vector<4x4xf32>
    %257 = vector.shape_cast %254 : vector<4x4xf32> to vector<1x4x4xf32>
    tpu.vector_store %arg11[%c31_286, %c1_287, %c1_288], %257 {strides = array<i32>} : memref<64x5x5xf32, #tpu.memory_space<vmem>>, vector<1x4x4xf32>,
    %c32 = arith.constant 32 : index
    %c0_289 = arith.constant 0 : index
    %c0_290 = arith.constant 0 : index
    %258 = vector.load %arg11[%c32, %c0_289, %c0_290] : memref<64x5x5xf32, #tpu.memory_space<vmem>>, vector<1x5x5xf32>
    %259 = vector.shape_cast %258 : vector<1x5x5xf32> to vector<5x5xf32>
    %260 = vector.shape_cast %0 : vector<5x5xf32> to vector<1x5x5xf32>
    tpu.vector_store %arg11[%c32, %c0_289, %c0_290], %260 {strides = array<i32>} : memref<64x5x5xf32, #tpu.memory_space<vmem>>, vector<1x5x5xf32>,
    %c0_291 = arith.constant 0 : index
    %c32_292 = arith.constant 32 : index
    %c0_293 = arith.constant 0 : index
    %c0_294 = arith.constant 0 : index
    %261 = vector.load %arg1[%c0_291, %c32_292, %c0_293, %c0_294] : memref<1x64x4x4xf32, #tpu.memory_space<vmem>>, vector<1x1x4x4xf32>
    %262 = vector.shape_cast %261 : vector<1x1x4x4xf32> to vector<4x4xf32>
    %c32_295 = arith.constant 32 : index
    %c1_296 = arith.constant 1 : index
    %c1_297 = arith.constant 1 : index
    %263 = vector.load %arg11[%c32_295, %c1_296, %c1_297] : memref<64x5x5xf32, #tpu.memory_space<vmem>>, vector<1x4x4xf32>
    %264 = vector.shape_cast %263 : vector<1x4x4xf32> to vector<4x4xf32>
    %265 = vector.shape_cast %262 : vector<4x4xf32> to vector<1x4x4xf32>
    tpu.vector_store %arg11[%c32_295, %c1_296, %c1_297], %265 {strides = array<i32>} : memref<64x5x5xf32, #tpu.memory_space<vmem>>, vector<1x4x4xf32>,
    %c33 = arith.constant 33 : index
    %c0_298 = arith.constant 0 : index
    %c0_299 = arith.constant 0 : index
    %266 = vector.load %arg11[%c33, %c0_298, %c0_299] : memref<64x5x5xf32, #tpu.memory_space<vmem>>, vector<1x5x5xf32>
    %267 = vector.shape_cast %266 : vector<1x5x5xf32> to vector<5x5xf32>
    %268 = vector.shape_cast %0 : vector<5x5xf32> to vector<1x5x5xf32>
    tpu.vector_store %arg11[%c33, %c0_298, %c0_299], %268 {strides = array<i32>} : memref<64x5x5xf32, #tpu.memory_space<vmem>>, vector<1x5x5xf32>,
    %c0_300 = arith.constant 0 : index
    %c33_301 = arith.constant 33 : index
    %c0_302 = arith.constant 0 : index
    %c0_303 = arith.constant 0 : index
    %269 = vector.load %arg1[%c0_300, %c33_301, %c0_302, %c0_303] : memref<1x64x4x4xf32, #tpu.memory_space<vmem>>, vector<1x1x4x4xf32>
    %270 = vector.shape_cast %269 : vector<1x1x4x4xf32> to vector<4x4xf32>
    %c33_304 = arith.constant 33 : index
    %c1_305 = arith.constant 1 : index
    %c1_306 = arith.constant 1 : index
    %271 = vector.load %arg11[%c33_304, %c1_305, %c1_306] : memref<64x5x5xf32, #tpu.memory_space<vmem>>, vector<1x4x4xf32>
    %272 = vector.shape_cast %271 : vector<1x4x4xf32> to vector<4x4xf32>
    %273 = vector.shape_cast %270 : vector<4x4xf32> to vector<1x4x4xf32>
    tpu.vector_store %arg11[%c33_304, %c1_305, %c1_306], %273 {strides = array<i32>} : memref<64x5x5xf32, #tpu.memory_space<vmem>>, vector<1x4x4xf32>,
    %c34 = arith.constant 34 : index
    %c0_307 = arith.constant 0 : index
    %c0_308 = arith.constant 0 : index
    %274 = vector.load %arg11[%c34, %c0_307, %c0_308] : memref<64x5x5xf32, #tpu.memory_space<vmem>>, vector<1x5x5xf32>
    %275 = vector.shape_cast %274 : vector<1x5x5xf32> to vector<5x5xf32>
    %276 = vector.shape_cast %0 : vector<5x5xf32> to vector<1x5x5xf32>
    tpu.vector_store %arg11[%c34, %c0_307, %c0_308], %276 {strides = array<i32>} : memref<64x5x5xf32, #tpu.memory_space<vmem>>, vector<1x5x5xf32>,
    %c0_309 = arith.constant 0 : index
    %c34_310 = arith.constant 34 : index
    %c0_311 = arith.constant 0 : index
    %c0_312 = arith.constant 0 : index
    %277 = vector.load %arg1[%c0_309, %c34_310, %c0_311, %c0_312] : memref<1x64x4x4xf32, #tpu.memory_space<vmem>>, vector<1x1x4x4xf32>
    %278 = vector.shape_cast %277 : vector<1x1x4x4xf32> to vector<4x4xf32>
    %c34_313 = arith.constant 34 : index
    %c1_314 = arith.constant 1 : index
    %c1_315 = arith.constant 1 : index
    %279 = vector.load %arg11[%c34_313, %c1_314, %c1_315] : memref<64x5x5xf32, #tpu.memory_space<vmem>>, vector<1x4x4xf32>
    %280 = vector.shape_cast %279 : vector<1x4x4xf32> to vector<4x4xf32>
    %281 = vector.shape_cast %278 : vector<4x4xf32> to vector<1x4x4xf32>
    tpu.vector_store %arg11[%c34_313, %c1_314, %c1_315], %281 {strides = array<i32>} : memref<64x5x5xf32, #tpu.memory_space<vmem>>, vector<1x4x4xf32>,
    %c35 = arith.constant 35 : index
    %c0_316 = arith.constant 0 : index
    %c0_317 = arith.constant 0 : index
    %282 = vector.load %arg11[%c35, %c0_316, %c0_317] : memref<64x5x5xf32, #tpu.memory_space<vmem>>, vector<1x5x5xf32>
    %283 = vector.shape_cast %282 : vector<1x5x5xf32> to vector<5x5xf32>
    %284 = vector.shape_cast %0 : vector<5x5xf32> to vector<1x5x5xf32>
    tpu.vector_store %arg11[%c35, %c0_316, %c0_317], %284 {strides = array<i32>} : memref<64x5x5xf32, #tpu.memory_space<vmem>>, vector<1x5x5xf32>,
    %c0_318 = arith.constant 0 : index
    %c35_319 = arith.constant 35 : index
    %c0_320 = arith.constant 0 : index
    %c0_321 = arith.constant 0 : index
    %285 = vector.load %arg1[%c0_318, %c35_319, %c0_320, %c0_321] : memref<1x64x4x4xf32, #tpu.memory_space<vmem>>, vector<1x1x4x4xf32>
    %286 = vector.shape_cast %285 : vector<1x1x4x4xf32> to vector<4x4xf32>
    %c35_322 = arith.constant 35 : index
    %c1_323 = arith.constant 1 : index
    %c1_324 = arith.constant 1 : index
    %287 = vector.load %arg11[%c35_322, %c1_323, %c1_324] : memref<64x5x5xf32, #tpu.memory_space<vmem>>, vector<1x4x4xf32>
    %288 = vector.shape_cast %287 : vector<1x4x4xf32> to vector<4x4xf32>
    %289 = vector.shape_cast %286 : vector<4x4xf32> to vector<1x4x4xf32>
    tpu.vector_store %arg11[%c35_322, %c1_323, %c1_324], %289 {strides = array<i32>} : memref<64x5x5xf32, #tpu.memory_space<vmem>>, vector<1x4x4xf32>,
    %c36 = arith.constant 36 : index
    %c0_325 = arith.constant 0 : index
    %c0_326 = arith.constant 0 : index
    %290 = vector.load %arg11[%c36, %c0_325, %c0_326] : memref<64x5x5xf32, #tpu.memory_space<vmem>>, vector<1x5x5xf32>
    %291 = vector.shape_cast %290 : vector<1x5x5xf32> to vector<5x5xf32>
    %292 = vector.shape_cast %0 : vector<5x5xf32> to vector<1x5x5xf32>
    tpu.vector_store %arg11[%c36, %c0_325, %c0_326], %292 {strides = array<i32>} : memref<64x5x5xf32, #tpu.memory_space<vmem>>, vector<1x5x5xf32>,
    %c0_327 = arith.constant 0 : index
    %c36_328 = arith.constant 36 : index
    %c0_329 = arith.constant 0 : index
    %c0_330 = arith.constant 0 : index
    %293 = vector.load %arg1[%c0_327, %c36_328, %c0_329, %c0_330] : memref<1x64x4x4xf32, #tpu.memory_space<vmem>>, vector<1x1x4x4xf32>
    %294 = vector.shape_cast %293 : vector<1x1x4x4xf32> to vector<4x4xf32>
    %c36_331 = arith.constant 36 : index
    %c1_332 = arith.constant 1 : index
    %c1_333 = arith.constant 1 : index
    %295 = vector.load %arg11[%c36_331, %c1_332, %c1_333] : memref<64x5x5xf32, #tpu.memory_space<vmem>>, vector<1x4x4xf32>
    %296 = vector.shape_cast %295 : vector<1x4x4xf32> to vector<4x4xf32>
    %297 = vector.shape_cast %294 : vector<4x4xf32> to vector<1x4x4xf32>
    tpu.vector_store %arg11[%c36_331, %c1_332, %c1_333], %297 {strides = array<i32>} : memref<64x5x5xf32, #tpu.memory_space<vmem>>, vector<1x4x4xf32>,
    %c37 = arith.constant 37 : index
    %c0_334 = arith.constant 0 : index
    %c0_335 = arith.constant 0 : index
    %298 = vector.load %arg11[%c37, %c0_334, %c0_335] : memref<64x5x5xf32, #tpu.memory_space<vmem>>, vector<1x5x5xf32>
    %299 = vector.shape_cast %298 : vector<1x5x5xf32> to vector<5x5xf32>
    %300 = vector.shape_cast %0 : vector<5x5xf32> to vector<1x5x5xf32>
    tpu.vector_store %arg11[%c37, %c0_334, %c0_335], %300 {strides = array<i32>} : memref<64x5x5xf32, #tpu.memory_space<vmem>>, vector<1x5x5xf32>,
    %c0_336 = arith.constant 0 : index
    %c37_337 = arith.constant 37 : index
    %c0_338 = arith.constant 0 : index
    %c0_339 = arith.constant 0 : index
    %301 = vector.load %arg1[%c0_336, %c37_337, %c0_338, %c0_339] : memref<1x64x4x4xf32, #tpu.memory_space<vmem>>, vector<1x1x4x4xf32>
    %302 = vector.shape_cast %301 : vector<1x1x4x4xf32> to vector<4x4xf32>
    %c37_340 = arith.constant 37 : index
    %c1_341 = arith.constant 1 : index
    %c1_342 = arith.constant 1 : index
    %303 = vector.load %arg11[%c37_340, %c1_341, %c1_342] : memref<64x5x5xf32, #tpu.memory_space<vmem>>, vector<1x4x4xf32>
    %304 = vector.shape_cast %303 : vector<1x4x4xf32> to vector<4x4xf32>
    %305 = vector.shape_cast %302 : vector<4x4xf32> to vector<1x4x4xf32>
    tpu.vector_store %arg11[%c37_340, %c1_341, %c1_342], %305 {strides = array<i32>} : memref<64x5x5xf32, #tpu.memory_space<vmem>>, vector<1x4x4xf32>,
    %c38 = arith.constant 38 : index
    %c0_343 = arith.constant 0 : index
    %c0_344 = arith.constant 0 : index
    %306 = vector.load %arg11[%c38, %c0_343, %c0_344] : memref<64x5x5xf32, #tpu.memory_space<vmem>>, vector<1x5x5xf32>
    %307 = vector.shape_cast %306 : vector<1x5x5xf32> to vector<5x5xf32>
    %308 = vector.shape_cast %0 : vector<5x5xf32> to vector<1x5x5xf32>
    tpu.vector_store %arg11[%c38, %c0_343, %c0_344], %308 {strides = array<i32>} : memref<64x5x5xf32, #tpu.memory_space<vmem>>, vector<1x5x5xf32>,
    %c0_345 = arith.constant 0 : index
    %c38_346 = arith.constant 38 : index
    %c0_347 = arith.constant 0 : index
    %c0_348 = arith.constant 0 : index
    %309 = vector.load %arg1[%c0_345, %c38_346, %c0_347, %c0_348] : memref<1x64x4x4xf32, #tpu.memory_space<vmem>>, vector<1x1x4x4xf32>
    %310 = vector.shape_cast %309 : vector<1x1x4x4xf32> to vector<4x4xf32>
    %c38_349 = arith.constant 38 : index
    %c1_350 = arith.constant 1 : index
    %c1_351 = arith.constant 1 : index
    %311 = vector.load %arg11[%c38_349, %c1_350, %c1_351] : memref<64x5x5xf32, #tpu.memory_space<vmem>>, vector<1x4x4xf32>
    %312 = vector.shape_cast %311 : vector<1x4x4xf32> to vector<4x4xf32>
    %313 = vector.shape_cast %310 : vector<4x4xf32> to vector<1x4x4xf32>
    tpu.vector_store %arg11[%c38_349, %c1_350, %c1_351], %313 {strides = array<i32>} : memref<64x5x5xf32, #tpu.memory_space<vmem>>, vector<1x4x4xf32>,
    %c39 = arith.constant 39 : index
    %c0_352 = arith.constant 0 : index
    %c0_353 = arith.constant 0 : index
    %314 = vector.load %arg11[%c39, %c0_352, %c0_353] : memref<64x5x5xf32, #tpu.memory_space<vmem>>, vector<1x5x5xf32>
    %315 = vector.shape_cast %314 : vector<1x5x5xf32> to vector<5x5xf32>
    %316 = vector.shape_cast %0 : vector<5x5xf32> to vector<1x5x5xf32>
    tpu.vector_store %arg11[%c39, %c0_352, %c0_353], %316 {strides = array<i32>} : memref<64x5x5xf32, #tpu.memory_space<vmem>>, vector<1x5x5xf32>,
    %c0_354 = arith.constant 0 : index
    %c39_355 = arith.constant 39 : index
    %c0_356 = arith.constant 0 : index
    %c0_357 = arith.constant 0 : index
    %317 = vector.load %arg1[%c0_354, %c39_355, %c0_356, %c0_357] : memref<1x64x4x4xf32, #tpu.memory_space<vmem>>, vector<1x1x4x4xf32>
    %318 = vector.shape_cast %317 : vector<1x1x4x4xf32> to vector<4x4xf32>
    %c39_358 = arith.constant 39 : index
    %c1_359 = arith.constant 1 : index
    %c1_360 = arith.constant 1 : index
    %319 = vector.load %arg11[%c39_358, %c1_359, %c1_360] : memref<64x5x5xf32, #tpu.memory_space<vmem>>, vector<1x4x4xf32>
    %320 = vector.shape_cast %319 : vector<1x4x4xf32> to vector<4x4xf32>
    %321 = vector.shape_cast %318 : vector<4x4xf32> to vector<1x4x4xf32>
    tpu.vector_store %arg11[%c39_358, %c1_359, %c1_360], %321 {strides = array<i32>} : memref<64x5x5xf32, #tpu.memory_space<vmem>>, vector<1x4x4xf32>,
    %c40 = arith.constant 40 : index
    %c0_361 = arith.constant 0 : index
    %c0_362 = arith.constant 0 : index
    %322 = vector.load %arg11[%c40, %c0_361, %c0_362] : memref<64x5x5xf32, #tpu.memory_space<vmem>>, vector<1x5x5xf32>
    %323 = vector.shape_cast %322 : vector<1x5x5xf32> to vector<5x5xf32>
    %324 = vector.shape_cast %0 : vector<5x5xf32> to vector<1x5x5xf32>
    tpu.vector_store %arg11[%c40, %c0_361, %c0_362], %324 {strides = array<i32>} : memref<64x5x5xf32, #tpu.memory_space<vmem>>, vector<1x5x5xf32>,
    %c0_363 = arith.constant 0 : index
    %c40_364 = arith.constant 40 : index
    %c0_365 = arith.constant 0 : index
    %c0_366 = arith.constant 0 : index
    %325 = vector.load %arg1[%c0_363, %c40_364, %c0_365, %c0_366] : memref<1x64x4x4xf32, #tpu.memory_space<vmem>>, vector<1x1x4x4xf32>
    %326 = vector.shape_cast %325 : vector<1x1x4x4xf32> to vector<4x4xf32>
    %c40_367 = arith.constant 40 : index
    %c1_368 = arith.constant 1 : index
    %c1_369 = arith.constant 1 : index
    %327 = vector.load %arg11[%c40_367, %c1_368, %c1_369] : memref<64x5x5xf32, #tpu.memory_space<vmem>>, vector<1x4x4xf32>
    %328 = vector.shape_cast %327 : vector<1x4x4xf32> to vector<4x4xf32>
    %329 = vector.shape_cast %326 : vector<4x4xf32> to vector<1x4x4xf32>
    tpu.vector_store %arg11[%c40_367, %c1_368, %c1_369], %329 {strides = array<i32>} : memref<64x5x5xf32, #tpu.memory_space<vmem>>, vector<1x4x4xf32>,
    %c41 = arith.constant 41 : index
    %c0_370 = arith.constant 0 : index
    %c0_371 = arith.constant 0 : index
    %330 = vector.load %arg11[%c41, %c0_370, %c0_371] : memref<64x5x5xf32, #tpu.memory_space<vmem>>, vector<1x5x5xf32>
    %331 = vector.shape_cast %330 : vector<1x5x5xf32> to vector<5x5xf32>
    %332 = vector.shape_cast %0 : vector<5x5xf32> to vector<1x5x5xf32>
    tpu.vector_store %arg11[%c41, %c0_370, %c0_371], %332 {strides = array<i32>} : memref<64x5x5xf32, #tpu.memory_space<vmem>>, vector<1x5x5xf32>,
    %c0_372 = arith.constant 0 : index
    %c41_373 = arith.constant 41 : index
    %c0_374 = arith.constant 0 : index
    %c0_375 = arith.constant 0 : index
    %333 = vector.load %arg1[%c0_372, %c41_373, %c0_374, %c0_375] : memref<1x64x4x4xf32, #tpu.memory_space<vmem>>, vector<1x1x4x4xf32>
    %334 = vector.shape_cast %333 : vector<1x1x4x4xf32> to vector<4x4xf32>
    %c41_376 = arith.constant 41 : index
    %c1_377 = arith.constant 1 : index
    %c1_378 = arith.constant 1 : index
    %335 = vector.load %arg11[%c41_376, %c1_377, %c1_378] : memref<64x5x5xf32, #tpu.memory_space<vmem>>, vector<1x4x4xf32>
    %336 = vector.shape_cast %335 : vector<1x4x4xf32> to vector<4x4xf32>
    %337 = vector.shape_cast %334 : vector<4x4xf32> to vector<1x4x4xf32>
    tpu.vector_store %arg11[%c41_376, %c1_377, %c1_378], %337 {strides = array<i32>} : memref<64x5x5xf32, #tpu.memory_space<vmem>>, vector<1x4x4xf32>,
    %c42 = arith.constant 42 : index
    %c0_379 = arith.constant 0 : index
    %c0_380 = arith.constant 0 : index
    %338 = vector.load %arg11[%c42, %c0_379, %c0_380] : memref<64x5x5xf32, #tpu.memory_space<vmem>>, vector<1x5x5xf32>
    %339 = vector.shape_cast %338 : vector<1x5x5xf32> to vector<5x5xf32>
    %340 = vector.shape_cast %0 : vector<5x5xf32> to vector<1x5x5xf32>
    tpu.vector_store %arg11[%c42, %c0_379, %c0_380], %340 {strides = array<i32>} : memref<64x5x5xf32, #tpu.memory_space<vmem>>, vector<1x5x5xf32>,
    %c0_381 = arith.constant 0 : index
    %c42_382 = arith.constant 42 : index
    %c0_383 = arith.constant 0 : index
    %c0_384 = arith.constant 0 : index
    %341 = vector.load %arg1[%c0_381, %c42_382, %c0_383, %c0_384] : memref<1x64x4x4xf32, #tpu.memory_space<vmem>>, vector<1x1x4x4xf32>
    %342 = vector.shape_cast %341 : vector<1x1x4x4xf32> to vector<4x4xf32>
    %c42_385 = arith.constant 42 : index
    %c1_386 = arith.constant 1 : index
    %c1_387 = arith.constant 1 : index
    %343 = vector.load %arg11[%c42_385, %c1_386, %c1_387] : memref<64x5x5xf32, #tpu.memory_space<vmem>>, vector<1x4x4xf32>
    %344 = vector.shape_cast %343 : vector<1x4x4xf32> to vector<4x4xf32>
    %345 = vector.shape_cast %342 : vector<4x4xf32> to vector<1x4x4xf32>
    tpu.vector_store %arg11[%c42_385, %c1_386, %c1_387], %345 {strides = array<i32>} : memref<64x5x5xf32, #tpu.memory_space<vmem>>, vector<1x4x4xf32>,
    %c43 = arith.constant 43 : index
    %c0_388 = arith.constant 0 : index
    %c0_389 = arith.constant 0 : index
    %346 = vector.load %arg11[%c43, %c0_388, %c0_389] : memref<64x5x5xf32, #tpu.memory_space<vmem>>, vector<1x5x5xf32>
    %347 = vector.shape_cast %346 : vector<1x5x5xf32> to vector<5x5xf32>
    %348 = vector.shape_cast %0 : vector<5x5xf32> to vector<1x5x5xf32>
    tpu.vector_store %arg11[%c43, %c0_388, %c0_389], %348 {strides = array<i32>} : memref<64x5x5xf32, #tpu.memory_space<vmem>>, vector<1x5x5xf32>,
    %c0_390 = arith.constant 0 : index
    %c43_391 = arith.constant 43 : index
    %c0_392 = arith.constant 0 : index
    %c0_393 = arith.constant 0 : index
    %349 = vector.load %arg1[%c0_390, %c43_391, %c0_392, %c0_393] : memref<1x64x4x4xf32, #tpu.memory_space<vmem>>, vector<1x1x4x4xf32>
    %350 = vector.shape_cast %349 : vector<1x1x4x4xf32> to vector<4x4xf32>
    %c43_394 = arith.constant 43 : index
    %c1_395 = arith.constant 1 : index
    %c1_396 = arith.constant 1 : index
    %351 = vector.load %arg11[%c43_394, %c1_395, %c1_396] : memref<64x5x5xf32, #tpu.memory_space<vmem>>, vector<1x4x4xf32>
    %352 = vector.shape_cast %351 : vector<1x4x4xf32> to vector<4x4xf32>
    %353 = vector.shape_cast %350 : vector<4x4xf32> to vector<1x4x4xf32>
    tpu.vector_store %arg11[%c43_394, %c1_395, %c1_396], %353 {strides = array<i32>} : memref<64x5x5xf32, #tpu.memory_space<vmem>>, vector<1x4x4xf32>,
    %c44 = arith.constant 44 : index
    %c0_397 = arith.constant 0 : index
    %c0_398 = arith.constant 0 : index
    %354 = vector.load %arg11[%c44, %c0_397, %c0_398] : memref<64x5x5xf32, #tpu.memory_space<vmem>>, vector<1x5x5xf32>
    %355 = vector.shape_cast %354 : vector<1x5x5xf32> to vector<5x5xf32>
    %356 = vector.shape_cast %0 : vector<5x5xf32> to vector<1x5x5xf32>
    tpu.vector_store %arg11[%c44, %c0_397, %c0_398], %356 {strides = array<i32>} : memref<64x5x5xf32, #tpu.memory_space<vmem>>, vector<1x5x5xf32>,
    %c0_399 = arith.constant 0 : index
    %c44_400 = arith.constant 44 : index
    %c0_401 = arith.constant 0 : index
    %c0_402 = arith.constant 0 : index
    %357 = vector.load %arg1[%c0_399, %c44_400, %c0_401, %c0_402] : memref<1x64x4x4xf32, #tpu.memory_space<vmem>>, vector<1x1x4x4xf32>
    %358 = vector.shape_cast %357 : vector<1x1x4x4xf32> to vector<4x4xf32>
    %c44_403 = arith.constant 44 : index
    %c1_404 = arith.constant 1 : index
    %c1_405 = arith.constant 1 : index
    %359 = vector.load %arg11[%c44_403, %c1_404, %c1_405] : memref<64x5x5xf32, #tpu.memory_space<vmem>>, vector<1x4x4xf32>
    %360 = vector.shape_cast %359 : vector<1x4x4xf32> to vector<4x4xf32>
    %361 = vector.shape_cast %358 : vector<4x4xf32> to vector<1x4x4xf32>
    tpu.vector_store %arg11[%c44_403, %c1_404, %c1_405], %361 {strides = array<i32>} : memref<64x5x5xf32, #tpu.memory_space<vmem>>, vector<1x4x4xf32>,
    %c45 = arith.constant 45 : index
    %c0_406 = arith.constant 0 : index
    %c0_407 = arith.constant 0 : index
    %362 = vector.load %arg11[%c45, %c0_406, %c0_407] : memref<64x5x5xf32, #tpu.memory_space<vmem>>, vector<1x5x5xf32>
    %363 = vector.shape_cast %362 : vector<1x5x5xf32> to vector<5x5xf32>
    %364 = vector.shape_cast %0 : vector<5x5xf32> to vector<1x5x5xf32>
    tpu.vector_store %arg11[%c45, %c0_406, %c0_407], %364 {strides = array<i32>} : memref<64x5x5xf32, #tpu.memory_space<vmem>>, vector<1x5x5xf32>,
    %c0_408 = arith.constant 0 : index
    %c45_409 = arith.constant 45 : index
    %c0_410 = arith.constant 0 : index
    %c0_411 = arith.constant 0 : index
    %365 = vector.load %arg1[%c0_408, %c45_409, %c0_410, %c0_411] : memref<1x64x4x4xf32, #tpu.memory_space<vmem>>, vector<1x1x4x4xf32>
    %366 = vector.shape_cast %365 : vector<1x1x4x4xf32> to vector<4x4xf32>
    %c45_412 = arith.constant 45 : index
    %c1_413 = arith.constant 1 : index
    %c1_414 = arith.constant 1 : index
    %367 = vector.load %arg11[%c45_412, %c1_413, %c1_414] : memref<64x5x5xf32, #tpu.memory_space<vmem>>, vector<1x4x4xf32>
    %368 = vector.shape_cast %367 : vector<1x4x4xf32> to vector<4x4xf32>
    %369 = vector.shape_cast %366 : vector<4x4xf32> to vector<1x4x4xf32>
    tpu.vector_store %arg11[%c45_412, %c1_413, %c1_414], %369 {strides = array<i32>} : memref<64x5x5xf32, #tpu.memory_space<vmem>>, vector<1x4x4xf32>,
    %c46 = arith.constant 46 : index
    %c0_415 = arith.constant 0 : index
    %c0_416 = arith.constant 0 : index
    %370 = vector.load %arg11[%c46, %c0_415, %c0_416] : memref<64x5x5xf32, #tpu.memory_space<vmem>>, vector<1x5x5xf32>
    %371 = vector.shape_cast %370 : vector<1x5x5xf32> to vector<5x5xf32>
    %372 = vector.shape_cast %0 : vector<5x5xf32> to vector<1x5x5xf32>
    tpu.vector_store %arg11[%c46, %c0_415, %c0_416], %372 {strides = array<i32>} : memref<64x5x5xf32, #tpu.memory_space<vmem>>, vector<1x5x5xf32>,
    %c0_417 = arith.constant 0 : index
    %c46_418 = arith.constant 46 : index
    %c0_419 = arith.constant 0 : index
    %c0_420 = arith.constant 0 : index
    %373 = vector.load %arg1[%c0_417, %c46_418, %c0_419, %c0_420] : memref<1x64x4x4xf32, #tpu.memory_space<vmem>>, vector<1x1x4x4xf32>
    %374 = vector.shape_cast %373 : vector<1x1x4x4xf32> to vector<4x4xf32>
    %c46_421 = arith.constant 46 : index
    %c1_422 = arith.constant 1 : index
    %c1_423 = arith.constant 1 : index
    %375 = vector.load %arg11[%c46_421, %c1_422, %c1_423] : memref<64x5x5xf32, #tpu.memory_space<vmem>>, vector<1x4x4xf32>
    %376 = vector.shape_cast %375 : vector<1x4x4xf32> to vector<4x4xf32>
    %377 = vector.shape_cast %374 : vector<4x4xf32> to vector<1x4x4xf32>
    tpu.vector_store %arg11[%c46_421, %c1_422, %c1_423], %377 {strides = array<i32>} : memref<64x5x5xf32, #tpu.memory_space<vmem>>, vector<1x4x4xf32>,
    %c47 = arith.constant 47 : index
    %c0_424 = arith.constant 0 : index
    %c0_425 = arith.constant 0 : index
    %378 = vector.load %arg11[%c47, %c0_424, %c0_425] : memref<64x5x5xf32, #tpu.memory_space<vmem>>, vector<1x5x5xf32>
    %379 = vector.shape_cast %378 : vector<1x5x5xf32> to vector<5x5xf32>
    %380 = vector.shape_cast %0 : vector<5x5xf32> to vector<1x5x5xf32>
    tpu.vector_store %arg11[%c47, %c0_424, %c0_425], %380 {strides = array<i32>} : memref<64x5x5xf32, #tpu.memory_space<vmem>>, vector<1x5x5xf32>,
    %c0_426 = arith.constant 0 : index
    %c47_427 = arith.constant 47 : index
    %c0_428 = arith.constant 0 : index
    %c0_429 = arith.constant 0 : index
    %381 = vector.load %arg1[%c0_426, %c47_427, %c0_428, %c0_429] : memref<1x64x4x4xf32, #tpu.memory_space<vmem>>, vector<1x1x4x4xf32>
    %382 = vector.shape_cast %381 : vector<1x1x4x4xf32> to vector<4x4xf32>
    %c47_430 = arith.constant 47 : index
    %c1_431 = arith.constant 1 : index
    %c1_432 = arith.constant 1 : index
    %383 = vector.load %arg11[%c47_430, %c1_431, %c1_432] : memref<64x5x5xf32, #tpu.memory_space<vmem>>, vector<1x4x4xf32>
    %384 = vector.shape_cast %383 : vector<1x4x4xf32> to vector<4x4xf32>
    %385 = vector.shape_cast %382 : vector<4x4xf32> to vector<1x4x4xf32>
    tpu.vector_store %arg11[%c47_430, %c1_431, %c1_432], %385 {strides = array<i32>} : memref<64x5x5xf32, #tpu.memory_space<vmem>>, vector<1x4x4xf32>,
    %c48 = arith.constant 48 : index
    %c0_433 = arith.constant 0 : index
    %c0_434 = arith.constant 0 : index
    %386 = vector.load %arg11[%c48, %c0_433, %c0_434] : memref<64x5x5xf32, #tpu.memory_space<vmem>>, vector<1x5x5xf32>
    %387 = vector.shape_cast %386 : vector<1x5x5xf32> to vector<5x5xf32>
    %388 = vector.shape_cast %0 : vector<5x5xf32> to vector<1x5x5xf32>
    tpu.vector_store %arg11[%c48, %c0_433, %c0_434], %388 {strides = array<i32>} : memref<64x5x5xf32, #tpu.memory_space<vmem>>, vector<1x5x5xf32>,
    %c0_435 = arith.constant 0 : index
    %c48_436 = arith.constant 48 : index
    %c0_437 = arith.constant 0 : index
    %c0_438 = arith.constant 0 : index
    %389 = vector.load %arg1[%c0_435, %c48_436, %c0_437, %c0_438] : memref<1x64x4x4xf32, #tpu.memory_space<vmem>>, vector<1x1x4x4xf32>
    %390 = vector.shape_cast %389 : vector<1x1x4x4xf32> to vector<4x4xf32>
    %c48_439 = arith.constant 48 : index
    %c1_440 = arith.constant 1 : index
    %c1_441 = arith.constant 1 : index
    %391 = vector.load %arg11[%c48_439, %c1_440, %c1_441] : memref<64x5x5xf32, #tpu.memory_space<vmem>>, vector<1x4x4xf32>
    %392 = vector.shape_cast %391 : vector<1x4x4xf32> to vector<4x4xf32>
    %393 = vector.shape_cast %390 : vector<4x4xf32> to vector<1x4x4xf32>
    tpu.vector_store %arg11[%c48_439, %c1_440, %c1_441], %393 {strides = array<i32>} : memref<64x5x5xf32, #tpu.memory_space<vmem>>, vector<1x4x4xf32>,
    %c49 = arith.constant 49 : index
    %c0_442 = arith.constant 0 : index
    %c0_443 = arith.constant 0 : index
    %394 = vector.load %arg11[%c49, %c0_442, %c0_443] : memref<64x5x5xf32, #tpu.memory_space<vmem>>, vector<1x5x5xf32>
    %395 = vector.shape_cast %394 : vector<1x5x5xf32> to vector<5x5xf32>
    %396 = vector.shape_cast %0 : vector<5x5xf32> to vector<1x5x5xf32>
    tpu.vector_store %arg11[%c49, %c0_442, %c0_443], %396 {strides = array<i32>} : memref<64x5x5xf32, #tpu.memory_space<vmem>>, vector<1x5x5xf32>,
    %c0_444 = arith.constant 0 : index
    %c49_445 = arith.constant 49 : index
    %c0_446 = arith.constant 0 : index
    %c0_447 = arith.constant 0 : index
    %397 = vector.load %arg1[%c0_444, %c49_445, %c0_446, %c0_447] : memref<1x64x4x4xf32, #tpu.memory_space<vmem>>, vector<1x1x4x4xf32>
    %398 = vector.shape_cast %397 : vector<1x1x4x4xf32> to vector<4x4xf32>
    %c49_448 = arith.constant 49 : index
    %c1_449 = arith.constant 1 : index
    %c1_450 = arith.constant 1 : index
    %399 = vector.load %arg11[%c49_448, %c1_449, %c1_450] : memref<64x5x5xf32, #tpu.memory_space<vmem>>, vector<1x4x4xf32>
    %400 = vector.shape_cast %399 : vector<1x4x4xf32> to vector<4x4xf32>
    %401 = vector.shape_cast %398 : vector<4x4xf32> to vector<1x4x4xf32>
    tpu.vector_store %arg11[%c49_448, %c1_449, %c1_450], %401 {strides = array<i32>} : memref<64x5x5xf32, #tpu.memory_space<vmem>>, vector<1x4x4xf32>,
    %c50 = arith.constant 50 : index
    %c0_451 = arith.constant 0 : index
    %c0_452 = arith.constant 0 : index
    %402 = vector.load %arg11[%c50, %c0_451, %c0_452] : memref<64x5x5xf32, #tpu.memory_space<vmem>>, vector<1x5x5xf32>
    %403 = vector.shape_cast %402 : vector<1x5x5xf32> to vector<5x5xf32>
    %404 = vector.shape_cast %0 : vector<5x5xf32> to vector<1x5x5xf32>
    tpu.vector_store %arg11[%c50, %c0_451, %c0_452], %404 {strides = array<i32>} : memref<64x5x5xf32, #tpu.memory_space<vmem>>, vector<1x5x5xf32>,
    %c0_453 = arith.constant 0 : index
    %c50_454 = arith.constant 50 : index
    %c0_455 = arith.constant 0 : index
    %c0_456 = arith.constant 0 : index
    %405 = vector.load %arg1[%c0_453, %c50_454, %c0_455, %c0_456] : memref<1x64x4x4xf32, #tpu.memory_space<vmem>>, vector<1x1x4x4xf32>
    %406 = vector.shape_cast %405 : vector<1x1x4x4xf32> to vector<4x4xf32>
    %c50_457 = arith.constant 50 : index
    %c1_458 = arith.constant 1 : index
    %c1_459 = arith.constant 1 : index
    %407 = vector.load %arg11[%c50_457, %c1_458, %c1_459] : memref<64x5x5xf32, #tpu.memory_space<vmem>>, vector<1x4x4xf32>
    %408 = vector.shape_cast %407 : vector<1x4x4xf32> to vector<4x4xf32>
    %409 = vector.shape_cast %406 : vector<4x4xf32> to vector<1x4x4xf32>
    tpu.vector_store %arg11[%c50_457, %c1_458, %c1_459], %409 {strides = array<i32>} : memref<64x5x5xf32, #tpu.memory_space<vmem>>, vector<1x4x4xf32>,
    %c51 = arith.constant 51 : index
    %c0_460 = arith.constant 0 : index
    %c0_461 = arith.constant 0 : index
    %410 = vector.load %arg11[%c51, %c0_460, %c0_461] : memref<64x5x5xf32, #tpu.memory_space<vmem>>, vector<1x5x5xf32>
    %411 = vector.shape_cast %410 : vector<1x5x5xf32> to vector<5x5xf32>
    %412 = vector.shape_cast %0 : vector<5x5xf32> to vector<1x5x5xf32>
    tpu.vector_store %arg11[%c51, %c0_460, %c0_461], %412 {strides = array<i32>} : memref<64x5x5xf32, #tpu.memory_space<vmem>>, vector<1x5x5xf32>,
    %c0_462 = arith.constant 0 : index
    %c51_463 = arith.constant 51 : index
    %c0_464 = arith.constant 0 : index
    %c0_465 = arith.constant 0 : index
    %413 = vector.load %arg1[%c0_462, %c51_463, %c0_464, %c0_465] : memref<1x64x4x4xf32, #tpu.memory_space<vmem>>, vector<1x1x4x4xf32>
    %414 = vector.shape_cast %413 : vector<1x1x4x4xf32> to vector<4x4xf32>
    %c51_466 = arith.constant 51 : index
    %c1_467 = arith.constant 1 : index
    %c1_468 = arith.constant 1 : index
    %415 = vector.load %arg11[%c51_466, %c1_467, %c1_468] : memref<64x5x5xf32, #tpu.memory_space<vmem>>, vector<1x4x4xf32>
    %416 = vector.shape_cast %415 : vector<1x4x4xf32> to vector<4x4xf32>
    %417 = vector.shape_cast %414 : vector<4x4xf32> to vector<1x4x4xf32>
    tpu.vector_store %arg11[%c51_466, %c1_467, %c1_468], %417 {strides = array<i32>} : memref<64x5x5xf32, #tpu.memory_space<vmem>>, vector<1x4x4xf32>,
    %c52 = arith.constant 52 : index
    %c0_469 = arith.constant 0 : index
    %c0_470 = arith.constant 0 : index
    %418 = vector.load %arg11[%c52, %c0_469, %c0_470] : memref<64x5x5xf32, #tpu.memory_space<vmem>>, vector<1x5x5xf32>
    %419 = vector.shape_cast %418 : vector<1x5x5xf32> to vector<5x5xf32>
    %420 = vector.shape_cast %0 : vector<5x5xf32> to vector<1x5x5xf32>
    tpu.vector_store %arg11[%c52, %c0_469, %c0_470], %420 {strides = array<i32>} : memref<64x5x5xf32, #tpu.memory_space<vmem>>, vector<1x5x5xf32>,
    %c0_471 = arith.constant 0 : index
    %c52_472 = arith.constant 52 : index
    %c0_473 = arith.constant 0 : index
    %c0_474 = arith.constant 0 : index
    %421 = vector.load %arg1[%c0_471, %c52_472, %c0_473, %c0_474] : memref<1x64x4x4xf32, #tpu.memory_space<vmem>>, vector<1x1x4x4xf32>
    %422 = vector.shape_cast %421 : vector<1x1x4x4xf32> to vector<4x4xf32>
    %c52_475 = arith.constant 52 : index
    %c1_476 = arith.constant 1 : index
    %c1_477 = arith.constant 1 : index
    %423 = vector.load %arg11[%c52_475, %c1_476, %c1_477] : memref<64x5x5xf32, #tpu.memory_space<vmem>>, vector<1x4x4xf32>
    %424 = vector.shape_cast %423 : vector<1x4x4xf32> to vector<4x4xf32>
    %425 = vector.shape_cast %422 : vector<4x4xf32> to vector<1x4x4xf32>
    tpu.vector_store %arg11[%c52_475, %c1_476, %c1_477], %425 {strides = array<i32>} : memref<64x5x5xf32, #tpu.memory_space<vmem>>, vector<1x4x4xf32>,
    %c53 = arith.constant 53 : index
    %c0_478 = arith.constant 0 : index
    %c0_479 = arith.constant 0 : index
    %426 = vector.load %arg11[%c53, %c0_478, %c0_479] : memref<64x5x5xf32, #tpu.memory_space<vmem>>, vector<1x5x5xf32>
    %427 = vector.shape_cast %426 : vector<1x5x5xf32> to vector<5x5xf32>
    %428 = vector.shape_cast %0 : vector<5x5xf32> to vector<1x5x5xf32>
    tpu.vector_store %arg11[%c53, %c0_478, %c0_479], %428 {strides = array<i32>} : memref<64x5x5xf32, #tpu.memory_space<vmem>>, vector<1x5x5xf32>,
    %c0_480 = arith.constant 0 : index
    %c53_481 = arith.constant 53 : index
    %c0_482 = arith.constant 0 : index
    %c0_483 = arith.constant 0 : index
    %429 = vector.load %arg1[%c0_480, %c53_481, %c0_482, %c0_483] : memref<1x64x4x4xf32, #tpu.memory_space<vmem>>, vector<1x1x4x4xf32>
    %430 = vector.shape_cast %429 : vector<1x1x4x4xf32> to vector<4x4xf32>
    %c53_484 = arith.constant 53 : index
    %c1_485 = arith.constant 1 : index
    %c1_486 = arith.constant 1 : index
    %431 = vector.load %arg11[%c53_484, %c1_485, %c1_486] : memref<64x5x5xf32, #tpu.memory_space<vmem>>, vector<1x4x4xf32>
    %432 = vector.shape_cast %431 : vector<1x4x4xf32> to vector<4x4xf32>
    %433 = vector.shape_cast %430 : vector<4x4xf32> to vector<1x4x4xf32>
    tpu.vector_store %arg11[%c53_484, %c1_485, %c1_486], %433 {strides = array<i32>} : memref<64x5x5xf32, #tpu.memory_space<vmem>>, vector<1x4x4xf32>,
    %c54 = arith.constant 54 : index
    %c0_487 = arith.constant 0 : index
    %c0_488 = arith.constant 0 : index
    %434 = vector.load %arg11[%c54, %c0_487, %c0_488] : memref<64x5x5xf32, #tpu.memory_space<vmem>>, vector<1x5x5xf32>
    %435 = vector.shape_cast %434 : vector<1x5x5xf32> to vector<5x5xf32>
    %436 = vector.shape_cast %0 : vector<5x5xf32> to vector<1x5x5xf32>
    tpu.vector_store %arg11[%c54, %c0_487, %c0_488], %436 {strides = array<i32>} : memref<64x5x5xf32, #tpu.memory_space<vmem>>, vector<1x5x5xf32>,
    %c0_489 = arith.constant 0 : index
    %c54_490 = arith.constant 54 : index
    %c0_491 = arith.constant 0 : index
    %c0_492 = arith.constant 0 : index
    %437 = vector.load %arg1[%c0_489, %c54_490, %c0_491, %c0_492] : memref<1x64x4x4xf32, #tpu.memory_space<vmem>>, vector<1x1x4x4xf32>
    %438 = vector.shape_cast %437 : vector<1x1x4x4xf32> to vector<4x4xf32>
    %c54_493 = arith.constant 54 : index
    %c1_494 = arith.constant 1 : index
    %c1_495 = arith.constant 1 : index
    %439 = vector.load %arg11[%c54_493, %c1_494, %c1_495] : memref<64x5x5xf32, #tpu.memory_space<vmem>>, vector<1x4x4xf32>
    %440 = vector.shape_cast %439 : vector<1x4x4xf32> to vector<4x4xf32>
    %441 = vector.shape_cast %438 : vector<4x4xf32> to vector<1x4x4xf32>
    tpu.vector_store %arg11[%c54_493, %c1_494, %c1_495], %441 {strides = array<i32>} : memref<64x5x5xf32, #tpu.memory_space<vmem>>, vector<1x4x4xf32>,
    %c55 = arith.constant 55 : index
    %c0_496 = arith.constant 0 : index
    %c0_497 = arith.constant 0 : index
    %442 = vector.load %arg11[%c55, %c0_496, %c0_497] : memref<64x5x5xf32, #tpu.memory_space<vmem>>, vector<1x5x5xf32>
    %443 = vector.shape_cast %442 : vector<1x5x5xf32> to vector<5x5xf32>
    %444 = vector.shape_cast %0 : vector<5x5xf32> to vector<1x5x5xf32>
    tpu.vector_store %arg11[%c55, %c0_496, %c0_497], %444 {strides = array<i32>} : memref<64x5x5xf32, #tpu.memory_space<vmem>>, vector<1x5x5xf32>,
    %c0_498 = arith.constant 0 : index
    %c55_499 = arith.constant 55 : index
    %c0_500 = arith.constant 0 : index
    %c0_501 = arith.constant 0 : index
    %445 = vector.load %arg1[%c0_498, %c55_499, %c0_500, %c0_501] : memref<1x64x4x4xf32, #tpu.memory_space<vmem>>, vector<1x1x4x4xf32>
    %446 = vector.shape_cast %445 : vector<1x1x4x4xf32> to vector<4x4xf32>
    %c55_502 = arith.constant 55 : index
    %c1_503 = arith.constant 1 : index
    %c1_504 = arith.constant 1 : index
    %447 = vector.load %arg11[%c55_502, %c1_503, %c1_504] : memref<64x5x5xf32, #tpu.memory_space<vmem>>, vector<1x4x4xf32>
    %448 = vector.shape_cast %447 : vector<1x4x4xf32> to vector<4x4xf32>
    %449 = vector.shape_cast %446 : vector<4x4xf32> to vector<1x4x4xf32>
    tpu.vector_store %arg11[%c55_502, %c1_503, %c1_504], %449 {strides = array<i32>} : memref<64x5x5xf32, #tpu.memory_space<vmem>>, vector<1x4x4xf32>,
    %c56 = arith.constant 56 : index
    %c0_505 = arith.constant 0 : index
    %c0_506 = arith.constant 0 : index
    %450 = vector.load %arg11[%c56, %c0_505, %c0_506] : memref<64x5x5xf32, #tpu.memory_space<vmem>>, vector<1x5x5xf32>
    %451 = vector.shape_cast %450 : vector<1x5x5xf32> to vector<5x5xf32>
    %452 = vector.shape_cast %0 : vector<5x5xf32> to vector<1x5x5xf32>
    tpu.vector_store %arg11[%c56, %c0_505, %c0_506], %452 {strides = array<i32>} : memref<64x5x5xf32, #tpu.memory_space<vmem>>, vector<1x5x5xf32>,
    %c0_507 = arith.constant 0 : index
    %c56_508 = arith.constant 56 : index
    %c0_509 = arith.constant 0 : index
    %c0_510 = arith.constant 0 : index
    %453 = vector.load %arg1[%c0_507, %c56_508, %c0_509, %c0_510] : memref<1x64x4x4xf32, #tpu.memory_space<vmem>>, vector<1x1x4x4xf32>
    %454 = vector.shape_cast %453 : vector<1x1x4x4xf32> to vector<4x4xf32>
    %c56_511 = arith.constant 56 : index
    %c1_512 = arith.constant 1 : index
    %c1_513 = arith.constant 1 : index
    %455 = vector.load %arg11[%c56_511, %c1_512, %c1_513] : memref<64x5x5xf32, #tpu.memory_space<vmem>>, vector<1x4x4xf32>
    %456 = vector.shape_cast %455 : vector<1x4x4xf32> to vector<4x4xf32>
    %457 = vector.shape_cast %454 : vector<4x4xf32> to vector<1x4x4xf32>
    tpu.vector_store %arg11[%c56_511, %c1_512, %c1_513], %457 {strides = array<i32>} : memref<64x5x5xf32, #tpu.memory_space<vmem>>, vector<1x4x4xf32>,
    %c57 = arith.constant 57 : index
    %c0_514 = arith.constant 0 : index
    %c0_515 = arith.constant 0 : index
    %458 = vector.load %arg11[%c57, %c0_514, %c0_515] : memref<64x5x5xf32, #tpu.memory_space<vmem>>, vector<1x5x5xf32>
    %459 = vector.shape_cast %458 : vector<1x5x5xf32> to vector<5x5xf32>
    %460 = vector.shape_cast %0 : vector<5x5xf32> to vector<1x5x5xf32>
    tpu.vector_store %arg11[%c57, %c0_514, %c0_515], %460 {strides = array<i32>} : memref<64x5x5xf32, #tpu.memory_space<vmem>>, vector<1x5x5xf32>,
    %c0_516 = arith.constant 0 : index
    %c57_517 = arith.constant 57 : index
    %c0_518 = arith.constant 0 : index
    %c0_519 = arith.constant 0 : index
    %461 = vector.load %arg1[%c0_516, %c57_517, %c0_518, %c0_519] : memref<1x64x4x4xf32, #tpu.memory_space<vmem>>, vector<1x1x4x4xf32>
    %462 = vector.shape_cast %461 : vector<1x1x4x4xf32> to vector<4x4xf32>
    %c57_520 = arith.constant 57 : index
    %c1_521 = arith.constant 1 : index
    %c1_522 = arith.constant 1 : index
    %463 = vector.load %arg11[%c57_520, %c1_521, %c1_522] : memref<64x5x5xf32, #tpu.memory_space<vmem>>, vector<1x4x4xf32>
    %464 = vector.shape_cast %463 : vector<1x4x4xf32> to vector<4x4xf32>
    %465 = vector.shape_cast %462 : vector<4x4xf32> to vector<1x4x4xf32>
    tpu.vector_store %arg11[%c57_520, %c1_521, %c1_522], %465 {strides = array<i32>} : memref<64x5x5xf32, #tpu.memory_space<vmem>>, vector<1x4x4xf32>,
    %c58 = arith.constant 58 : index
    %c0_523 = arith.constant 0 : index
    %c0_524 = arith.constant 0 : index
    %466 = vector.load %arg11[%c58, %c0_523, %c0_524] : memref<64x5x5xf32, #tpu.memory_space<vmem>>, vector<1x5x5xf32>
    %467 = vector.shape_cast %466 : vector<1x5x5xf32> to vector<5x5xf32>
    %468 = vector.shape_cast %0 : vector<5x5xf32> to vector<1x5x5xf32>
    tpu.vector_store %arg11[%c58, %c0_523, %c0_524], %468 {strides = array<i32>} : memref<64x5x5xf32, #tpu.memory_space<vmem>>, vector<1x5x5xf32>,
    %c0_525 = arith.constant 0 : index
    %c58_526 = arith.constant 58 : index
    %c0_527 = arith.constant 0 : index
    %c0_528 = arith.constant 0 : index
    %469 = vector.load %arg1[%c0_525, %c58_526, %c0_527, %c0_528] : memref<1x64x4x4xf32, #tpu.memory_space<vmem>>, vector<1x1x4x4xf32>
    %470 = vector.shape_cast %469 : vector<1x1x4x4xf32> to vector<4x4xf32>
    %c58_529 = arith.constant 58 : index
    %c1_530 = arith.constant 1 : index
    %c1_531 = arith.constant 1 : index
    %471 = vector.load %arg11[%c58_529, %c1_530, %c1_531] : memref<64x5x5xf32, #tpu.memory_space<vmem>>, vector<1x4x4xf32>
    %472 = vector.shape_cast %471 : vector<1x4x4xf32> to vector<4x4xf32>
    %473 = vector.shape_cast %470 : vector<4x4xf32> to vector<1x4x4xf32>
    tpu.vector_store %arg11[%c58_529, %c1_530, %c1_531], %473 {strides = array<i32>} : memref<64x5x5xf32, #tpu.memory_space<vmem>>, vector<1x4x4xf32>,
    %c59 = arith.constant 59 : index
    %c0_532 = arith.constant 0 : index
    %c0_533 = arith.constant 0 : index
    %474 = vector.load %arg11[%c59, %c0_532, %c0_533] : memref<64x5x5xf32, #tpu.memory_space<vmem>>, vector<1x5x5xf32>
    %475 = vector.shape_cast %474 : vector<1x5x5xf32> to vector<5x5xf32>
    %476 = vector.shape_cast %0 : vector<5x5xf32> to vector<1x5x5xf32>
    tpu.vector_store %arg11[%c59, %c0_532, %c0_533], %476 {strides = array<i32>} : memref<64x5x5xf32, #tpu.memory_space<vmem>>, vector<1x5x5xf32>,
    %c0_534 = arith.constant 0 : index
    %c59_535 = arith.constant 59 : index
    %c0_536 = arith.constant 0 : index
    %c0_537 = arith.constant 0 : index
    %477 = vector.load %arg1[%c0_534, %c59_535, %c0_536, %c0_537] : memref<1x64x4x4xf32, #tpu.memory_space<vmem>>, vector<1x1x4x4xf32>
    %478 = vector.shape_cast %477 : vector<1x1x4x4xf32> to vector<4x4xf32>
    %c59_538 = arith.constant 59 : index
    %c1_539 = arith.constant 1 : index
    %c1_540 = arith.constant 1 : index
    %479 = vector.load %arg11[%c59_538, %c1_539, %c1_540] : memref<64x5x5xf32, #tpu.memory_space<vmem>>, vector<1x4x4xf32>
    %480 = vector.shape_cast %479 : vector<1x4x4xf32> to vector<4x4xf32>
    %481 = vector.shape_cast %478 : vector<4x4xf32> to vector<1x4x4xf32>
    tpu.vector_store %arg11[%c59_538, %c1_539, %c1_540], %481 {strides = array<i32>} : memref<64x5x5xf32, #tpu.memory_space<vmem>>, vector<1x4x4xf32>,
    %c60 = arith.constant 60 : index
    %c0_541 = arith.constant 0 : index
    %c0_542 = arith.constant 0 : index
    %482 = vector.load %arg11[%c60, %c0_541, %c0_542] : memref<64x5x5xf32, #tpu.memory_space<vmem>>, vector<1x5x5xf32>
    %483 = vector.shape_cast %482 : vector<1x5x5xf32> to vector<5x5xf32>
    %484 = vector.shape_cast %0 : vector<5x5xf32> to vector<1x5x5xf32>
    tpu.vector_store %arg11[%c60, %c0_541, %c0_542], %484 {strides = array<i32>} : memref<64x5x5xf32, #tpu.memory_space<vmem>>, vector<1x5x5xf32>,
    %c0_543 = arith.constant 0 : index
    %c60_544 = arith.constant 60 : index
    %c0_545 = arith.constant 0 : index
    %c0_546 = arith.constant 0 : index
    %485 = vector.load %arg1[%c0_543, %c60_544, %c0_545, %c0_546] : memref<1x64x4x4xf32, #tpu.memory_space<vmem>>, vector<1x1x4x4xf32>
    %486 = vector.shape_cast %485 : vector<1x1x4x4xf32> to vector<4x4xf32>
    %c60_547 = arith.constant 60 : index
    %c1_548 = arith.constant 1 : index
    %c1_549 = arith.constant 1 : index
    %487 = vector.load %arg11[%c60_547, %c1_548, %c1_549] : memref<64x5x5xf32, #tpu.memory_space<vmem>>, vector<1x4x4xf32>
    %488 = vector.shape_cast %487 : vector<1x4x4xf32> to vector<4x4xf32>
    %489 = vector.shape_cast %486 : vector<4x4xf32> to vector<1x4x4xf32>
    tpu.vector_store %arg11[%c60_547, %c1_548, %c1_549], %489 {strides = array<i32>} : memref<64x5x5xf32, #tpu.memory_space<vmem>>, vector<1x4x4xf32>,
    %c61 = arith.constant 61 : index
    %c0_550 = arith.constant 0 : index
    %c0_551 = arith.constant 0 : index
    %490 = vector.load %arg11[%c61, %c0_550, %c0_551] : memref<64x5x5xf32, #tpu.memory_space<vmem>>, vector<1x5x5xf32>
    %491 = vector.shape_cast %490 : vector<1x5x5xf32> to vector<5x5xf32>
    %492 = vector.shape_cast %0 : vector<5x5xf32> to vector<1x5x5xf32>
    tpu.vector_store %arg11[%c61, %c0_550, %c0_551], %492 {strides = array<i32>} : memref<64x5x5xf32, #tpu.memory_space<vmem>>, vector<1x5x5xf32>,
    %c0_552 = arith.constant 0 : index
    %c61_553 = arith.constant 61 : index
    %c0_554 = arith.constant 0 : index
    %c0_555 = arith.constant 0 : index
    %493 = vector.load %arg1[%c0_552, %c61_553, %c0_554, %c0_555] : memref<1x64x4x4xf32, #tpu.memory_space<vmem>>, vector<1x1x4x4xf32>
    %494 = vector.shape_cast %493 : vector<1x1x4x4xf32> to vector<4x4xf32>
    %c61_556 = arith.constant 61 : index
    %c1_557 = arith.constant 1 : index
    %c1_558 = arith.constant 1 : index
    %495 = vector.load %arg11[%c61_556, %c1_557, %c1_558] : memref<64x5x5xf32, #tpu.memory_space<vmem>>, vector<1x4x4xf32>
    %496 = vector.shape_cast %495 : vector<1x4x4xf32> to vector<4x4xf32>
    %497 = vector.shape_cast %494 : vector<4x4xf32> to vector<1x4x4xf32>
    tpu.vector_store %arg11[%c61_556, %c1_557, %c1_558], %497 {strides = array<i32>} : memref<64x5x5xf32, #tpu.memory_space<vmem>>, vector<1x4x4xf32>,
    %c62 = arith.constant 62 : index
    %c0_559 = arith.constant 0 : index
    %c0_560 = arith.constant 0 : index
    %498 = vector.load %arg11[%c62, %c0_559, %c0_560] : memref<64x5x5xf32, #tpu.memory_space<vmem>>, vector<1x5x5xf32>
    %499 = vector.shape_cast %498 : vector<1x5x5xf32> to vector<5x5xf32>
    %500 = vector.shape_cast %0 : vector<5x5xf32> to vector<1x5x5xf32>
    tpu.vector_store %arg11[%c62, %c0_559, %c0_560], %500 {strides = array<i32>} : memref<64x5x5xf32, #tpu.memory_space<vmem>>, vector<1x5x5xf32>,
    %c0_561 = arith.constant 0 : index
    %c62_562 = arith.constant 62 : index
    %c0_563 = arith.constant 0 : index
    %c0_564 = arith.constant 0 : index
    %501 = vector.load %arg1[%c0_561, %c62_562, %c0_563, %c0_564] : memref<1x64x4x4xf32, #tpu.memory_space<vmem>>, vector<1x1x4x4xf32>
    %502 = vector.shape_cast %501 : vector<1x1x4x4xf32> to vector<4x4xf32>
    %c62_565 = arith.constant 62 : index
    %c1_566 = arith.constant 1 : index
    %c1_567 = arith.constant 1 : index
    %503 = vector.load %arg11[%c62_565, %c1_566, %c1_567] : memref<64x5x5xf32, #tpu.memory_space<vmem>>, vector<1x4x4xf32>
    %504 = vector.shape_cast %503 : vector<1x4x4xf32> to vector<4x4xf32>
    %505 = vector.shape_cast %502 : vector<4x4xf32> to vector<1x4x4xf32>
    tpu.vector_store %arg11[%c62_565, %c1_566, %c1_567], %505 {strides = array<i32>} : memref<64x5x5xf32, #tpu.memory_space<vmem>>, vector<1x4x4xf32>,
    %c63 = arith.constant 63 : index
    %c0_568 = arith.constant 0 : index
    %c0_569 = arith.constant 0 : index
    %506 = vector.load %arg11[%c63, %c0_568, %c0_569] : memref<64x5x5xf32, #tpu.memory_space<vmem>>, vector<1x5x5xf32>
    %507 = vector.shape_cast %506 : vector<1x5x5xf32> to vector<5x5xf32>
    %508 = vector.shape_cast %0 : vector<5x5xf32> to vector<1x5x5xf32>
    tpu.vector_store %arg11[%c63, %c0_568, %c0_569], %508 {strides = array<i32>} : memref<64x5x5xf32, #tpu.memory_space<vmem>>, vector<1x5x5xf32>,
    %c0_570 = arith.constant 0 : index
    %c63_571 = arith.constant 63 : index
    %c0_572 = arith.constant 0 : index
    %c0_573 = arith.constant 0 : index
    %509 = vector.load %arg1[%c0_570, %c63_571, %c0_572, %c0_573] : memref<1x64x4x4xf32, #tpu.memory_space<vmem>>, vector<1x1x4x4xf32>
    %510 = vector.shape_cast %509 : vector<1x1x4x4xf32> to vector<4x4xf32>
    %c63_574 = arith.constant 63 : index
    %c1_575 = arith.constant 1 : index
    %c1_576 = arith.constant 1 : index
    %511 = vector.load %arg11[%c63_574, %c1_575, %c1_576] : memref<64x5x5xf32, #tpu.memory_space<vmem>>, vector<1x4x4xf32>
    %512 = vector.shape_cast %511 : vector<1x4x4xf32> to vector<4x4xf32>
    %513 = vector.shape_cast %510 : vector<4x4xf32> to vector<1x4x4xf32>
    tpu.vector_store %arg11[%c63_574, %c1_575, %c1_576], %513 {strides = array<i32>} : memref<64x5x5xf32, #tpu.memory_space<vmem>>, vector<1x4x4xf32>,
    %c0_577 = arith.constant 0 : index
    %514 = memref.load %arg2[%c0_577] : memref<36xf32, #tpu.memory_space<smem>>
    %c60_578 = arith.constant 60 : index
    %c0_579 = arith.constant 0 : index
    %c0_580 = arith.constant 0 : index
    %515 = vector.load %arg11[%c60_578, %c0_579, %c0_580] : memref<64x5x5xf32, #tpu.memory_space<vmem>>, vector<1x4x4xf32>
    %516 = vector.shape_cast %515 : vector<1x4x4xf32> to vector<4x4xf32>
    %517 = vector.broadcast %514 : f32 to vector<4x4xf32>
    %518 = arith.mulf %517, %516 : vector<4x4xf32>
    %519 = arith.addf %1, %518 : vector<4x4xf32>
    %c4_581 = arith.constant 4 : index
    %520 = memref.load %arg2[%c4_581] : memref<36xf32, #tpu.memory_space<smem>>
    %c48_582 = arith.constant 48 : index
    %c0_583 = arith.constant 0 : index
    %c1_584 = arith.constant 1 : index
    %521 = vector.load %arg11[%c48_582, %c0_583, %c1_584] : memref<64x5x5xf32, #tpu.memory_space<vmem>>, vector<1x4x4xf32>
    %522 = vector.shape_cast %521 : vector<1x4x4xf32> to vector<4x4xf32>
    %523 = vector.broadcast %520 : f32 to vector<4x4xf32>
    %524 = arith.mulf %523, %522 : vector<4x4xf32>
    %525 = arith.addf %519, %524 : vector<4x4xf32>
    %c8_585 = arith.constant 8 : index
    %526 = memref.load %arg2[%c8_585] : memref<36xf32, #tpu.memory_space<smem>>
    %c52_586 = arith.constant 52 : index
    %c0_587 = arith.constant 0 : index
    %c1_588 = arith.constant 1 : index
    %527 = vector.load %arg11[%c52_586, %c0_587, %c1_588] : memref<64x5x5xf32, #tpu.memory_space<vmem>>, vector<1x4x4xf32>
    %528 = vector.shape_cast %527 : vector<1x4x4xf32> to vector<4x4xf32>
    %529 = vector.broadcast %526 : f32 to vector<4x4xf32>
    %530 = arith.mulf %529, %528 : vector<4x4xf32>
    %531 = arith.addf %525, %530 : vector<4x4xf32>
    %c12_589 = arith.constant 12 : index
    %532 = memref.load %arg2[%c12_589] : memref<36xf32, #tpu.memory_space<smem>>
    %c12_590 = arith.constant 12 : index
    %c1_591 = arith.constant 1 : index
    %c0_592 = arith.constant 0 : index
    %533 = vector.load %arg11[%c12_590, %c1_591, %c0_592] : memref<64x5x5xf32, #tpu.memory_space<vmem>>, vector<1x4x4xf32>
    %534 = vector.shape_cast %533 : vector<1x4x4xf32> to vector<4x4xf32>
    %535 = vector.broadcast %532 : f32 to vector<4x4xf32>
    %536 = arith.mulf %535, %534 : vector<4x4xf32>
    %537 = arith.addf %531, %536 : vector<4x4xf32>
    %c16_593 = arith.constant 16 : index
    %538 = memref.load %arg2[%c16_593] : memref<36xf32, #tpu.memory_space<smem>>
    %c0_594 = arith.constant 0 : index
    %c1_595 = arith.constant 1 : index
    %c1_596 = arith.constant 1 : index
    %539 = vector.load %arg11[%c0_594, %c1_595, %c1_596] : memref<64x5x5xf32, #tpu.memory_space<vmem>>, vector<1x4x4xf32>
    %540 = vector.shape_cast %539 : vector<1x4x4xf32> to vector<4x4xf32>
    %541 = vector.broadcast %538 : f32 to vector<4x4xf32>
    %542 = arith.mulf %541, %540 : vector<4x4xf32>
    %543 = arith.addf %537, %542 : vector<4x4xf32>
    %c20_597 = arith.constant 20 : index
    %544 = memref.load %arg2[%c20_597] : memref<36xf32, #tpu.memory_space<smem>>
    %c4_598 = arith.constant 4 : index
    %c1_599 = arith.constant 1 : index
    %c1_600 = arith.constant 1 : index
    %545 = vector.load %arg11[%c4_598, %c1_599, %c1_600] : memref<64x5x5xf32, #tpu.memory_space<vmem>>, vector<1x4x4xf32>
    %546 = vector.shape_cast %545 : vector<1x4x4xf32> to vector<4x4xf32>
    %547 = vector.broadcast %544 : f32 to vector<4x4xf32>
    %548 = arith.mulf %547, %546 : vector<4x4xf32>
    %549 = arith.addf %543, %548 : vector<4x4xf32>
    %c24_601 = arith.constant 24 : index
    %550 = memref.load %arg2[%c24_601] : memref<36xf32, #tpu.memory_space<smem>>
    %c28_602 = arith.constant 28 : index
    %c1_603 = arith.constant 1 : index
    %c0_604 = arith.constant 0 : index
    %551 = vector.load %arg11[%c28_602, %c1_603, %c0_604] : memref<64x5x5xf32, #tpu.memory_space<vmem>>, vector<1x4x4xf32>
    %552 = vector.shape_cast %551 : vector<1x4x4xf32> to vector<4x4xf32>
    %553 = vector.broadcast %550 : f32 to vector<4x4xf32>
    %554 = arith.mulf %553, %552 : vector<4x4xf32>
    %555 = arith.addf %549, %554 : vector<4x4xf32>
    %c28_605 = arith.constant 28 : index
    %556 = memref.load %arg2[%c28_605] : memref<36xf32, #tpu.memory_space<smem>>
    %c16_606 = arith.constant 16 : index
    %c1_607 = arith.constant 1 : index
    %c1_608 = arith.constant 1 : index
    %557 = vector.load %arg11[%c16_606, %c1_607, %c1_608] : memref<64x5x5xf32, #tpu.memory_space<vmem>>, vector<1x4x4xf32>
    %558 = vector.shape_cast %557 : vector<1x4x4xf32> to vector<4x4xf32>
    %559 = vector.broadcast %556 : f32 to vector<4x4xf32>
    %560 = arith.mulf %559, %558 : vector<4x4xf32>
    %561 = arith.addf %555, %560 : vector<4x4xf32>
    %c32_609 = arith.constant 32 : index
    %562 = memref.load %arg2[%c32_609] : memref<36xf32, #tpu.memory_space<smem>>
    %c20_610 = arith.constant 20 : index
    %c1_611 = arith.constant 1 : index
    %c1_612 = arith.constant 1 : index
    %563 = vector.load %arg11[%c20_610, %c1_611, %c1_612] : memref<64x5x5xf32, #tpu.memory_space<vmem>>, vector<1x4x4xf32>
    %564 = vector.shape_cast %563 : vector<1x4x4xf32> to vector<4x4xf32>
    %565 = vector.broadcast %562 : f32 to vector<4x4xf32>
    %566 = arith.mulf %565, %564 : vector<4x4xf32>
    %567 = arith.addf %561, %566 : vector<4x4xf32>
    %c0_613 = arith.constant 0 : index
    %568 = memref.load %arg3[%c0_613] : memref<4xf32, #tpu.memory_space<smem>>
    %569 = vector.broadcast %568 : f32 to vector<4x4xf32>
    %570 = arith.addf %567, %569 : vector<4x4xf32>
    %cst_614 = arith.constant 0.000000e+00 : f32
    %571 = vector.broadcast %cst_614 : f32 to vector<4x4xf32>
    %572 = arith.maximumf %570, %571 : vector<4x4xf32>
    %c1_615 = arith.constant 1 : index
    %573 = memref.load %arg2[%c1_615] : memref<36xf32, #tpu.memory_space<smem>>
    %c61_616 = arith.constant 61 : index
    %c0_617 = arith.constant 0 : index
    %c0_618 = arith.constant 0 : index
    %574 = vector.load %arg11[%c61_616, %c0_617, %c0_618] : memref<64x5x5xf32, #tpu.memory_space<vmem>>, vector<1x4x4xf32>
    %575 = vector.shape_cast %574 : vector<1x4x4xf32> to vector<4x4xf32>
    %576 = vector.broadcast %573 : f32 to vector<4x4xf32>
    %577 = arith.mulf %576, %575 : vector<4x4xf32>
    %578 = arith.addf %1, %577 : vector<4x4xf32>
    %c5_619 = arith.constant 5 : index
    %579 = memref.load %arg2[%c5_619] : memref<36xf32, #tpu.memory_space<smem>>
    %c49_620 = arith.constant 49 : index
    %c0_621 = arith.constant 0 : index
    %c1_622 = arith.constant 1 : index
    %580 = vector.load %arg11[%c49_620, %c0_621, %c1_622] : memref<64x5x5xf32, #tpu.memory_space<vmem>>, vector<1x4x4xf32>
    %581 = vector.shape_cast %580 : vector<1x4x4xf32> to vector<4x4xf32>
    %582 = vector.broadcast %579 : f32 to vector<4x4xf32>
    %583 = arith.mulf %582, %581 : vector<4x4xf32>
    %584 = arith.addf %578, %583 : vector<4x4xf32>
    %c9_623 = arith.constant 9 : index
    %585 = memref.load %arg2[%c9_623] : memref<36xf32, #tpu.memory_space<smem>>
    %c53_624 = arith.constant 53 : index
    %c0_625 = arith.constant 0 : index
    %c1_626 = arith.constant 1 : index
    %586 = vector.load %arg11[%c53_624, %c0_625, %c1_626] : memref<64x5x5xf32, #tpu.memory_space<vmem>>, vector<1x4x4xf32>
    %587 = vector.shape_cast %586 : vector<1x4x4xf32> to vector<4x4xf32>
    %588 = vector.broadcast %585 : f32 to vector<4x4xf32>
    %589 = arith.mulf %588, %587 : vector<4x4xf32>
    %590 = arith.addf %584, %589 : vector<4x4xf32>
    %c13_627 = arith.constant 13 : index
    %591 = memref.load %arg2[%c13_627] : memref<36xf32, #tpu.memory_space<smem>>
    %c13_628 = arith.constant 13 : index
    %c1_629 = arith.constant 1 : index
    %c0_630 = arith.constant 0 : index
    %592 = vector.load %arg11[%c13_628, %c1_629, %c0_630] : memref<64x5x5xf32, #tpu.memory_space<vmem>>, vector<1x4x4xf32>
    %593 = vector.shape_cast %592 : vector<1x4x4xf32> to vector<4x4xf32>
    %594 = vector.broadcast %591 : f32 to vector<4x4xf32>
    %595 = arith.mulf %594, %593 : vector<4x4xf32>
    %596 = arith.addf %590, %595 : vector<4x4xf32>
    %c17_631 = arith.constant 17 : index
    %597 = memref.load %arg2[%c17_631] : memref<36xf32, #tpu.memory_space<smem>>
    %c1_632 = arith.constant 1 : index
    %c1_633 = arith.constant 1 : index
    %c1_634 = arith.constant 1 : index
    %598 = vector.load %arg11[%c1_632, %c1_633, %c1_634] : memref<64x5x5xf32, #tpu.memory_space<vmem>>, vector<1x4x4xf32>
    %599 = vector.shape_cast %598 : vector<1x4x4xf32> to vector<4x4xf32>
    %600 = vector.broadcast %597 : f32 to vector<4x4xf32>
    %601 = arith.mulf %600, %599 : vector<4x4xf32>
    %602 = arith.addf %596, %601 : vector<4x4xf32>
    %c21_635 = arith.constant 21 : index
    %603 = memref.load %arg2[%c21_635] : memref<36xf32, #tpu.memory_space<smem>>
    %c5_636 = arith.constant 5 : index
    %c1_637 = arith.constant 1 : index
    %c1_638 = arith.constant 1 : index
    %604 = vector.load %arg11[%c5_636, %c1_637, %c1_638] : memref<64x5x5xf32, #tpu.memory_space<vmem>>, vector<1x4x4xf32>
    %605 = vector.shape_cast %604 : vector<1x4x4xf32> to vector<4x4xf32>
    %606 = vector.broadcast %603 : f32 to vector<4x4xf32>
    %607 = arith.mulf %606, %605 : vector<4x4xf32>
    %608 = arith.addf %602, %607 : vector<4x4xf32>
    %c25_639 = arith.constant 25 : index
    %609 = memref.load %arg2[%c25_639] : memref<36xf32, #tpu.memory_space<smem>>
    %c29_640 = arith.constant 29 : index
    %c1_641 = arith.constant 1 : index
    %c0_642 = arith.constant 0 : index
    %610 = vector.load %arg11[%c29_640, %c1_641, %c0_642] : memref<64x5x5xf32, #tpu.memory_space<vmem>>, vector<1x4x4xf32>
    %611 = vector.shape_cast %610 : vector<1x4x4xf32> to vector<4x4xf32>
    %612 = vector.broadcast %609 : f32 to vector<4x4xf32>
    %613 = arith.mulf %612, %611 : vector<4x4xf32>
    %614 = arith.addf %608, %613 : vector<4x4xf32>
    %c29_643 = arith.constant 29 : index
    %615 = memref.load %arg2[%c29_643] : memref<36xf32, #tpu.memory_space<smem>>
    %c17_644 = arith.constant 17 : index
    %c1_645 = arith.constant 1 : index
    %c1_646 = arith.constant 1 : index
    %616 = vector.load %arg11[%c17_644, %c1_645, %c1_646] : memref<64x5x5xf32, #tpu.memory_space<vmem>>, vector<1x4x4xf32>
    %617 = vector.shape_cast %616 : vector<1x4x4xf32> to vector<4x4xf32>
    %618 = vector.broadcast %615 : f32 to vector<4x4xf32>
    %619 = arith.mulf %618, %617 : vector<4x4xf32>
    %620 = arith.addf %614, %619 : vector<4x4xf32>
    %c33_647 = arith.constant 33 : index
    %621 = memref.load %arg2[%c33_647] : memref<36xf32, #tpu.memory_space<smem>>
    %c21_648 = arith.constant 21 : index
    %c1_649 = arith.constant 1 : index
    %c1_650 = arith.constant 1 : index
    %622 = vector.load %arg11[%c21_648, %c1_649, %c1_650] : memref<64x5x5xf32, #tpu.memory_space<vmem>>, vector<1x4x4xf32>
    %623 = vector.shape_cast %622 : vector<1x4x4xf32> to vector<4x4xf32>
    %624 = vector.broadcast %621 : f32 to vector<4x4xf32>
    %625 = arith.mulf %624, %623 : vector<4x4xf32>
    %626 = arith.addf %620, %625 : vector<4x4xf32>
    %c1_651 = arith.constant 1 : index
    %627 = memref.load %arg3[%c1_651] : memref<4xf32, #tpu.memory_space<smem>>
    %628 = vector.broadcast %627 : f32 to vector<4x4xf32>
    %629 = arith.addf %626, %628 : vector<4x4xf32>
    %cst_652 = arith.constant 0.000000e+00 : f32
    %630 = vector.broadcast %cst_652 : f32 to vector<4x4xf32>
    %631 = arith.maximumf %629, %630 : vector<4x4xf32>
    %c2_653 = arith.constant 2 : index
    %632 = memref.load %arg2[%c2_653] : memref<36xf32, #tpu.memory_space<smem>>
    %c62_654 = arith.constant 62 : index
    %c0_655 = arith.constant 0 : index
    %c0_656 = arith.constant 0 : index
    %633 = vector.load %arg11[%c62_654, %c0_655, %c0_656] : memref<64x5x5xf32, #tpu.memory_space<vmem>>, vector<1x4x4xf32>
    %634 = vector.shape_cast %633 : vector<1x4x4xf32> to vector<4x4xf32>
    %635 = vector.broadcast %632 : f32 to vector<4x4xf32>
    %636 = arith.mulf %635, %634 : vector<4x4xf32>
    %637 = arith.addf %1, %636 : vector<4x4xf32>
    %c6_657 = arith.constant 6 : index
    %638 = memref.load %arg2[%c6_657] : memref<36xf32, #tpu.memory_space<smem>>
    %c50_658 = arith.constant 50 : index
    %c0_659 = arith.constant 0 : index
    %c1_660 = arith.constant 1 : index
    %639 = vector.load %arg11[%c50_658, %c0_659, %c1_660] : memref<64x5x5xf32, #tpu.memory_space<vmem>>, vector<1x4x4xf32>
    %640 = vector.shape_cast %639 : vector<1x4x4xf32> to vector<4x4xf32>
    %641 = vector.broadcast %638 : f32 to vector<4x4xf32>
    %642 = arith.mulf %641, %640 : vector<4x4xf32>
    %643 = arith.addf %637, %642 : vector<4x4xf32>
    %c10_661 = arith.constant 10 : index
    %644 = memref.load %arg2[%c10_661] : memref<36xf32, #tpu.memory_space<smem>>
    %c54_662 = arith.constant 54 : index
    %c0_663 = arith.constant 0 : index
    %c1_664 = arith.constant 1 : index
    %645 = vector.load %arg11[%c54_662, %c0_663, %c1_664] : memref<64x5x5xf32, #tpu.memory_space<vmem>>, vector<1x4x4xf32>
    %646 = vector.shape_cast %645 : vector<1x4x4xf32> to vector<4x4xf32>
    %647 = vector.broadcast %644 : f32 to vector<4x4xf32>
    %648 = arith.mulf %647, %646 : vector<4x4xf32>
    %649 = arith.addf %643, %648 : vector<4x4xf32>
    %c14_665 = arith.constant 14 : index
    %650 = memref.load %arg2[%c14_665] : memref<36xf32, #tpu.memory_space<smem>>
    %c14_666 = arith.constant 14 : index
    %c1_667 = arith.constant 1 : index
    %c0_668 = arith.constant 0 : index
    %651 = vector.load %arg11[%c14_666, %c1_667, %c0_668] : memref<64x5x5xf32, #tpu.memory_space<vmem>>, vector<1x4x4xf32>
    %652 = vector.shape_cast %651 : vector<1x4x4xf32> to vector<4x4xf32>
    %653 = vector.broadcast %650 : f32 to vector<4x4xf32>
    %654 = arith.mulf %653, %652 : vector<4x4xf32>
    %655 = arith.addf %649, %654 : vector<4x4xf32>
    %c18_669 = arith.constant 18 : index
    %656 = memref.load %arg2[%c18_669] : memref<36xf32, #tpu.memory_space<smem>>
    %c2_670 = arith.constant 2 : index
    %c1_671 = arith.constant 1 : index
    %c1_672 = arith.constant 1 : index
    %657 = vector.load %arg11[%c2_670, %c1_671, %c1_672] : memref<64x5x5xf32, #tpu.memory_space<vmem>>, vector<1x4x4xf32>
    %658 = vector.shape_cast %657 : vector<1x4x4xf32> to vector<4x4xf32>
    %659 = vector.broadcast %656 : f32 to vector<4x4xf32>
    %660 = arith.mulf %659, %658 : vector<4x4xf32>
    %661 = arith.addf %655, %660 : vector<4x4xf32>
    %c22_673 = arith.constant 22 : index
    %662 = memref.load %arg2[%c22_673] : memref<36xf32, #tpu.memory_space<smem>>
    %c6_674 = arith.constant 6 : index
    %c1_675 = arith.constant 1 : index
    %c1_676 = arith.constant 1 : index
    %663 = vector.load %arg11[%c6_674, %c1_675, %c1_676] : memref<64x5x5xf32, #tpu.memory_space<vmem>>, vector<1x4x4xf32>
    %664 = vector.shape_cast %663 : vector<1x4x4xf32> to vector<4x4xf32>
    %665 = vector.broadcast %662 : f32 to vector<4x4xf32>
    %666 = arith.mulf %665, %664 : vector<4x4xf32>
    %667 = arith.addf %661, %666 : vector<4x4xf32>
    %c26_677 = arith.constant 26 : index
    %668 = memref.load %arg2[%c26_677] : memref<36xf32, #tpu.memory_space<smem>>
    %c30_678 = arith.constant 30 : index
    %c1_679 = arith.constant 1 : index
    %c0_680 = arith.constant 0 : index
    %669 = vector.load %arg11[%c30_678, %c1_679, %c0_680] : memref<64x5x5xf32, #tpu.memory_space<vmem>>, vector<1x4x4xf32>
    %670 = vector.shape_cast %669 : vector<1x4x4xf32> to vector<4x4xf32>
    %671 = vector.broadcast %668 : f32 to vector<4x4xf32>
    %672 = arith.mulf %671, %670 : vector<4x4xf32>
    %673 = arith.addf %667, %672 : vector<4x4xf32>
    %c30_681 = arith.constant 30 : index
    %674 = memref.load %arg2[%c30_681] : memref<36xf32, #tpu.memory_space<smem>>
    %c18_682 = arith.constant 18 : index
    %c1_683 = arith.constant 1 : index
    %c1_684 = arith.constant 1 : index
    %675 = vector.load %arg11[%c18_682, %c1_683, %c1_684] : memref<64x5x5xf32, #tpu.memory_space<vmem>>, vector<1x4x4xf32>
    %676 = vector.shape_cast %675 : vector<1x4x4xf32> to vector<4x4xf32>
    %677 = vector.broadcast %674 : f32 to vector<4x4xf32>
    %678 = arith.mulf %677, %676 : vector<4x4xf32>
    %679 = arith.addf %673, %678 : vector<4x4xf32>
    %c34_685 = arith.constant 34 : index
    %680 = memref.load %arg2[%c34_685] : memref<36xf32, #tpu.memory_space<smem>>
    %c22_686 = arith.constant 22 : index
    %c1_687 = arith.constant 1 : index
    %c1_688 = arith.constant 1 : index
    %681 = vector.load %arg11[%c22_686, %c1_687, %c1_688] : memref<64x5x5xf32, #tpu.memory_space<vmem>>, vector<1x4x4xf32>
    %682 = vector.shape_cast %681 : vector<1x4x4xf32> to vector<4x4xf32>
    %683 = vector.broadcast %680 : f32 to vector<4x4xf32>
    %684 = arith.mulf %683, %682 : vector<4x4xf32>
    %685 = arith.addf %679, %684 : vector<4x4xf32>
    %c2_689 = arith.constant 2 : index
    %686 = memref.load %arg3[%c2_689] : memref<4xf32, #tpu.memory_space<smem>>
    %687 = vector.broadcast %686 : f32 to vector<4x4xf32>
    %688 = arith.addf %685, %687 : vector<4x4xf32>
    %cst_690 = arith.constant 0.000000e+00 : f32
    %689 = vector.broadcast %cst_690 : f32 to vector<4x4xf32>
    %690 = arith.maximumf %688, %689 : vector<4x4xf32>
    %c3_691 = arith.constant 3 : index
    %691 = memref.load %arg2[%c3_691] : memref<36xf32, #tpu.memory_space<smem>>
    %c63_692 = arith.constant 63 : index
    %c0_693 = arith.constant 0 : index
    %c0_694 = arith.constant 0 : index
    %692 = vector.load %arg11[%c63_692, %c0_693, %c0_694] : memref<64x5x5xf32, #tpu.memory_space<vmem>>, vector<1x4x4xf32>
    %693 = vector.shape_cast %692 : vector<1x4x4xf32> to vector<4x4xf32>
    %694 = vector.broadcast %691 : f32 to vector<4x4xf32>
    %695 = arith.mulf %694, %693 : vector<4x4xf32>
    %696 = arith.addf %1, %695 : vector<4x4xf32>
    %c7_695 = arith.constant 7 : index
    %697 = memref.load %arg2[%c7_695] : memref<36xf32, #tpu.memory_space<smem>>
    %c51_696 = arith.constant 51 : index
    %c0_697 = arith.constant 0 : index
    %c1_698 = arith.constant 1 : index
    %698 = vector.load %arg11[%c51_696, %c0_697, %c1_698] : memref<64x5x5xf32, #tpu.memory_space<vmem>>, vector<1x4x4xf32>
    %699 = vector.shape_cast %698 : vector<1x4x4xf32> to vector<4x4xf32>
    %700 = vector.broadcast %697 : f32 to vector<4x4xf32>
    %701 = arith.mulf %700, %699 : vector<4x4xf32>
    %702 = arith.addf %696, %701 : vector<4x4xf32>
    %c11_699 = arith.constant 11 : index
    %703 = memref.load %arg2[%c11_699] : memref<36xf32, #tpu.memory_space<smem>>
    %c55_700 = arith.constant 55 : index
    %c0_701 = arith.constant 0 : index
    %c1_702 = arith.constant 1 : index
    %704 = vector.load %arg11[%c55_700, %c0_701, %c1_702] : memref<64x5x5xf32, #tpu.memory_space<vmem>>, vector<1x4x4xf32>
    %705 = vector.shape_cast %704 : vector<1x4x4xf32> to vector<4x4xf32>
    %706 = vector.broadcast %703 : f32 to vector<4x4xf32>
    %707 = arith.mulf %706, %705 : vector<4x4xf32>
    %708 = arith.addf %702, %707 : vector<4x4xf32>
    %c15_703 = arith.constant 15 : index
    %709 = memref.load %arg2[%c15_703] : memref<36xf32, #tpu.memory_space<smem>>
    %c15_704 = arith.constant 15 : index
    %c1_705 = arith.constant 1 : index
    %c0_706 = arith.constant 0 : index
    %710 = vector.load %arg11[%c15_704, %c1_705, %c0_706] : memref<64x5x5xf32, #tpu.memory_space<vmem>>, vector<1x4x4xf32>
    %711 = vector.shape_cast %710 : vector<1x4x4xf32> to vector<4x4xf32>
    %712 = vector.broadcast %709 : f32 to vector<4x4xf32>
    %713 = arith.mulf %712, %711 : vector<4x4xf32>
    %714 = arith.addf %708, %713 : vector<4x4xf32>
    %c19_707 = arith.constant 19 : index
    %715 = memref.load %arg2[%c19_707] : memref<36xf32, #tpu.memory_space<smem>>
    %c3_708 = arith.constant 3 : index
    %c1_709 = arith.constant 1 : index
    %c1_710 = arith.constant 1 : index
    %716 = vector.load %arg11[%c3_708, %c1_709, %c1_710] : memref<64x5x5xf32, #tpu.memory_space<vmem>>, vector<1x4x4xf32>
    %717 = vector.shape_cast %716 : vector<1x4x4xf32> to vector<4x4xf32>
    %718 = vector.broadcast %715 : f32 to vector<4x4xf32>
    %719 = arith.mulf %718, %717 : vector<4x4xf32>
    %720 = arith.addf %714, %719 : vector<4x4xf32>
    %c23_711 = arith.constant 23 : index
    %721 = memref.load %arg2[%c23_711] : memref<36xf32, #tpu.memory_space<smem>>
    %c7_712 = arith.constant 7 : index
    %c1_713 = arith.constant 1 : index
    %c1_714 = arith.constant 1 : index
    %722 = vector.load %arg11[%c7_712, %c1_713, %c1_714] : memref<64x5x5xf32, #tpu.memory_space<vmem>>, vector<1x4x4xf32>
    %723 = vector.shape_cast %722 : vector<1x4x4xf32> to vector<4x4xf32>
    %724 = vector.broadcast %721 : f32 to vector<4x4xf32>
    %725 = arith.mulf %724, %723 : vector<4x4xf32>
    %726 = arith.addf %720, %725 : vector<4x4xf32>
    %c27_715 = arith.constant 27 : index
    %727 = memref.load %arg2[%c27_715] : memref<36xf32, #tpu.memory_space<smem>>
    %c31_716 = arith.constant 31 : index
    %c1_717 = arith.constant 1 : index
    %c0_718 = arith.constant 0 : index
    %728 = vector.load %arg11[%c31_716, %c1_717, %c0_718] : memref<64x5x5xf32, #tpu.memory_space<vmem>>, vector<1x4x4xf32>
    %729 = vector.shape_cast %728 : vector<1x4x4xf32> to vector<4x4xf32>
    %730 = vector.broadcast %727 : f32 to vector<4x4xf32>
    %731 = arith.mulf %730, %729 : vector<4x4xf32>
    %732 = arith.addf %726, %731 : vector<4x4xf32>
    %c31_719 = arith.constant 31 : index
    %733 = memref.load %arg2[%c31_719] : memref<36xf32, #tpu.memory_space<smem>>
    %c19_720 = arith.constant 19 : index
    %c1_721 = arith.constant 1 : index
    %c1_722 = arith.constant 1 : index
    %734 = vector.load %arg11[%c19_720, %c1_721, %c1_722] : memref<64x5x5xf32, #tpu.memory_space<vmem>>, vector<1x4x4xf32>
    %735 = vector.shape_cast %734 : vector<1x4x4xf32> to vector<4x4xf32>
    %736 = vector.broadcast %733 : f32 to vector<4x4xf32>
    %737 = arith.mulf %736, %735 : vector<4x4xf32>
    %738 = arith.addf %732, %737 : vector<4x4xf32>
    %c35_723 = arith.constant 35 : index
    %739 = memref.load %arg2[%c35_723] : memref<36xf32, #tpu.memory_space<smem>>
    %c23_724 = arith.constant 23 : index
    %c1_725 = arith.constant 1 : index
    %c1_726 = arith.constant 1 : index
    %740 = vector.load %arg11[%c23_724, %c1_725, %c1_726] : memref<64x5x5xf32, #tpu.memory_space<vmem>>, vector<1x4x4xf32>
    %741 = vector.shape_cast %740 : vector<1x4x4xf32> to vector<4x4xf32>
    %742 = vector.broadcast %739 : f32 to vector<4x4xf32>
    %743 = arith.mulf %742, %741 : vector<4x4xf32>
    %744 = arith.addf %738, %743 : vector<4x4xf32>
    %c3_727 = arith.constant 3 : index
    %745 = memref.load %arg3[%c3_727] : memref<4xf32, #tpu.memory_space<smem>>
    %746 = vector.broadcast %745 : f32 to vector<4x4xf32>
    %747 = arith.addf %744, %746 : vector<4x4xf32>
    %cst_728 = arith.constant 0.000000e+00 : f32
    %748 = vector.broadcast %cst_728 : f32 to vector<4x4xf32>
    %749 = arith.maximumf %747, %748 : vector<4x4xf32>
    %c0_729 = arith.constant 0 : index
    %750 = memref.load %arg4[%c0_729] : memref<16xf32, #tpu.memory_space<smem>>
    %751 = vector.broadcast %750 : f32 to vector<4x4xf32>
    %752 = arith.mulf %751, %572 : vector<4x4xf32>
    %753 = arith.addf %1, %752 : vector<4x4xf32>
    %c4_730 = arith.constant 4 : index
    %754 = memref.load %arg4[%c4_730] : memref<16xf32, #tpu.memory_space<smem>>
    %755 = vector.broadcast %754 : f32 to vector<4x4xf32>
    %756 = arith.mulf %755, %631 : vector<4x4xf32>
    %757 = arith.addf %753, %756 : vector<4x4xf32>
    %c8_731 = arith.constant 8 : index
    %758 = memref.load %arg4[%c8_731] : memref<16xf32, #tpu.memory_space<smem>>
    %759 = vector.broadcast %758 : f32 to vector<4x4xf32>
    %760 = arith.mulf %759, %690 : vector<4x4xf32>
    %761 = arith.addf %757, %760 : vector<4x4xf32>
    %c12_732 = arith.constant 12 : index
    %762 = memref.load %arg4[%c12_732] : memref<16xf32, #tpu.memory_space<smem>>
    %763 = vector.broadcast %762 : f32 to vector<4x4xf32>
    %764 = arith.mulf %763, %749 : vector<4x4xf32>
    %765 = arith.addf %761, %764 : vector<4x4xf32>
    %c0_733 = arith.constant 0 : index
    %766 = memref.load %arg5[%c0_733] : memref<4xf32, #tpu.memory_space<smem>>
    %767 = vector.broadcast %766 : f32 to vector<4x4xf32>
    %768 = arith.addf %765, %767 : vector<4x4xf32>
    %cst_734 = arith.constant 0.000000e+00 : f32
    %769 = vector.broadcast %cst_734 : f32 to vector<4x4xf32>
    %770 = arith.maximumf %768, %769 : vector<4x4xf32>
    %c0_735 = arith.constant 0 : index
    %c0_736 = arith.constant 0 : index
    %c0_737 = arith.constant 0 : index
    %771 = vector.load %arg12[%c0_735, %c0_736, %c0_737] : memref<16x5x5xf32, #tpu.memory_space<vmem>>, vector<1x5x5xf32>
    %772 = vector.shape_cast %771 : vector<1x5x5xf32> to vector<5x5xf32>
    %773 = vector.shape_cast %0 : vector<5x5xf32> to vector<1x5x5xf32>
    tpu.vector_store %arg12[%c0_735, %c0_736, %c0_737], %773 {strides = array<i32>} : memref<16x5x5xf32, #tpu.memory_space<vmem>>, vector<1x5x5xf32>,
    %c0_738 = arith.constant 0 : index
    %c1_739 = arith.constant 1 : index
    %c1_740 = arith.constant 1 : index
    %774 = vector.load %arg12[%c0_738, %c1_739, %c1_740] : memref<16x5x5xf32, #tpu.memory_space<vmem>>, vector<1x4x4xf32>
    %775 = vector.shape_cast %774 : vector<1x4x4xf32> to vector<4x4xf32>
    %776 = vector.shape_cast %770 : vector<4x4xf32> to vector<1x4x4xf32>
    tpu.vector_store %arg12[%c0_738, %c1_739, %c1_740], %776 {strides = array<i32>} : memref<16x5x5xf32, #tpu.memory_space<vmem>>, vector<1x4x4xf32>,
    %c1_741 = arith.constant 1 : index
    %777 = memref.load %arg4[%c1_741] : memref<16xf32, #tpu.memory_space<smem>>
    %778 = vector.broadcast %777 : f32 to vector<4x4xf32>
    %779 = arith.mulf %778, %572 : vector<4x4xf32>
    %780 = arith.addf %1, %779 : vector<4x4xf32>
    %c5_742 = arith.constant 5 : index
    %781 = memref.load %arg4[%c5_742] : memref<16xf32, #tpu.memory_space<smem>>
    %782 = vector.broadcast %781 : f32 to vector<4x4xf32>
    %783 = arith.mulf %782, %631 : vector<4x4xf32>
    %784 = arith.addf %780, %783 : vector<4x4xf32>
    %c9_743 = arith.constant 9 : index
    %785 = memref.load %arg4[%c9_743] : memref<16xf32, #tpu.memory_space<smem>>
    %786 = vector.broadcast %785 : f32 to vector<4x4xf32>
    %787 = arith.mulf %786, %690 : vector<4x4xf32>
    %788 = arith.addf %784, %787 : vector<4x4xf32>
    %c13_744 = arith.constant 13 : index
    %789 = memref.load %arg4[%c13_744] : memref<16xf32, #tpu.memory_space<smem>>
    %790 = vector.broadcast %789 : f32 to vector<4x4xf32>
    %791 = arith.mulf %790, %749 : vector<4x4xf32>
    %792 = arith.addf %788, %791 : vector<4x4xf32>
    %c1_745 = arith.constant 1 : index
    %793 = memref.load %arg5[%c1_745] : memref<4xf32, #tpu.memory_space<smem>>
    %794 = vector.broadcast %793 : f32 to vector<4x4xf32>
    %795 = arith.addf %792, %794 : vector<4x4xf32>
    %cst_746 = arith.constant 0.000000e+00 : f32
    %796 = vector.broadcast %cst_746 : f32 to vector<4x4xf32>
    %797 = arith.maximumf %795, %796 : vector<4x4xf32>
    %c1_747 = arith.constant 1 : index
    %c0_748 = arith.constant 0 : index
    %c0_749 = arith.constant 0 : index
    %798 = vector.load %arg12[%c1_747, %c0_748, %c0_749] : memref<16x5x5xf32, #tpu.memory_space<vmem>>, vector<1x5x5xf32>
    %799 = vector.shape_cast %798 : vector<1x5x5xf32> to vector<5x5xf32>
    %800 = vector.shape_cast %0 : vector<5x5xf32> to vector<1x5x5xf32>
    tpu.vector_store %arg12[%c1_747, %c0_748, %c0_749], %800 {strides = array<i32>} : memref<16x5x5xf32, #tpu.memory_space<vmem>>, vector<1x5x5xf32>,
    %c1_750 = arith.constant 1 : index
    %c1_751 = arith.constant 1 : index
    %c1_752 = arith.constant 1 : index
    %801 = vector.load %arg12[%c1_750, %c1_751, %c1_752] : memref<16x5x5xf32, #tpu.memory_space<vmem>>, vector<1x4x4xf32>
    %802 = vector.shape_cast %801 : vector<1x4x4xf32> to vector<4x4xf32>
    %803 = vector.shape_cast %797 : vector<4x4xf32> to vector<1x4x4xf32>
    tpu.vector_store %arg12[%c1_750, %c1_751, %c1_752], %803 {strides = array<i32>} : memref<16x5x5xf32, #tpu.memory_space<vmem>>, vector<1x4x4xf32>,
    %c2_753 = arith.constant 2 : index
    %804 = memref.load %arg4[%c2_753] : memref<16xf32, #tpu.memory_space<smem>>
    %805 = vector.broadcast %804 : f32 to vector<4x4xf32>
    %806 = arith.mulf %805, %572 : vector<4x4xf32>
    %807 = arith.addf %1, %806 : vector<4x4xf32>
    %c6_754 = arith.constant 6 : index
    %808 = memref.load %arg4[%c6_754] : memref<16xf32, #tpu.memory_space<smem>>
    %809 = vector.broadcast %808 : f32 to vector<4x4xf32>
    %810 = arith.mulf %809, %631 : vector<4x4xf32>
    %811 = arith.addf %807, %810 : vector<4x4xf32>
    %c10_755 = arith.constant 10 : index
    %812 = memref.load %arg4[%c10_755] : memref<16xf32, #tpu.memory_space<smem>>
    %813 = vector.broadcast %812 : f32 to vector<4x4xf32>
    %814 = arith.mulf %813, %690 : vector<4x4xf32>
    %815 = arith.addf %811, %814 : vector<4x4xf32>
    %c14_756 = arith.constant 14 : index
    %816 = memref.load %arg4[%c14_756] : memref<16xf32, #tpu.memory_space<smem>>
    %817 = vector.broadcast %816 : f32 to vector<4x4xf32>
    %818 = arith.mulf %817, %749 : vector<4x4xf32>
    %819 = arith.addf %815, %818 : vector<4x4xf32>
    %c2_757 = arith.constant 2 : index
    %820 = memref.load %arg5[%c2_757] : memref<4xf32, #tpu.memory_space<smem>>
    %821 = vector.broadcast %820 : f32 to vector<4x4xf32>
    %822 = arith.addf %819, %821 : vector<4x4xf32>
    %cst_758 = arith.constant 0.000000e+00 : f32
    %823 = vector.broadcast %cst_758 : f32 to vector<4x4xf32>
    %824 = arith.maximumf %822, %823 : vector<4x4xf32>
    %c2_759 = arith.constant 2 : index
    %c0_760 = arith.constant 0 : index
    %c0_761 = arith.constant 0 : index
    %825 = vector.load %arg12[%c2_759, %c0_760, %c0_761] : memref<16x5x5xf32, #tpu.memory_space<vmem>>, vector<1x5x5xf32>
    %826 = vector.shape_cast %825 : vector<1x5x5xf32> to vector<5x5xf32>
    %827 = vector.shape_cast %0 : vector<5x5xf32> to vector<1x5x5xf32>
    tpu.vector_store %arg12[%c2_759, %c0_760, %c0_761], %827 {strides = array<i32>} : memref<16x5x5xf32, #tpu.memory_space<vmem>>, vector<1x5x5xf32>,
    %c2_762 = arith.constant 2 : index
    %c1_763 = arith.constant 1 : index
    %c1_764 = arith.constant 1 : index
    %828 = vector.load %arg12[%c2_762, %c1_763, %c1_764] : memref<16x5x5xf32, #tpu.memory_space<vmem>>, vector<1x4x4xf32>
    %829 = vector.shape_cast %828 : vector<1x4x4xf32> to vector<4x4xf32>
    %830 = vector.shape_cast %824 : vector<4x4xf32> to vector<1x4x4xf32>
    tpu.vector_store %arg12[%c2_762, %c1_763, %c1_764], %830 {strides = array<i32>} : memref<16x5x5xf32, #tpu.memory_space<vmem>>, vector<1x4x4xf32>,
    %c3_765 = arith.constant 3 : index
    %831 = memref.load %arg4[%c3_765] : memref<16xf32, #tpu.memory_space<smem>>
    %832 = vector.broadcast %831 : f32 to vector<4x4xf32>
    %833 = arith.mulf %832, %572 : vector<4x4xf32>
    %834 = arith.addf %1, %833 : vector<4x4xf32>
    %c7_766 = arith.constant 7 : index
    %835 = memref.load %arg4[%c7_766] : memref<16xf32, #tpu.memory_space<smem>>
    %836 = vector.broadcast %835 : f32 to vector<4x4xf32>
    %837 = arith.mulf %836, %631 : vector<4x4xf32>
    %838 = arith.addf %834, %837 : vector<4x4xf32>
    %c11_767 = arith.constant 11 : index
    %839 = memref.load %arg4[%c11_767] : memref<16xf32, #tpu.memory_space<smem>>
    %840 = vector.broadcast %839 : f32 to vector<4x4xf32>
    %841 = arith.mulf %840, %690 : vector<4x4xf32>
    %842 = arith.addf %838, %841 : vector<4x4xf32>
    %c15_768 = arith.constant 15 : index
    %843 = memref.load %arg4[%c15_768] : memref<16xf32, #tpu.memory_space<smem>>
    %844 = vector.broadcast %843 : f32 to vector<4x4xf32>
    %845 = arith.mulf %844, %749 : vector<4x4xf32>
    %846 = arith.addf %842, %845 : vector<4x4xf32>
    %c3_769 = arith.constant 3 : index
    %847 = memref.load %arg5[%c3_769] : memref<4xf32, #tpu.memory_space<smem>>
    %848 = vector.broadcast %847 : f32 to vector<4x4xf32>
    %849 = arith.addf %846, %848 : vector<4x4xf32>
    %cst_770 = arith.constant 0.000000e+00 : f32
    %850 = vector.broadcast %cst_770 : f32 to vector<4x4xf32>
    %851 = arith.maximumf %849, %850 : vector<4x4xf32>
    %c3_771 = arith.constant 3 : index
    %c0_772 = arith.constant 0 : index
    %c0_773 = arith.constant 0 : index
    %852 = vector.load %arg12[%c3_771, %c0_772, %c0_773] : memref<16x5x5xf32, #tpu.memory_space<vmem>>, vector<1x5x5xf32>
    %853 = vector.shape_cast %852 : vector<1x5x5xf32> to vector<5x5xf32>
    %854 = vector.shape_cast %0 : vector<5x5xf32> to vector<1x5x5xf32>
    tpu.vector_store %arg12[%c3_771, %c0_772, %c0_773], %854 {strides = array<i32>} : memref<16x5x5xf32, #tpu.memory_space<vmem>>, vector<1x5x5xf32>,
    %c3_774 = arith.constant 3 : index
    %c1_775 = arith.constant 1 : index
    %c1_776 = arith.constant 1 : index
    %855 = vector.load %arg12[%c3_774, %c1_775, %c1_776] : memref<16x5x5xf32, #tpu.memory_space<vmem>>, vector<1x4x4xf32>
    %856 = vector.shape_cast %855 : vector<1x4x4xf32> to vector<4x4xf32>
    %857 = vector.shape_cast %851 : vector<4x4xf32> to vector<1x4x4xf32>
    tpu.vector_store %arg12[%c3_774, %c1_775, %c1_776], %857 {strides = array<i32>} : memref<16x5x5xf32, #tpu.memory_space<vmem>>, vector<1x4x4xf32>,
    %c0_777 = arith.constant 0 : index
    %858 = memref.load %arg2[%c0_777] : memref<36xf32, #tpu.memory_space<smem>>
    %c52_778 = arith.constant 52 : index
    %c0_779 = arith.constant 0 : index
    %c1_780 = arith.constant 1 : index
    %859 = vector.load %arg11[%c52_778, %c0_779, %c1_780] : memref<64x5x5xf32, #tpu.memory_space<vmem>>, vector<1x4x4xf32>
    %860 = vector.shape_cast %859 : vector<1x4x4xf32> to vector<4x4xf32>
    %861 = vector.broadcast %858 : f32 to vector<4x4xf32>
    %862 = arith.mulf %861, %860 : vector<4x4xf32>
    %863 = arith.addf %1, %862 : vector<4x4xf32>
    %c4_781 = arith.constant 4 : index
    %864 = memref.load %arg2[%c4_781] : memref<36xf32, #tpu.memory_space<smem>>
    %c56_782 = arith.constant 56 : index
    %c0_783 = arith.constant 0 : index
    %c1_784 = arith.constant 1 : index
    %865 = vector.load %arg11[%c56_782, %c0_783, %c1_784] : memref<64x5x5xf32, #tpu.memory_space<vmem>>, vector<1x4x4xf32>
    %866 = vector.shape_cast %865 : vector<1x4x4xf32> to vector<4x4xf32>
    %867 = vector.broadcast %864 : f32 to vector<4x4xf32>
    %868 = arith.mulf %867, %866 : vector<4x4xf32>
    %869 = arith.addf %863, %868 : vector<4x4xf32>
    %c8_785 = arith.constant 8 : index
    %870 = memref.load %arg2[%c8_785] : memref<36xf32, #tpu.memory_space<smem>>
    %c60_786 = arith.constant 60 : index
    %c0_787 = arith.constant 0 : index
    %c1_788 = arith.constant 1 : index
    %871 = vector.load %arg11[%c60_786, %c0_787, %c1_788] : memref<64x5x5xf32, #tpu.memory_space<vmem>>, vector<1x4x4xf32>
    %872 = vector.shape_cast %871 : vector<1x4x4xf32> to vector<4x4xf32>
    %873 = vector.broadcast %870 : f32 to vector<4x4xf32>
    %874 = arith.mulf %873, %872 : vector<4x4xf32>
    %875 = arith.addf %869, %874 : vector<4x4xf32>
    %c12_789 = arith.constant 12 : index
    %876 = memref.load %arg2[%c12_789] : memref<36xf32, #tpu.memory_space<smem>>
    %c4_790 = arith.constant 4 : index
    %c1_791 = arith.constant 1 : index
    %c1_792 = arith.constant 1 : index
    %877 = vector.load %arg11[%c4_790, %c1_791, %c1_792] : memref<64x5x5xf32, #tpu.memory_space<vmem>>, vector<1x4x4xf32>
    %878 = vector.shape_cast %877 : vector<1x4x4xf32> to vector<4x4xf32>
    %879 = vector.broadcast %876 : f32 to vector<4x4xf32>
    %880 = arith.mulf %879, %878 : vector<4x4xf32>
    %881 = arith.addf %875, %880 : vector<4x4xf32>
    %c16_793 = arith.constant 16 : index
    %882 = memref.load %arg2[%c16_793] : memref<36xf32, #tpu.memory_space<smem>>
    %c8_794 = arith.constant 8 : index
    %c1_795 = arith.constant 1 : index
    %c1_796 = arith.constant 1 : index
    %883 = vector.load %arg11[%c8_794, %c1_795, %c1_796] : memref<64x5x5xf32, #tpu.memory_space<vmem>>, vector<1x4x4xf32>
    %884 = vector.shape_cast %883 : vector<1x4x4xf32> to vector<4x4xf32>
    %885 = vector.broadcast %882 : f32 to vector<4x4xf32>
    %886 = arith.mulf %885, %884 : vector<4x4xf32>
    %887 = arith.addf %881, %886 : vector<4x4xf32>
    %c20_797 = arith.constant 20 : index
    %888 = memref.load %arg2[%c20_797] : memref<36xf32, #tpu.memory_space<smem>>
    %c12_798 = arith.constant 12 : index
    %c1_799 = arith.constant 1 : index
    %c1_800 = arith.constant 1 : index
    %889 = vector.load %arg11[%c12_798, %c1_799, %c1_800] : memref<64x5x5xf32, #tpu.memory_space<vmem>>, vector<1x4x4xf32>
    %890 = vector.shape_cast %889 : vector<1x4x4xf32> to vector<4x4xf32>
    %891 = vector.broadcast %888 : f32 to vector<4x4xf32>
    %892 = arith.mulf %891, %890 : vector<4x4xf32>
    %893 = arith.addf %887, %892 : vector<4x4xf32>
    %c24_801 = arith.constant 24 : index
    %894 = memref.load %arg2[%c24_801] : memref<36xf32, #tpu.memory_space<smem>>
    %c20_802 = arith.constant 20 : index
    %c1_803 = arith.constant 1 : index
    %c1_804 = arith.constant 1 : index
    %895 = vector.load %arg11[%c20_802, %c1_803, %c1_804] : memref<64x5x5xf32, #tpu.memory_space<vmem>>, vector<1x4x4xf32>
    %896 = vector.shape_cast %895 : vector<1x4x4xf32> to vector<4x4xf32>
    %897 = vector.broadcast %894 : f32 to vector<4x4xf32>
    %898 = arith.mulf %897, %896 : vector<4x4xf32>
    %899 = arith.addf %893, %898 : vector<4x4xf32>
    %c28_805 = arith.constant 28 : index
    %900 = memref.load %arg2[%c28_805] : memref<36xf32, #tpu.memory_space<smem>>
    %c24_806 = arith.constant 24 : index
    %c1_807 = arith.constant 1 : index
    %c1_808 = arith.constant 1 : index
    %901 = vector.load %arg11[%c24_806, %c1_807, %c1_808] : memref<64x5x5xf32, #tpu.memory_space<vmem>>, vector<1x4x4xf32>
    %902 = vector.shape_cast %901 : vector<1x4x4xf32> to vector<4x4xf32>
    %903 = vector.broadcast %900 : f32 to vector<4x4xf32>
    %904 = arith.mulf %903, %902 : vector<4x4xf32>
    %905 = arith.addf %899, %904 : vector<4x4xf32>
    %c32_809 = arith.constant 32 : index
    %906 = memref.load %arg2[%c32_809] : memref<36xf32, #tpu.memory_space<smem>>
    %c28_810 = arith.constant 28 : index
    %c1_811 = arith.constant 1 : index
    %c1_812 = arith.constant 1 : index
    %907 = vector.load %arg11[%c28_810, %c1_811, %c1_812] : memref<64x5x5xf32, #tpu.memory_space<vmem>>, vector<1x4x4xf32>
    %908 = vector.shape_cast %907 : vector<1x4x4xf32> to vector<4x4xf32>
    %909 = vector.broadcast %906 : f32 to vector<4x4xf32>
    %910 = arith.mulf %909, %908 : vector<4x4xf32>
    %911 = arith.addf %905, %910 : vector<4x4xf32>
    %c0_813 = arith.constant 0 : index
    %912 = memref.load %arg3[%c0_813] : memref<4xf32, #tpu.memory_space<smem>>
    %913 = vector.broadcast %912 : f32 to vector<4x4xf32>
    %914 = arith.addf %911, %913 : vector<4x4xf32>
    %cst_814 = arith.constant 0.000000e+00 : f32
    %915 = vector.broadcast %cst_814 : f32 to vector<4x4xf32>
    %916 = arith.maximumf %914, %915 : vector<4x4xf32>
    %c1_815 = arith.constant 1 : index
    %917 = memref.load %arg2[%c1_815] : memref<36xf32, #tpu.memory_space<smem>>
    %c53_816 = arith.constant 53 : index
    %c0_817 = arith.constant 0 : index
    %c1_818 = arith.constant 1 : index
    %918 = vector.load %arg11[%c53_816, %c0_817, %c1_818] : memref<64x5x5xf32, #tpu.memory_space<vmem>>, vector<1x4x4xf32>
    %919 = vector.shape_cast %918 : vector<1x4x4xf32> to vector<4x4xf32>
    %920 = vector.broadcast %917 : f32 to vector<4x4xf32>
    %921 = arith.mulf %920, %919 : vector<4x4xf32>
    %922 = arith.addf %1, %921 : vector<4x4xf32>
    %c5_819 = arith.constant 5 : index
    %923 = memref.load %arg2[%c5_819] : memref<36xf32, #tpu.memory_space<smem>>
    %c57_820 = arith.constant 57 : index
    %c0_821 = arith.constant 0 : index
    %c1_822 = arith.constant 1 : index
    %924 = vector.load %arg11[%c57_820, %c0_821, %c1_822] : memref<64x5x5xf32, #tpu.memory_space<vmem>>, vector<1x4x4xf32>
    %925 = vector.shape_cast %924 : vector<1x4x4xf32> to vector<4x4xf32>
    %926 = vector.broadcast %923 : f32 to vector<4x4xf32>
    %927 = arith.mulf %926, %925 : vector<4x4xf32>
    %928 = arith.addf %922, %927 : vector<4x4xf32>
    %c9_823 = arith.constant 9 : index
    %929 = memref.load %arg2[%c9_823] : memref<36xf32, #tpu.memory_space<smem>>
    %c61_824 = arith.constant 61 : index
    %c0_825 = arith.constant 0 : index
    %c1_826 = arith.constant 1 : index
    %930 = vector.load %arg11[%c61_824, %c0_825, %c1_826] : memref<64x5x5xf32, #tpu.memory_space<vmem>>, vector<1x4x4xf32>
    %931 = vector.shape_cast %930 : vector<1x4x4xf32> to vector<4x4xf32>
    %932 = vector.broadcast %929 : f32 to vector<4x4xf32>
    %933 = arith.mulf %932, %931 : vector<4x4xf32>
    %934 = arith.addf %928, %933 : vector<4x4xf32>
    %c13_827 = arith.constant 13 : index
    %935 = memref.load %arg2[%c13_827] : memref<36xf32, #tpu.memory_space<smem>>
    %c5_828 = arith.constant 5 : index
    %c1_829 = arith.constant 1 : index
    %c1_830 = arith.constant 1 : index
    %936 = vector.load %arg11[%c5_828, %c1_829, %c1_830] : memref<64x5x5xf32, #tpu.memory_space<vmem>>, vector<1x4x4xf32>
    %937 = vector.shape_cast %936 : vector<1x4x4xf32> to vector<4x4xf32>
    %938 = vector.broadcast %935 : f32 to vector<4x4xf32>
    %939 = arith.mulf %938, %937 : vector<4x4xf32>
    %940 = arith.addf %934, %939 : vector<4x4xf32>
    %c17_831 = arith.constant 17 : index
    %941 = memref.load %arg2[%c17_831] : memref<36xf32, #tpu.memory_space<smem>>
    %c9_832 = arith.constant 9 : index
    %c1_833 = arith.constant 1 : index
    %c1_834 = arith.constant 1 : index
    %942 = vector.load %arg11[%c9_832, %c1_833, %c1_834] : memref<64x5x5xf32, #tpu.memory_space<vmem>>, vector<1x4x4xf32>
    %943 = vector.shape_cast %942 : vector<1x4x4xf32> to vector<4x4xf32>
    %944 = vector.broadcast %941 : f32 to vector<4x4xf32>
    %945 = arith.mulf %944, %943 : vector<4x4xf32>
    %946 = arith.addf %940, %945 : vector<4x4xf32>
    %c21_835 = arith.constant 21 : index
    %947 = memref.load %arg2[%c21_835] : memref<36xf32, #tpu.memory_space<smem>>
    %c13_836 = arith.constant 13 : index
    %c1_837 = arith.constant 1 : index
    %c1_838 = arith.constant 1 : index
    %948 = vector.load %arg11[%c13_836, %c1_837, %c1_838] : memref<64x5x5xf32, #tpu.memory_space<vmem>>, vector<1x4x4xf32>
    %949 = vector.shape_cast %948 : vector<1x4x4xf32> to vector<4x4xf32>
    %950 = vector.broadcast %947 : f32 to vector<4x4xf32>
    %951 = arith.mulf %950, %949 : vector<4x4xf32>
    %952 = arith.addf %946, %951 : vector<4x4xf32>
    %c25_839 = arith.constant 25 : index
    %953 = memref.load %arg2[%c25_839] : memref<36xf32, #tpu.memory_space<smem>>
    %c21_840 = arith.constant 21 : index
    %c1_841 = arith.constant 1 : index
    %c1_842 = arith.constant 1 : index
    %954 = vector.load %arg11[%c21_840, %c1_841, %c1_842] : memref<64x5x5xf32, #tpu.memory_space<vmem>>, vector<1x4x4xf32>
    %955 = vector.shape_cast %954 : vector<1x4x4xf32> to vector<4x4xf32>
    %956 = vector.broadcast %953 : f32 to vector<4x4xf32>
    %957 = arith.mulf %956, %955 : vector<4x4xf32>
    %958 = arith.addf %952, %957 : vector<4x4xf32>
    %c29_843 = arith.constant 29 : index
    %959 = memref.load %arg2[%c29_843] : memref<36xf32, #tpu.memory_space<smem>>
    %c25_844 = arith.constant 25 : index
    %c1_845 = arith.constant 1 : index
    %c1_846 = arith.constant 1 : index
    %960 = vector.load %arg11[%c25_844, %c1_845, %c1_846] : memref<64x5x5xf32, #tpu.memory_space<vmem>>, vector<1x4x4xf32>
    %961 = vector.shape_cast %960 : vector<1x4x4xf32> to vector<4x4xf32>
    %962 = vector.broadcast %959 : f32 to vector<4x4xf32>
    %963 = arith.mulf %962, %961 : vector<4x4xf32>
    %964 = arith.addf %958, %963 : vector<4x4xf32>
    %c33_847 = arith.constant 33 : index
    %965 = memref.load %arg2[%c33_847] : memref<36xf32, #tpu.memory_space<smem>>
    %c29_848 = arith.constant 29 : index
    %c1_849 = arith.constant 1 : index
    %c1_850 = arith.constant 1 : index
    %966 = vector.load %arg11[%c29_848, %c1_849, %c1_850] : memref<64x5x5xf32, #tpu.memory_space<vmem>>, vector<1x4x4xf32>
    %967 = vector.shape_cast %966 : vector<1x4x4xf32> to vector<4x4xf32>
    %968 = vector.broadcast %965 : f32 to vector<4x4xf32>
    %969 = arith.mulf %968, %967 : vector<4x4xf32>
    %970 = arith.addf %964, %969 : vector<4x4xf32>
    %c1_851 = arith.constant 1 : index
    %971 = memref.load %arg3[%c1_851] : memref<4xf32, #tpu.memory_space<smem>>
    %972 = vector.broadcast %971 : f32 to vector<4x4xf32>
    %973 = arith.addf %970, %972 : vector<4x4xf32>
    %cst_852 = arith.constant 0.000000e+00 : f32
    %974 = vector.broadcast %cst_852 : f32 to vector<4x4xf32>
    %975 = arith.maximumf %973, %974 : vector<4x4xf32>
    %c2_853 = arith.constant 2 : index
    %976 = memref.load %arg2[%c2_853] : memref<36xf32, #tpu.memory_space<smem>>
    %c54_854 = arith.constant 54 : index
    %c0_855 = arith.constant 0 : index
    %c1_856 = arith.constant 1 : index
    %977 = vector.load %arg11[%c54_854, %c0_855, %c1_856] : memref<64x5x5xf32, #tpu.memory_space<vmem>>, vector<1x4x4xf32>
    %978 = vector.shape_cast %977 : vector<1x4x4xf32> to vector<4x4xf32>
    %979 = vector.broadcast %976 : f32 to vector<4x4xf32>
    %980 = arith.mulf %979, %978 : vector<4x4xf32>
    %981 = arith.addf %1, %980 : vector<4x4xf32>
    %c6_857 = arith.constant 6 : index
    %982 = memref.load %arg2[%c6_857] : memref<36xf32, #tpu.memory_space<smem>>
    %c58_858 = arith.constant 58 : index
    %c0_859 = arith.constant 0 : index
    %c1_860 = arith.constant 1 : index
    %983 = vector.load %arg11[%c58_858, %c0_859, %c1_860] : memref<64x5x5xf32, #tpu.memory_space<vmem>>, vector<1x4x4xf32>
    %984 = vector.shape_cast %983 : vector<1x4x4xf32> to vector<4x4xf32>
    %985 = vector.broadcast %982 : f32 to vector<4x4xf32>
    %986 = arith.mulf %985, %984 : vector<4x4xf32>
    %987 = arith.addf %981, %986 : vector<4x4xf32>
    %c10_861 = arith.constant 10 : index
    %988 = memref.load %arg2[%c10_861] : memref<36xf32, #tpu.memory_space<smem>>
    %c62_862 = arith.constant 62 : index
    %c0_863 = arith.constant 0 : index
    %c1_864 = arith.constant 1 : index
    %989 = vector.load %arg11[%c62_862, %c0_863, %c1_864] : memref<64x5x5xf32, #tpu.memory_space<vmem>>, vector<1x4x4xf32>
    %990 = vector.shape_cast %989 : vector<1x4x4xf32> to vector<4x4xf32>
    %991 = vector.broadcast %988 : f32 to vector<4x4xf32>
    %992 = arith.mulf %991, %990 : vector<4x4xf32>
    %993 = arith.addf %987, %992 : vector<4x4xf32>
    %c14_865 = arith.constant 14 : index
    %994 = memref.load %arg2[%c14_865] : memref<36xf32, #tpu.memory_space<smem>>
    %c6_866 = arith.constant 6 : index
    %c1_867 = arith.constant 1 : index
    %c1_868 = arith.constant 1 : index
    %995 = vector.load %arg11[%c6_866, %c1_867, %c1_868] : memref<64x5x5xf32, #tpu.memory_space<vmem>>, vector<1x4x4xf32>
    %996 = vector.shape_cast %995 : vector<1x4x4xf32> to vector<4x4xf32>
    %997 = vector.broadcast %994 : f32 to vector<4x4xf32>
    %998 = arith.mulf %997, %996 : vector<4x4xf32>
    %999 = arith.addf %993, %998 : vector<4x4xf32>
    %c18_869 = arith.constant 18 : index
    %1000 = memref.load %arg2[%c18_869] : memref<36xf32, #tpu.memory_space<smem>>
    %c10_870 = arith.constant 10 : index
    %c1_871 = arith.constant 1 : index
    %c1_872 = arith.constant 1 : index
    %1001 = vector.load %arg11[%c10_870, %c1_871, %c1_872] : memref<64x5x5xf32, #tpu.memory_space<vmem>>, vector<1x4x4xf32>
    %1002 = vector.shape_cast %1001 : vector<1x4x4xf32> to vector<4x4xf32>
    %1003 = vector.broadcast %1000 : f32 to vector<4x4xf32>
    %1004 = arith.mulf %1003, %1002 : vector<4x4xf32>
    %1005 = arith.addf %999, %1004 : vector<4x4xf32>
    %c22_873 = arith.constant 22 : index
    %1006 = memref.load %arg2[%c22_873] : memref<36xf32, #tpu.memory_space<smem>>
    %c14_874 = arith.constant 14 : index
    %c1_875 = arith.constant 1 : index
    %c1_876 = arith.constant 1 : index
    %1007 = vector.load %arg11[%c14_874, %c1_875, %c1_876] : memref<64x5x5xf32, #tpu.memory_space<vmem>>, vector<1x4x4xf32>
    %1008 = vector.shape_cast %1007 : vector<1x4x4xf32> to vector<4x4xf32>
    %1009 = vector.broadcast %1006 : f32 to vector<4x4xf32>
    %1010 = arith.mulf %1009, %1008 : vector<4x4xf32>
    %1011 = arith.addf %1005, %1010 : vector<4x4xf32>
    %c26_877 = arith.constant 26 : index
    %1012 = memref.load %arg2[%c26_877] : memref<36xf32, #tpu.memory_space<smem>>
    %c22_878 = arith.constant 22 : index
    %c1_879 = arith.constant 1 : index
    %c1_880 = arith.constant 1 : index
    %1013 = vector.load %arg11[%c22_878, %c1_879, %c1_880] : memref<64x5x5xf32, #tpu.memory_space<vmem>>, vector<1x4x4xf32>
    %1014 = vector.shape_cast %1013 : vector<1x4x4xf32> to vector<4x4xf32>
    %1015 = vector.broadcast %1012 : f32 to vector<4x4xf32>
    %1016 = arith.mulf %1015, %1014 : vector<4x4xf32>
    %1017 = arith.addf %1011, %1016 : vector<4x4xf32>
    %c30_881 = arith.constant 30 : index
    %1018 = memref.load %arg2[%c30_881] : memref<36xf32, #tpu.memory_space<smem>>
    %c26_882 = arith.constant 26 : index
    %c1_883 = arith.constant 1 : index
    %c1_884 = arith.constant 1 : index
    %1019 = vector.load %arg11[%c26_882, %c1_883, %c1_884] : memref<64x5x5xf32, #tpu.memory_space<vmem>>, vector<1x4x4xf32>
    %1020 = vector.shape_cast %1019 : vector<1x4x4xf32> to vector<4x4xf32>
    %1021 = vector.broadcast %1018 : f32 to vector<4x4xf32>
    %1022 = arith.mulf %1021, %1020 : vector<4x4xf32>
    %1023 = arith.addf %1017, %1022 : vector<4x4xf32>
    %c34_885 = arith.constant 34 : index
    %1024 = memref.load %arg2[%c34_885] : memref<36xf32, #tpu.memory_space<smem>>
    %c30_886 = arith.constant 30 : index
    %c1_887 = arith.constant 1 : index
    %c1_888 = arith.constant 1 : index
    %1025 = vector.load %arg11[%c30_886, %c1_887, %c1_888] : memref<64x5x5xf32, #tpu.memory_space<vmem>>, vector<1x4x4xf32>
    %1026 = vector.shape_cast %1025 : vector<1x4x4xf32> to vector<4x4xf32>
    %1027 = vector.broadcast %1024 : f32 to vector<4x4xf32>
    %1028 = arith.mulf %1027, %1026 : vector<4x4xf32>
    %1029 = arith.addf %1023, %1028 : vector<4x4xf32>
    %c2_889 = arith.constant 2 : index
    %1030 = memref.load %arg3[%c2_889] : memref<4xf32, #tpu.memory_space<smem>>
    %1031 = vector.broadcast %1030 : f32 to vector<4x4xf32>
    %1032 = arith.addf %1029, %1031 : vector<4x4xf32>
    %cst_890 = arith.constant 0.000000e+00 : f32
    %1033 = vector.broadcast %cst_890 : f32 to vector<4x4xf32>
    %1034 = arith.maximumf %1032, %1033 : vector<4x4xf32>
    %c3_891 = arith.constant 3 : index
    %1035 = memref.load %arg2[%c3_891] : memref<36xf32, #tpu.memory_space<smem>>
    %c55_892 = arith.constant 55 : index
    %c0_893 = arith.constant 0 : index
    %c1_894 = arith.constant 1 : index
    %1036 = vector.load %arg11[%c55_892, %c0_893, %c1_894] : memref<64x5x5xf32, #tpu.memory_space<vmem>>, vector<1x4x4xf32>
    %1037 = vector.shape_cast %1036 : vector<1x4x4xf32> to vector<4x4xf32>
    %1038 = vector.broadcast %1035 : f32 to vector<4x4xf32>
    %1039 = arith.mulf %1038, %1037 : vector<4x4xf32>
    %1040 = arith.addf %1, %1039 : vector<4x4xf32>
    %c7_895 = arith.constant 7 : index
    %1041 = memref.load %arg2[%c7_895] : memref<36xf32, #tpu.memory_space<smem>>
    %c59_896 = arith.constant 59 : index
    %c0_897 = arith.constant 0 : index
    %c1_898 = arith.constant 1 : index
    %1042 = vector.load %arg11[%c59_896, %c0_897, %c1_898] : memref<64x5x5xf32, #tpu.memory_space<vmem>>, vector<1x4x4xf32>
    %1043 = vector.shape_cast %1042 : vector<1x4x4xf32> to vector<4x4xf32>
    %1044 = vector.broadcast %1041 : f32 to vector<4x4xf32>
    %1045 = arith.mulf %1044, %1043 : vector<4x4xf32>
    %1046 = arith.addf %1040, %1045 : vector<4x4xf32>
    %c11_899 = arith.constant 11 : index
    %1047 = memref.load %arg2[%c11_899] : memref<36xf32, #tpu.memory_space<smem>>
    %c63_900 = arith.constant 63 : index
    %c0_901 = arith.constant 0 : index
    %c1_902 = arith.constant 1 : index
    %1048 = vector.load %arg11[%c63_900, %c0_901, %c1_902] : memref<64x5x5xf32, #tpu.memory_space<vmem>>, vector<1x4x4xf32>
    %1049 = vector.shape_cast %1048 : vector<1x4x4xf32> to vector<4x4xf32>
    %1050 = vector.broadcast %1047 : f32 to vector<4x4xf32>
    %1051 = arith.mulf %1050, %1049 : vector<4x4xf32>
    %1052 = arith.addf %1046, %1051 : vector<4x4xf32>
    %c15_903 = arith.constant 15 : index
    %1053 = memref.load %arg2[%c15_903] : memref<36xf32, #tpu.memory_space<smem>>
    %c7_904 = arith.constant 7 : index
    %c1_905 = arith.constant 1 : index
    %c1_906 = arith.constant 1 : index
    %1054 = vector.load %arg11[%c7_904, %c1_905, %c1_906] : memref<64x5x5xf32, #tpu.memory_space<vmem>>, vector<1x4x4xf32>
    %1055 = vector.shape_cast %1054 : vector<1x4x4xf32> to vector<4x4xf32>
    %1056 = vector.broadcast %1053 : f32 to vector<4x4xf32>
    %1057 = arith.mulf %1056, %1055 : vector<4x4xf32>
    %1058 = arith.addf %1052, %1057 : vector<4x4xf32>
    %c19_907 = arith.constant 19 : index
    %1059 = memref.load %arg2[%c19_907] : memref<36xf32, #tpu.memory_space<smem>>
    %c11_908 = arith.constant 11 : index
    %c1_909 = arith.constant 1 : index
    %c1_910 = arith.constant 1 : index
    %1060 = vector.load %arg11[%c11_908, %c1_909, %c1_910] : memref<64x5x5xf32, #tpu.memory_space<vmem>>, vector<1x4x4xf32>
    %1061 = vector.shape_cast %1060 : vector<1x4x4xf32> to vector<4x4xf32>
    %1062 = vector.broadcast %1059 : f32 to vector<4x4xf32>
    %1063 = arith.mulf %1062, %1061 : vector<4x4xf32>
    %1064 = arith.addf %1058, %1063 : vector<4x4xf32>
    %c23_911 = arith.constant 23 : index
    %1065 = memref.load %arg2[%c23_911] : memref<36xf32, #tpu.memory_space<smem>>
    %c15_912 = arith.constant 15 : index
    %c1_913 = arith.constant 1 : index
    %c1_914 = arith.constant 1 : index
    %1066 = vector.load %arg11[%c15_912, %c1_913, %c1_914] : memref<64x5x5xf32, #tpu.memory_space<vmem>>, vector<1x4x4xf32>
    %1067 = vector.shape_cast %1066 : vector<1x4x4xf32> to vector<4x4xf32>
    %1068 = vector.broadcast %1065 : f32 to vector<4x4xf32>
    %1069 = arith.mulf %1068, %1067 : vector<4x4xf32>
    %1070 = arith.addf %1064, %1069 : vector<4x4xf32>
    %c27_915 = arith.constant 27 : index
    %1071 = memref.load %arg2[%c27_915] : memref<36xf32, #tpu.memory_space<smem>>
    %c23_916 = arith.constant 23 : index
    %c1_917 = arith.constant 1 : index
    %c1_918 = arith.constant 1 : index
    %1072 = vector.load %arg11[%c23_916, %c1_917, %c1_918] : memref<64x5x5xf32, #tpu.memory_space<vmem>>, vector<1x4x4xf32>
    %1073 = vector.shape_cast %1072 : vector<1x4x4xf32> to vector<4x4xf32>
    %1074 = vector.broadcast %1071 : f32 to vector<4x4xf32>
    %1075 = arith.mulf %1074, %1073 : vector<4x4xf32>
    %1076 = arith.addf %1070, %1075 : vector<4x4xf32>
    %c31_919 = arith.constant 31 : index
    %1077 = memref.load %arg2[%c31_919] : memref<36xf32, #tpu.memory_space<smem>>
    %c27_920 = arith.constant 27 : index
    %c1_921 = arith.constant 1 : index
    %c1_922 = arith.constant 1 : index
    %1078 = vector.load %arg11[%c27_920, %c1_921, %c1_922] : memref<64x5x5xf32, #tpu.memory_space<vmem>>, vector<1x4x4xf32>
    %1079 = vector.shape_cast %1078 : vector<1x4x4xf32> to vector<4x4xf32>
    %1080 = vector.broadcast %1077 : f32 to vector<4x4xf32>
    %1081 = arith.mulf %1080, %1079 : vector<4x4xf32>
    %1082 = arith.addf %1076, %1081 : vector<4x4xf32>
    %c35_923 = arith.constant 35 : index
    %1083 = memref.load %arg2[%c35_923] : memref<36xf32, #tpu.memory_space<smem>>
    %c31_924 = arith.constant 31 : index
    %c1_925 = arith.constant 1 : index
    %c1_926 = arith.constant 1 : index
    %1084 = vector.load %arg11[%c31_924, %c1_925, %c1_926] : memref<64x5x5xf32, #tpu.memory_space<vmem>>, vector<1x4x4xf32>
    %1085 = vector.shape_cast %1084 : vector<1x4x4xf32> to vector<4x4xf32>
    %1086 = vector.broadcast %1083 : f32 to vector<4x4xf32>
    %1087 = arith.mulf %1086, %1085 : vector<4x4xf32>
    %1088 = arith.addf %1082, %1087 : vector<4x4xf32>
    %c3_927 = arith.constant 3 : index
    %1089 = memref.load %arg3[%c3_927] : memref<4xf32, #tpu.memory_space<smem>>
    %1090 = vector.broadcast %1089 : f32 to vector<4x4xf32>
    %1091 = arith.addf %1088, %1090 : vector<4x4xf32>
    %cst_928 = arith.constant 0.000000e+00 : f32
    %1092 = vector.broadcast %cst_928 : f32 to vector<4x4xf32>
    %1093 = arith.maximumf %1091, %1092 : vector<4x4xf32>
    %c0_929 = arith.constant 0 : index
    %1094 = memref.load %arg4[%c0_929] : memref<16xf32, #tpu.memory_space<smem>>
    %1095 = vector.broadcast %1094 : f32 to vector<4x4xf32>
    %1096 = arith.mulf %1095, %916 : vector<4x4xf32>
    %1097 = arith.addf %1, %1096 : vector<4x4xf32>
    %c4_930 = arith.constant 4 : index
    %1098 = memref.load %arg4[%c4_930] : memref<16xf32, #tpu.memory_space<smem>>
    %1099 = vector.broadcast %1098 : f32 to vector<4x4xf32>
    %1100 = arith.mulf %1099, %975 : vector<4x4xf32>
    %1101 = arith.addf %1097, %1100 : vector<4x4xf32>
    %c8_931 = arith.constant 8 : index
    %1102 = memref.load %arg4[%c8_931] : memref<16xf32, #tpu.memory_space<smem>>
    %1103 = vector.broadcast %1102 : f32 to vector<4x4xf32>
    %1104 = arith.mulf %1103, %1034 : vector<4x4xf32>
    %1105 = arith.addf %1101, %1104 : vector<4x4xf32>
    %c12_932 = arith.constant 12 : index
    %1106 = memref.load %arg4[%c12_932] : memref<16xf32, #tpu.memory_space<smem>>
    %1107 = vector.broadcast %1106 : f32 to vector<4x4xf32>
    %1108 = arith.mulf %1107, %1093 : vector<4x4xf32>
    %1109 = arith.addf %1105, %1108 : vector<4x4xf32>
    %c0_933 = arith.constant 0 : index
    %1110 = memref.load %arg5[%c0_933] : memref<4xf32, #tpu.memory_space<smem>>
    %1111 = vector.broadcast %1110 : f32 to vector<4x4xf32>
    %1112 = arith.addf %1109, %1111 : vector<4x4xf32>
    %cst_934 = arith.constant 0.000000e+00 : f32
    %1113 = vector.broadcast %cst_934 : f32 to vector<4x4xf32>
    %1114 = arith.maximumf %1112, %1113 : vector<4x4xf32>
    %c4_935 = arith.constant 4 : index
    %c0_936 = arith.constant 0 : index
    %c0_937 = arith.constant 0 : index
    %1115 = vector.load %arg12[%c4_935, %c0_936, %c0_937] : memref<16x5x5xf32, #tpu.memory_space<vmem>>, vector<1x5x5xf32>
    %1116 = vector.shape_cast %1115 : vector<1x5x5xf32> to vector<5x5xf32>
    %1117 = vector.shape_cast %0 : vector<5x5xf32> to vector<1x5x5xf32>
    tpu.vector_store %arg12[%c4_935, %c0_936, %c0_937], %1117 {strides = array<i32>} : memref<16x5x5xf32, #tpu.memory_space<vmem>>, vector<1x5x5xf32>,
    %c4_938 = arith.constant 4 : index
    %c1_939 = arith.constant 1 : index
    %c1_940 = arith.constant 1 : index
    %1118 = vector.load %arg12[%c4_938, %c1_939, %c1_940] : memref<16x5x5xf32, #tpu.memory_space<vmem>>, vector<1x4x4xf32>
    %1119 = vector.shape_cast %1118 : vector<1x4x4xf32> to vector<4x4xf32>
    %1120 = vector.shape_cast %1114 : vector<4x4xf32> to vector<1x4x4xf32>
    tpu.vector_store %arg12[%c4_938, %c1_939, %c1_940], %1120 {strides = array<i32>} : memref<16x5x5xf32, #tpu.memory_space<vmem>>, vector<1x4x4xf32>,
    %c1_941 = arith.constant 1 : index
    %1121 = memref.load %arg4[%c1_941] : memref<16xf32, #tpu.memory_space<smem>>
    %1122 = vector.broadcast %1121 : f32 to vector<4x4xf32>
    %1123 = arith.mulf %1122, %916 : vector<4x4xf32>
    %1124 = arith.addf %1, %1123 : vector<4x4xf32>
    %c5_942 = arith.constant 5 : index
    %1125 = memref.load %arg4[%c5_942] : memref<16xf32, #tpu.memory_space<smem>>
    %1126 = vector.broadcast %1125 : f32 to vector<4x4xf32>
    %1127 = arith.mulf %1126, %975 : vector<4x4xf32>
    %1128 = arith.addf %1124, %1127 : vector<4x4xf32>
    %c9_943 = arith.constant 9 : index
    %1129 = memref.load %arg4[%c9_943] : memref<16xf32, #tpu.memory_space<smem>>
    %1130 = vector.broadcast %1129 : f32 to vector<4x4xf32>
    %1131 = arith.mulf %1130, %1034 : vector<4x4xf32>
    %1132 = arith.addf %1128, %1131 : vector<4x4xf32>
    %c13_944 = arith.constant 13 : index
    %1133 = memref.load %arg4[%c13_944] : memref<16xf32, #tpu.memory_space<smem>>
    %1134 = vector.broadcast %1133 : f32 to vector<4x4xf32>
    %1135 = arith.mulf %1134, %1093 : vector<4x4xf32>
    %1136 = arith.addf %1132, %1135 : vector<4x4xf32>
    %c1_945 = arith.constant 1 : index
    %1137 = memref.load %arg5[%c1_945] : memref<4xf32, #tpu.memory_space<smem>>
    %1138 = vector.broadcast %1137 : f32 to vector<4x4xf32>
    %1139 = arith.addf %1136, %1138 : vector<4x4xf32>
    %cst_946 = arith.constant 0.000000e+00 : f32
    %1140 = vector.broadcast %cst_946 : f32 to vector<4x4xf32>
    %1141 = arith.maximumf %1139, %1140 : vector<4x4xf32>
    %c5_947 = arith.constant 5 : index
    %c0_948 = arith.constant 0 : index
    %c0_949 = arith.constant 0 : index
    %1142 = vector.load %arg12[%c5_947, %c0_948, %c0_949] : memref<16x5x5xf32, #tpu.memory_space<vmem>>, vector<1x5x5xf32>
    %1143 = vector.shape_cast %1142 : vector<1x5x5xf32> to vector<5x5xf32>
    %1144 = vector.shape_cast %0 : vector<5x5xf32> to vector<1x5x5xf32>
    tpu.vector_store %arg12[%c5_947, %c0_948, %c0_949], %1144 {strides = array<i32>} : memref<16x5x5xf32, #tpu.memory_space<vmem>>, vector<1x5x5xf32>,
    %c5_950 = arith.constant 5 : index
    %c1_951 = arith.constant 1 : index
    %c1_952 = arith.constant 1 : index
    %1145 = vector.load %arg12[%c5_950, %c1_951, %c1_952] : memref<16x5x5xf32, #tpu.memory_space<vmem>>, vector<1x4x4xf32>
    %1146 = vector.shape_cast %1145 : vector<1x4x4xf32> to vector<4x4xf32>
    %1147 = vector.shape_cast %1141 : vector<4x4xf32> to vector<1x4x4xf32>
    tpu.vector_store %arg12[%c5_950, %c1_951, %c1_952], %1147 {strides = array<i32>} : memref<16x5x5xf32, #tpu.memory_space<vmem>>, vector<1x4x4xf32>,
    %c2_953 = arith.constant 2 : index
    %1148 = memref.load %arg4[%c2_953] : memref<16xf32, #tpu.memory_space<smem>>
    %1149 = vector.broadcast %1148 : f32 to vector<4x4xf32>
    %1150 = arith.mulf %1149, %916 : vector<4x4xf32>
    %1151 = arith.addf %1, %1150 : vector<4x4xf32>
    %c6_954 = arith.constant 6 : index
    %1152 = memref.load %arg4[%c6_954] : memref<16xf32, #tpu.memory_space<smem>>
    %1153 = vector.broadcast %1152 : f32 to vector<4x4xf32>
    %1154 = arith.mulf %1153, %975 : vector<4x4xf32>
    %1155 = arith.addf %1151, %1154 : vector<4x4xf32>
    %c10_955 = arith.constant 10 : index
    %1156 = memref.load %arg4[%c10_955] : memref<16xf32, #tpu.memory_space<smem>>
    %1157 = vector.broadcast %1156 : f32 to vector<4x4xf32>
    %1158 = arith.mulf %1157, %1034 : vector<4x4xf32>
    %1159 = arith.addf %1155, %1158 : vector<4x4xf32>
    %c14_956 = arith.constant 14 : index
    %1160 = memref.load %arg4[%c14_956] : memref<16xf32, #tpu.memory_space<smem>>
    %1161 = vector.broadcast %1160 : f32 to vector<4x4xf32>
    %1162 = arith.mulf %1161, %1093 : vector<4x4xf32>
    %1163 = arith.addf %1159, %1162 : vector<4x4xf32>
    %c2_957 = arith.constant 2 : index
    %1164 = memref.load %arg5[%c2_957] : memref<4xf32, #tpu.memory_space<smem>>
    %1165 = vector.broadcast %1164 : f32 to vector<4x4xf32>
    %1166 = arith.addf %1163, %1165 : vector<4x4xf32>
    %cst_958 = arith.constant 0.000000e+00 : f32
    %1167 = vector.broadcast %cst_958 : f32 to vector<4x4xf32>
    %1168 = arith.maximumf %1166, %1167 : vector<4x4xf32>
    %c6_959 = arith.constant 6 : index
    %c0_960 = arith.constant 0 : index
    %c0_961 = arith.constant 0 : index
    %1169 = vector.load %arg12[%c6_959, %c0_960, %c0_961] : memref<16x5x5xf32, #tpu.memory_space<vmem>>, vector<1x5x5xf32>
    %1170 = vector.shape_cast %1169 : vector<1x5x5xf32> to vector<5x5xf32>
    %1171 = vector.shape_cast %0 : vector<5x5xf32> to vector<1x5x5xf32>
    tpu.vector_store %arg12[%c6_959, %c0_960, %c0_961], %1171 {strides = array<i32>} : memref<16x5x5xf32, #tpu.memory_space<vmem>>, vector<1x5x5xf32>,
    %c6_962 = arith.constant 6 : index
    %c1_963 = arith.constant 1 : index
    %c1_964 = arith.constant 1 : index
    %1172 = vector.load %arg12[%c6_962, %c1_963, %c1_964] : memref<16x5x5xf32, #tpu.memory_space<vmem>>, vector<1x4x4xf32>
    %1173 = vector.shape_cast %1172 : vector<1x4x4xf32> to vector<4x4xf32>
    %1174 = vector.shape_cast %1168 : vector<4x4xf32> to vector<1x4x4xf32>
    tpu.vector_store %arg12[%c6_962, %c1_963, %c1_964], %1174 {strides = array<i32>} : memref<16x5x5xf32, #tpu.memory_space<vmem>>, vector<1x4x4xf32>,
    %c3_965 = arith.constant 3 : index
    %1175 = memref.load %arg4[%c3_965] : memref<16xf32, #tpu.memory_space<smem>>
    %1176 = vector.broadcast %1175 : f32 to vector<4x4xf32>
    %1177 = arith.mulf %1176, %916 : vector<4x4xf32>
    %1178 = arith.addf %1, %1177 : vector<4x4xf32>
    %c7_966 = arith.constant 7 : index
    %1179 = memref.load %arg4[%c7_966] : memref<16xf32, #tpu.memory_space<smem>>
    %1180 = vector.broadcast %1179 : f32 to vector<4x4xf32>
    %1181 = arith.mulf %1180, %975 : vector<4x4xf32>
    %1182 = arith.addf %1178, %1181 : vector<4x4xf32>
    %c11_967 = arith.constant 11 : index
    %1183 = memref.load %arg4[%c11_967] : memref<16xf32, #tpu.memory_space<smem>>
    %1184 = vector.broadcast %1183 : f32 to vector<4x4xf32>
    %1185 = arith.mulf %1184, %1034 : vector<4x4xf32>
    %1186 = arith.addf %1182, %1185 : vector<4x4xf32>
    %c15_968 = arith.constant 15 : index
    %1187 = memref.load %arg4[%c15_968] : memref<16xf32, #tpu.memory_space<smem>>
    %1188 = vector.broadcast %1187 : f32 to vector<4x4xf32>
    %1189 = arith.mulf %1188, %1093 : vector<4x4xf32>
    %1190 = arith.addf %1186, %1189 : vector<4x4xf32>
    %c3_969 = arith.constant 3 : index
    %1191 = memref.load %arg5[%c3_969] : memref<4xf32, #tpu.memory_space<smem>>
    %1192 = vector.broadcast %1191 : f32 to vector<4x4xf32>
    %1193 = arith.addf %1190, %1192 : vector<4x4xf32>
    %cst_970 = arith.constant 0.000000e+00 : f32
    %1194 = vector.broadcast %cst_970 : f32 to vector<4x4xf32>
    %1195 = arith.maximumf %1193, %1194 : vector<4x4xf32>
    %c7_971 = arith.constant 7 : index
    %c0_972 = arith.constant 0 : index
    %c0_973 = arith.constant 0 : index
    %1196 = vector.load %arg12[%c7_971, %c0_972, %c0_973] : memref<16x5x5xf32, #tpu.memory_space<vmem>>, vector<1x5x5xf32>
    %1197 = vector.shape_cast %1196 : vector<1x5x5xf32> to vector<5x5xf32>
    %1198 = vector.shape_cast %0 : vector<5x5xf32> to vector<1x5x5xf32>
    tpu.vector_store %arg12[%c7_971, %c0_972, %c0_973], %1198 {strides = array<i32>} : memref<16x5x5xf32, #tpu.memory_space<vmem>>, vector<1x5x5xf32>,
    %c7_974 = arith.constant 7 : index
    %c1_975 = arith.constant 1 : index
    %c1_976 = arith.constant 1 : index
    %1199 = vector.load %arg12[%c7_974, %c1_975, %c1_976] : memref<16x5x5xf32, #tpu.memory_space<vmem>>, vector<1x4x4xf32>
    %1200 = vector.shape_cast %1199 : vector<1x4x4xf32> to vector<4x4xf32>
    %1201 = vector.shape_cast %1195 : vector<4x4xf32> to vector<1x4x4xf32>
    tpu.vector_store %arg12[%c7_974, %c1_975, %c1_976], %1201 {strides = array<i32>} : memref<16x5x5xf32, #tpu.memory_space<vmem>>, vector<1x4x4xf32>,
    %c0_977 = arith.constant 0 : index
    %1202 = memref.load %arg2[%c0_977] : memref<36xf32, #tpu.memory_space<smem>>
    %c28_978 = arith.constant 28 : index
    %c1_979 = arith.constant 1 : index
    %c0_980 = arith.constant 0 : index
    %1203 = vector.load %arg11[%c28_978, %c1_979, %c0_980] : memref<64x5x5xf32, #tpu.memory_space<vmem>>, vector<1x4x4xf32>
    %1204 = vector.shape_cast %1203 : vector<1x4x4xf32> to vector<4x4xf32>
    %1205 = vector.broadcast %1202 : f32 to vector<4x4xf32>
    %1206 = arith.mulf %1205, %1204 : vector<4x4xf32>
    %1207 = arith.addf %1, %1206 : vector<4x4xf32>
    %c4_981 = arith.constant 4 : index
    %1208 = memref.load %arg2[%c4_981] : memref<36xf32, #tpu.memory_space<smem>>
    %c16_982 = arith.constant 16 : index
    %c1_983 = arith.constant 1 : index
    %c1_984 = arith.constant 1 : index
    %1209 = vector.load %arg11[%c16_982, %c1_983, %c1_984] : memref<64x5x5xf32, #tpu.memory_space<vmem>>, vector<1x4x4xf32>
    %1210 = vector.shape_cast %1209 : vector<1x4x4xf32> to vector<4x4xf32>
    %1211 = vector.broadcast %1208 : f32 to vector<4x4xf32>
    %1212 = arith.mulf %1211, %1210 : vector<4x4xf32>
    %1213 = arith.addf %1207, %1212 : vector<4x4xf32>
    %c8_985 = arith.constant 8 : index
    %1214 = memref.load %arg2[%c8_985] : memref<36xf32, #tpu.memory_space<smem>>
    %c20_986 = arith.constant 20 : index
    %c1_987 = arith.constant 1 : index
    %c1_988 = arith.constant 1 : index
    %1215 = vector.load %arg11[%c20_986, %c1_987, %c1_988] : memref<64x5x5xf32, #tpu.memory_space<vmem>>, vector<1x4x4xf32>
    %1216 = vector.shape_cast %1215 : vector<1x4x4xf32> to vector<4x4xf32>
    %1217 = vector.broadcast %1214 : f32 to vector<4x4xf32>
    %1218 = arith.mulf %1217, %1216 : vector<4x4xf32>
    %1219 = arith.addf %1213, %1218 : vector<4x4xf32>
    %c12_989 = arith.constant 12 : index
    %1220 = memref.load %arg2[%c12_989] : memref<36xf32, #tpu.memory_space<smem>>
    %c44_990 = arith.constant 44 : index
    %c1_991 = arith.constant 1 : index
    %c0_992 = arith.constant 0 : index
    %1221 = vector.load %arg11[%c44_990, %c1_991, %c0_992] : memref<64x5x5xf32, #tpu.memory_space<vmem>>, vector<1x4x4xf32>
    %1222 = vector.shape_cast %1221 : vector<1x4x4xf32> to vector<4x4xf32>
    %1223 = vector.broadcast %1220 : f32 to vector<4x4xf32>
    %1224 = arith.mulf %1223, %1222 : vector<4x4xf32>
    %1225 = arith.addf %1219, %1224 : vector<4x4xf32>
    %c16_993 = arith.constant 16 : index
    %1226 = memref.load %arg2[%c16_993] : memref<36xf32, #tpu.memory_space<smem>>
    %c32_994 = arith.constant 32 : index
    %c1_995 = arith.constant 1 : index
    %c1_996 = arith.constant 1 : index
    %1227 = vector.load %arg11[%c32_994, %c1_995, %c1_996] : memref<64x5x5xf32, #tpu.memory_space<vmem>>, vector<1x4x4xf32>
    %1228 = vector.shape_cast %1227 : vector<1x4x4xf32> to vector<4x4xf32>
    %1229 = vector.broadcast %1226 : f32 to vector<4x4xf32>
    %1230 = arith.mulf %1229, %1228 : vector<4x4xf32>
    %1231 = arith.addf %1225, %1230 : vector<4x4xf32>
    %c20_997 = arith.constant 20 : index
    %1232 = memref.load %arg2[%c20_997] : memref<36xf32, #tpu.memory_space<smem>>
    %c36_998 = arith.constant 36 : index
    %c1_999 = arith.constant 1 : index
    %c1_1000 = arith.constant 1 : index
    %1233 = vector.load %arg11[%c36_998, %c1_999, %c1_1000] : memref<64x5x5xf32, #tpu.memory_space<vmem>>, vector<1x4x4xf32>
    %1234 = vector.shape_cast %1233 : vector<1x4x4xf32> to vector<4x4xf32>
    %1235 = vector.broadcast %1232 : f32 to vector<4x4xf32>
    %1236 = arith.mulf %1235, %1234 : vector<4x4xf32>
    %1237 = arith.addf %1231, %1236 : vector<4x4xf32>
    %c24_1001 = arith.constant 24 : index
    %1238 = memref.load %arg2[%c24_1001] : memref<36xf32, #tpu.memory_space<smem>>
    %c60_1002 = arith.constant 60 : index
    %c1_1003 = arith.constant 1 : index
    %c0_1004 = arith.constant 0 : index
    %1239 = vector.load %arg11[%c60_1002, %c1_1003, %c0_1004] : memref<64x5x5xf32, #tpu.memory_space<vmem>>, vector<1x4x4xf32>
    %1240 = vector.shape_cast %1239 : vector<1x4x4xf32> to vector<4x4xf32>
    %1241 = vector.broadcast %1238 : f32 to vector<4x4xf32>
    %1242 = arith.mulf %1241, %1240 : vector<4x4xf32>
    %1243 = arith.addf %1237, %1242 : vector<4x4xf32>
    %c28_1005 = arith.constant 28 : index
    %1244 = memref.load %arg2[%c28_1005] : memref<36xf32, #tpu.memory_space<smem>>
    %c48_1006 = arith.constant 48 : index
    %c1_1007 = arith.constant 1 : index
    %c1_1008 = arith.constant 1 : index
    %1245 = vector.load %arg11[%c48_1006, %c1_1007, %c1_1008] : memref<64x5x5xf32, #tpu.memory_space<vmem>>, vector<1x4x4xf32>
    %1246 = vector.shape_cast %1245 : vector<1x4x4xf32> to vector<4x4xf32>
    %1247 = vector.broadcast %1244 : f32 to vector<4x4xf32>
    %1248 = arith.mulf %1247, %1246 : vector<4x4xf32>
    %1249 = arith.addf %1243, %1248 : vector<4x4xf32>
    %c32_1009 = arith.constant 32 : index
    %1250 = memref.load %arg2[%c32_1009] : memref<36xf32, #tpu.memory_space<smem>>
    %c52_1010 = arith.constant 52 : index
    %c1_1011 = arith.constant 1 : index
    %c1_1012 = arith.constant 1 : index
    %1251 = vector.load %arg11[%c52_1010, %c1_1011, %c1_1012] : memref<64x5x5xf32, #tpu.memory_space<vmem>>, vector<1x4x4xf32>
    %1252 = vector.shape_cast %1251 : vector<1x4x4xf32> to vector<4x4xf32>
    %1253 = vector.broadcast %1250 : f32 to vector<4x4xf32>
    %1254 = arith.mulf %1253, %1252 : vector<4x4xf32>
    %1255 = arith.addf %1249, %1254 : vector<4x4xf32>
    %c0_1013 = arith.constant 0 : index
    %1256 = memref.load %arg3[%c0_1013] : memref<4xf32, #tpu.memory_space<smem>>
    %1257 = vector.broadcast %1256 : f32 to vector<4x4xf32>
    %1258 = arith.addf %1255, %1257 : vector<4x4xf32>
    %cst_1014 = arith.constant 0.000000e+00 : f32
    %1259 = vector.broadcast %cst_1014 : f32 to vector<4x4xf32>
    %1260 = arith.maximumf %1258, %1259 : vector<4x4xf32>
    %c1_1015 = arith.constant 1 : index
    %1261 = memref.load %arg2[%c1_1015] : memref<36xf32, #tpu.memory_space<smem>>
    %c29_1016 = arith.constant 29 : index
    %c1_1017 = arith.constant 1 : index
    %c0_1018 = arith.constant 0 : index
    %1262 = vector.load %arg11[%c29_1016, %c1_1017, %c0_1018] : memref<64x5x5xf32, #tpu.memory_space<vmem>>, vector<1x4x4xf32>
    %1263 = vector.shape_cast %1262 : vector<1x4x4xf32> to vector<4x4xf32>
    %1264 = vector.broadcast %1261 : f32 to vector<4x4xf32>
    %1265 = arith.mulf %1264, %1263 : vector<4x4xf32>
    %1266 = arith.addf %1, %1265 : vector<4x4xf32>
    %c5_1019 = arith.constant 5 : index
    %1267 = memref.load %arg2[%c5_1019] : memref<36xf32, #tpu.memory_space<smem>>
    %c17_1020 = arith.constant 17 : index
    %c1_1021 = arith.constant 1 : index
    %c1_1022 = arith.constant 1 : index
    %1268 = vector.load %arg11[%c17_1020, %c1_1021, %c1_1022] : memref<64x5x5xf32, #tpu.memory_space<vmem>>, vector<1x4x4xf32>
    %1269 = vector.shape_cast %1268 : vector<1x4x4xf32> to vector<4x4xf32>
    %1270 = vector.broadcast %1267 : f32 to vector<4x4xf32>
    %1271 = arith.mulf %1270, %1269 : vector<4x4xf32>
    %1272 = arith.addf %1266, %1271 : vector<4x4xf32>
    %c9_1023 = arith.constant 9 : index
    %1273 = memref.load %arg2[%c9_1023] : memref<36xf32, #tpu.memory_space<smem>>
    %c21_1024 = arith.constant 21 : index
    %c1_1025 = arith.constant 1 : index
    %c1_1026 = arith.constant 1 : index
    %1274 = vector.load %arg11[%c21_1024, %c1_1025, %c1_1026] : memref<64x5x5xf32, #tpu.memory_space<vmem>>, vector<1x4x4xf32>
    %1275 = vector.shape_cast %1274 : vector<1x4x4xf32> to vector<4x4xf32>
    %1276 = vector.broadcast %1273 : f32 to vector<4x4xf32>
    %1277 = arith.mulf %1276, %1275 : vector<4x4xf32>
    %1278 = arith.addf %1272, %1277 : vector<4x4xf32>
    %c13_1027 = arith.constant 13 : index
    %1279 = memref.load %arg2[%c13_1027] : memref<36xf32, #tpu.memory_space<smem>>
    %c45_1028 = arith.constant 45 : index
    %c1_1029 = arith.constant 1 : index
    %c0_1030 = arith.constant 0 : index
    %1280 = vector.load %arg11[%c45_1028, %c1_1029, %c0_1030] : memref<64x5x5xf32, #tpu.memory_space<vmem>>, vector<1x4x4xf32>
    %1281 = vector.shape_cast %1280 : vector<1x4x4xf32> to vector<4x4xf32>
    %1282 = vector.broadcast %1279 : f32 to vector<4x4xf32>
    %1283 = arith.mulf %1282, %1281 : vector<4x4xf32>
    %1284 = arith.addf %1278, %1283 : vector<4x4xf32>
    %c17_1031 = arith.constant 17 : index
    %1285 = memref.load %arg2[%c17_1031] : memref<36xf32, #tpu.memory_space<smem>>
    %c33_1032 = arith.constant 33 : index
    %c1_1033 = arith.constant 1 : index
    %c1_1034 = arith.constant 1 : index
    %1286 = vector.load %arg11[%c33_1032, %c1_1033, %c1_1034] : memref<64x5x5xf32, #tpu.memory_space<vmem>>, vector<1x4x4xf32>
    %1287 = vector.shape_cast %1286 : vector<1x4x4xf32> to vector<4x4xf32>
    %1288 = vector.broadcast %1285 : f32 to vector<4x4xf32>
    %1289 = arith.mulf %1288, %1287 : vector<4x4xf32>
    %1290 = arith.addf %1284, %1289 : vector<4x4xf32>
    %c21_1035 = arith.constant 21 : index
    %1291 = memref.load %arg2[%c21_1035] : memref<36xf32, #tpu.memory_space<smem>>
    %c37_1036 = arith.constant 37 : index
    %c1_1037 = arith.constant 1 : index
    %c1_1038 = arith.constant 1 : index
    %1292 = vector.load %arg11[%c37_1036, %c1_1037, %c1_1038] : memref<64x5x5xf32, #tpu.memory_space<vmem>>, vector<1x4x4xf32>
    %1293 = vector.shape_cast %1292 : vector<1x4x4xf32> to vector<4x4xf32>
    %1294 = vector.broadcast %1291 : f32 to vector<4x4xf32>
    %1295 = arith.mulf %1294, %1293 : vector<4x4xf32>
    %1296 = arith.addf %1290, %1295 : vector<4x4xf32>
    %c25_1039 = arith.constant 25 : index
    %1297 = memref.load %arg2[%c25_1039] : memref<36xf32, #tpu.memory_space<smem>>
    %c61_1040 = arith.constant 61 : index
    %c1_1041 = arith.constant 1 : index
    %c0_1042 = arith.constant 0 : index
    %1298 = vector.load %arg11[%c61_1040, %c1_1041, %c0_1042] : memref<64x5x5xf32, #tpu.memory_space<vmem>>, vector<1x4x4xf32>
    %1299 = vector.shape_cast %1298 : vector<1x4x4xf32> to vector<4x4xf32>
    %1300 = vector.broadcast %1297 : f32 to vector<4x4xf32>
    %1301 = arith.mulf %1300, %1299 : vector<4x4xf32>
    %1302 = arith.addf %1296, %1301 : vector<4x4xf32>
    %c29_1043 = arith.constant 29 : index
    %1303 = memref.load %arg2[%c29_1043] : memref<36xf32, #tpu.memory_space<smem>>
    %c49_1044 = arith.constant 49 : index
    %c1_1045 = arith.constant 1 : index
    %c1_1046 = arith.constant 1 : index
    %1304 = vector.load %arg11[%c49_1044, %c1_1045, %c1_1046] : memref<64x5x5xf32, #tpu.memory_space<vmem>>, vector<1x4x4xf32>
    %1305 = vector.shape_cast %1304 : vector<1x4x4xf32> to vector<4x4xf32>
    %1306 = vector.broadcast %1303 : f32 to vector<4x4xf32>
    %1307 = arith.mulf %1306, %1305 : vector<4x4xf32>
    %1308 = arith.addf %1302, %1307 : vector<4x4xf32>
    %c33_1047 = arith.constant 33 : index
    %1309 = memref.load %arg2[%c33_1047] : memref<36xf32, #tpu.memory_space<smem>>
    %c53_1048 = arith.constant 53 : index
    %c1_1049 = arith.constant 1 : index
    %c1_1050 = arith.constant 1 : index
    %1310 = vector.load %arg11[%c53_1048, %c1_1049, %c1_1050] : memref<64x5x5xf32, #tpu.memory_space<vmem>>, vector<1x4x4xf32>
    %1311 = vector.shape_cast %1310 : vector<1x4x4xf32> to vector<4x4xf32>
    %1312 = vector.broadcast %1309 : f32 to vector<4x4xf32>
    %1313 = arith.mulf %1312, %1311 : vector<4x4xf32>
    %1314 = arith.addf %1308, %1313 : vector<4x4xf32>
    %c1_1051 = arith.constant 1 : index
    %1315 = memref.load %arg3[%c1_1051] : memref<4xf32, #tpu.memory_space<smem>>
    %1316 = vector.broadcast %1315 : f32 to vector<4x4xf32>
    %1317 = arith.addf %1314, %1316 : vector<4x4xf32>
    %cst_1052 = arith.constant 0.000000e+00 : f32
    %1318 = vector.broadcast %cst_1052 : f32 to vector<4x4xf32>
    %1319 = arith.maximumf %1317, %1318 : vector<4x4xf32>
    %c2_1053 = arith.constant 2 : index
    %1320 = memref.load %arg2[%c2_1053] : memref<36xf32, #tpu.memory_space<smem>>
    %c30_1054 = arith.constant 30 : index
    %c1_1055 = arith.constant 1 : index
    %c0_1056 = arith.constant 0 : index
    %1321 = vector.load %arg11[%c30_1054, %c1_1055, %c0_1056] : memref<64x5x5xf32, #tpu.memory_space<vmem>>, vector<1x4x4xf32>
    %1322 = vector.shape_cast %1321 : vector<1x4x4xf32> to vector<4x4xf32>
    %1323 = vector.broadcast %1320 : f32 to vector<4x4xf32>
    %1324 = arith.mulf %1323, %1322 : vector<4x4xf32>
    %1325 = arith.addf %1, %1324 : vector<4x4xf32>
    %c6_1057 = arith.constant 6 : index
    %1326 = memref.load %arg2[%c6_1057] : memref<36xf32, #tpu.memory_space<smem>>
    %c18_1058 = arith.constant 18 : index
    %c1_1059 = arith.constant 1 : index
    %c1_1060 = arith.constant 1 : index
    %1327 = vector.load %arg11[%c18_1058, %c1_1059, %c1_1060] : memref<64x5x5xf32, #tpu.memory_space<vmem>>, vector<1x4x4xf32>
    %1328 = vector.shape_cast %1327 : vector<1x4x4xf32> to vector<4x4xf32>
    %1329 = vector.broadcast %1326 : f32 to vector<4x4xf32>
    %1330 = arith.mulf %1329, %1328 : vector<4x4xf32>
    %1331 = arith.addf %1325, %1330 : vector<4x4xf32>
    %c10_1061 = arith.constant 10 : index
    %1332 = memref.load %arg2[%c10_1061] : memref<36xf32, #tpu.memory_space<smem>>
    %c22_1062 = arith.constant 22 : index
    %c1_1063 = arith.constant 1 : index
    %c1_1064 = arith.constant 1 : index
    %1333 = vector.load %arg11[%c22_1062, %c1_1063, %c1_1064] : memref<64x5x5xf32, #tpu.memory_space<vmem>>, vector<1x4x4xf32>
    %1334 = vector.shape_cast %1333 : vector<1x4x4xf32> to vector<4x4xf32>
    %1335 = vector.broadcast %1332 : f32 to vector<4x4xf32>
    %1336 = arith.mulf %1335, %1334 : vector<4x4xf32>
    %1337 = arith.addf %1331, %1336 : vector<4x4xf32>
    %c14_1065 = arith.constant 14 : index
    %1338 = memref.load %arg2[%c14_1065] : memref<36xf32, #tpu.memory_space<smem>>
    %c46_1066 = arith.constant 46 : index
    %c1_1067 = arith.constant 1 : index
    %c0_1068 = arith.constant 0 : index
    %1339 = vector.load %arg11[%c46_1066, %c1_1067, %c0_1068] : memref<64x5x5xf32, #tpu.memory_space<vmem>>, vector<1x4x4xf32>
    %1340 = vector.shape_cast %1339 : vector<1x4x4xf32> to vector<4x4xf32>
    %1341 = vector.broadcast %1338 : f32 to vector<4x4xf32>
    %1342 = arith.mulf %1341, %1340 : vector<4x4xf32>
    %1343 = arith.addf %1337, %1342 : vector<4x4xf32>
    %c18_1069 = arith.constant 18 : index
    %1344 = memref.load %arg2[%c18_1069] : memref<36xf32, #tpu.memory_space<smem>>
    %c34_1070 = arith.constant 34 : index
    %c1_1071 = arith.constant 1 : index
    %c1_1072 = arith.constant 1 : index
    %1345 = vector.load %arg11[%c34_1070, %c1_1071, %c1_1072] : memref<64x5x5xf32, #tpu.memory_space<vmem>>, vector<1x4x4xf32>
    %1346 = vector.shape_cast %1345 : vector<1x4x4xf32> to vector<4x4xf32>
    %1347 = vector.broadcast %1344 : f32 to vector<4x4xf32>
    %1348 = arith.mulf %1347, %1346 : vector<4x4xf32>
    %1349 = arith.addf %1343, %1348 : vector<4x4xf32>
    %c22_1073 = arith.constant 22 : index
    %1350 = memref.load %arg2[%c22_1073] : memref<36xf32, #tpu.memory_space<smem>>
    %c38_1074 = arith.constant 38 : index
    %c1_1075 = arith.constant 1 : index
    %c1_1076 = arith.constant 1 : index
    %1351 = vector.load %arg11[%c38_1074, %c1_1075, %c1_1076] : memref<64x5x5xf32, #tpu.memory_space<vmem>>, vector<1x4x4xf32>
    %1352 = vector.shape_cast %1351 : vector<1x4x4xf32> to vector<4x4xf32>
    %1353 = vector.broadcast %1350 : f32 to vector<4x4xf32>
    %1354 = arith.mulf %1353, %1352 : vector<4x4xf32>
    %1355 = arith.addf %1349, %1354 : vector<4x4xf32>
    %c26_1077 = arith.constant 26 : index
    %1356 = memref.load %arg2[%c26_1077] : memref<36xf32, #tpu.memory_space<smem>>
    %c62_1078 = arith.constant 62 : index
    %c1_1079 = arith.constant 1 : index
    %c0_1080 = arith.constant 0 : index
    %1357 = vector.load %arg11[%c62_1078, %c1_1079, %c0_1080] : memref<64x5x5xf32, #tpu.memory_space<vmem>>, vector<1x4x4xf32>
    %1358 = vector.shape_cast %1357 : vector<1x4x4xf32> to vector<4x4xf32>
    %1359 = vector.broadcast %1356 : f32 to vector<4x4xf32>
    %1360 = arith.mulf %1359, %1358 : vector<4x4xf32>
    %1361 = arith.addf %1355, %1360 : vector<4x4xf32>
    %c30_1081 = arith.constant 30 : index
    %1362 = memref.load %arg2[%c30_1081] : memref<36xf32, #tpu.memory_space<smem>>
    %c50_1082 = arith.constant 50 : index
    %c1_1083 = arith.constant 1 : index
    %c1_1084 = arith.constant 1 : index
    %1363 = vector.load %arg11[%c50_1082, %c1_1083, %c1_1084] : memref<64x5x5xf32, #tpu.memory_space<vmem>>, vector<1x4x4xf32>
    %1364 = vector.shape_cast %1363 : vector<1x4x4xf32> to vector<4x4xf32>
    %1365 = vector.broadcast %1362 : f32 to vector<4x4xf32>
    %1366 = arith.mulf %1365, %1364 : vector<4x4xf32>
    %1367 = arith.addf %1361, %1366 : vector<4x4xf32>
    %c34_1085 = arith.constant 34 : index
    %1368 = memref.load %arg2[%c34_1085] : memref<36xf32, #tpu.memory_space<smem>>
    %c54_1086 = arith.constant 54 : index
    %c1_1087 = arith.constant 1 : index
    %c1_1088 = arith.constant 1 : index
    %1369 = vector.load %arg11[%c54_1086, %c1_1087, %c1_1088] : memref<64x5x5xf32, #tpu.memory_space<vmem>>, vector<1x4x4xf32>
    %1370 = vector.shape_cast %1369 : vector<1x4x4xf32> to vector<4x4xf32>
    %1371 = vector.broadcast %1368 : f32 to vector<4x4xf32>
    %1372 = arith.mulf %1371, %1370 : vector<4x4xf32>
    %1373 = arith.addf %1367, %1372 : vector<4x4xf32>
    %c2_1089 = arith.constant 2 : index
    %1374 = memref.load %arg3[%c2_1089] : memref<4xf32, #tpu.memory_space<smem>>
    %1375 = vector.broadcast %1374 : f32 to vector<4x4xf32>
    %1376 = arith.addf %1373, %1375 : vector<4x4xf32>
    %cst_1090 = arith.constant 0.000000e+00 : f32
    %1377 = vector.broadcast %cst_1090 : f32 to vector<4x4xf32>
    %1378 = arith.maximumf %1376, %1377 : vector<4x4xf32>
    %c3_1091 = arith.constant 3 : index
    %1379 = memref.load %arg2[%c3_1091] : memref<36xf32, #tpu.memory_space<smem>>
    %c31_1092 = arith.constant 31 : index
    %c1_1093 = arith.constant 1 : index
    %c0_1094 = arith.constant 0 : index
    %1380 = vector.load %arg11[%c31_1092, %c1_1093, %c0_1094] : memref<64x5x5xf32, #tpu.memory_space<vmem>>, vector<1x4x4xf32>
    %1381 = vector.shape_cast %1380 : vector<1x4x4xf32> to vector<4x4xf32>
    %1382 = vector.broadcast %1379 : f32 to vector<4x4xf32>
    %1383 = arith.mulf %1382, %1381 : vector<4x4xf32>
    %1384 = arith.addf %1, %1383 : vector<4x4xf32>
    %c7_1095 = arith.constant 7 : index
    %1385 = memref.load %arg2[%c7_1095] : memref<36xf32, #tpu.memory_space<smem>>
    %c19_1096 = arith.constant 19 : index
    %c1_1097 = arith.constant 1 : index
    %c1_1098 = arith.constant 1 : index
    %1386 = vector.load %arg11[%c19_1096, %c1_1097, %c1_1098] : memref<64x5x5xf32, #tpu.memory_space<vmem>>, vector<1x4x4xf32>
    %1387 = vector.shape_cast %1386 : vector<1x4x4xf32> to vector<4x4xf32>
    %1388 = vector.broadcast %1385 : f32 to vector<4x4xf32>
    %1389 = arith.mulf %1388, %1387 : vector<4x4xf32>
    %1390 = arith.addf %1384, %1389 : vector<4x4xf32>
    %c11_1099 = arith.constant 11 : index
    %1391 = memref.load %arg2[%c11_1099] : memref<36xf32, #tpu.memory_space<smem>>
    %c23_1100 = arith.constant 23 : index
    %c1_1101 = arith.constant 1 : index
    %c1_1102 = arith.constant 1 : index
    %1392 = vector.load %arg11[%c23_1100, %c1_1101, %c1_1102] : memref<64x5x5xf32, #tpu.memory_space<vmem>>, vector<1x4x4xf32>
    %1393 = vector.shape_cast %1392 : vector<1x4x4xf32> to vector<4x4xf32>
    %1394 = vector.broadcast %1391 : f32 to vector<4x4xf32>
    %1395 = arith.mulf %1394, %1393 : vector<4x4xf32>
    %1396 = arith.addf %1390, %1395 : vector<4x4xf32>
    %c15_1103 = arith.constant 15 : index
    %1397 = memref.load %arg2[%c15_1103] : memref<36xf32, #tpu.memory_space<smem>>
    %c47_1104 = arith.constant 47 : index
    %c1_1105 = arith.constant 1 : index
    %c0_1106 = arith.constant 0 : index
    %1398 = vector.load %arg11[%c47_1104, %c1_1105, %c0_1106] : memref<64x5x5xf32, #tpu.memory_space<vmem>>, vector<1x4x4xf32>
    %1399 = vector.shape_cast %1398 : vector<1x4x4xf32> to vector<4x4xf32>
    %1400 = vector.broadcast %1397 : f32 to vector<4x4xf32>
    %1401 = arith.mulf %1400, %1399 : vector<4x4xf32>
    %1402 = arith.addf %1396, %1401 : vector<4x4xf32>
    %c19_1107 = arith.constant 19 : index
    %1403 = memref.load %arg2[%c19_1107] : memref<36xf32, #tpu.memory_space<smem>>
    %c35_1108 = arith.constant 35 : index
    %c1_1109 = arith.constant 1 : index
    %c1_1110 = arith.constant 1 : index
    %1404 = vector.load %arg11[%c35_1108, %c1_1109, %c1_1110] : memref<64x5x5xf32, #tpu.memory_space<vmem>>, vector<1x4x4xf32>
    %1405 = vector.shape_cast %1404 : vector<1x4x4xf32> to vector<4x4xf32>
    %1406 = vector.broadcast %1403 : f32 to vector<4x4xf32>
    %1407 = arith.mulf %1406, %1405 : vector<4x4xf32>
    %1408 = arith.addf %1402, %1407 : vector<4x4xf32>
    %c23_1111 = arith.constant 23 : index
    %1409 = memref.load %arg2[%c23_1111] : memref<36xf32, #tpu.memory_space<smem>>
    %c39_1112 = arith.constant 39 : index
    %c1_1113 = arith.constant 1 : index
    %c1_1114 = arith.constant 1 : index
    %1410 = vector.load %arg11[%c39_1112, %c1_1113, %c1_1114] : memref<64x5x5xf32, #tpu.memory_space<vmem>>, vector<1x4x4xf32>
    %1411 = vector.shape_cast %1410 : vector<1x4x4xf32> to vector<4x4xf32>
    %1412 = vector.broadcast %1409 : f32 to vector<4x4xf32>
    %1413 = arith.mulf %1412, %1411 : vector<4x4xf32>
    %1414 = arith.addf %1408, %1413 : vector<4x4xf32>
    %c27_1115 = arith.constant 27 : index
    %1415 = memref.load %arg2[%c27_1115] : memref<36xf32, #tpu.memory_space<smem>>
    %c63_1116 = arith.constant 63 : index
    %c1_1117 = arith.constant 1 : index
    %c0_1118 = arith.constant 0 : index
    %1416 = vector.load %arg11[%c63_1116, %c1_1117, %c0_1118] : memref<64x5x5xf32, #tpu.memory_space<vmem>>, vector<1x4x4xf32>
    %1417 = vector.shape_cast %1416 : vector<1x4x4xf32> to vector<4x4xf32>
    %1418 = vector.broadcast %1415 : f32 to vector<4x4xf32>
    %1419 = arith.mulf %1418, %1417 : vector<4x4xf32>
    %1420 = arith.addf %1414, %1419 : vector<4x4xf32>
    %c31_1119 = arith.constant 31 : index
    %1421 = memref.load %arg2[%c31_1119] : memref<36xf32, #tpu.memory_space<smem>>
    %c51_1120 = arith.constant 51 : index
    %c1_1121 = arith.constant 1 : index
    %c1_1122 = arith.constant 1 : index
    %1422 = vector.load %arg11[%c51_1120, %c1_1121, %c1_1122] : memref<64x5x5xf32, #tpu.memory_space<vmem>>, vector<1x4x4xf32>
    %1423 = vector.shape_cast %1422 : vector<1x4x4xf32> to vector<4x4xf32>
    %1424 = vector.broadcast %1421 : f32 to vector<4x4xf32>
    %1425 = arith.mulf %1424, %1423 : vector<4x4xf32>
    %1426 = arith.addf %1420, %1425 : vector<4x4xf32>
    %c35_1123 = arith.constant 35 : index
    %1427 = memref.load %arg2[%c35_1123] : memref<36xf32, #tpu.memory_space<smem>>
    %c55_1124 = arith.constant 55 : index
    %c1_1125 = arith.constant 1 : index
    %c1_1126 = arith.constant 1 : index
    %1428 = vector.load %arg11[%c55_1124, %c1_1125, %c1_1126] : memref<64x5x5xf32, #tpu.memory_space<vmem>>, vector<1x4x4xf32>
    %1429 = vector.shape_cast %1428 : vector<1x4x4xf32> to vector<4x4xf32>
    %1430 = vector.broadcast %1427 : f32 to vector<4x4xf32>
    %1431 = arith.mulf %1430, %1429 : vector<4x4xf32>
    %1432 = arith.addf %1426, %1431 : vector<4x4xf32>
    %c3_1127 = arith.constant 3 : index
    %1433 = memref.load %arg3[%c3_1127] : memref<4xf32, #tpu.memory_space<smem>>
    %1434 = vector.broadcast %1433 : f32 to vector<4x4xf32>
    %1435 = arith.addf %1432, %1434 : vector<4x4xf32>
    %cst_1128 = arith.constant 0.000000e+00 : f32
    %1436 = vector.broadcast %cst_1128 : f32 to vector<4x4xf32>
    %1437 = arith.maximumf %1435, %1436 : vector<4x4xf32>
    %c0_1129 = arith.constant 0 : index
    %1438 = memref.load %arg4[%c0_1129] : memref<16xf32, #tpu.memory_space<smem>>
    %1439 = vector.broadcast %1438 : f32 to vector<4x4xf32>
    %1440 = arith.mulf %1439, %1260 : vector<4x4xf32>
    %1441 = arith.addf %1, %1440 : vector<4x4xf32>
    %c4_1130 = arith.constant 4 : index
    %1442 = memref.load %arg4[%c4_1130] : memref<16xf32, #tpu.memory_space<smem>>
    %1443 = vector.broadcast %1442 : f32 to vector<4x4xf32>
    %1444 = arith.mulf %1443, %1319 : vector<4x4xf32>
    %1445 = arith.addf %1441, %1444 : vector<4x4xf32>
    %c8_1131 = arith.constant 8 : index
    %1446 = memref.load %arg4[%c8_1131] : memref<16xf32, #tpu.memory_space<smem>>
    %1447 = vector.broadcast %1446 : f32 to vector<4x4xf32>
    %1448 = arith.mulf %1447, %1378 : vector<4x4xf32>
    %1449 = arith.addf %1445, %1448 : vector<4x4xf32>
    %c12_1132 = arith.constant 12 : index
    %1450 = memref.load %arg4[%c12_1132] : memref<16xf32, #tpu.memory_space<smem>>
    %1451 = vector.broadcast %1450 : f32 to vector<4x4xf32>
    %1452 = arith.mulf %1451, %1437 : vector<4x4xf32>
    %1453 = arith.addf %1449, %1452 : vector<4x4xf32>
    %c0_1133 = arith.constant 0 : index
    %1454 = memref.load %arg5[%c0_1133] : memref<4xf32, #tpu.memory_space<smem>>
    %1455 = vector.broadcast %1454 : f32 to vector<4x4xf32>
    %1456 = arith.addf %1453, %1455 : vector<4x4xf32>
    %cst_1134 = arith.constant 0.000000e+00 : f32
    %1457 = vector.broadcast %cst_1134 : f32 to vector<4x4xf32>
    %1458 = arith.maximumf %1456, %1457 : vector<4x4xf32>
    %c8_1135 = arith.constant 8 : index
    %c0_1136 = arith.constant 0 : index
    %c0_1137 = arith.constant 0 : index
    %1459 = vector.load %arg12[%c8_1135, %c0_1136, %c0_1137] : memref<16x5x5xf32, #tpu.memory_space<vmem>>, vector<1x5x5xf32>
    %1460 = vector.shape_cast %1459 : vector<1x5x5xf32> to vector<5x5xf32>
    %1461 = vector.shape_cast %0 : vector<5x5xf32> to vector<1x5x5xf32>
    tpu.vector_store %arg12[%c8_1135, %c0_1136, %c0_1137], %1461 {strides = array<i32>} : memref<16x5x5xf32, #tpu.memory_space<vmem>>, vector<1x5x5xf32>,
    %c8_1138 = arith.constant 8 : index
    %c1_1139 = arith.constant 1 : index
    %c1_1140 = arith.constant 1 : index
    %1462 = vector.load %arg12[%c8_1138, %c1_1139, %c1_1140] : memref<16x5x5xf32, #tpu.memory_space<vmem>>, vector<1x4x4xf32>
    %1463 = vector.shape_cast %1462 : vector<1x4x4xf32> to vector<4x4xf32>
    %1464 = vector.shape_cast %1458 : vector<4x4xf32> to vector<1x4x4xf32>
    tpu.vector_store %arg12[%c8_1138, %c1_1139, %c1_1140], %1464 {strides = array<i32>} : memref<16x5x5xf32, #tpu.memory_space<vmem>>, vector<1x4x4xf32>,
    %c1_1141 = arith.constant 1 : index
    %1465 = memref.load %arg4[%c1_1141] : memref<16xf32, #tpu.memory_space<smem>>
    %1466 = vector.broadcast %1465 : f32 to vector<4x4xf32>
    %1467 = arith.mulf %1466, %1260 : vector<4x4xf32>
    %1468 = arith.addf %1, %1467 : vector<4x4xf32>
    %c5_1142 = arith.constant 5 : index
    %1469 = memref.load %arg4[%c5_1142] : memref<16xf32, #tpu.memory_space<smem>>
    %1470 = vector.broadcast %1469 : f32 to vector<4x4xf32>
    %1471 = arith.mulf %1470, %1319 : vector<4x4xf32>
    %1472 = arith.addf %1468, %1471 : vector<4x4xf32>
    %c9_1143 = arith.constant 9 : index
    %1473 = memref.load %arg4[%c9_1143] : memref<16xf32, #tpu.memory_space<smem>>
    %1474 = vector.broadcast %1473 : f32 to vector<4x4xf32>
    %1475 = arith.mulf %1474, %1378 : vector<4x4xf32>
    %1476 = arith.addf %1472, %1475 : vector<4x4xf32>
    %c13_1144 = arith.constant 13 : index
    %1477 = memref.load %arg4[%c13_1144] : memref<16xf32, #tpu.memory_space<smem>>
    %1478 = vector.broadcast %1477 : f32 to vector<4x4xf32>
    %1479 = arith.mulf %1478, %1437 : vector<4x4xf32>
    %1480 = arith.addf %1476, %1479 : vector<4x4xf32>
    %c1_1145 = arith.constant 1 : index
    %1481 = memref.load %arg5[%c1_1145] : memref<4xf32, #tpu.memory_space<smem>>
    %1482 = vector.broadcast %1481 : f32 to vector<4x4xf32>
    %1483 = arith.addf %1480, %1482 : vector<4x4xf32>
    %cst_1146 = arith.constant 0.000000e+00 : f32
    %1484 = vector.broadcast %cst_1146 : f32 to vector<4x4xf32>
    %1485 = arith.maximumf %1483, %1484 : vector<4x4xf32>
    %c9_1147 = arith.constant 9 : index
    %c0_1148 = arith.constant 0 : index
    %c0_1149 = arith.constant 0 : index
    %1486 = vector.load %arg12[%c9_1147, %c0_1148, %c0_1149] : memref<16x5x5xf32, #tpu.memory_space<vmem>>, vector<1x5x5xf32>
    %1487 = vector.shape_cast %1486 : vector<1x5x5xf32> to vector<5x5xf32>
    %1488 = vector.shape_cast %0 : vector<5x5xf32> to vector<1x5x5xf32>
    tpu.vector_store %arg12[%c9_1147, %c0_1148, %c0_1149], %1488 {strides = array<i32>} : memref<16x5x5xf32, #tpu.memory_space<vmem>>, vector<1x5x5xf32>,
    %c9_1150 = arith.constant 9 : index
    %c1_1151 = arith.constant 1 : index
    %c1_1152 = arith.constant 1 : index
    %1489 = vector.load %arg12[%c9_1150, %c1_1151, %c1_1152] : memref<16x5x5xf32, #tpu.memory_space<vmem>>, vector<1x4x4xf32>
    %1490 = vector.shape_cast %1489 : vector<1x4x4xf32> to vector<4x4xf32>
    %1491 = vector.shape_cast %1485 : vector<4x4xf32> to vector<1x4x4xf32>
    tpu.vector_store %arg12[%c9_1150, %c1_1151, %c1_1152], %1491 {strides = array<i32>} : memref<16x5x5xf32, #tpu.memory_space<vmem>>, vector<1x4x4xf32>,
    %c2_1153 = arith.constant 2 : index
    %1492 = memref.load %arg4[%c2_1153] : memref<16xf32, #tpu.memory_space<smem>>
    %1493 = vector.broadcast %1492 : f32 to vector<4x4xf32>
    %1494 = arith.mulf %1493, %1260 : vector<4x4xf32>
    %1495 = arith.addf %1, %1494 : vector<4x4xf32>
    %c6_1154 = arith.constant 6 : index
    %1496 = memref.load %arg4[%c6_1154] : memref<16xf32, #tpu.memory_space<smem>>
    %1497 = vector.broadcast %1496 : f32 to vector<4x4xf32>
    %1498 = arith.mulf %1497, %1319 : vector<4x4xf32>
    %1499 = arith.addf %1495, %1498 : vector<4x4xf32>
    %c10_1155 = arith.constant 10 : index
    %1500 = memref.load %arg4[%c10_1155] : memref<16xf32, #tpu.memory_space<smem>>
    %1501 = vector.broadcast %1500 : f32 to vector<4x4xf32>
    %1502 = arith.mulf %1501, %1378 : vector<4x4xf32>
    %1503 = arith.addf %1499, %1502 : vector<4x4xf32>
    %c14_1156 = arith.constant 14 : index
    %1504 = memref.load %arg4[%c14_1156] : memref<16xf32, #tpu.memory_space<smem>>
    %1505 = vector.broadcast %1504 : f32 to vector<4x4xf32>
    %1506 = arith.mulf %1505, %1437 : vector<4x4xf32>
    %1507 = arith.addf %1503, %1506 : vector<4x4xf32>
    %c2_1157 = arith.constant 2 : index
    %1508 = memref.load %arg5[%c2_1157] : memref<4xf32, #tpu.memory_space<smem>>
    %1509 = vector.broadcast %1508 : f32 to vector<4x4xf32>
    %1510 = arith.addf %1507, %1509 : vector<4x4xf32>
    %cst_1158 = arith.constant 0.000000e+00 : f32
    %1511 = vector.broadcast %cst_1158 : f32 to vector<4x4xf32>
    %1512 = arith.maximumf %1510, %1511 : vector<4x4xf32>
    %c10_1159 = arith.constant 10 : index
    %c0_1160 = arith.constant 0 : index
    %c0_1161 = arith.constant 0 : index
    %1513 = vector.load %arg12[%c10_1159, %c0_1160, %c0_1161] : memref<16x5x5xf32, #tpu.memory_space<vmem>>, vector<1x5x5xf32>
    %1514 = vector.shape_cast %1513 : vector<1x5x5xf32> to vector<5x5xf32>
    %1515 = vector.shape_cast %0 : vector<5x5xf32> to vector<1x5x5xf32>
    tpu.vector_store %arg12[%c10_1159, %c0_1160, %c0_1161], %1515 {strides = array<i32>} : memref<16x5x5xf32, #tpu.memory_space<vmem>>, vector<1x5x5xf32>,
    %c10_1162 = arith.constant 10 : index
    %c1_1163 = arith.constant 1 : index
    %c1_1164 = arith.constant 1 : index
    %1516 = vector.load %arg12[%c10_1162, %c1_1163, %c1_1164] : memref<16x5x5xf32, #tpu.memory_space<vmem>>, vector<1x4x4xf32>
    %1517 = vector.shape_cast %1516 : vector<1x4x4xf32> to vector<4x4xf32>
    %1518 = vector.shape_cast %1512 : vector<4x4xf32> to vector<1x4x4xf32>
    tpu.vector_store %arg12[%c10_1162, %c1_1163, %c1_1164], %1518 {strides = array<i32>} : memref<16x5x5xf32, #tpu.memory_space<vmem>>, vector<1x4x4xf32>,
    %c3_1165 = arith.constant 3 : index
    %1519 = memref.load %arg4[%c3_1165] : memref<16xf32, #tpu.memory_space<smem>>
    %1520 = vector.broadcast %1519 : f32 to vector<4x4xf32>
    %1521 = arith.mulf %1520, %1260 : vector<4x4xf32>
    %1522 = arith.addf %1, %1521 : vector<4x4xf32>
    %c7_1166 = arith.constant 7 : index
    %1523 = memref.load %arg4[%c7_1166] : memref<16xf32, #tpu.memory_space<smem>>
    %1524 = vector.broadcast %1523 : f32 to vector<4x4xf32>
    %1525 = arith.mulf %1524, %1319 : vector<4x4xf32>
    %1526 = arith.addf %1522, %1525 : vector<4x4xf32>
    %c11_1167 = arith.constant 11 : index
    %1527 = memref.load %arg4[%c11_1167] : memref<16xf32, #tpu.memory_space<smem>>
    %1528 = vector.broadcast %1527 : f32 to vector<4x4xf32>
    %1529 = arith.mulf %1528, %1378 : vector<4x4xf32>
    %1530 = arith.addf %1526, %1529 : vector<4x4xf32>
    %c15_1168 = arith.constant 15 : index
    %1531 = memref.load %arg4[%c15_1168] : memref<16xf32, #tpu.memory_space<smem>>
    %1532 = vector.broadcast %1531 : f32 to vector<4x4xf32>
    %1533 = arith.mulf %1532, %1437 : vector<4x4xf32>
    %1534 = arith.addf %1530, %1533 : vector<4x4xf32>
    %c3_1169 = arith.constant 3 : index
    %1535 = memref.load %arg5[%c3_1169] : memref<4xf32, #tpu.memory_space<smem>>
    %1536 = vector.broadcast %1535 : f32 to vector<4x4xf32>
    %1537 = arith.addf %1534, %1536 : vector<4x4xf32>
    %cst_1170 = arith.constant 0.000000e+00 : f32
    %1538 = vector.broadcast %cst_1170 : f32 to vector<4x4xf32>
    %1539 = arith.maximumf %1537, %1538 : vector<4x4xf32>
    %c11_1171 = arith.constant 11 : index
    %c0_1172 = arith.constant 0 : index
    %c0_1173 = arith.constant 0 : index
    %1540 = vector.load %arg12[%c11_1171, %c0_1172, %c0_1173] : memref<16x5x5xf32, #tpu.memory_space<vmem>>, vector<1x5x5xf32>
    %1541 = vector.shape_cast %1540 : vector<1x5x5xf32> to vector<5x5xf32>
    %1542 = vector.shape_cast %0 : vector<5x5xf32> to vector<1x5x5xf32>
    tpu.vector_store %arg12[%c11_1171, %c0_1172, %c0_1173], %1542 {strides = array<i32>} : memref<16x5x5xf32, #tpu.memory_space<vmem>>, vector<1x5x5xf32>,
    %c11_1174 = arith.constant 11 : index
    %c1_1175 = arith.constant 1 : index
    %c1_1176 = arith.constant 1 : index
    %1543 = vector.load %arg12[%c11_1174, %c1_1175, %c1_1176] : memref<16x5x5xf32, #tpu.memory_space<vmem>>, vector<1x4x4xf32>
    %1544 = vector.shape_cast %1543 : vector<1x4x4xf32> to vector<4x4xf32>
    %1545 = vector.shape_cast %1539 : vector<4x4xf32> to vector<1x4x4xf32>
    tpu.vector_store %arg12[%c11_1174, %c1_1175, %c1_1176], %1545 {strides = array<i32>} : memref<16x5x5xf32, #tpu.memory_space<vmem>>, vector<1x4x4xf32>,
    %c0_1177 = arith.constant 0 : index
    %1546 = memref.load %arg2[%c0_1177] : memref<36xf32, #tpu.memory_space<smem>>
    %c20_1178 = arith.constant 20 : index
    %c1_1179 = arith.constant 1 : index
    %c1_1180 = arith.constant 1 : index
    %1547 = vector.load %arg11[%c20_1178, %c1_1179, %c1_1180] : memref<64x5x5xf32, #tpu.memory_space<vmem>>, vector<1x4x4xf32>
    %1548 = vector.shape_cast %1547 : vector<1x4x4xf32> to vector<4x4xf32>
    %1549 = vector.broadcast %1546 : f32 to vector<4x4xf32>
    %1550 = arith.mulf %1549, %1548 : vector<4x4xf32>
    %1551 = arith.addf %1, %1550 : vector<4x4xf32>
    %c4_1181 = arith.constant 4 : index
    %1552 = memref.load %arg2[%c4_1181] : memref<36xf32, #tpu.memory_space<smem>>
    %c24_1182 = arith.constant 24 : index
    %c1_1183 = arith.constant 1 : index
    %c1_1184 = arith.constant 1 : index
    %1553 = vector.load %arg11[%c24_1182, %c1_1183, %c1_1184] : memref<64x5x5xf32, #tpu.memory_space<vmem>>, vector<1x4x4xf32>
    %1554 = vector.shape_cast %1553 : vector<1x4x4xf32> to vector<4x4xf32>
    %1555 = vector.broadcast %1552 : f32 to vector<4x4xf32>
    %1556 = arith.mulf %1555, %1554 : vector<4x4xf32>
    %1557 = arith.addf %1551, %1556 : vector<4x4xf32>
    %c8_1185 = arith.constant 8 : index
    %1558 = memref.load %arg2[%c8_1185] : memref<36xf32, #tpu.memory_space<smem>>
    %c28_1186 = arith.constant 28 : index
    %c1_1187 = arith.constant 1 : index
    %c1_1188 = arith.constant 1 : index
    %1559 = vector.load %arg11[%c28_1186, %c1_1187, %c1_1188] : memref<64x5x5xf32, #tpu.memory_space<vmem>>, vector<1x4x4xf32>
    %1560 = vector.shape_cast %1559 : vector<1x4x4xf32> to vector<4x4xf32>
    %1561 = vector.broadcast %1558 : f32 to vector<4x4xf32>
    %1562 = arith.mulf %1561, %1560 : vector<4x4xf32>
    %1563 = arith.addf %1557, %1562 : vector<4x4xf32>
    %c12_1189 = arith.constant 12 : index
    %1564 = memref.load %arg2[%c12_1189] : memref<36xf32, #tpu.memory_space<smem>>
    %c36_1190 = arith.constant 36 : index
    %c1_1191 = arith.constant 1 : index
    %c1_1192 = arith.constant 1 : index
    %1565 = vector.load %arg11[%c36_1190, %c1_1191, %c1_1192] : memref<64x5x5xf32, #tpu.memory_space<vmem>>, vector<1x4x4xf32>
    %1566 = vector.shape_cast %1565 : vector<1x4x4xf32> to vector<4x4xf32>
    %1567 = vector.broadcast %1564 : f32 to vector<4x4xf32>
    %1568 = arith.mulf %1567, %1566 : vector<4x4xf32>
    %1569 = arith.addf %1563, %1568 : vector<4x4xf32>
    %c16_1193 = arith.constant 16 : index
    %1570 = memref.load %arg2[%c16_1193] : memref<36xf32, #tpu.memory_space<smem>>
    %c40_1194 = arith.constant 40 : index
    %c1_1195 = arith.constant 1 : index
    %c1_1196 = arith.constant 1 : index
    %1571 = vector.load %arg11[%c40_1194, %c1_1195, %c1_1196] : memref<64x5x5xf32, #tpu.memory_space<vmem>>, vector<1x4x4xf32>
    %1572 = vector.shape_cast %1571 : vector<1x4x4xf32> to vector<4x4xf32>
    %1573 = vector.broadcast %1570 : f32 to vector<4x4xf32>
    %1574 = arith.mulf %1573, %1572 : vector<4x4xf32>
    %1575 = arith.addf %1569, %1574 : vector<4x4xf32>
    %c20_1197 = arith.constant 20 : index
    %1576 = memref.load %arg2[%c20_1197] : memref<36xf32, #tpu.memory_space<smem>>
    %c44_1198 = arith.constant 44 : index
    %c1_1199 = arith.constant 1 : index
    %c1_1200 = arith.constant 1 : index
    %1577 = vector.load %arg11[%c44_1198, %c1_1199, %c1_1200] : memref<64x5x5xf32, #tpu.memory_space<vmem>>, vector<1x4x4xf32>
    %1578 = vector.shape_cast %1577 : vector<1x4x4xf32> to vector<4x4xf32>
    %1579 = vector.broadcast %1576 : f32 to vector<4x4xf32>
    %1580 = arith.mulf %1579, %1578 : vector<4x4xf32>
    %1581 = arith.addf %1575, %1580 : vector<4x4xf32>
    %c24_1201 = arith.constant 24 : index
    %1582 = memref.load %arg2[%c24_1201] : memref<36xf32, #tpu.memory_space<smem>>
    %c52_1202 = arith.constant 52 : index
    %c1_1203 = arith.constant 1 : index
    %c1_1204 = arith.constant 1 : index
    %1583 = vector.load %arg11[%c52_1202, %c1_1203, %c1_1204] : memref<64x5x5xf32, #tpu.memory_space<vmem>>, vector<1x4x4xf32>
    %1584 = vector.shape_cast %1583 : vector<1x4x4xf32> to vector<4x4xf32>
    %1585 = vector.broadcast %1582 : f32 to vector<4x4xf32>
    %1586 = arith.mulf %1585, %1584 : vector<4x4xf32>
    %1587 = arith.addf %1581, %1586 : vector<4x4xf32>
    %c28_1205 = arith.constant 28 : index
    %1588 = memref.load %arg2[%c28_1205] : memref<36xf32, #tpu.memory_space<smem>>
    %c56_1206 = arith.constant 56 : index
    %c1_1207 = arith.constant 1 : index
    %c1_1208 = arith.constant 1 : index
    %1589 = vector.load %arg11[%c56_1206, %c1_1207, %c1_1208] : memref<64x5x5xf32, #tpu.memory_space<vmem>>, vector<1x4x4xf32>
    %1590 = vector.shape_cast %1589 : vector<1x4x4xf32> to vector<4x4xf32>
    %1591 = vector.broadcast %1588 : f32 to vector<4x4xf32>
    %1592 = arith.mulf %1591, %1590 : vector<4x4xf32>
    %1593 = arith.addf %1587, %1592 : vector<4x4xf32>
    %c32_1209 = arith.constant 32 : index
    %1594 = memref.load %arg2[%c32_1209] : memref<36xf32, #tpu.memory_space<smem>>
    %c60_1210 = arith.constant 60 : index
    %c1_1211 = arith.constant 1 : index
    %c1_1212 = arith.constant 1 : index
    %1595 = vector.load %arg11[%c60_1210, %c1_1211, %c1_1212] : memref<64x5x5xf32, #tpu.memory_space<vmem>>, vector<1x4x4xf32>
    %1596 = vector.shape_cast %1595 : vector<1x4x4xf32> to vector<4x4xf32>
    %1597 = vector.broadcast %1594 : f32 to vector<4x4xf32>
    %1598 = arith.mulf %1597, %1596 : vector<4x4xf32>
    %1599 = arith.addf %1593, %1598 : vector<4x4xf32>
    %c0_1213 = arith.constant 0 : index
    %1600 = memref.load %arg3[%c0_1213] : memref<4xf32, #tpu.memory_space<smem>>
    %1601 = vector.broadcast %1600 : f32 to vector<4x4xf32>
    %1602 = arith.addf %1599, %1601 : vector<4x4xf32>
    %cst_1214 = arith.constant 0.000000e+00 : f32
    %1603 = vector.broadcast %cst_1214 : f32 to vector<4x4xf32>
    %1604 = arith.maximumf %1602, %1603 : vector<4x4xf32>
    %c1_1215 = arith.constant 1 : index
    %1605 = memref.load %arg2[%c1_1215] : memref<36xf32, #tpu.memory_space<smem>>
    %c21_1216 = arith.constant 21 : index
    %c1_1217 = arith.constant 1 : index
    %c1_1218 = arith.constant 1 : index
    %1606 = vector.load %arg11[%c21_1216, %c1_1217, %c1_1218] : memref<64x5x5xf32, #tpu.memory_space<vmem>>, vector<1x4x4xf32>
    %1607 = vector.shape_cast %1606 : vector<1x4x4xf32> to vector<4x4xf32>
    %1608 = vector.broadcast %1605 : f32 to vector<4x4xf32>
    %1609 = arith.mulf %1608, %1607 : vector<4x4xf32>
    %1610 = arith.addf %1, %1609 : vector<4x4xf32>
    %c5_1219 = arith.constant 5 : index
    %1611 = memref.load %arg2[%c5_1219] : memref<36xf32, #tpu.memory_space<smem>>
    %c25_1220 = arith.constant 25 : index
    %c1_1221 = arith.constant 1 : index
    %c1_1222 = arith.constant 1 : index
    %1612 = vector.load %arg11[%c25_1220, %c1_1221, %c1_1222] : memref<64x5x5xf32, #tpu.memory_space<vmem>>, vector<1x4x4xf32>
    %1613 = vector.shape_cast %1612 : vector<1x4x4xf32> to vector<4x4xf32>
    %1614 = vector.broadcast %1611 : f32 to vector<4x4xf32>
    %1615 = arith.mulf %1614, %1613 : vector<4x4xf32>
    %1616 = arith.addf %1610, %1615 : vector<4x4xf32>
    %c9_1223 = arith.constant 9 : index
    %1617 = memref.load %arg2[%c9_1223] : memref<36xf32, #tpu.memory_space<smem>>
    %c29_1224 = arith.constant 29 : index
    %c1_1225 = arith.constant 1 : index
    %c1_1226 = arith.constant 1 : index
    %1618 = vector.load %arg11[%c29_1224, %c1_1225, %c1_1226] : memref<64x5x5xf32, #tpu.memory_space<vmem>>, vector<1x4x4xf32>
    %1619 = vector.shape_cast %1618 : vector<1x4x4xf32> to vector<4x4xf32>
    %1620 = vector.broadcast %1617 : f32 to vector<4x4xf32>
    %1621 = arith.mulf %1620, %1619 : vector<4x4xf32>
    %1622 = arith.addf %1616, %1621 : vector<4x4xf32>
    %c13_1227 = arith.constant 13 : index
    %1623 = memref.load %arg2[%c13_1227] : memref<36xf32, #tpu.memory_space<smem>>
    %c37_1228 = arith.constant 37 : index
    %c1_1229 = arith.constant 1 : index
    %c1_1230 = arith.constant 1 : index
    %1624 = vector.load %arg11[%c37_1228, %c1_1229, %c1_1230] : memref<64x5x5xf32, #tpu.memory_space<vmem>>, vector<1x4x4xf32>
    %1625 = vector.shape_cast %1624 : vector<1x4x4xf32> to vector<4x4xf32>
    %1626 = vector.broadcast %1623 : f32 to vector<4x4xf32>
    %1627 = arith.mulf %1626, %1625 : vector<4x4xf32>
    %1628 = arith.addf %1622, %1627 : vector<4x4xf32>
    %c17_1231 = arith.constant 17 : index
    %1629 = memref.load %arg2[%c17_1231] : memref<36xf32, #tpu.memory_space<smem>>
    %c41_1232 = arith.constant 41 : index
    %c1_1233 = arith.constant 1 : index
    %c1_1234 = arith.constant 1 : index
    %1630 = vector.load %arg11[%c41_1232, %c1_1233, %c1_1234] : memref<64x5x5xf32, #tpu.memory_space<vmem>>, vector<1x4x4xf32>
    %1631 = vector.shape_cast %1630 : vector<1x4x4xf32> to vector<4x4xf32>
    %1632 = vector.broadcast %1629 : f32 to vector<4x4xf32>
    %1633 = arith.mulf %1632, %1631 : vector<4x4xf32>
    %1634 = arith.addf %1628, %1633 : vector<4x4xf32>
    %c21_1235 = arith.constant 21 : index
    %1635 = memref.load %arg2[%c21_1235] : memref<36xf32, #tpu.memory_space<smem>>
    %c45_1236 = arith.constant 45 : index
    %c1_1237 = arith.constant 1 : index
    %c1_1238 = arith.constant 1 : index
    %1636 = vector.load %arg11[%c45_1236, %c1_1237, %c1_1238] : memref<64x5x5xf32, #tpu.memory_space<vmem>>, vector<1x4x4xf32>
    %1637 = vector.shape_cast %1636 : vector<1x4x4xf32> to vector<4x4xf32>
    %1638 = vector.broadcast %1635 : f32 to vector<4x4xf32>
    %1639 = arith.mulf %1638, %1637 : vector<4x4xf32>
    %1640 = arith.addf %1634, %1639 : vector<4x4xf32>
    %c25_1239 = arith.constant 25 : index
    %1641 = memref.load %arg2[%c25_1239] : memref<36xf32, #tpu.memory_space<smem>>
    %c53_1240 = arith.constant 53 : index
    %c1_1241 = arith.constant 1 : index
    %c1_1242 = arith.constant 1 : index
    %1642 = vector.load %arg11[%c53_1240, %c1_1241, %c1_1242] : memref<64x5x5xf32, #tpu.memory_space<vmem>>, vector<1x4x4xf32>
    %1643 = vector.shape_cast %1642 : vector<1x4x4xf32> to vector<4x4xf32>
    %1644 = vector.broadcast %1641 : f32 to vector<4x4xf32>
    %1645 = arith.mulf %1644, %1643 : vector<4x4xf32>
    %1646 = arith.addf %1640, %1645 : vector<4x4xf32>
    %c29_1243 = arith.constant 29 : index
    %1647 = memref.load %arg2[%c29_1243] : memref<36xf32, #tpu.memory_space<smem>>
    %c57_1244 = arith.constant 57 : index
    %c1_1245 = arith.constant 1 : index
    %c1_1246 = arith.constant 1 : index
    %1648 = vector.load %arg11[%c57_1244, %c1_1245, %c1_1246] : memref<64x5x5xf32, #tpu.memory_space<vmem>>, vector<1x4x4xf32>
    %1649 = vector.shape_cast %1648 : vector<1x4x4xf32> to vector<4x4xf32>
    %1650 = vector.broadcast %1647 : f32 to vector<4x4xf32>
    %1651 = arith.mulf %1650, %1649 : vector<4x4xf32>
    %1652 = arith.addf %1646, %1651 : vector<4x4xf32>
    %c33_1247 = arith.constant 33 : index
    %1653 = memref.load %arg2[%c33_1247] : memref<36xf32, #tpu.memory_space<smem>>
    %c61_1248 = arith.constant 61 : index
    %c1_1249 = arith.constant 1 : index
    %c1_1250 = arith.constant 1 : index
    %1654 = vector.load %arg11[%c61_1248, %c1_1249, %c1_1250] : memref<64x5x5xf32, #tpu.memory_space<vmem>>, vector<1x4x4xf32>
    %1655 = vector.shape_cast %1654 : vector<1x4x4xf32> to vector<4x4xf32>
    %1656 = vector.broadcast %1653 : f32 to vector<4x4xf32>
    %1657 = arith.mulf %1656, %1655 : vector<4x4xf32>
    %1658 = arith.addf %1652, %1657 : vector<4x4xf32>
    %c1_1251 = arith.constant 1 : index
    %1659 = memref.load %arg3[%c1_1251] : memref<4xf32, #tpu.memory_space<smem>>
    %1660 = vector.broadcast %1659 : f32 to vector<4x4xf32>
    %1661 = arith.addf %1658, %1660 : vector<4x4xf32>
    %cst_1252 = arith.constant 0.000000e+00 : f32
    %1662 = vector.broadcast %cst_1252 : f32 to vector<4x4xf32>
    %1663 = arith.maximumf %1661, %1662 : vector<4x4xf32>
    %c2_1253 = arith.constant 2 : index
    %1664 = memref.load %arg2[%c2_1253] : memref<36xf32, #tpu.memory_space<smem>>
    %c22_1254 = arith.constant 22 : index
    %c1_1255 = arith.constant 1 : index
    %c1_1256 = arith.constant 1 : index
    %1665 = vector.load %arg11[%c22_1254, %c1_1255, %c1_1256] : memref<64x5x5xf32, #tpu.memory_space<vmem>>, vector<1x4x4xf32>
    %1666 = vector.shape_cast %1665 : vector<1x4x4xf32> to vector<4x4xf32>
    %1667 = vector.broadcast %1664 : f32 to vector<4x4xf32>
    %1668 = arith.mulf %1667, %1666 : vector<4x4xf32>
    %1669 = arith.addf %1, %1668 : vector<4x4xf32>
    %c6_1257 = arith.constant 6 : index
    %1670 = memref.load %arg2[%c6_1257] : memref<36xf32, #tpu.memory_space<smem>>
    %c26_1258 = arith.constant 26 : index
    %c1_1259 = arith.constant 1 : index
    %c1_1260 = arith.constant 1 : index
    %1671 = vector.load %arg11[%c26_1258, %c1_1259, %c1_1260] : memref<64x5x5xf32, #tpu.memory_space<vmem>>, vector<1x4x4xf32>
    %1672 = vector.shape_cast %1671 : vector<1x4x4xf32> to vector<4x4xf32>
    %1673 = vector.broadcast %1670 : f32 to vector<4x4xf32>
    %1674 = arith.mulf %1673, %1672 : vector<4x4xf32>
    %1675 = arith.addf %1669, %1674 : vector<4x4xf32>
    %c10_1261 = arith.constant 10 : index
    %1676 = memref.load %arg2[%c10_1261] : memref<36xf32, #tpu.memory_space<smem>>
    %c30_1262 = arith.constant 30 : index
    %c1_1263 = arith.constant 1 : index
    %c1_1264 = arith.constant 1 : index
    %1677 = vector.load %arg11[%c30_1262, %c1_1263, %c1_1264] : memref<64x5x5xf32, #tpu.memory_space<vmem>>, vector<1x4x4xf32>
    %1678 = vector.shape_cast %1677 : vector<1x4x4xf32> to vector<4x4xf32>
    %1679 = vector.broadcast %1676 : f32 to vector<4x4xf32>
    %1680 = arith.mulf %1679, %1678 : vector<4x4xf32>
    %1681 = arith.addf %1675, %1680 : vector<4x4xf32>
    %c14_1265 = arith.constant 14 : index
    %1682 = memref.load %arg2[%c14_1265] : memref<36xf32, #tpu.memory_space<smem>>
    %c38_1266 = arith.constant 38 : index
    %c1_1267 = arith.constant 1 : index
    %c1_1268 = arith.constant 1 : index
    %1683 = vector.load %arg11[%c38_1266, %c1_1267, %c1_1268] : memref<64x5x5xf32, #tpu.memory_space<vmem>>, vector<1x4x4xf32>
    %1684 = vector.shape_cast %1683 : vector<1x4x4xf32> to vector<4x4xf32>
    %1685 = vector.broadcast %1682 : f32 to vector<4x4xf32>
    %1686 = arith.mulf %1685, %1684 : vector<4x4xf32>
    %1687 = arith.addf %1681, %1686 : vector<4x4xf32>
    %c18_1269 = arith.constant 18 : index
    %1688 = memref.load %arg2[%c18_1269] : memref<36xf32, #tpu.memory_space<smem>>
    %c42_1270 = arith.constant 42 : index
    %c1_1271 = arith.constant 1 : index
    %c1_1272 = arith.constant 1 : index
    %1689 = vector.load %arg11[%c42_1270, %c1_1271, %c1_1272] : memref<64x5x5xf32, #tpu.memory_space<vmem>>, vector<1x4x4xf32>
    %1690 = vector.shape_cast %1689 : vector<1x4x4xf32> to vector<4x4xf32>
    %1691 = vector.broadcast %1688 : f32 to vector<4x4xf32>
    %1692 = arith.mulf %1691, %1690 : vector<4x4xf32>
    %1693 = arith.addf %1687, %1692 : vector<4x4xf32>
    %c22_1273 = arith.constant 22 : index
    %1694 = memref.load %arg2[%c22_1273] : memref<36xf32, #tpu.memory_space<smem>>
    %c46_1274 = arith.constant 46 : index
    %c1_1275 = arith.constant 1 : index
    %c1_1276 = arith.constant 1 : index
    %1695 = vector.load %arg11[%c46_1274, %c1_1275, %c1_1276] : memref<64x5x5xf32, #tpu.memory_space<vmem>>, vector<1x4x4xf32>
    %1696 = vector.shape_cast %1695 : vector<1x4x4xf32> to vector<4x4xf32>
    %1697 = vector.broadcast %1694 : f32 to vector<4x4xf32>
    %1698 = arith.mulf %1697, %1696 : vector<4x4xf32>
    %1699 = arith.addf %1693, %1698 : vector<4x4xf32>
    %c26_1277 = arith.constant 26 : index
    %1700 = memref.load %arg2[%c26_1277] : memref<36xf32, #tpu.memory_space<smem>>
    %c54_1278 = arith.constant 54 : index
    %c1_1279 = arith.constant 1 : index
    %c1_1280 = arith.constant 1 : index
    %1701 = vector.load %arg11[%c54_1278, %c1_1279, %c1_1280] : memref<64x5x5xf32, #tpu.memory_space<vmem>>, vector<1x4x4xf32>
    %1702 = vector.shape_cast %1701 : vector<1x4x4xf32> to vector<4x4xf32>
    %1703 = vector.broadcast %1700 : f32 to vector<4x4xf32>
    %1704 = arith.mulf %1703, %1702 : vector<4x4xf32>
    %1705 = arith.addf %1699, %1704 : vector<4x4xf32>
    %c30_1281 = arith.constant 30 : index
    %1706 = memref.load %arg2[%c30_1281] : memref<36xf32, #tpu.memory_space<smem>>
    %c58_1282 = arith.constant 58 : index
    %c1_1283 = arith.constant 1 : index
    %c1_1284 = arith.constant 1 : index
    %1707 = vector.load %arg11[%c58_1282, %c1_1283, %c1_1284] : memref<64x5x5xf32, #tpu.memory_space<vmem>>, vector<1x4x4xf32>
    %1708 = vector.shape_cast %1707 : vector<1x4x4xf32> to vector<4x4xf32>
    %1709 = vector.broadcast %1706 : f32 to vector<4x4xf32>
    %1710 = arith.mulf %1709, %1708 : vector<4x4xf32>
    %1711 = arith.addf %1705, %1710 : vector<4x4xf32>
    %c34_1285 = arith.constant 34 : index
    %1712 = memref.load %arg2[%c34_1285] : memref<36xf32, #tpu.memory_space<smem>>
    %c62_1286 = arith.constant 62 : index
    %c1_1287 = arith.constant 1 : index
    %c1_1288 = arith.constant 1 : index
    %1713 = vector.load %arg11[%c62_1286, %c1_1287, %c1_1288] : memref<64x5x5xf32, #tpu.memory_space<vmem>>, vector<1x4x4xf32>
    %1714 = vector.shape_cast %1713 : vector<1x4x4xf32> to vector<4x4xf32>
    %1715 = vector.broadcast %1712 : f32 to vector<4x4xf32>
    %1716 = arith.mulf %1715, %1714 : vector<4x4xf32>
    %1717 = arith.addf %1711, %1716 : vector<4x4xf32>
    %c2_1289 = arith.constant 2 : index
    %1718 = memref.load %arg3[%c2_1289] : memref<4xf32, #tpu.memory_space<smem>>
    %1719 = vector.broadcast %1718 : f32 to vector<4x4xf32>
    %1720 = arith.addf %1717, %1719 : vector<4x4xf32>
    %cst_1290 = arith.constant 0.000000e+00 : f32
    %1721 = vector.broadcast %cst_1290 : f32 to vector<4x4xf32>
    %1722 = arith.maximumf %1720, %1721 : vector<4x4xf32>
    %c3_1291 = arith.constant 3 : index
    %1723 = memref.load %arg2[%c3_1291] : memref<36xf32, #tpu.memory_space<smem>>
    %c23_1292 = arith.constant 23 : index
    %c1_1293 = arith.constant 1 : index
    %c1_1294 = arith.constant 1 : index
    %1724 = vector.load %arg11[%c23_1292, %c1_1293, %c1_1294] : memref<64x5x5xf32, #tpu.memory_space<vmem>>, vector<1x4x4xf32>
    %1725 = vector.shape_cast %1724 : vector<1x4x4xf32> to vector<4x4xf32>
    %1726 = vector.broadcast %1723 : f32 to vector<4x4xf32>
    %1727 = arith.mulf %1726, %1725 : vector<4x4xf32>
    %1728 = arith.addf %1, %1727 : vector<4x4xf32>
    %c7_1295 = arith.constant 7 : index
    %1729 = memref.load %arg2[%c7_1295] : memref<36xf32, #tpu.memory_space<smem>>
    %c27_1296 = arith.constant 27 : index
    %c1_1297 = arith.constant 1 : index
    %c1_1298 = arith.constant 1 : index
    %1730 = vector.load %arg11[%c27_1296, %c1_1297, %c1_1298] : memref<64x5x5xf32, #tpu.memory_space<vmem>>, vector<1x4x4xf32>
    %1731 = vector.shape_cast %1730 : vector<1x4x4xf32> to vector<4x4xf32>
    %1732 = vector.broadcast %1729 : f32 to vector<4x4xf32>
    %1733 = arith.mulf %1732, %1731 : vector<4x4xf32>
    %1734 = arith.addf %1728, %1733 : vector<4x4xf32>
    %c11_1299 = arith.constant 11 : index
    %1735 = memref.load %arg2[%c11_1299] : memref<36xf32, #tpu.memory_space<smem>>
    %c31_1300 = arith.constant 31 : index
    %c1_1301 = arith.constant 1 : index
    %c1_1302 = arith.constant 1 : index
    %1736 = vector.load %arg11[%c31_1300, %c1_1301, %c1_1302] : memref<64x5x5xf32, #tpu.memory_space<vmem>>, vector<1x4x4xf32>
    %1737 = vector.shape_cast %1736 : vector<1x4x4xf32> to vector<4x4xf32>
    %1738 = vector.broadcast %1735 : f32 to vector<4x4xf32>
    %1739 = arith.mulf %1738, %1737 : vector<4x4xf32>
    %1740 = arith.addf %1734, %1739 : vector<4x4xf32>
    %c15_1303 = arith.constant 15 : index
    %1741 = memref.load %arg2[%c15_1303] : memref<36xf32, #tpu.memory_space<smem>>
    %c39_1304 = arith.constant 39 : index
    %c1_1305 = arith.constant 1 : index
    %c1_1306 = arith.constant 1 : index
    %1742 = vector.load %arg11[%c39_1304, %c1_1305, %c1_1306] : memref<64x5x5xf32, #tpu.memory_space<vmem>>, vector<1x4x4xf32>
    %1743 = vector.shape_cast %1742 : vector<1x4x4xf32> to vector<4x4xf32>
    %1744 = vector.broadcast %1741 : f32 to vector<4x4xf32>
    %1745 = arith.mulf %1744, %1743 : vector<4x4xf32>
    %1746 = arith.addf %1740, %1745 : vector<4x4xf32>
    %c19_1307 = arith.constant 19 : index
    %1747 = memref.load %arg2[%c19_1307] : memref<36xf32, #tpu.memory_space<smem>>
    %c43_1308 = arith.constant 43 : index
    %c1_1309 = arith.constant 1 : index
    %c1_1310 = arith.constant 1 : index
    %1748 = vector.load %arg11[%c43_1308, %c1_1309, %c1_1310] : memref<64x5x5xf32, #tpu.memory_space<vmem>>, vector<1x4x4xf32>
    %1749 = vector.shape_cast %1748 : vector<1x4x4xf32> to vector<4x4xf32>
    %1750 = vector.broadcast %1747 : f32 to vector<4x4xf32>
    %1751 = arith.mulf %1750, %1749 : vector<4x4xf32>
    %1752 = arith.addf %1746, %1751 : vector<4x4xf32>
    %c23_1311 = arith.constant 23 : index
    %1753 = memref.load %arg2[%c23_1311] : memref<36xf32, #tpu.memory_space<smem>>
    %c47_1312 = arith.constant 47 : index
    %c1_1313 = arith.constant 1 : index
    %c1_1314 = arith.constant 1 : index
    %1754 = vector.load %arg11[%c47_1312, %c1_1313, %c1_1314] : memref<64x5x5xf32, #tpu.memory_space<vmem>>, vector<1x4x4xf32>
    %1755 = vector.shape_cast %1754 : vector<1x4x4xf32> to vector<4x4xf32>
    %1756 = vector.broadcast %1753 : f32 to vector<4x4xf32>
    %1757 = arith.mulf %1756, %1755 : vector<4x4xf32>
    %1758 = arith.addf %1752, %1757 : vector<4x4xf32>
    %c27_1315 = arith.constant 27 : index
    %1759 = memref.load %arg2[%c27_1315] : memref<36xf32, #tpu.memory_space<smem>>
    %c55_1316 = arith.constant 55 : index
    %c1_1317 = arith.constant 1 : index
    %c1_1318 = arith.constant 1 : index
    %1760 = vector.load %arg11[%c55_1316, %c1_1317, %c1_1318] : memref<64x5x5xf32, #tpu.memory_space<vmem>>, vector<1x4x4xf32>
    %1761 = vector.shape_cast %1760 : vector<1x4x4xf32> to vector<4x4xf32>
    %1762 = vector.broadcast %1759 : f32 to vector<4x4xf32>
    %1763 = arith.mulf %1762, %1761 : vector<4x4xf32>
    %1764 = arith.addf %1758, %1763 : vector<4x4xf32>
    %c31_1319 = arith.constant 31 : index
    %1765 = memref.load %arg2[%c31_1319] : memref<36xf32, #tpu.memory_space<smem>>
    %c59_1320 = arith.constant 59 : index
    %c1_1321 = arith.constant 1 : index
    %c1_1322 = arith.constant 1 : index
    %1766 = vector.load %arg11[%c59_1320, %c1_1321, %c1_1322] : memref<64x5x5xf32, #tpu.memory_space<vmem>>, vector<1x4x4xf32>
    %1767 = vector.shape_cast %1766 : vector<1x4x4xf32> to vector<4x4xf32>
    %1768 = vector.broadcast %1765 : f32 to vector<4x4xf32>
    %1769 = arith.mulf %1768, %1767 : vector<4x4xf32>
    %1770 = arith.addf %1764, %1769 : vector<4x4xf32>
    %c35_1323 = arith.constant 35 : index
    %1771 = memref.load %arg2[%c35_1323] : memref<36xf32, #tpu.memory_space<smem>>
    %c63_1324 = arith.constant 63 : index
    %c1_1325 = arith.constant 1 : index
    %c1_1326 = arith.constant 1 : index
    %1772 = vector.load %arg11[%c63_1324, %c1_1325, %c1_1326] : memref<64x5x5xf32, #tpu.memory_space<vmem>>, vector<1x4x4xf32>
    %1773 = vector.shape_cast %1772 : vector<1x4x4xf32> to vector<4x4xf32>
    %1774 = vector.broadcast %1771 : f32 to vector<4x4xf32>
    %1775 = arith.mulf %1774, %1773 : vector<4x4xf32>
    %1776 = arith.addf %1770, %1775 : vector<4x4xf32>
    %c3_1327 = arith.constant 3 : index
    %1777 = memref.load %arg3[%c3_1327] : memref<4xf32, #tpu.memory_space<smem>>
    %1778 = vector.broadcast %1777 : f32 to vector<4x4xf32>
    %1779 = arith.addf %1776, %1778 : vector<4x4xf32>
    %cst_1328 = arith.constant 0.000000e+00 : f32
    %1780 = vector.broadcast %cst_1328 : f32 to vector<4x4xf32>
    %1781 = arith.maximumf %1779, %1780 : vector<4x4xf32>
    %c0_1329 = arith.constant 0 : index
    %1782 = memref.load %arg4[%c0_1329] : memref<16xf32, #tpu.memory_space<smem>>
    %1783 = vector.broadcast %1782 : f32 to vector<4x4xf32>
    %1784 = arith.mulf %1783, %1604 : vector<4x4xf32>
    %1785 = arith.addf %1, %1784 : vector<4x4xf32>
    %c4_1330 = arith.constant 4 : index
    %1786 = memref.load %arg4[%c4_1330] : memref<16xf32, #tpu.memory_space<smem>>
    %1787 = vector.broadcast %1786 : f32 to vector<4x4xf32>
    %1788 = arith.mulf %1787, %1663 : vector<4x4xf32>
    %1789 = arith.addf %1785, %1788 : vector<4x4xf32>
    %c8_1331 = arith.constant 8 : index
    %1790 = memref.load %arg4[%c8_1331] : memref<16xf32, #tpu.memory_space<smem>>
    %1791 = vector.broadcast %1790 : f32 to vector<4x4xf32>
    %1792 = arith.mulf %1791, %1722 : vector<4x4xf32>
    %1793 = arith.addf %1789, %1792 : vector<4x4xf32>
    %c12_1332 = arith.constant 12 : index
    %1794 = memref.load %arg4[%c12_1332] : memref<16xf32, #tpu.memory_space<smem>>
    %1795 = vector.broadcast %1794 : f32 to vector<4x4xf32>
    %1796 = arith.mulf %1795, %1781 : vector<4x4xf32>
    %1797 = arith.addf %1793, %1796 : vector<4x4xf32>
    %c0_1333 = arith.constant 0 : index
    %1798 = memref.load %arg5[%c0_1333] : memref<4xf32, #tpu.memory_space<smem>>
    %1799 = vector.broadcast %1798 : f32 to vector<4x4xf32>
    %1800 = arith.addf %1797, %1799 : vector<4x4xf32>
    %cst_1334 = arith.constant 0.000000e+00 : f32
    %1801 = vector.broadcast %cst_1334 : f32 to vector<4x4xf32>
    %1802 = arith.maximumf %1800, %1801 : vector<4x4xf32>
    %c12_1335 = arith.constant 12 : index
    %c0_1336 = arith.constant 0 : index
    %c0_1337 = arith.constant 0 : index
    %1803 = vector.load %arg12[%c12_1335, %c0_1336, %c0_1337] : memref<16x5x5xf32, #tpu.memory_space<vmem>>, vector<1x5x5xf32>
    %1804 = vector.shape_cast %1803 : vector<1x5x5xf32> to vector<5x5xf32>
    %1805 = vector.shape_cast %0 : vector<5x5xf32> to vector<1x5x5xf32>
    tpu.vector_store %arg12[%c12_1335, %c0_1336, %c0_1337], %1805 {strides = array<i32>} : memref<16x5x5xf32, #tpu.memory_space<vmem>>, vector<1x5x5xf32>,
    %c12_1338 = arith.constant 12 : index
    %c1_1339 = arith.constant 1 : index
    %c1_1340 = arith.constant 1 : index
    %1806 = vector.load %arg12[%c12_1338, %c1_1339, %c1_1340] : memref<16x5x5xf32, #tpu.memory_space<vmem>>, vector<1x4x4xf32>
    %1807 = vector.shape_cast %1806 : vector<1x4x4xf32> to vector<4x4xf32>
    %1808 = vector.shape_cast %1802 : vector<4x4xf32> to vector<1x4x4xf32>
    tpu.vector_store %arg12[%c12_1338, %c1_1339, %c1_1340], %1808 {strides = array<i32>} : memref<16x5x5xf32, #tpu.memory_space<vmem>>, vector<1x4x4xf32>,
    %c1_1341 = arith.constant 1 : index
    %1809 = memref.load %arg4[%c1_1341] : memref<16xf32, #tpu.memory_space<smem>>
    %1810 = vector.broadcast %1809 : f32 to vector<4x4xf32>
    %1811 = arith.mulf %1810, %1604 : vector<4x4xf32>
    %1812 = arith.addf %1, %1811 : vector<4x4xf32>
    %c5_1342 = arith.constant 5 : index
    %1813 = memref.load %arg4[%c5_1342] : memref<16xf32, #tpu.memory_space<smem>>
    %1814 = vector.broadcast %1813 : f32 to vector<4x4xf32>
    %1815 = arith.mulf %1814, %1663 : vector<4x4xf32>
    %1816 = arith.addf %1812, %1815 : vector<4x4xf32>
    %c9_1343 = arith.constant 9 : index
    %1817 = memref.load %arg4[%c9_1343] : memref<16xf32, #tpu.memory_space<smem>>
    %1818 = vector.broadcast %1817 : f32 to vector<4x4xf32>
    %1819 = arith.mulf %1818, %1722 : vector<4x4xf32>
    %1820 = arith.addf %1816, %1819 : vector<4x4xf32>
    %c13_1344 = arith.constant 13 : index
    %1821 = memref.load %arg4[%c13_1344] : memref<16xf32, #tpu.memory_space<smem>>
    %1822 = vector.broadcast %1821 : f32 to vector<4x4xf32>
    %1823 = arith.mulf %1822, %1781 : vector<4x4xf32>
    %1824 = arith.addf %1820, %1823 : vector<4x4xf32>
    %c1_1345 = arith.constant 1 : index
    %1825 = memref.load %arg5[%c1_1345] : memref<4xf32, #tpu.memory_space<smem>>
    %1826 = vector.broadcast %1825 : f32 to vector<4x4xf32>
    %1827 = arith.addf %1824, %1826 : vector<4x4xf32>
    %cst_1346 = arith.constant 0.000000e+00 : f32
    %1828 = vector.broadcast %cst_1346 : f32 to vector<4x4xf32>
    %1829 = arith.maximumf %1827, %1828 : vector<4x4xf32>
    %c13_1347 = arith.constant 13 : index
    %c0_1348 = arith.constant 0 : index
    %c0_1349 = arith.constant 0 : index
    %1830 = vector.load %arg12[%c13_1347, %c0_1348, %c0_1349] : memref<16x5x5xf32, #tpu.memory_space<vmem>>, vector<1x5x5xf32>
    %1831 = vector.shape_cast %1830 : vector<1x5x5xf32> to vector<5x5xf32>
    %1832 = vector.shape_cast %0 : vector<5x5xf32> to vector<1x5x5xf32>
    tpu.vector_store %arg12[%c13_1347, %c0_1348, %c0_1349], %1832 {strides = array<i32>} : memref<16x5x5xf32, #tpu.memory_space<vmem>>, vector<1x5x5xf32>,
    %c13_1350 = arith.constant 13 : index
    %c1_1351 = arith.constant 1 : index
    %c1_1352 = arith.constant 1 : index
    %1833 = vector.load %arg12[%c13_1350, %c1_1351, %c1_1352] : memref<16x5x5xf32, #tpu.memory_space<vmem>>, vector<1x4x4xf32>
    %1834 = vector.shape_cast %1833 : vector<1x4x4xf32> to vector<4x4xf32>
    %1835 = vector.shape_cast %1829 : vector<4x4xf32> to vector<1x4x4xf32>
    tpu.vector_store %arg12[%c13_1350, %c1_1351, %c1_1352], %1835 {strides = array<i32>} : memref<16x5x5xf32, #tpu.memory_space<vmem>>, vector<1x4x4xf32>,
    %c2_1353 = arith.constant 2 : index
    %1836 = memref.load %arg4[%c2_1353] : memref<16xf32, #tpu.memory_space<smem>>
    %1837 = vector.broadcast %1836 : f32 to vector<4x4xf32>
    %1838 = arith.mulf %1837, %1604 : vector<4x4xf32>
    %1839 = arith.addf %1, %1838 : vector<4x4xf32>
    %c6_1354 = arith.constant 6 : index
    %1840 = memref.load %arg4[%c6_1354] : memref<16xf32, #tpu.memory_space<smem>>
    %1841 = vector.broadcast %1840 : f32 to vector<4x4xf32>
    %1842 = arith.mulf %1841, %1663 : vector<4x4xf32>
    %1843 = arith.addf %1839, %1842 : vector<4x4xf32>
    %c10_1355 = arith.constant 10 : index
    %1844 = memref.load %arg4[%c10_1355] : memref<16xf32, #tpu.memory_space<smem>>
    %1845 = vector.broadcast %1844 : f32 to vector<4x4xf32>
    %1846 = arith.mulf %1845, %1722 : vector<4x4xf32>
    %1847 = arith.addf %1843, %1846 : vector<4x4xf32>
    %c14_1356 = arith.constant 14 : index
    %1848 = memref.load %arg4[%c14_1356] : memref<16xf32, #tpu.memory_space<smem>>
    %1849 = vector.broadcast %1848 : f32 to vector<4x4xf32>
    %1850 = arith.mulf %1849, %1781 : vector<4x4xf32>
    %1851 = arith.addf %1847, %1850 : vector<4x4xf32>
    %c2_1357 = arith.constant 2 : index
    %1852 = memref.load %arg5[%c2_1357] : memref<4xf32, #tpu.memory_space<smem>>
    %1853 = vector.broadcast %1852 : f32 to vector<4x4xf32>
    %1854 = arith.addf %1851, %1853 : vector<4x4xf32>
    %cst_1358 = arith.constant 0.000000e+00 : f32
    %1855 = vector.broadcast %cst_1358 : f32 to vector<4x4xf32>
    %1856 = arith.maximumf %1854, %1855 : vector<4x4xf32>
    %c14_1359 = arith.constant 14 : index
    %c0_1360 = arith.constant 0 : index
    %c0_1361 = arith.constant 0 : index
    %1857 = vector.load %arg12[%c14_1359, %c0_1360, %c0_1361] : memref<16x5x5xf32, #tpu.memory_space<vmem>>, vector<1x5x5xf32>
    %1858 = vector.shape_cast %1857 : vector<1x5x5xf32> to vector<5x5xf32>
    %1859 = vector.shape_cast %0 : vector<5x5xf32> to vector<1x5x5xf32>
    tpu.vector_store %arg12[%c14_1359, %c0_1360, %c0_1361], %1859 {strides = array<i32>} : memref<16x5x5xf32, #tpu.memory_space<vmem>>, vector<1x5x5xf32>,
    %c14_1362 = arith.constant 14 : index
    %c1_1363 = arith.constant 1 : index
    %c1_1364 = arith.constant 1 : index
    %1860 = vector.load %arg12[%c14_1362, %c1_1363, %c1_1364] : memref<16x5x5xf32, #tpu.memory_space<vmem>>, vector<1x4x4xf32>
    %1861 = vector.shape_cast %1860 : vector<1x4x4xf32> to vector<4x4xf32>
    %1862 = vector.shape_cast %1856 : vector<4x4xf32> to vector<1x4x4xf32>
    tpu.vector_store %arg12[%c14_1362, %c1_1363, %c1_1364], %1862 {strides = array<i32>} : memref<16x5x5xf32, #tpu.memory_space<vmem>>, vector<1x4x4xf32>,
    %c3_1365 = arith.constant 3 : index
    %1863 = memref.load %arg4[%c3_1365] : memref<16xf32, #tpu.memory_space<smem>>
    %1864 = vector.broadcast %1863 : f32 to vector<4x4xf32>
    %1865 = arith.mulf %1864, %1604 : vector<4x4xf32>
    %1866 = arith.addf %1, %1865 : vector<4x4xf32>
    %c7_1366 = arith.constant 7 : index
    %1867 = memref.load %arg4[%c7_1366] : memref<16xf32, #tpu.memory_space<smem>>
    %1868 = vector.broadcast %1867 : f32 to vector<4x4xf32>
    %1869 = arith.mulf %1868, %1663 : vector<4x4xf32>
    %1870 = arith.addf %1866, %1869 : vector<4x4xf32>
    %c11_1367 = arith.constant 11 : index
    %1871 = memref.load %arg4[%c11_1367] : memref<16xf32, #tpu.memory_space<smem>>
    %1872 = vector.broadcast %1871 : f32 to vector<4x4xf32>
    %1873 = arith.mulf %1872, %1722 : vector<4x4xf32>
    %1874 = arith.addf %1870, %1873 : vector<4x4xf32>
    %c15_1368 = arith.constant 15 : index
    %1875 = memref.load %arg4[%c15_1368] : memref<16xf32, #tpu.memory_space<smem>>
    %1876 = vector.broadcast %1875 : f32 to vector<4x4xf32>
    %1877 = arith.mulf %1876, %1781 : vector<4x4xf32>
    %1878 = arith.addf %1874, %1877 : vector<4x4xf32>
    %c3_1369 = arith.constant 3 : index
    %1879 = memref.load %arg5[%c3_1369] : memref<4xf32, #tpu.memory_space<smem>>
    %1880 = vector.broadcast %1879 : f32 to vector<4x4xf32>
    %1881 = arith.addf %1878, %1880 : vector<4x4xf32>
    %cst_1370 = arith.constant 0.000000e+00 : f32
    %1882 = vector.broadcast %cst_1370 : f32 to vector<4x4xf32>
    %1883 = arith.maximumf %1881, %1882 : vector<4x4xf32>
    %c15_1371 = arith.constant 15 : index
    %c0_1372 = arith.constant 0 : index
    %c0_1373 = arith.constant 0 : index
    %1884 = vector.load %arg12[%c15_1371, %c0_1372, %c0_1373] : memref<16x5x5xf32, #tpu.memory_space<vmem>>, vector<1x5x5xf32>
    %1885 = vector.shape_cast %1884 : vector<1x5x5xf32> to vector<5x5xf32>
    %1886 = vector.shape_cast %0 : vector<5x5xf32> to vector<1x5x5xf32>
    tpu.vector_store %arg12[%c15_1371, %c0_1372, %c0_1373], %1886 {strides = array<i32>} : memref<16x5x5xf32, #tpu.memory_space<vmem>>, vector<1x5x5xf32>,
    %c15_1374 = arith.constant 15 : index
    %c1_1375 = arith.constant 1 : index
    %c1_1376 = arith.constant 1 : index
    %1887 = vector.load %arg12[%c15_1374, %c1_1375, %c1_1376] : memref<16x5x5xf32, #tpu.memory_space<vmem>>, vector<1x4x4xf32>
    %1888 = vector.shape_cast %1887 : vector<1x4x4xf32> to vector<4x4xf32>
    %1889 = vector.shape_cast %1883 : vector<4x4xf32> to vector<1x4x4xf32>
    tpu.vector_store %arg12[%c15_1374, %c1_1375, %c1_1376], %1889 {strides = array<i32>} : memref<16x5x5xf32, #tpu.memory_space<vmem>>, vector<1x4x4xf32>,
    %c0_1377 = arith.constant 0 : index
    %1890 = memref.load %arg6[%c0_1377] : memref<36xf32, #tpu.memory_space<smem>>
    %c12_1378 = arith.constant 12 : index
    %c0_1379 = arith.constant 0 : index
    %c0_1380 = arith.constant 0 : index
    %1891 = vector.load %arg12[%c12_1378, %c0_1379, %c0_1380] : memref<16x5x5xf32, #tpu.memory_space<vmem>>, vector<1x4x4xf32>
    %1892 = vector.shape_cast %1891 : vector<1x4x4xf32> to vector<4x4xf32>
    %1893 = vector.broadcast %1890 : f32 to vector<4x4xf32>
    %1894 = arith.mulf %1893, %1892 : vector<4x4xf32>
    %1895 = arith.addf %1, %1894 : vector<4x4xf32>
    %c4_1381 = arith.constant 4 : index
    %1896 = memref.load %arg6[%c4_1381] : memref<36xf32, #tpu.memory_space<smem>>
    %c8_1382 = arith.constant 8 : index
    %c0_1383 = arith.constant 0 : index
    %c1_1384 = arith.constant 1 : index
    %1897 = vector.load %arg12[%c8_1382, %c0_1383, %c1_1384] : memref<16x5x5xf32, #tpu.memory_space<vmem>>, vector<1x4x4xf32>
    %1898 = vector.shape_cast %1897 : vector<1x4x4xf32> to vector<4x4xf32>
    %1899 = vector.broadcast %1896 : f32 to vector<4x4xf32>
    %1900 = arith.mulf %1899, %1898 : vector<4x4xf32>
    %1901 = arith.addf %1895, %1900 : vector<4x4xf32>
    %c8_1385 = arith.constant 8 : index
    %1902 = memref.load %arg6[%c8_1385] : memref<36xf32, #tpu.memory_space<smem>>
    %c12_1386 = arith.constant 12 : index
    %c0_1387 = arith.constant 0 : index
    %c1_1388 = arith.constant 1 : index
    %1903 = vector.load %arg12[%c12_1386, %c0_1387, %c1_1388] : memref<16x5x5xf32, #tpu.memory_space<vmem>>, vector<1x4x4xf32>
    %1904 = vector.shape_cast %1903 : vector<1x4x4xf32> to vector<4x4xf32>
    %1905 = vector.broadcast %1902 : f32 to vector<4x4xf32>
    %1906 = arith.mulf %1905, %1904 : vector<4x4xf32>
    %1907 = arith.addf %1901, %1906 : vector<4x4xf32>
    %c12_1389 = arith.constant 12 : index
    %1908 = memref.load %arg6[%c12_1389] : memref<36xf32, #tpu.memory_space<smem>>
    %c4_1390 = arith.constant 4 : index
    %c1_1391 = arith.constant 1 : index
    %c0_1392 = arith.constant 0 : index
    %1909 = vector.load %arg12[%c4_1390, %c1_1391, %c0_1392] : memref<16x5x5xf32, #tpu.memory_space<vmem>>, vector<1x4x4xf32>
    %1910 = vector.shape_cast %1909 : vector<1x4x4xf32> to vector<4x4xf32>
    %1911 = vector.broadcast %1908 : f32 to vector<4x4xf32>
    %1912 = arith.mulf %1911, %1910 : vector<4x4xf32>
    %1913 = arith.addf %1907, %1912 : vector<4x4xf32>
    %c16_1393 = arith.constant 16 : index
    %1914 = memref.load %arg6[%c16_1393] : memref<36xf32, #tpu.memory_space<smem>>
    %c0_1394 = arith.constant 0 : index
    %c1_1395 = arith.constant 1 : index
    %c1_1396 = arith.constant 1 : index
    %1915 = vector.load %arg12[%c0_1394, %c1_1395, %c1_1396] : memref<16x5x5xf32, #tpu.memory_space<vmem>>, vector<1x4x4xf32>
    %1916 = vector.shape_cast %1915 : vector<1x4x4xf32> to vector<4x4xf32>
    %1917 = vector.broadcast %1914 : f32 to vector<4x4xf32>
    %1918 = arith.mulf %1917, %1916 : vector<4x4xf32>
    %1919 = arith.addf %1913, %1918 : vector<4x4xf32>
    %c20_1397 = arith.constant 20 : index
    %1920 = memref.load %arg6[%c20_1397] : memref<36xf32, #tpu.memory_space<smem>>
    %c4_1398 = arith.constant 4 : index
    %c1_1399 = arith.constant 1 : index
    %c1_1400 = arith.constant 1 : index
    %1921 = vector.load %arg12[%c4_1398, %c1_1399, %c1_1400] : memref<16x5x5xf32, #tpu.memory_space<vmem>>, vector<1x4x4xf32>
    %1922 = vector.shape_cast %1921 : vector<1x4x4xf32> to vector<4x4xf32>
    %1923 = vector.broadcast %1920 : f32 to vector<4x4xf32>
    %1924 = arith.mulf %1923, %1922 : vector<4x4xf32>
    %1925 = arith.addf %1919, %1924 : vector<4x4xf32>
    %c24_1401 = arith.constant 24 : index
    %1926 = memref.load %arg6[%c24_1401] : memref<36xf32, #tpu.memory_space<smem>>
    %c12_1402 = arith.constant 12 : index
    %c1_1403 = arith.constant 1 : index
    %c0_1404 = arith.constant 0 : index
    %1927 = vector.load %arg12[%c12_1402, %c1_1403, %c0_1404] : memref<16x5x5xf32, #tpu.memory_space<vmem>>, vector<1x4x4xf32>
    %1928 = vector.shape_cast %1927 : vector<1x4x4xf32> to vector<4x4xf32>
    %1929 = vector.broadcast %1926 : f32 to vector<4x4xf32>
    %1930 = arith.mulf %1929, %1928 : vector<4x4xf32>
    %1931 = arith.addf %1925, %1930 : vector<4x4xf32>
    %c28_1405 = arith.constant 28 : index
    %1932 = memref.load %arg6[%c28_1405] : memref<36xf32, #tpu.memory_space<smem>>
    %c8_1406 = arith.constant 8 : index
    %c1_1407 = arith.constant 1 : index
    %c1_1408 = arith.constant 1 : index
    %1933 = vector.load %arg12[%c8_1406, %c1_1407, %c1_1408] : memref<16x5x5xf32, #tpu.memory_space<vmem>>, vector<1x4x4xf32>
    %1934 = vector.shape_cast %1933 : vector<1x4x4xf32> to vector<4x4xf32>
    %1935 = vector.broadcast %1932 : f32 to vector<4x4xf32>
    %1936 = arith.mulf %1935, %1934 : vector<4x4xf32>
    %1937 = arith.addf %1931, %1936 : vector<4x4xf32>
    %c32_1409 = arith.constant 32 : index
    %1938 = memref.load %arg6[%c32_1409] : memref<36xf32, #tpu.memory_space<smem>>
    %c12_1410 = arith.constant 12 : index
    %c1_1411 = arith.constant 1 : index
    %c1_1412 = arith.constant 1 : index
    %1939 = vector.load %arg12[%c12_1410, %c1_1411, %c1_1412] : memref<16x5x5xf32, #tpu.memory_space<vmem>>, vector<1x4x4xf32>
    %1940 = vector.shape_cast %1939 : vector<1x4x4xf32> to vector<4x4xf32>
    %1941 = vector.broadcast %1938 : f32 to vector<4x4xf32>
    %1942 = arith.mulf %1941, %1940 : vector<4x4xf32>
    %1943 = arith.addf %1937, %1942 : vector<4x4xf32>
    %c0_1413 = arith.constant 0 : index
    %1944 = memref.load %arg7[%c0_1413] : memref<4xf32, #tpu.memory_space<smem>>
    %1945 = vector.broadcast %1944 : f32 to vector<4x4xf32>
    %1946 = arith.addf %1943, %1945 : vector<4x4xf32>
    %cst_1414 = arith.constant 0.000000e+00 : f32
    %1947 = vector.broadcast %cst_1414 : f32 to vector<4x4xf32>
    %1948 = arith.maximumf %1946, %1947 : vector<4x4xf32>
    %c1_1415 = arith.constant 1 : index
    %1949 = memref.load %arg6[%c1_1415] : memref<36xf32, #tpu.memory_space<smem>>
    %c13_1416 = arith.constant 13 : index
    %c0_1417 = arith.constant 0 : index
    %c0_1418 = arith.constant 0 : index
    %1950 = vector.load %arg12[%c13_1416, %c0_1417, %c0_1418] : memref<16x5x5xf32, #tpu.memory_space<vmem>>, vector<1x4x4xf32>
    %1951 = vector.shape_cast %1950 : vector<1x4x4xf32> to vector<4x4xf32>
    %1952 = vector.broadcast %1949 : f32 to vector<4x4xf32>
    %1953 = arith.mulf %1952, %1951 : vector<4x4xf32>
    %1954 = arith.addf %1, %1953 : vector<4x4xf32>
    %c5_1419 = arith.constant 5 : index
    %1955 = memref.load %arg6[%c5_1419] : memref<36xf32, #tpu.memory_space<smem>>
    %c9_1420 = arith.constant 9 : index
    %c0_1421 = arith.constant 0 : index
    %c1_1422 = arith.constant 1 : index
    %1956 = vector.load %arg12[%c9_1420, %c0_1421, %c1_1422] : memref<16x5x5xf32, #tpu.memory_space<vmem>>, vector<1x4x4xf32>
    %1957 = vector.shape_cast %1956 : vector<1x4x4xf32> to vector<4x4xf32>
    %1958 = vector.broadcast %1955 : f32 to vector<4x4xf32>
    %1959 = arith.mulf %1958, %1957 : vector<4x4xf32>
    %1960 = arith.addf %1954, %1959 : vector<4x4xf32>
    %c9_1423 = arith.constant 9 : index
    %1961 = memref.load %arg6[%c9_1423] : memref<36xf32, #tpu.memory_space<smem>>
    %c13_1424 = arith.constant 13 : index
    %c0_1425 = arith.constant 0 : index
    %c1_1426 = arith.constant 1 : index
    %1962 = vector.load %arg12[%c13_1424, %c0_1425, %c1_1426] : memref<16x5x5xf32, #tpu.memory_space<vmem>>, vector<1x4x4xf32>
    %1963 = vector.shape_cast %1962 : vector<1x4x4xf32> to vector<4x4xf32>
    %1964 = vector.broadcast %1961 : f32 to vector<4x4xf32>
    %1965 = arith.mulf %1964, %1963 : vector<4x4xf32>
    %1966 = arith.addf %1960, %1965 : vector<4x4xf32>
    %c13_1427 = arith.constant 13 : index
    %1967 = memref.load %arg6[%c13_1427] : memref<36xf32, #tpu.memory_space<smem>>
    %c5_1428 = arith.constant 5 : index
    %c1_1429 = arith.constant 1 : index
    %c0_1430 = arith.constant 0 : index
    %1968 = vector.load %arg12[%c5_1428, %c1_1429, %c0_1430] : memref<16x5x5xf32, #tpu.memory_space<vmem>>, vector<1x4x4xf32>
    %1969 = vector.shape_cast %1968 : vector<1x4x4xf32> to vector<4x4xf32>
    %1970 = vector.broadcast %1967 : f32 to vector<4x4xf32>
    %1971 = arith.mulf %1970, %1969 : vector<4x4xf32>
    %1972 = arith.addf %1966, %1971 : vector<4x4xf32>
    %c17_1431 = arith.constant 17 : index
    %1973 = memref.load %arg6[%c17_1431] : memref<36xf32, #tpu.memory_space<smem>>
    %c1_1432 = arith.constant 1 : index
    %c1_1433 = arith.constant 1 : index
    %c1_1434 = arith.constant 1 : index
    %1974 = vector.load %arg12[%c1_1432, %c1_1433, %c1_1434] : memref<16x5x5xf32, #tpu.memory_space<vmem>>, vector<1x4x4xf32>
    %1975 = vector.shape_cast %1974 : vector<1x4x4xf32> to vector<4x4xf32>
    %1976 = vector.broadcast %1973 : f32 to vector<4x4xf32>
    %1977 = arith.mulf %1976, %1975 : vector<4x4xf32>
    %1978 = arith.addf %1972, %1977 : vector<4x4xf32>
    %c21_1435 = arith.constant 21 : index
    %1979 = memref.load %arg6[%c21_1435] : memref<36xf32, #tpu.memory_space<smem>>
    %c5_1436 = arith.constant 5 : index
    %c1_1437 = arith.constant 1 : index
    %c1_1438 = arith.constant 1 : index
    %1980 = vector.load %arg12[%c5_1436, %c1_1437, %c1_1438] : memref<16x5x5xf32, #tpu.memory_space<vmem>>, vector<1x4x4xf32>
    %1981 = vector.shape_cast %1980 : vector<1x4x4xf32> to vector<4x4xf32>
    %1982 = vector.broadcast %1979 : f32 to vector<4x4xf32>
    %1983 = arith.mulf %1982, %1981 : vector<4x4xf32>
    %1984 = arith.addf %1978, %1983 : vector<4x4xf32>
    %c25_1439 = arith.constant 25 : index
    %1985 = memref.load %arg6[%c25_1439] : memref<36xf32, #tpu.memory_space<smem>>
    %c13_1440 = arith.constant 13 : index
    %c1_1441 = arith.constant 1 : index
    %c0_1442 = arith.constant 0 : index
    %1986 = vector.load %arg12[%c13_1440, %c1_1441, %c0_1442] : memref<16x5x5xf32, #tpu.memory_space<vmem>>, vector<1x4x4xf32>
    %1987 = vector.shape_cast %1986 : vector<1x4x4xf32> to vector<4x4xf32>
    %1988 = vector.broadcast %1985 : f32 to vector<4x4xf32>
    %1989 = arith.mulf %1988, %1987 : vector<4x4xf32>
    %1990 = arith.addf %1984, %1989 : vector<4x4xf32>
    %c29_1443 = arith.constant 29 : index
    %1991 = memref.load %arg6[%c29_1443] : memref<36xf32, #tpu.memory_space<smem>>
    %c9_1444 = arith.constant 9 : index
    %c1_1445 = arith.constant 1 : index
    %c1_1446 = arith.constant 1 : index
    %1992 = vector.load %arg12[%c9_1444, %c1_1445, %c1_1446] : memref<16x5x5xf32, #tpu.memory_space<vmem>>, vector<1x4x4xf32>
    %1993 = vector.shape_cast %1992 : vector<1x4x4xf32> to vector<4x4xf32>
    %1994 = vector.broadcast %1991 : f32 to vector<4x4xf32>
    %1995 = arith.mulf %1994, %1993 : vector<4x4xf32>
    %1996 = arith.addf %1990, %1995 : vector<4x4xf32>
    %c33_1447 = arith.constant 33 : index
    %1997 = memref.load %arg6[%c33_1447] : memref<36xf32, #tpu.memory_space<smem>>
    %c13_1448 = arith.constant 13 : index
    %c1_1449 = arith.constant 1 : index
    %c1_1450 = arith.constant 1 : index
    %1998 = vector.load %arg12[%c13_1448, %c1_1449, %c1_1450] : memref<16x5x5xf32, #tpu.memory_space<vmem>>, vector<1x4x4xf32>
    %1999 = vector.shape_cast %1998 : vector<1x4x4xf32> to vector<4x4xf32>
    %2000 = vector.broadcast %1997 : f32 to vector<4x4xf32>
    %2001 = arith.mulf %2000, %1999 : vector<4x4xf32>
    %2002 = arith.addf %1996, %2001 : vector<4x4xf32>
    %c1_1451 = arith.constant 1 : index
    %2003 = memref.load %arg7[%c1_1451] : memref<4xf32, #tpu.memory_space<smem>>
    %2004 = vector.broadcast %2003 : f32 to vector<4x4xf32>
    %2005 = arith.addf %2002, %2004 : vector<4x4xf32>
    %cst_1452 = arith.constant 0.000000e+00 : f32
    %2006 = vector.broadcast %cst_1452 : f32 to vector<4x4xf32>
    %2007 = arith.maximumf %2005, %2006 : vector<4x4xf32>
    %c2_1453 = arith.constant 2 : index
    %2008 = memref.load %arg6[%c2_1453] : memref<36xf32, #tpu.memory_space<smem>>
    %c14_1454 = arith.constant 14 : index
    %c0_1455 = arith.constant 0 : index
    %c0_1456 = arith.constant 0 : index
    %2009 = vector.load %arg12[%c14_1454, %c0_1455, %c0_1456] : memref<16x5x5xf32, #tpu.memory_space<vmem>>, vector<1x4x4xf32>
    %2010 = vector.shape_cast %2009 : vector<1x4x4xf32> to vector<4x4xf32>
    %2011 = vector.broadcast %2008 : f32 to vector<4x4xf32>
    %2012 = arith.mulf %2011, %2010 : vector<4x4xf32>
    %2013 = arith.addf %1, %2012 : vector<4x4xf32>
    %c6_1457 = arith.constant 6 : index
    %2014 = memref.load %arg6[%c6_1457] : memref<36xf32, #tpu.memory_space<smem>>
    %c10_1458 = arith.constant 10 : index
    %c0_1459 = arith.constant 0 : index
    %c1_1460 = arith.constant 1 : index
    %2015 = vector.load %arg12[%c10_1458, %c0_1459, %c1_1460] : memref<16x5x5xf32, #tpu.memory_space<vmem>>, vector<1x4x4xf32>
    %2016 = vector.shape_cast %2015 : vector<1x4x4xf32> to vector<4x4xf32>
    %2017 = vector.broadcast %2014 : f32 to vector<4x4xf32>
    %2018 = arith.mulf %2017, %2016 : vector<4x4xf32>
    %2019 = arith.addf %2013, %2018 : vector<4x4xf32>
    %c10_1461 = arith.constant 10 : index
    %2020 = memref.load %arg6[%c10_1461] : memref<36xf32, #tpu.memory_space<smem>>
    %c14_1462 = arith.constant 14 : index
    %c0_1463 = arith.constant 0 : index
    %c1_1464 = arith.constant 1 : index
    %2021 = vector.load %arg12[%c14_1462, %c0_1463, %c1_1464] : memref<16x5x5xf32, #tpu.memory_space<vmem>>, vector<1x4x4xf32>
    %2022 = vector.shape_cast %2021 : vector<1x4x4xf32> to vector<4x4xf32>
    %2023 = vector.broadcast %2020 : f32 to vector<4x4xf32>
    %2024 = arith.mulf %2023, %2022 : vector<4x4xf32>
    %2025 = arith.addf %2019, %2024 : vector<4x4xf32>
    %c14_1465 = arith.constant 14 : index
    %2026 = memref.load %arg6[%c14_1465] : memref<36xf32, #tpu.memory_space<smem>>
    %c6_1466 = arith.constant 6 : index
    %c1_1467 = arith.constant 1 : index
    %c0_1468 = arith.constant 0 : index
    %2027 = vector.load %arg12[%c6_1466, %c1_1467, %c0_1468] : memref<16x5x5xf32, #tpu.memory_space<vmem>>, vector<1x4x4xf32>
    %2028 = vector.shape_cast %2027 : vector<1x4x4xf32> to vector<4x4xf32>
    %2029 = vector.broadcast %2026 : f32 to vector<4x4xf32>
    %2030 = arith.mulf %2029, %2028 : vector<4x4xf32>
    %2031 = arith.addf %2025, %2030 : vector<4x4xf32>
    %c18_1469 = arith.constant 18 : index
    %2032 = memref.load %arg6[%c18_1469] : memref<36xf32, #tpu.memory_space<smem>>
    %c2_1470 = arith.constant 2 : index
    %c1_1471 = arith.constant 1 : index
    %c1_1472 = arith.constant 1 : index
    %2033 = vector.load %arg12[%c2_1470, %c1_1471, %c1_1472] : memref<16x5x5xf32, #tpu.memory_space<vmem>>, vector<1x4x4xf32>
    %2034 = vector.shape_cast %2033 : vector<1x4x4xf32> to vector<4x4xf32>
    %2035 = vector.broadcast %2032 : f32 to vector<4x4xf32>
    %2036 = arith.mulf %2035, %2034 : vector<4x4xf32>
    %2037 = arith.addf %2031, %2036 : vector<4x4xf32>
    %c22_1473 = arith.constant 22 : index
    %2038 = memref.load %arg6[%c22_1473] : memref<36xf32, #tpu.memory_space<smem>>
    %c6_1474 = arith.constant 6 : index
    %c1_1475 = arith.constant 1 : index
    %c1_1476 = arith.constant 1 : index
    %2039 = vector.load %arg12[%c6_1474, %c1_1475, %c1_1476] : memref<16x5x5xf32, #tpu.memory_space<vmem>>, vector<1x4x4xf32>
    %2040 = vector.shape_cast %2039 : vector<1x4x4xf32> to vector<4x4xf32>
    %2041 = vector.broadcast %2038 : f32 to vector<4x4xf32>
    %2042 = arith.mulf %2041, %2040 : vector<4x4xf32>
    %2043 = arith.addf %2037, %2042 : vector<4x4xf32>
    %c26_1477 = arith.constant 26 : index
    %2044 = memref.load %arg6[%c26_1477] : memref<36xf32, #tpu.memory_space<smem>>
    %c14_1478 = arith.constant 14 : index
    %c1_1479 = arith.constant 1 : index
    %c0_1480 = arith.constant 0 : index
    %2045 = vector.load %arg12[%c14_1478, %c1_1479, %c0_1480] : memref<16x5x5xf32, #tpu.memory_space<vmem>>, vector<1x4x4xf32>
    %2046 = vector.shape_cast %2045 : vector<1x4x4xf32> to vector<4x4xf32>
    %2047 = vector.broadcast %2044 : f32 to vector<4x4xf32>
    %2048 = arith.mulf %2047, %2046 : vector<4x4xf32>
    %2049 = arith.addf %2043, %2048 : vector<4x4xf32>
    %c30_1481 = arith.constant 30 : index
    %2050 = memref.load %arg6[%c30_1481] : memref<36xf32, #tpu.memory_space<smem>>
    %c10_1482 = arith.constant 10 : index
    %c1_1483 = arith.constant 1 : index
    %c1_1484 = arith.constant 1 : index
    %2051 = vector.load %arg12[%c10_1482, %c1_1483, %c1_1484] : memref<16x5x5xf32, #tpu.memory_space<vmem>>, vector<1x4x4xf32>
    %2052 = vector.shape_cast %2051 : vector<1x4x4xf32> to vector<4x4xf32>
    %2053 = vector.broadcast %2050 : f32 to vector<4x4xf32>
    %2054 = arith.mulf %2053, %2052 : vector<4x4xf32>
    %2055 = arith.addf %2049, %2054 : vector<4x4xf32>
    %c34_1485 = arith.constant 34 : index
    %2056 = memref.load %arg6[%c34_1485] : memref<36xf32, #tpu.memory_space<smem>>
    %c14_1486 = arith.constant 14 : index
    %c1_1487 = arith.constant 1 : index
    %c1_1488 = arith.constant 1 : index
    %2057 = vector.load %arg12[%c14_1486, %c1_1487, %c1_1488] : memref<16x5x5xf32, #tpu.memory_space<vmem>>, vector<1x4x4xf32>
    %2058 = vector.shape_cast %2057 : vector<1x4x4xf32> to vector<4x4xf32>
    %2059 = vector.broadcast %2056 : f32 to vector<4x4xf32>
    %2060 = arith.mulf %2059, %2058 : vector<4x4xf32>
    %2061 = arith.addf %2055, %2060 : vector<4x4xf32>
    %c2_1489 = arith.constant 2 : index
    %2062 = memref.load %arg7[%c2_1489] : memref<4xf32, #tpu.memory_space<smem>>
    %2063 = vector.broadcast %2062 : f32 to vector<4x4xf32>
    %2064 = arith.addf %2061, %2063 : vector<4x4xf32>
    %cst_1490 = arith.constant 0.000000e+00 : f32
    %2065 = vector.broadcast %cst_1490 : f32 to vector<4x4xf32>
    %2066 = arith.maximumf %2064, %2065 : vector<4x4xf32>
    %c3_1491 = arith.constant 3 : index
    %2067 = memref.load %arg6[%c3_1491] : memref<36xf32, #tpu.memory_space<smem>>
    %c15_1492 = arith.constant 15 : index
    %c0_1493 = arith.constant 0 : index
    %c0_1494 = arith.constant 0 : index
    %2068 = vector.load %arg12[%c15_1492, %c0_1493, %c0_1494] : memref<16x5x5xf32, #tpu.memory_space<vmem>>, vector<1x4x4xf32>
    %2069 = vector.shape_cast %2068 : vector<1x4x4xf32> to vector<4x4xf32>
    %2070 = vector.broadcast %2067 : f32 to vector<4x4xf32>
    %2071 = arith.mulf %2070, %2069 : vector<4x4xf32>
    %2072 = arith.addf %1, %2071 : vector<4x4xf32>
    %c7_1495 = arith.constant 7 : index
    %2073 = memref.load %arg6[%c7_1495] : memref<36xf32, #tpu.memory_space<smem>>
    %c11_1496 = arith.constant 11 : index
    %c0_1497 = arith.constant 0 : index
    %c1_1498 = arith.constant 1 : index
    %2074 = vector.load %arg12[%c11_1496, %c0_1497, %c1_1498] : memref<16x5x5xf32, #tpu.memory_space<vmem>>, vector<1x4x4xf32>
    %2075 = vector.shape_cast %2074 : vector<1x4x4xf32> to vector<4x4xf32>
    %2076 = vector.broadcast %2073 : f32 to vector<4x4xf32>
    %2077 = arith.mulf %2076, %2075 : vector<4x4xf32>
    %2078 = arith.addf %2072, %2077 : vector<4x4xf32>
    %c11_1499 = arith.constant 11 : index
    %2079 = memref.load %arg6[%c11_1499] : memref<36xf32, #tpu.memory_space<smem>>
    %c15_1500 = arith.constant 15 : index
    %c0_1501 = arith.constant 0 : index
    %c1_1502 = arith.constant 1 : index
    %2080 = vector.load %arg12[%c15_1500, %c0_1501, %c1_1502] : memref<16x5x5xf32, #tpu.memory_space<vmem>>, vector<1x4x4xf32>
    %2081 = vector.shape_cast %2080 : vector<1x4x4xf32> to vector<4x4xf32>
    %2082 = vector.broadcast %2079 : f32 to vector<4x4xf32>
    %2083 = arith.mulf %2082, %2081 : vector<4x4xf32>
    %2084 = arith.addf %2078, %2083 : vector<4x4xf32>
    %c15_1503 = arith.constant 15 : index
    %2085 = memref.load %arg6[%c15_1503] : memref<36xf32, #tpu.memory_space<smem>>
    %c7_1504 = arith.constant 7 : index
    %c1_1505 = arith.constant 1 : index
    %c0_1506 = arith.constant 0 : index
    %2086 = vector.load %arg12[%c7_1504, %c1_1505, %c0_1506] : memref<16x5x5xf32, #tpu.memory_space<vmem>>, vector<1x4x4xf32>
    %2087 = vector.shape_cast %2086 : vector<1x4x4xf32> to vector<4x4xf32>
    %2088 = vector.broadcast %2085 : f32 to vector<4x4xf32>
    %2089 = arith.mulf %2088, %2087 : vector<4x4xf32>
    %2090 = arith.addf %2084, %2089 : vector<4x4xf32>
    %c19_1507 = arith.constant 19 : index
    %2091 = memref.load %arg6[%c19_1507] : memref<36xf32, #tpu.memory_space<smem>>
    %c3_1508 = arith.constant 3 : index
    %c1_1509 = arith.constant 1 : index
    %c1_1510 = arith.constant 1 : index
    %2092 = vector.load %arg12[%c3_1508, %c1_1509, %c1_1510] : memref<16x5x5xf32, #tpu.memory_space<vmem>>, vector<1x4x4xf32>
    %2093 = vector.shape_cast %2092 : vector<1x4x4xf32> to vector<4x4xf32>
    %2094 = vector.broadcast %2091 : f32 to vector<4x4xf32>
    %2095 = arith.mulf %2094, %2093 : vector<4x4xf32>
    %2096 = arith.addf %2090, %2095 : vector<4x4xf32>
    %c23_1511 = arith.constant 23 : index
    %2097 = memref.load %arg6[%c23_1511] : memref<36xf32, #tpu.memory_space<smem>>
    %c7_1512 = arith.constant 7 : index
    %c1_1513 = arith.constant 1 : index
    %c1_1514 = arith.constant 1 : index
    %2098 = vector.load %arg12[%c7_1512, %c1_1513, %c1_1514] : memref<16x5x5xf32, #tpu.memory_space<vmem>>, vector<1x4x4xf32>
    %2099 = vector.shape_cast %2098 : vector<1x4x4xf32> to vector<4x4xf32>
    %2100 = vector.broadcast %2097 : f32 to vector<4x4xf32>
    %2101 = arith.mulf %2100, %2099 : vector<4x4xf32>
    %2102 = arith.addf %2096, %2101 : vector<4x4xf32>
    %c27_1515 = arith.constant 27 : index
    %2103 = memref.load %arg6[%c27_1515] : memref<36xf32, #tpu.memory_space<smem>>
    %c15_1516 = arith.constant 15 : index
    %c1_1517 = arith.constant 1 : index
    %c0_1518 = arith.constant 0 : index
    %2104 = vector.load %arg12[%c15_1516, %c1_1517, %c0_1518] : memref<16x5x5xf32, #tpu.memory_space<vmem>>, vector<1x4x4xf32>
    %2105 = vector.shape_cast %2104 : vector<1x4x4xf32> to vector<4x4xf32>
    %2106 = vector.broadcast %2103 : f32 to vector<4x4xf32>
    %2107 = arith.mulf %2106, %2105 : vector<4x4xf32>
    %2108 = arith.addf %2102, %2107 : vector<4x4xf32>
    %c31_1519 = arith.constant 31 : index
    %2109 = memref.load %arg6[%c31_1519] : memref<36xf32, #tpu.memory_space<smem>>
    %c11_1520 = arith.constant 11 : index
    %c1_1521 = arith.constant 1 : index
    %c1_1522 = arith.constant 1 : index
    %2110 = vector.load %arg12[%c11_1520, %c1_1521, %c1_1522] : memref<16x5x5xf32, #tpu.memory_space<vmem>>, vector<1x4x4xf32>
    %2111 = vector.shape_cast %2110 : vector<1x4x4xf32> to vector<4x4xf32>
    %2112 = vector.broadcast %2109 : f32 to vector<4x4xf32>
    %2113 = arith.mulf %2112, %2111 : vector<4x4xf32>
    %2114 = arith.addf %2108, %2113 : vector<4x4xf32>
    %c35_1523 = arith.constant 35 : index
    %2115 = memref.load %arg6[%c35_1523] : memref<36xf32, #tpu.memory_space<smem>>
    %c15_1524 = arith.constant 15 : index
    %c1_1525 = arith.constant 1 : index
    %c1_1526 = arith.constant 1 : index
    %2116 = vector.load %arg12[%c15_1524, %c1_1525, %c1_1526] : memref<16x5x5xf32, #tpu.memory_space<vmem>>, vector<1x4x4xf32>
    %2117 = vector.shape_cast %2116 : vector<1x4x4xf32> to vector<4x4xf32>
    %2118 = vector.broadcast %2115 : f32 to vector<4x4xf32>
    %2119 = arith.mulf %2118, %2117 : vector<4x4xf32>
    %2120 = arith.addf %2114, %2119 : vector<4x4xf32>
    %c3_1527 = arith.constant 3 : index
    %2121 = memref.load %arg7[%c3_1527] : memref<4xf32, #tpu.memory_space<smem>>
    %2122 = vector.broadcast %2121 : f32 to vector<4x4xf32>
    %2123 = arith.addf %2120, %2122 : vector<4x4xf32>
    %cst_1528 = arith.constant 0.000000e+00 : f32
    %2124 = vector.broadcast %cst_1528 : f32 to vector<4x4xf32>
    %2125 = arith.maximumf %2123, %2124 : vector<4x4xf32>
    %c0_1529 = arith.constant 0 : index
    %2126 = memref.load %arg8[%c0_1529] : memref<32xf32, #tpu.memory_space<smem>>
    %2127 = vector.broadcast %2126 : f32 to vector<4x4xf32>
    %2128 = arith.mulf %2127, %1948 : vector<4x4xf32>
    %2129 = arith.addf %1, %2128 : vector<4x4xf32>
    %c8_1530 = arith.constant 8 : index
    %2130 = memref.load %arg8[%c8_1530] : memref<32xf32, #tpu.memory_space<smem>>
    %2131 = vector.broadcast %2130 : f32 to vector<4x4xf32>
    %2132 = arith.mulf %2131, %2007 : vector<4x4xf32>
    %2133 = arith.addf %2129, %2132 : vector<4x4xf32>
    %c16_1531 = arith.constant 16 : index
    %2134 = memref.load %arg8[%c16_1531] : memref<32xf32, #tpu.memory_space<smem>>
    %2135 = vector.broadcast %2134 : f32 to vector<4x4xf32>
    %2136 = arith.mulf %2135, %2066 : vector<4x4xf32>
    %2137 = arith.addf %2133, %2136 : vector<4x4xf32>
    %c24_1532 = arith.constant 24 : index
    %2138 = memref.load %arg8[%c24_1532] : memref<32xf32, #tpu.memory_space<smem>>
    %2139 = vector.broadcast %2138 : f32 to vector<4x4xf32>
    %2140 = arith.mulf %2139, %2125 : vector<4x4xf32>
    %2141 = arith.addf %2137, %2140 : vector<4x4xf32>
    %c0_1533 = arith.constant 0 : index
    %2142 = memref.load %arg9[%c0_1533] : memref<8xf32, #tpu.memory_space<smem>>
    %2143 = vector.broadcast %2142 : f32 to vector<4x4xf32>
    %2144 = arith.addf %2141, %2143 : vector<4x4xf32>
    %cst_1534 = arith.constant 0.000000e+00 : f32
    %2145 = vector.broadcast %cst_1534 : f32 to vector<4x4xf32>
    %2146 = arith.maximumf %2144, %2145 : vector<4x4xf32>
    %c0_1535 = arith.constant 0 : index
    %c0_1536 = arith.constant 0 : index
    %c0_1537 = arith.constant 0 : index
    %c0_1538 = arith.constant 0 : index
    %2147 = vector.load %arg10[%c0_1535, %c0_1536, %c0_1537, %c0_1538] : memref<1x8x4x4xf32, #tpu.memory_space<vmem>>, vector<1x1x4x4xf32>
    %2148 = vector.shape_cast %2147 : vector<1x1x4x4xf32> to vector<4x4xf32>
    %2149 = vector.shape_cast %2146 : vector<4x4xf32> to vector<1x1x4x4xf32>
    tpu.vector_store %arg10[%c0_1535, %c0_1536, %c0_1537, %c0_1538], %2149 {strides = array<i32>} : memref<1x8x4x4xf32, #tpu.memory_space<vmem>>, vector<1x1x4x4xf32>,
    %c1_1539 = arith.constant 1 : index
    %2150 = memref.load %arg8[%c1_1539] : memref<32xf32, #tpu.memory_space<smem>>
    %2151 = vector.broadcast %2150 : f32 to vector<4x4xf32>
    %2152 = arith.mulf %2151, %1948 : vector<4x4xf32>
    %2153 = arith.addf %1, %2152 : vector<4x4xf32>
    %c9_1540 = arith.constant 9 : index
    %2154 = memref.load %arg8[%c9_1540] : memref<32xf32, #tpu.memory_space<smem>>
    %2155 = vector.broadcast %2154 : f32 to vector<4x4xf32>
    %2156 = arith.mulf %2155, %2007 : vector<4x4xf32>
    %2157 = arith.addf %2153, %2156 : vector<4x4xf32>
    %c17_1541 = arith.constant 17 : index
    %2158 = memref.load %arg8[%c17_1541] : memref<32xf32, #tpu.memory_space<smem>>
    %2159 = vector.broadcast %2158 : f32 to vector<4x4xf32>
    %2160 = arith.mulf %2159, %2066 : vector<4x4xf32>
    %2161 = arith.addf %2157, %2160 : vector<4x4xf32>
    %c25_1542 = arith.constant 25 : index
    %2162 = memref.load %arg8[%c25_1542] : memref<32xf32, #tpu.memory_space<smem>>
    %2163 = vector.broadcast %2162 : f32 to vector<4x4xf32>
    %2164 = arith.mulf %2163, %2125 : vector<4x4xf32>
    %2165 = arith.addf %2161, %2164 : vector<4x4xf32>
    %c1_1543 = arith.constant 1 : index
    %2166 = memref.load %arg9[%c1_1543] : memref<8xf32, #tpu.memory_space<smem>>
    %2167 = vector.broadcast %2166 : f32 to vector<4x4xf32>
    %2168 = arith.addf %2165, %2167 : vector<4x4xf32>
    %cst_1544 = arith.constant 0.000000e+00 : f32
    %2169 = vector.broadcast %cst_1544 : f32 to vector<4x4xf32>
    %2170 = arith.maximumf %2168, %2169 : vector<4x4xf32>
    %c0_1545 = arith.constant 0 : index
    %c1_1546 = arith.constant 1 : index
    %c0_1547 = arith.constant 0 : index
    %c0_1548 = arith.constant 0 : index
    %2171 = vector.load %arg10[%c0_1545, %c1_1546, %c0_1547, %c0_1548] : memref<1x8x4x4xf32, #tpu.memory_space<vmem>>, vector<1x1x4x4xf32>
    %2172 = vector.shape_cast %2171 : vector<1x1x4x4xf32> to vector<4x4xf32>
    %2173 = vector.shape_cast %2170 : vector<4x4xf32> to vector<1x1x4x4xf32>
    tpu.vector_store %arg10[%c0_1545, %c1_1546, %c0_1547, %c0_1548], %2173 {strides = array<i32>} : memref<1x8x4x4xf32, #tpu.memory_space<vmem>>, vector<1x1x4x4xf32>,
    %c2_1549 = arith.constant 2 : index
    %2174 = memref.load %arg8[%c2_1549] : memref<32xf32, #tpu.memory_space<smem>>
    %2175 = vector.broadcast %2174 : f32 to vector<4x4xf32>
    %2176 = arith.mulf %2175, %1948 : vector<4x4xf32>
    %2177 = arith.addf %1, %2176 : vector<4x4xf32>
    %c10_1550 = arith.constant 10 : index
    %2178 = memref.load %arg8[%c10_1550] : memref<32xf32, #tpu.memory_space<smem>>
    %2179 = vector.broadcast %2178 : f32 to vector<4x4xf32>
    %2180 = arith.mulf %2179, %2007 : vector<4x4xf32>
    %2181 = arith.addf %2177, %2180 : vector<4x4xf32>
    %c18_1551 = arith.constant 18 : index
    %2182 = memref.load %arg8[%c18_1551] : memref<32xf32, #tpu.memory_space<smem>>
    %2183 = vector.broadcast %2182 : f32 to vector<4x4xf32>
    %2184 = arith.mulf %2183, %2066 : vector<4x4xf32>
    %2185 = arith.addf %2181, %2184 : vector<4x4xf32>
    %c26_1552 = arith.constant 26 : index
    %2186 = memref.load %arg8[%c26_1552] : memref<32xf32, #tpu.memory_space<smem>>
    %2187 = vector.broadcast %2186 : f32 to vector<4x4xf32>
    %2188 = arith.mulf %2187, %2125 : vector<4x4xf32>
    %2189 = arith.addf %2185, %2188 : vector<4x4xf32>
    %c2_1553 = arith.constant 2 : index
    %2190 = memref.load %arg9[%c2_1553] : memref<8xf32, #tpu.memory_space<smem>>
    %2191 = vector.broadcast %2190 : f32 to vector<4x4xf32>
    %2192 = arith.addf %2189, %2191 : vector<4x4xf32>
    %cst_1554 = arith.constant 0.000000e+00 : f32
    %2193 = vector.broadcast %cst_1554 : f32 to vector<4x4xf32>
    %2194 = arith.maximumf %2192, %2193 : vector<4x4xf32>
    %c0_1555 = arith.constant 0 : index
    %c2_1556 = arith.constant 2 : index
    %c0_1557 = arith.constant 0 : index
    %c0_1558 = arith.constant 0 : index
    %2195 = vector.load %arg10[%c0_1555, %c2_1556, %c0_1557, %c0_1558] : memref<1x8x4x4xf32, #tpu.memory_space<vmem>>, vector<1x1x4x4xf32>
    %2196 = vector.shape_cast %2195 : vector<1x1x4x4xf32> to vector<4x4xf32>
    %2197 = vector.shape_cast %2194 : vector<4x4xf32> to vector<1x1x4x4xf32>
    tpu.vector_store %arg10[%c0_1555, %c2_1556, %c0_1557, %c0_1558], %2197 {strides = array<i32>} : memref<1x8x4x4xf32, #tpu.memory_space<vmem>>, vector<1x1x4x4xf32>,
    %c3_1559 = arith.constant 3 : index
    %2198 = memref.load %arg8[%c3_1559] : memref<32xf32, #tpu.memory_space<smem>>
    %2199 = vector.broadcast %2198 : f32 to vector<4x4xf32>
    %2200 = arith.mulf %2199, %1948 : vector<4x4xf32>
    %2201 = arith.addf %1, %2200 : vector<4x4xf32>
    %c11_1560 = arith.constant 11 : index
    %2202 = memref.load %arg8[%c11_1560] : memref<32xf32, #tpu.memory_space<smem>>
    %2203 = vector.broadcast %2202 : f32 to vector<4x4xf32>
    %2204 = arith.mulf %2203, %2007 : vector<4x4xf32>
    %2205 = arith.addf %2201, %2204 : vector<4x4xf32>
    %c19_1561 = arith.constant 19 : index
    %2206 = memref.load %arg8[%c19_1561] : memref<32xf32, #tpu.memory_space<smem>>
    %2207 = vector.broadcast %2206 : f32 to vector<4x4xf32>
    %2208 = arith.mulf %2207, %2066 : vector<4x4xf32>
    %2209 = arith.addf %2205, %2208 : vector<4x4xf32>
    %c27_1562 = arith.constant 27 : index
    %2210 = memref.load %arg8[%c27_1562] : memref<32xf32, #tpu.memory_space<smem>>
    %2211 = vector.broadcast %2210 : f32 to vector<4x4xf32>
    %2212 = arith.mulf %2211, %2125 : vector<4x4xf32>
    %2213 = arith.addf %2209, %2212 : vector<4x4xf32>
    %c3_1563 = arith.constant 3 : index
    %2214 = memref.load %arg9[%c3_1563] : memref<8xf32, #tpu.memory_space<smem>>
    %2215 = vector.broadcast %2214 : f32 to vector<4x4xf32>
    %2216 = arith.addf %2213, %2215 : vector<4x4xf32>
    %cst_1564 = arith.constant 0.000000e+00 : f32
    %2217 = vector.broadcast %cst_1564 : f32 to vector<4x4xf32>
    %2218 = arith.maximumf %2216, %2217 : vector<4x4xf32>
    %c0_1565 = arith.constant 0 : index
    %c3_1566 = arith.constant 3 : index
    %c0_1567 = arith.constant 0 : index
    %c0_1568 = arith.constant 0 : index
    %2219 = vector.load %arg10[%c0_1565, %c3_1566, %c0_1567, %c0_1568] : memref<1x8x4x4xf32, #tpu.memory_space<vmem>>, vector<1x1x4x4xf32>
    %2220 = vector.shape_cast %2219 : vector<1x1x4x4xf32> to vector<4x4xf32>
    %2221 = vector.shape_cast %2218 : vector<4x4xf32> to vector<1x1x4x4xf32>
    tpu.vector_store %arg10[%c0_1565, %c3_1566, %c0_1567, %c0_1568], %2221 {strides = array<i32>} : memref<1x8x4x4xf32, #tpu.memory_space<vmem>>, vector<1x1x4x4xf32>,
    %c4_1569 = arith.constant 4 : index
    %2222 = memref.load %arg8[%c4_1569] : memref<32xf32, #tpu.memory_space<smem>>
    %2223 = vector.broadcast %2222 : f32 to vector<4x4xf32>
    %2224 = arith.mulf %2223, %1948 : vector<4x4xf32>
    %2225 = arith.addf %1, %2224 : vector<4x4xf32>
    %c12_1570 = arith.constant 12 : index
    %2226 = memref.load %arg8[%c12_1570] : memref<32xf32, #tpu.memory_space<smem>>
    %2227 = vector.broadcast %2226 : f32 to vector<4x4xf32>
    %2228 = arith.mulf %2227, %2007 : vector<4x4xf32>
    %2229 = arith.addf %2225, %2228 : vector<4x4xf32>
    %c20_1571 = arith.constant 20 : index
    %2230 = memref.load %arg8[%c20_1571] : memref<32xf32, #tpu.memory_space<smem>>
    %2231 = vector.broadcast %2230 : f32 to vector<4x4xf32>
    %2232 = arith.mulf %2231, %2066 : vector<4x4xf32>
    %2233 = arith.addf %2229, %2232 : vector<4x4xf32>
    %c28_1572 = arith.constant 28 : index
    %2234 = memref.load %arg8[%c28_1572] : memref<32xf32, #tpu.memory_space<smem>>
    %2235 = vector.broadcast %2234 : f32 to vector<4x4xf32>
    %2236 = arith.mulf %2235, %2125 : vector<4x4xf32>
    %2237 = arith.addf %2233, %2236 : vector<4x4xf32>
    %c4_1573 = arith.constant 4 : index
    %2238 = memref.load %arg9[%c4_1573] : memref<8xf32, #tpu.memory_space<smem>>
    %2239 = vector.broadcast %2238 : f32 to vector<4x4xf32>
    %2240 = arith.addf %2237, %2239 : vector<4x4xf32>
    %cst_1574 = arith.constant 0.000000e+00 : f32
    %2241 = vector.broadcast %cst_1574 : f32 to vector<4x4xf32>
    %2242 = arith.maximumf %2240, %2241 : vector<4x4xf32>
    %c0_1575 = arith.constant 0 : index
    %c4_1576 = arith.constant 4 : index
    %c0_1577 = arith.constant 0 : index
    %c0_1578 = arith.constant 0 : index
    %2243 = vector.load %arg10[%c0_1575, %c4_1576, %c0_1577, %c0_1578] : memref<1x8x4x4xf32, #tpu.memory_space<vmem>>, vector<1x1x4x4xf32>
    %2244 = vector.shape_cast %2243 : vector<1x1x4x4xf32> to vector<4x4xf32>
    %2245 = vector.shape_cast %2242 : vector<4x4xf32> to vector<1x1x4x4xf32>
    tpu.vector_store %arg10[%c0_1575, %c4_1576, %c0_1577, %c0_1578], %2245 {strides = array<i32>} : memref<1x8x4x4xf32, #tpu.memory_space<vmem>>, vector<1x1x4x4xf32>,
    %c5_1579 = arith.constant 5 : index
    %2246 = memref.load %arg8[%c5_1579] : memref<32xf32, #tpu.memory_space<smem>>
    %2247 = vector.broadcast %2246 : f32 to vector<4x4xf32>
    %2248 = arith.mulf %2247, %1948 : vector<4x4xf32>
    %2249 = arith.addf %1, %2248 : vector<4x4xf32>
    %c13_1580 = arith.constant 13 : index
    %2250 = memref.load %arg8[%c13_1580] : memref<32xf32, #tpu.memory_space<smem>>
    %2251 = vector.broadcast %2250 : f32 to vector<4x4xf32>
    %2252 = arith.mulf %2251, %2007 : vector<4x4xf32>
    %2253 = arith.addf %2249, %2252 : vector<4x4xf32>
    %c21_1581 = arith.constant 21 : index
    %2254 = memref.load %arg8[%c21_1581] : memref<32xf32, #tpu.memory_space<smem>>
    %2255 = vector.broadcast %2254 : f32 to vector<4x4xf32>
    %2256 = arith.mulf %2255, %2066 : vector<4x4xf32>
    %2257 = arith.addf %2253, %2256 : vector<4x4xf32>
    %c29_1582 = arith.constant 29 : index
    %2258 = memref.load %arg8[%c29_1582] : memref<32xf32, #tpu.memory_space<smem>>
    %2259 = vector.broadcast %2258 : f32 to vector<4x4xf32>
    %2260 = arith.mulf %2259, %2125 : vector<4x4xf32>
    %2261 = arith.addf %2257, %2260 : vector<4x4xf32>
    %c5_1583 = arith.constant 5 : index
    %2262 = memref.load %arg9[%c5_1583] : memref<8xf32, #tpu.memory_space<smem>>
    %2263 = vector.broadcast %2262 : f32 to vector<4x4xf32>
    %2264 = arith.addf %2261, %2263 : vector<4x4xf32>
    %cst_1584 = arith.constant 0.000000e+00 : f32
    %2265 = vector.broadcast %cst_1584 : f32 to vector<4x4xf32>
    %2266 = arith.maximumf %2264, %2265 : vector<4x4xf32>
    %c0_1585 = arith.constant 0 : index
    %c5_1586 = arith.constant 5 : index
    %c0_1587 = arith.constant 0 : index
    %c0_1588 = arith.constant 0 : index
    %2267 = vector.load %arg10[%c0_1585, %c5_1586, %c0_1587, %c0_1588] : memref<1x8x4x4xf32, #tpu.memory_space<vmem>>, vector<1x1x4x4xf32>
    %2268 = vector.shape_cast %2267 : vector<1x1x4x4xf32> to vector<4x4xf32>
    %2269 = vector.shape_cast %2266 : vector<4x4xf32> to vector<1x1x4x4xf32>
    tpu.vector_store %arg10[%c0_1585, %c5_1586, %c0_1587, %c0_1588], %2269 {strides = array<i32>} : memref<1x8x4x4xf32, #tpu.memory_space<vmem>>, vector<1x1x4x4xf32>,
    %c6_1589 = arith.constant 6 : index
    %2270 = memref.load %arg8[%c6_1589] : memref<32xf32, #tpu.memory_space<smem>>
    %2271 = vector.broadcast %2270 : f32 to vector<4x4xf32>
    %2272 = arith.mulf %2271, %1948 : vector<4x4xf32>
    %2273 = arith.addf %1, %2272 : vector<4x4xf32>
    %c14_1590 = arith.constant 14 : index
    %2274 = memref.load %arg8[%c14_1590] : memref<32xf32, #tpu.memory_space<smem>>
    %2275 = vector.broadcast %2274 : f32 to vector<4x4xf32>
    %2276 = arith.mulf %2275, %2007 : vector<4x4xf32>
    %2277 = arith.addf %2273, %2276 : vector<4x4xf32>
    %c22_1591 = arith.constant 22 : index
    %2278 = memref.load %arg8[%c22_1591] : memref<32xf32, #tpu.memory_space<smem>>
    %2279 = vector.broadcast %2278 : f32 to vector<4x4xf32>
    %2280 = arith.mulf %2279, %2066 : vector<4x4xf32>
    %2281 = arith.addf %2277, %2280 : vector<4x4xf32>
    %c30_1592 = arith.constant 30 : index
    %2282 = memref.load %arg8[%c30_1592] : memref<32xf32, #tpu.memory_space<smem>>
    %2283 = vector.broadcast %2282 : f32 to vector<4x4xf32>
    %2284 = arith.mulf %2283, %2125 : vector<4x4xf32>
    %2285 = arith.addf %2281, %2284 : vector<4x4xf32>
    %c6_1593 = arith.constant 6 : index
    %2286 = memref.load %arg9[%c6_1593] : memref<8xf32, #tpu.memory_space<smem>>
    %2287 = vector.broadcast %2286 : f32 to vector<4x4xf32>
    %2288 = arith.addf %2285, %2287 : vector<4x4xf32>
    %cst_1594 = arith.constant 0.000000e+00 : f32
    %2289 = vector.broadcast %cst_1594 : f32 to vector<4x4xf32>
    %2290 = arith.maximumf %2288, %2289 : vector<4x4xf32>
    %c0_1595 = arith.constant 0 : index
    %c6_1596 = arith.constant 6 : index
    %c0_1597 = arith.constant 0 : index
    %c0_1598 = arith.constant 0 : index
    %2291 = vector.load %arg10[%c0_1595, %c6_1596, %c0_1597, %c0_1598] : memref<1x8x4x4xf32, #tpu.memory_space<vmem>>, vector<1x1x4x4xf32>
    %2292 = vector.shape_cast %2291 : vector<1x1x4x4xf32> to vector<4x4xf32>
    %2293 = vector.shape_cast %2290 : vector<4x4xf32> to vector<1x1x4x4xf32>
    tpu.vector_store %arg10[%c0_1595, %c6_1596, %c0_1597, %c0_1598], %2293 {strides = array<i32>} : memref<1x8x4x4xf32, #tpu.memory_space<vmem>>, vector<1x1x4x4xf32>,
    %c7_1599 = arith.constant 7 : index
    %2294 = memref.load %arg8[%c7_1599] : memref<32xf32, #tpu.memory_space<smem>>
    %2295 = vector.broadcast %2294 : f32 to vector<4x4xf32>
    %2296 = arith.mulf %2295, %1948 : vector<4x4xf32>
    %2297 = arith.addf %1, %2296 : vector<4x4xf32>
    %c15_1600 = arith.constant 15 : index
    %2298 = memref.load %arg8[%c15_1600] : memref<32xf32, #tpu.memory_space<smem>>
    %2299 = vector.broadcast %2298 : f32 to vector<4x4xf32>
    %2300 = arith.mulf %2299, %2007 : vector<4x4xf32>
    %2301 = arith.addf %2297, %2300 : vector<4x4xf32>
    %c23_1601 = arith.constant 23 : index
    %2302 = memref.load %arg8[%c23_1601] : memref<32xf32, #tpu.memory_space<smem>>
    %2303 = vector.broadcast %2302 : f32 to vector<4x4xf32>
    %2304 = arith.mulf %2303, %2066 : vector<4x4xf32>
    %2305 = arith.addf %2301, %2304 : vector<4x4xf32>
    %c31_1602 = arith.constant 31 : index
    %2306 = memref.load %arg8[%c31_1602] : memref<32xf32, #tpu.memory_space<smem>>
    %2307 = vector.broadcast %2306 : f32 to vector<4x4xf32>
    %2308 = arith.mulf %2307, %2125 : vector<4x4xf32>
    %2309 = arith.addf %2305, %2308 : vector<4x4xf32>
    %c7_1603 = arith.constant 7 : index
    %2310 = memref.load %arg9[%c7_1603] : memref<8xf32, #tpu.memory_space<smem>>
    %2311 = vector.broadcast %2310 : f32 to vector<4x4xf32>
    %2312 = arith.addf %2309, %2311 : vector<4x4xf32>
    %cst_1604 = arith.constant 0.000000e+00 : f32
    %2313 = vector.broadcast %cst_1604 : f32 to vector<4x4xf32>
    %2314 = arith.maximumf %2312, %2313 : vector<4x4xf32>
    %c0_1605 = arith.constant 0 : index
    %c7_1606 = arith.constant 7 : index
    %c0_1607 = arith.constant 0 : index
    %c0_1608 = arith.constant 0 : index
    %2315 = vector.load %arg10[%c0_1605, %c7_1606, %c0_1607, %c0_1608] : memref<1x8x4x4xf32, #tpu.memory_space<vmem>>, vector<1x1x4x4xf32>
    %2316 = vector.shape_cast %2315 : vector<1x1x4x4xf32> to vector<4x4xf32>
    %2317 = vector.shape_cast %2314 : vector<4x4xf32> to vector<1x1x4x4xf32>
    tpu.vector_store %arg10[%c0_1605, %c7_1606, %c0_1607, %c0_1608], %2317 {strides = array<i32>} : memref<1x8x4x4xf32, #tpu.memory_space<vmem>>, vector<1x1x4x4xf32>,
    return
  }
  func.func @transform_0(%arg0: i32) -> (i32, i32, i32, i32) {
    %c0_i32 = arith.constant 0 : i32
    %c0_i32_0 = arith.constant 0 : i32
    %c0_i32_1 = arith.constant 0 : i32
    %c0_i32_2 = arith.constant 0 : i32
    return %arg0, %c0_i32, %c0_i32_0, %c0_i32_1 : i32, i32, i32, i32
  }
  func.func @transform_1(%arg0: i32) -> i32 {
    %c0_i32 = arith.constant 0 : i32
    %c0_i32_0 = arith.constant 0 : i32
    return %c0_i32 : i32
  }
  func.func @transform_2(%arg0: i32) -> i32 {
    %c0_i32 = arith.constant 0 : i32
    %c0_i32_0 = arith.constant 0 : i32
    return %c0_i32 : i32
  }
  func.func @transform_3(%arg0: i32) -> i32 {
    %c0_i32 = arith.constant 0 : i32
    %c0_i32_0 = arith.constant 0 : i32
    return %c0_i32 : i32
  }
  func.func @transform_4(%arg0: i32) -> i32 {
    %c0_i32 = arith.constant 0 : i32
    %c0_i32_0 = arith.constant 0 : i32
    return %c0_i32 : i32
  }
  func.func @transform_5(%arg0: i32) -> i32 {
    %c0_i32 = arith.constant 0 : i32
    %c0_i32_0 = arith.constant 0 : i32
    return %c0_i32 : i32
  }
  func.func @transform_6(%arg0: i32) -> i32 {
    %c0_i32 = arith.constant 0 : i32
    %c0_i32_0 = arith.constant 0 : i32
    return %c0_i32 : i32
  }
  func.func @transform_7(%arg0: i32) -> i32 {
    %c0_i32 = arith.constant 0 : i32
    %c0_i32_0 = arith.constant 0 : i32
    return %c0_i32 : i32
  }
  func.func @transform_8(%arg0: i32) -> i32 {
    %c0_i32 = arith.constant 0 : i32
    %c0_i32_0 = arith.constant 0 : i32
    return %c0_i32 : i32
  }
  func.func @transform_9(%arg0: i32) -> (i32, i32, i32, i32) {
    %c0_i32 = arith.constant 0 : i32
    %c0_i32_0 = arith.constant 0 : i32
    %c0_i32_1 = arith.constant 0 : i32
    %c0_i32_2 = arith.constant 0 : i32
    return %arg0, %c0_i32, %c0_i32_0, %c0_i32_1 : i32, i32, i32, i32
  }
}

</mosaic_0001>

<llo_original>
// kernel: _lambda_.1
$region0: #{_lambda_.1}
  #allocation0 [shape = 'u32[]', space=smem, size = 0x4, offset = 0x4, fixed_abs, tag = 'smem constant byte address 0x4 - core index']
  #allocation1 [shape = 'u32[72,128]{1,0:T(1,128)}', space=vmem, size = 0x9000, scoped, tag = 'internal scratch']
  #allocation2 [shape = 'f32[64,5,5]{2,1,0:T(8,128)}', space=vmem, size = 0x40000, scoped, tag = 'scratch operand']
  #allocation3 [shape = 'f32[16,5,5]{2,1,0:T(8,128)}', space=vmem, size = 0x10000, scoped, tag = 'scratch operand']
  %s0 = inlined_call_operand.vmem [shape: f32[2,64,4,4], index: 0, kind: input, shape index: {}]
  %s1 = inlined_call_operand.vmem [shape: f32[36], index: 1, kind: input, shape index: {}]
  %s2 = inlined_call_operand.vmem [shape: f32[4], index: 2, kind: input, shape index: {}]
  %s3 = inlined_call_operand.vmem [shape: f32[16], index: 3, kind: input, shape index: {}]
  %s4 = inlined_call_operand.vmem [shape: f32[4], index: 4, kind: input, shape index: {}]
  %s5 = inlined_call_operand.vmem [shape: f32[36], index: 5, kind: input, shape index: {}]
  %s6 = inlined_call_operand.vmem [shape: f32[4], index: 6, kind: input, shape index: {}]
  %s7 = inlined_call_operand.vmem [shape: f32[32], index: 7, kind: input, shape index: {}]
  %s8 = inlined_call_operand.vmem [shape: f32[8], index: 8, kind: input, shape index: {}]
  %s9 = inlined_call_operand.vmem [shape: f32[2,8,4,4], index: 9, kind: output, shape index: {}]
  %s10 = sld [smem:[#allocation0]]
  $region101: #{_lambda_.1} parent=0
    _
  %s12 = ssub.s32 1, %s10
  %s13 = scalar_select 0, %s12, %s10
  $region1: #{_lambda_.1} parent=0
    #allocation4 [shape = 'u8[512]{0}', space=smem, size = 0x200, scoped, tag = 'input window, operand 1, single buffered']
    #allocation5 [shape = 's32[2]{0}', space=sflag, size = 0x8, scoped, tag = 'scoped memory for _lambda_.1']
    #allocation6 [shape = 'u8[512]{0}', space=smem, size = 0x200, scoped, tag = 'input window, operand 2, single buffered']
    #allocation7 [shape = 's32[1]{0}', space=sflag, size = 0x4, scoped, tag = 'scoped memory for _lambda_.1']
    #allocation8 [shape = 'u8[512]{0}', space=smem, size = 0x200, scoped, tag = 'input window, operand 3, single buffered']
    #allocation9 [shape = 'u8[512]{0}', space=smem, size = 0x200, scoped, tag = 'input window, operand 4, single buffered']
    #allocation10 [shape = 's32[1]{0}', space=sflag, size = 0x4, scoped, tag = 'scoped memory for _lambda_.1']
    #allocation11 [shape = 'u8[512]{0}', space=smem, size = 0x200, scoped, tag = 'input window, operand 5, single buffered']
    #allocation12 [shape = 'u8[512]{0}', space=smem, size = 0x200, scoped, tag = 'input window, operand 6, single buffered']
    #allocation13 [shape = 's32[1]{0}', space=sflag, size = 0x4, scoped, tag = 'scoped memory for _lambda_.1']
    #allocation14 [shape = 'u8[512]{0}', space=smem, size = 0x200, scoped, tag = 'input window, operand 7, single buffered']
    #allocation15 [shape = 'u8[512]{0}', space=smem, size = 0x200, scoped, tag = 'input window, operand 8, single buffered']
    #allocation16 [shape = 's32[1]{0}', space=sflag, size = 0x4, scoped, tag = 'scoped memory for _lambda_.1']
    %14 = vsyncpa [#allocation5], 0
    %15 = vsyncpa [#allocation7], 0
    %16 = vsyncpa [#allocation10], 0
    %17 = vsyncpa [#allocation13], 0
    %18 = vsyncpa [#allocation16], 0
    loop: start=0, step=1, limit=4
    $region2: #{_lambda_.1} parent=1 // loop_pre_header
      _
    $region3: #{_lambda_.1} parent=1 // loop_header
      %s20 = sphi 0, %s24
      %p21 = scmp.ge.s32.totalorder %s20, 4
      %s30 = sphi 0, %s32
      %s33 = sphi 0, %s30
      %s34 = sphi 0, %s33
      %s50 = sphi 0, %s34
      %s54 = sphi 0, %s54
      %s56 = sphi 0, %s54
      %s57 = sphi 0, %s56
      %s71 = sphi 0, %s57
      %s75 = sphi 0, %s75
      %s77 = sphi 0, %s75
      %s78 = sphi 0, %s77
      %s92 = sphi 0, %s78
      %s96 = sphi 0, %s96
      %s98 = sphi 0, %s96
      %s99 = sphi 0, %s98
      %s113 = sphi 0, %s99
      %s117 = sphi 0, %s117
      %s119 = sphi 0, %s117
      %s120 = sphi 0, %s119
      %s134 = sphi 0, %s120
      %s138 = sphi 0, %s138
      %s140 = sphi 0, %s138
      %s141 = sphi 0, %s140
      %s155 = sphi 0, %s141
      %s159 = sphi 0, %s159
      %s161 = sphi 0, %s159
      %s162 = sphi 0, %s161
      %s176 = sphi 0, %s162
      %s180 = sphi 0, %s180
      %s182 = sphi 0, %s180
      %s183 = sphi 0, %s182
      %s197 = sphi 0, %s183
      %s201 = sphi 0, %s201
      %s203 = sphi 0, %s201
      %s204 = sphi 0, %s203
      %s218 = sphi 0, %s204
      %s224 = sphi 0, %s226
      %s227 = sphi 0, %s224
      %s228 = sphi 0, %s227
      %s244 = sphi 0, %s228
    $region4: #{_lambda_.1} parent=1 // loop_header_branch
      %23 = sbr.rel (%p21) target = $region8
    $region5: #{_lambda_.1} parent=1 // loop_body
      %s25 = ssub.s32 %s20, 1
      %s26 = ssub.s32 %s20, 2
      %s27 = sadd.s32 %s20, 1
      %s28 = ssub.s32 %s20, %s27
      %p29 = scmp.eq.s32.totalorder %s28, 0
      %s31 = sadd.s32 %s30, 1
      %s32 = scalar_select %p29, %s30, %s31
      %p35 = pneg %p29
      %p36 = scmp.eq.s32.totalorder %s20, 1
      %p37 = por %p35, %p36
      %p38 = scmp.ne.s32.totalorder %s30, %s33
      %p39 = scmp.eq.s32.totalorder %s20, 0
      %p40 = por %p38, %p39
      %p41 = scmp.ne.s32.totalorder %s30, %s33
      %p42 = scmp.eq.s32.totalorder %s25, 1
      %p43 = por %p41, %p42
      %p44 = scmp.ne.s32.totalorder %s33, %s34
      %p45 = scmp.eq.s32.totalorder %s25, 0
      %p46 = por %p44, %p45
      %p47 = scmp.ne.s32.totalorder %s33, %s34
      %p48 = scmp.eq.s32.totalorder %s26, 1
      %p49 = por %p47, %p48
      %p51 = scmp.ne.s32.totalorder %s34, %s50
      %p52 = scmp.eq.s32.totalorder %s26, 0
      %p53 = por %p51, %p52
      %s55 = sadd.s32 %s54, 1
      %p58 = scmp.eq.s32.totalorder %s20, 1
      %p59 = scmp.ne.s32.totalorder %s54, %s56
      %p60 = scmp.eq.s32.totalorder %s20, 0
      %p61 = por %p59, %p60
      %p62 = scmp.ne.s32.totalorder %s54, %s56
      %p63 = scmp.eq.s32.totalorder %s25, 1
      %p64 = por %p62, %p63
      %p65 = scmp.ne.s32.totalorder %s56, %s57
      %p66 = scmp.eq.s32.totalorder %s25, 0
      %p67 = por %p65, %p66
      %p68 = scmp.ne.s32.totalorder %s56, %s57
      %p69 = scmp.eq.s32.totalorder %s26, 1
      %p70 = por %p68, %p69
      %p72 = scmp.ne.s32.totalorder %s57, %s71
      %p73 = scmp.eq.s32.totalorder %s26, 0
      %p74 = por %p72, %p73
      %s76 = sadd.s32 %s75, 1
      %p79 = scmp.eq.s32.totalorder %s20, 1
      %p80 = scmp.ne.s32.totalorder %s75, %s77
      %p81 = scmp.eq.s32.totalorder %s20, 0
      %p82 = por %p80, %p81
      %p83 = scmp.ne.s32.totalorder %s75, %s77
      %p84 = scmp.eq.s32.totalorder %s25, 1
      %p85 = por %p83, %p84
      %p86 = scmp.ne.s32.totalorder %s77, %s78
      %p87 = scmp.eq.s32.totalorder %s25, 0
      %p88 = por %p86, %p87
      %p89 = scmp.ne.s32.totalorder %s77, %s78
      %p90 = scmp.eq.s32.totalorder %s26, 1
      %p91 = por %p89, %p90
      %p93 = scmp.ne.s32.totalorder %s78, %s92
      %p94 = scmp.eq.s32.totalorder %s26, 0
      %p95 = por %p93, %p94
      %s97 = sadd.s32 %s96, 1
      %p100 = scmp.eq.s32.totalorder %s20, 1
      %p101 = scmp.ne.s32.totalorder %s96, %s98
      %p102 = scmp.eq.s32.totalorder %s20, 0
      %p103 = por %p101, %p102
      %p104 = scmp.ne.s32.totalorder %s96, %s98
      %p105 = scmp.eq.s32.totalorder %s25, 1
      %p106 = por %p104, %p105
      %p107 = scmp.ne.s32.totalorder %s98, %s99
      %p108 = scmp.eq.s32.totalorder %s25, 0
      %p109 = por %p107, %p108
      %p110 = scmp.ne.s32.totalorder %s98, %s99
      %p111 = scmp.eq.s32.totalorder %s26, 1
      %p112 = por %p110, %p111
      %p114 = scmp.ne.s32.totalorder %s99, %s113
      %p115 = scmp.eq.s32.totalorder %s26, 0
      %p116 = por %p114, %p115
      %s118 = sadd.s32 %s117, 1
      %p121 = scmp.eq.s32.totalorder %s20, 1
      %p122 = scmp.ne.s32.totalorder %s117, %s119
      %p123 = scmp.eq.s32.totalorder %s20, 0
      %p124 = por %p122, %p123
      %p125 = scmp.ne.s32.totalorder %s117, %s119
      %p126 = scmp.eq.s32.totalorder %s25, 1
      %p127 = por %p125, %p126
      %p128 = scmp.ne.s32.totalorder %s119, %s120
      %p129 = scmp.eq.s32.totalorder %s25, 0
      %p130 = por %p128, %p129
      %p131 = scmp.ne.s32.totalorder %s119, %s120
      %p132 = scmp.eq.s32.totalorder %s26, 1
      %p133 = por %p131, %p132
      %p135 = scmp.ne.s32.totalorder %s120, %s134
      %p136 = scmp.eq.s32.totalorder %s26, 0
      %p137 = por %p135, %p136
      %s139 = sadd.s32 %s138, 1
      %p142 = scmp.eq.s32.totalorder %s20, 1
      %p143 = scmp.ne.s32.totalorder %s138, %s140
      %p144 = scmp.eq.s32.totalorder %s20, 0
      %p145 = por %p143, %p144
      %p146 = scmp.ne.s32.totalorder %s138, %s140
      %p147 = scmp.eq.s32.totalorder %s25, 1
      %p148 = por %p146, %p147
      %p149 = scmp.ne.s32.totalorder %s140, %s141
      %p150 = scmp.eq.s32.totalorder %s25, 0
      %p151 = por %p149, %p150
      %p152 = scmp.ne.s32.totalorder %s140, %s141
      %p153 = scmp.eq.s32.totalorder %s26, 1
      %p154 = por %p152, %p153
      %p156 = scmp.ne.s32.totalorder %s141, %s155
      %p157 = scmp.eq.s32.totalorder %s26, 0
      %p158 = por %p156, %p157
      %s160 = sadd.s32 %s159, 1
      %p163 = scmp.eq.s32.totalorder %s20, 1
      %p164 = scmp.ne.s32.totalorder %s159, %s161
      %p165 = scmp.eq.s32.totalorder %s20, 0
      %p166 = por %p164, %p165
      %p167 = scmp.ne.s32.totalorder %s159, %s161
      %p168 = scmp.eq.s32.totalorder %s25, 1
      %p169 = por %p167, %p168
      %p170 = scmp.ne.s32.totalorder %s161, %s162
      %p171 = scmp.eq.s32.totalorder %s25, 0
      %p172 = por %p170, %p171
      %p173 = scmp.ne.s32.totalorder %s161, %s162
      %p174 = scmp.eq.s32.totalorder %s26, 1
      %p175 = por %p173, %p174
      %p177 = scmp.ne.s32.totalorder %s162, %s176
      %p178 = scmp.eq.s32.totalorder %s26, 0
      %p179 = por %p177, %p178
      %s181 = sadd.s32 %s180, 1
      %p184 = scmp.eq.s32.totalorder %s20, 1
      %p185 = scmp.ne.s32.totalorder %s180, %s182
      %p186 = scmp.eq.s32.totalorder %s20, 0
      %p187 = por %p185, %p186
      %p188 = scmp.ne.s32.totalorder %s180, %s182
      %p189 = scmp.eq.s32.totalorder %s25, 1
      %p190 = por %p188, %p189
      %p191 = scmp.ne.s32.totalorder %s182, %s183
      %p192 = scmp.eq.s32.totalorder %s25, 0
      %p193 = por %p191, %p192
      %p194 = scmp.ne.s32.totalorder %s182, %s183
      %p195 = scmp.eq.s32.totalorder %s26, 1
      %p196 = por %p194, %p195
      %p198 = scmp.ne.s32.totalorder %s183, %s197
      %p199 = scmp.eq.s32.totalorder %s26, 0
      %p200 = por %p198, %p199
      %s202 = sadd.s32 %s201, 1
      %p205 = scmp.eq.s32.totalorder %s20, 1
      %p206 = scmp.ne.s32.totalorder %s201, %s203
      %p207 = scmp.eq.s32.totalorder %s20, 0
      %p208 = por %p206, %p207
      %p209 = scmp.ne.s32.totalorder %s201, %s203
      %p210 = scmp.eq.s32.totalorder %s25, 1
      %p211 = por %p209, %p210
      %p212 = scmp.ne.s32.totalorder %s203, %s204
      %p213 = scmp.eq.s32.totalorder %s25, 0
      %p214 = por %p212, %p213
      %p215 = scmp.ne.s32.totalorder %s203, %s204
      %p216 = scmp.eq.s32.totalorder %s26, 1
      %p217 = por %p215, %p216
      %p219 = scmp.ne.s32.totalorder %s204, %s218
      %p220 = scmp.eq.s32.totalorder %s26, 0
      %p221 = por %p219, %p220
      %s222 = ssub.s32 %s20, %s27
      %p223 = scmp.eq.s32.totalorder %s222, 0
      %s225 = sadd.s32 %s224, 1
      %s226 = scalar_select %p223, %s224, %s225
      %p229 = pneg %p223
      %p230 = scmp.eq.s32.totalorder %s20, 1
      %p231 = por %p229, %p230
      %p232 = scmp.ne.s32.totalorder %s224, %s227
      %p233 = scmp.eq.s32.totalorder %s20, 0
      %p234 = por %p232, %p233
      %p235 = scmp.ne.s32.totalorder %s224, %s227
      %p236 = scmp.eq.s32.totalorder %s25, 1
      %p237 = por %p235, %p236
      %p238 = scmp.ne.s32.totalorder %s227, %s228
      %p239 = scmp.eq.s32.totalorder %s25, 0
      %p240 = por %p238, %p239
      %p241 = scmp.ne.s32.totalorder %s227, %s228
      %p242 = scmp.eq.s32.totalorder %s26, 1
      %p243 = por %p241, %p242
      %p245 = scmp.ne.s32.totalorder %s228, %s244
      %p246 = scmp.eq.s32.totalorder %s26, 0
      %p247 = por %p245, %p246
      %p248 = scmp.le.s32.totalorder 1, %s20
      %p249 = scmp.lt.s32.totalorder %s20, 3
      %p250 = pnand %p248, %p249
      %p251 = pneg %p250
      // Predicated region
      $region9: #{_lambda_.1} parent=5 // pred_check
        _
      $region10: #{_lambda_.1} parent=5 // pred_check_branch
        %253 = sbr.rel (%p250) target = $region12
      $region11: #{_lambda_.1} parent=5 // pred_region
        %s254 = ssub.s32 %s20, 1
        // Predicated region
        $region13: #{_lambda_.1} parent=11 // pred_check
          %p255 = pneg %p67
        $region14: #{_lambda_.1} parent=11 // pred_check_branch
          %257 = sbr.rel (%p255) target = $region16
        $region15: #{_lambda_.1} parent=11 // pred_region
          %259 = vsyncadd [#allocation5], 0
          %s261 = sshll.u32 %s1, 4
          %s262 = int_to_ptr.vmem [resolvable:$true] %s261
          %264 = dma.vmem_to_smem %s262, 16, [#allocation4], [#allocation5]
        $region16: #{_lambda_.1} parent=11 // pred_fallthru
          _
        // Predicated region
        $region17: #{_lambda_.1} parent=11 // pred_check
          %p265 = pneg %p88
        $region18: #{_lambda_.1} parent=11 // pred_check_branch
          %267 = sbr.rel (%p265) target = $region20
        $region19: #{_lambda_.1} parent=11 // pred_region
          %269 = vsyncadd [#allocation7], 0
          %s271 = sshll.u32 %s2, 4
          %s272 = int_to_ptr.vmem [resolvable:$true] %s271
          %274 = dma.vmem_to_smem %s272, 16, [#allocation6], [#allocation7]
        $region20: #{_lambda_.1} parent=11 // pred_fallthru
          _
        // Predicated region
        $region21: #{_lambda_.1} parent=11 // pred_check
          %p275 = pneg %p109
        $region22: #{_lambda_.1} parent=11 // pred_check_branch
          %277 = sbr.rel (%p275) target = $region24
        $region23: #{_lambda_.1} parent=11 // pred_region
          %279 = vsyncadd [#allocation7], 0
          %s281 = sshll.u32 %s3, 4
          %s282 = int_to_ptr.vmem [resolvable:$true] %s281
          %284 = dma.vmem_to_smem %s282, 16, [#allocation8], [#allocation7]
        $region24: #{_lambda_.1} parent=11 // pred_fallthru
          _
        // Predicated region
        $region25: #{_lambda_.1} parent=11 // pred_check
          %p285 = pneg %p130
        $region26: #{_lambda_.1} parent=11 // pred_check_branch
          %287 = sbr.rel (%p285) target = $region28
        $region27: #{_lambda_.1} parent=11 // pred_region
          %289 = vsyncadd [#allocation10], 0
          %s291 = sshll.u32 %s4, 4
          %s292 = int_to_ptr.vmem [resolvable:$true] %s291
          %294 = dma.vmem_to_smem %s292, 16, [#allocation9], [#allocation10]
        $region28: #{_lambda_.1} parent=11 // pred_fallthru
          _
        // Predicated region
        $region29: #{_lambda_.1} parent=11 // pred_check
          %p295 = pneg %p151
        $region30: #{_lambda_.1} parent=11 // pred_check_branch
          %297 = sbr.rel (%p295) target = $region32
        $region31: #{_lambda_.1} parent=11 // pred_region
          %299 = vsyncadd [#allocation10], 0
          %s301 = sshll.u32 %s5, 4
          %s302 = int_to_ptr.vmem [resolvable:$true] %s301
          %304 = dma.vmem_to_smem %s302, 16, [#allocation11], [#allocation10]
        $region32: #{_lambda_.1} parent=11 // pred_fallthru
          _
        // Predicated region
        $region33: #{_lambda_.1} parent=11 // pred_check
          %p305 = pneg %p172
        $region34: #{_lambda_.1} parent=11 // pred_check_branch
          %307 = sbr.rel (%p305) target = $region36
        $region35: #{_lambda_.1} parent=11 // pred_region
          %309 = vsyncadd [#allocation13], 0
          %s311 = sshll.u32 %s6, 4
          %s312 = int_to_ptr.vmem [resolvable:$true] %s311
          %314 = dma.vmem_to_smem %s312, 16, [#allocation12], [#allocation13]
        $region36: #{_lambda_.1} parent=11 // pred_fallthru
          _
        // Predicated region
        $region37: #{_lambda_.1} parent=11 // pred_check
          %p315 = pneg %p193
        $region38: #{_lambda_.1} parent=11 // pred_check_branch
          %317 = sbr.rel (%p315) target = $region40
        $region39: #{_lambda_.1} parent=11 // pred_region
          %319 = vsyncadd [#allocation13], 0
          %s321 = sshll.u32 %s7, 4
          %s322 = int_to_ptr.vmem [resolvable:$true] %s321
          %324 = dma.vmem_to_smem %s322, 16, [#allocation14], [#allocation13]
        $region40: #{_lambda_.1} parent=11 // pred_fallthru
          _
        // Predicated region
        $region41: #{_lambda_.1} parent=11 // pred_check
          %p325 = pneg %p214
        $region42: #{_lambda_.1} parent=11 // pred_check_branch
          %327 = sbr.rel (%p325) target = $region44
        $region43: #{_lambda_.1} parent=11 // pred_region
          %329 = vsyncadd [#allocation16], 0
          %s331 = sshll.u32 %s8, 4
          %s332 = int_to_ptr.vmem [resolvable:$true] %s331
          %334 = dma.vmem_to_smem %s332, 16, [#allocation15], [#allocation16]
        $region44: #{_lambda_.1} parent=11 // pred_fallthru
          _
      $region12: #{_lambda_.1} parent=5 // pred_fallthru
        _
      %p335 = scmp.lt.s32.totalorder %s20, 2
      // Predicated region
      $region45: #{_lambda_.1} parent=5 // pred_check
        %p336 = pneg %p335
      $region46: #{_lambda_.1} parent=5 // pred_check_branch
        %338 = sbr.rel (%p336) target = $region48
      $region47: #{_lambda_.1} parent=5 // pred_region
        // Predicated region
        $region49: #{_lambda_.1} parent=47 // pred_check
          %p339 = pneg %p40
        $region50: #{_lambda_.1} parent=47 // pred_check_branch
          %341 = sbr.rel (%p339) target = $region52
        $region51: #{_lambda_.1} parent=47 // pred_region
          %p342 = scmp.lt.s32.totalorder %s20, 1
          %s343 = scalar_select %p342, %s20, 1
          %s344 = smul.addr %s343, 64
          %s345 = smul.addr %s344, 4
          %s346 = scalar_lea.vmem %s0, %s345
        $region52: #{_lambda_.1} parent=47 // pred_fallthru
          _
      $region48: #{_lambda_.1} parent=5 // pred_fallthru
        _
      %p347 = scmp.le.s32.totalorder 1, %s20
      %p348 = scmp.lt.s32.totalorder %s20, 3
      %p349 = pnand %p347, %p348
      %p350 = pneg %p349
      // Predicated region
      $region53: #{_lambda_.1} parent=5 // pred_check
        _
      $region54: #{_lambda_.1} parent=5 // pred_check_branch
        %352 = sbr.rel (%p349) target = $region56
      $region55: #{_lambda_.1} parent=5 // pred_region
        %s353 = ssub.s32 %s20, 1
        // Predicated region
        $region57: #{_lambda_.1} parent=55 // pred_check
          %p354 = pneg %p67
        $region58: #{_lambda_.1} parent=55 // pred_check_branch
          %356 = sbr.rel (%p354) target = $region60
        $region59: #{_lambda_.1} parent=55 // pred_region
          %358 = dma.done [#allocation5], 16
        $region60: #{_lambda_.1} parent=55 // pred_fallthru
          _
        // Predicated region
        $region61: #{_lambda_.1} parent=55 // pred_check
          %p359 = pneg %p88
        $region62: #{_lambda_.1} parent=55 // pred_check_branch
          %361 = sbr.rel (%p359) target = $region64
        $region63: #{_lambda_.1} parent=55 // pred_region
          %363 = dma.done [#allocation7], 16
        $region64: #{_lambda_.1} parent=55 // pred_fallthru
          _
        // Predicated region
        $region65: #{_lambda_.1} parent=55 // pred_check
          %p364 = pneg %p109
        $region66: #{_lambda_.1} parent=55 // pred_check_branch
          %366 = sbr.rel (%p364) target = $region68
        $region67: #{_lambda_.1} parent=55 // pred_region
          %368 = dma.done [#allocation7], 16
        $region68: #{_lambda_.1} parent=55 // pred_fallthru
          _
        // Predicated region
        $region69: #{_lambda_.1} parent=55 // pred_check
          %p369 = pneg %p130
        $region70: #{_lambda_.1} parent=55 // pred_check_branch
          %371 = sbr.rel (%p369) target = $region72
        $region71: #{_lambda_.1} parent=55 // pred_region
          %373 = dma.done [#allocation10], 16
        $region72: #{_lambda_.1} parent=55 // pred_fallthru
          _
        // Predicated region
        $region73: #{_lambda_.1} parent=55 // pred_check
          %p374 = pneg %p151
        $region74: #{_lambda_.1} parent=55 // pred_check_branch
          %376 = sbr.rel (%p374) target = $region76
        $region75: #{_lambda_.1} parent=55 // pred_region
          %378 = dma.done [#allocation10], 16
        $region76: #{_lambda_.1} parent=55 // pred_fallthru
          _
        // Predicated region
        $region77: #{_lambda_.1} parent=55 // pred_check
          %p379 = pneg %p172
        $region78: #{_lambda_.1} parent=55 // pred_check_branch
          %381 = sbr.rel (%p379) target = $region80
        $region79: #{_lambda_.1} parent=55 // pred_region
          %383 = dma.done [#allocation13], 16
        $region80: #{_lambda_.1} parent=55 // pred_fallthru
          _
        // Predicated region
        $region81: #{_lambda_.1} parent=55 // pred_check
          %p384 = pneg %p193
        $region82: #{_lambda_.1} parent=55 // pred_check_branch
          %386 = sbr.rel (%p384) target = $region84
        $region83: #{_lambda_.1} parent=55 // pred_region
          %388 = dma.done [#allocation13], 16
        $region84: #{_lambda_.1} parent=55 // pred_fallthru
          _
        // Predicated region
        $region85: #{_lambda_.1} parent=55 // pred_check
          %p389 = pneg %p214
        $region86: #{_lambda_.1} parent=55 // pred_check_branch
          %391 = sbr.rel (%p389) target = $region88
        $region87: #{_lambda_.1} parent=55 // pred_region
          %393 = dma.done [#allocation16], 16
        $region88: #{_lambda_.1} parent=55 // pred_fallthru
          _
        %394 = sfence
        %p395 = scmp.lt.s32.totalorder %s25, 1
        %s396 = scalar_select %p395, %s25, 1
        %s397 = smul.addr %s396, 64
        %s398 = smul.addr %s397, 4
        %s399 = scalar_lea.vmem %s0, %s398
        %p400 = pneg %p46
        %p401 = pneg %p43
        %p402 = pneg %p67
        %p403 = pneg %p64
        %p404 = pneg %p88
        %p405 = pneg %p85
        %p406 = pneg %p109
        %p407 = pneg %p106
        %p408 = pneg %p130
        %p409 = pneg %p127
        %p410 = pneg %p151
        %p411 = pneg %p148
        %p412 = pneg %p172
        %p413 = pneg %p169
        %p414 = pneg %p193
        %p415 = pneg %p190
        %p416 = pneg %p214
        %p417 = pneg %p211
        %p418 = pneg %p240
        %p419 = pneg %p237
        %p420 = scmp.lt.s32.totalorder %s25, 1
        %s421 = scalar_select %p420, %s25, 1
        %s422 = smul.addr %s421, 8
        %s423 = smul.addr %s422, 4
        %s424 = scalar_lea.vmem %s9, %s423
        %p425 = scmp.lt.s32.totalorder %s25, 1
        %s426 = scalar_select %p425, %s25, 1
        %s427 = smul.addr %s426, 64
        %s428 = smul.addr %s427, 4
        %s429 = scalar_lea.vmem %s0, %s428
        %p430 = scmp.lt.s32.totalorder %s25, 1
        %s431 = scalar_select %p430, %s25, 1
        %s432 = smul.addr %s431, 8
        %s433 = smul.addr %s432, 4
        %s434 = scalar_lea.vmem %s9, %s433
        %vm435 = vcmask 36864
        %436 = vst.msk [vmem:[#allocation2] sm:$0x1f] %vm435, 0.0
        %v437 = vld [vmem:[%s429] sm:$0xf]
        %439 = vrot.lane.b32.xlu0 %v437, 1
        %v440 = vpop.permute.xlu0 %439
        %vm442 = vcmask 35848
        %443 = vst.msk [vmem:[#allocation2 + $0x1] sm:$0xf] %vm442, %v440
        %s444 = scalar_lea.vmem [#allocation2], 8
        %445 = vst.msk [vmem:[%s444] sm:$0x1f] %vm435, 0.0
        %s446 = scalar_lea.vmem %s429, 4
        %v447 = vld [vmem:[%s446] sm:$0xf]
        %449 = vrot.lane.b32.xlu0 %v447, 1
        %v450 = vpop.permute.xlu0 %449
        %452 = vst.msk [vmem:[%s444 + $0x1] sm:$0xf] %vm442, %v450
        %s453 = scalar_lea.vmem [#allocation2], 16
        %454 = vst.msk [vmem:[%s453] sm:$0x1f] %vm435, 0.0
        %s455 = scalar_lea.vmem %s429, 8
        %v456 = vld [vmem:[%s455] sm:$0xf]
        %458 = vrot.lane.b32.xlu0 %v456, 1
        %v459 = vpop.permute.xlu0 %458
        %461 = vst.msk [vmem:[%s453 + $0x1] sm:$0xf] %vm442, %v459
        %s462 = scalar_lea.vmem [#allocation2], 24
        %463 = vst.msk [vmem:[%s462] sm:$0x1f] %vm435, 0.0
        %s464 = scalar_lea.vmem %s429, 12
        %v465 = vld [vmem:[%s464] sm:$0xf]
        %467 = vrot.lane.b32.xlu0 %v465, 1
        %v468 = vpop.permute.xlu0 %467
        %470 = vst.msk [vmem:[%s462 + $0x1] sm:$0xf] %vm442, %v468
        %s471 = scalar_lea.vmem [#allocation2], 32
        %472 = vst.msk [vmem:[%s471] sm:$0x1f] %vm435, 0.0
        %s473 = scalar_lea.vmem %s429, 16
        %v474 = vld [vmem:[%s473] sm:$0xf]
        %476 = vrot.lane.b32.xlu0 %v474, 1
        %v477 = vpop.permute.xlu0 %476
        %479 = vst.msk [vmem:[%s471 + $0x1] sm:$0xf] %vm442, %v477
        %s480 = scalar_lea.vmem [#allocation2], 40
        %481 = vst.msk [vmem:[%s480] sm:$0x1f] %vm435, 0.0
        %s482 = scalar_lea.vmem %s429, 20
        %v483 = vld [vmem:[%s482] sm:$0xf]
        %485 = vrot.lane.b32.xlu0 %v483, 1
        %v486 = vpop.permute.xlu0 %485
        %488 = vst.msk [vmem:[%s480 + $0x1] sm:$0xf] %vm442, %v486
        %s489 = scalar_lea.vmem [#allocation2], 48
        %490 = vst.msk [vmem:[%s489] sm:$0x1f] %vm435, 0.0
        %s491 = scalar_lea.vmem %s429, 24
        %v492 = vld [vmem:[%s491] sm:$0xf]
        %494 = vrot.lane.b32.xlu0 %v492, 1
        %v495 = vpop.permute.xlu0 %494
        %497 = vst.msk [vmem:[%s489 + $0x1] sm:$0xf] %vm442, %v495
        %s498 = scalar_lea.vmem [#allocation2], 56
        %499 = vst.msk [vmem:[%s498] sm:$0x1f] %vm435, 0.0
        %s500 = scalar_lea.vmem %s429, 28
        %v501 = vld [vmem:[%s500] sm:$0xf]
        %503 = vrot.lane.b32.xlu0 %v501, 1
        %v504 = vpop.permute.xlu0 %503
        %506 = vst.msk [vmem:[%s498 + $0x1] sm:$0xf] %vm442, %v504
        %s507 = scalar_lea.vmem [#allocation2], 64
        %508 = vst.msk [vmem:[%s507] sm:$0x1f] %vm435, 0.0
        %s509 = scalar_lea.vmem %s429, 32
        %v510 = vld [vmem:[%s509] sm:$0xf]
        %512 = vrot.lane.b32.xlu0 %v510, 1
        %v513 = vpop.permute.xlu0 %512
        %515 = vst.msk [vmem:[%s507 + $0x1] sm:$0xf] %vm442, %v513
        %s516 = scalar_lea.vmem [#allocation2], 72
        %517 = vst.msk [vmem:[%s516] sm:$0x1f] %vm435, 0.0
        %s518 = scalar_lea.vmem %s429, 36
        %v519 = vld [vmem:[%s518] sm:$0xf]
        %521 = vrot.lane.b32.xlu0 %v519, 1
        %v522 = vpop.permute.xlu0 %521
        %524 = vst.msk [vmem:[%s516 + $0x1] sm:$0xf] %vm442, %v522
        %s525 = scalar_lea.vmem [#allocation2], 80
        %526 = vst.msk [vmem:[%s525] sm:$0x1f] %vm435, 0.0
        %s527 = scalar_lea.vmem %s429, 40
        %v528 = vld [vmem:[%s527] sm:$0xf]
        %530 = vrot.lane.b32.xlu0 %v528, 1
        %v531 = vpop.permute.xlu0 %530
        %533 = vst.msk [vmem:[%s525 + $0x1] sm:$0xf] %vm442, %v531
        %s534 = scalar_lea.vmem [#allocation2], 88
        %535 = vst.msk [vmem:[%s534] sm:$0x1f] %vm435, 0.0
        %s536 = scalar_lea.vmem %s429, 44
        %v537 = vld [vmem:[%s536] sm:$0xf]
        %539 = vrot.lane.b32.xlu0 %v537, 1
        %v540 = vpop.permute.xlu0 %539
        %542 = vst.msk [vmem:[%s534 + $0x1] sm:$0xf] %vm442, %v540
        %s543 = scalar_lea.vmem [#allocation2], 96
        %544 = vst.msk [vmem:[%s543] sm:$0x1f] %vm435, 0.0
        %s545 = scalar_lea.vmem %s429, 48
        %v546 = vld [vmem:[%s545] sm:$0xf]
        %548 = vrot.lane.b32.xlu0 %v546, 1
        %v549 = vpop.permute.xlu0 %548
        %551 = vst.msk [vmem:[%s543 + $0x1] sm:$0xf] %vm442, %v549
        %s552 = scalar_lea.vmem [#allocation2], 104
        %553 = vst.msk [vmem:[%s552] sm:$0x1f] %vm435, 0.0
        %s554 = scalar_lea.vmem %s429, 52
        %v555 = vld [vmem:[%s554] sm:$0xf]
        %557 = vrot.lane.b32.xlu0 %v555, 1
        %v558 = vpop.permute.xlu0 %557
        %560 = vst.msk [vmem:[%s552 + $0x1] sm:$0xf] %vm442, %v558
        %s561 = scalar_lea.vmem [#allocation2], 112
        %562 = vst.msk [vmem:[%s561] sm:$0x1f] %vm435, 0.0
        %s563 = scalar_lea.vmem %s429, 56
        %v564 = vld [vmem:[%s563] sm:$0xf]
        %566 = vrot.lane.b32.xlu0 %v564, 1
        %v567 = vpop.permute.xlu0 %566
        %569 = vst.msk [vmem:[%s561 + $0x1] sm:$0xf] %vm442, %v567
        %s570 = scalar_lea.vmem [#allocation2], 120
        %571 = vst.msk [vmem:[%s570] sm:$0x1f] %vm435, 0.0
        %s572 = scalar_lea.vmem %s429, 60
        %v573 = vld [vmem:[%s572] sm:$0xf]
        %575 = vrot.lane.b32.xlu0 %v573, 1
        %v576 = vpop.permute.xlu0 %575
        %578 = vst.msk [vmem:[%s570 + $0x1] sm:$0xf] %vm442, %v576
        %s579 = scalar_lea.vmem [#allocation2], 128
        %580 = vst.msk [vmem:[%s579] sm:$0x1f] %vm435, 0.0
        %s581 = scalar_lea.vmem %s429, 64
        %v582 = vld [vmem:[%s581] sm:$0xf]
        %584 = vrot.lane.b32.xlu0 %v582, 1
        %v585 = vpop.permute.xlu0 %584
        %587 = vst.msk [vmem:[%s579 + $0x1] sm:$0xf] %vm442, %v585
        %s588 = scalar_lea.vmem [#allocation2], 136
        %589 = vst.msk [vmem:[%s588] sm:$0x1f] %vm435, 0.0
        %s590 = scalar_lea.vmem %s429, 68
        %v591 = vld [vmem:[%s590] sm:$0xf]
        %593 = vrot.lane.b32.xlu0 %v591, 1
        %v594 = vpop.permute.xlu0 %593
        %596 = vst.msk [vmem:[%s588 + $0x1] sm:$0xf] %vm442, %v594
        %s597 = scalar_lea.vmem [#allocation2], 144
        %598 = vst.msk [vmem:[%s597] sm:$0x1f] %vm435, 0.0
        %s599 = scalar_lea.vmem %s429, 72
        %v600 = vld [vmem:[%s599] sm:$0xf]
        %602 = vrot.lane.b32.xlu0 %v600, 1
        %v603 = vpop.permute.xlu0 %602
        %605 = vst.msk [vmem:[%s597 + $0x1] sm:$0xf] %vm442, %v603
        %s606 = scalar_lea.vmem [#allocation2], 152
        %607 = vst.msk [vmem:[%s606] sm:$0x1f] %vm435, 0.0
        %s608 = scalar_lea.vmem %s429, 76
        %v609 = vld [vmem:[%s608] sm:$0xf]
        %611 = vrot.lane.b32.xlu0 %v609, 1
        %v612 = vpop.permute.xlu0 %611
        %614 = vst.msk [vmem:[%s606 + $0x1] sm:$0xf] %vm442, %v612
        %s615 = scalar_lea.vmem [#allocation2], 160
        %616 = vst.msk [vmem:[%s615] sm:$0x1f] %vm435, 0.0
        %s617 = scalar_lea.vmem %s429, 80
        %v618 = vld [vmem:[%s617] sm:$0xf]
        %620 = vrot.lane.b32.xlu0 %v618, 1
        %v621 = vpop.permute.xlu0 %620
        %623 = vst.msk [vmem:[%s615 + $0x1] sm:$0xf] %vm442, %v621
        %s624 = scalar_lea.vmem [#allocation2], 168
        %625 = vst.msk [vmem:[%s624] sm:$0x1f] %vm435, 0.0
        %s626 = scalar_lea.vmem %s429, 84
        %v627 = vld [vmem:[%s626] sm:$0xf]
        %629 = vrot.lane.b32.xlu0 %v627, 1
        %v630 = vpop.permute.xlu0 %629
        %632 = vst.msk [vmem:[%s624 + $0x1] sm:$0xf] %vm442, %v630
        %s633 = scalar_lea.vmem [#allocation2], 176
        %634 = vst.msk [vmem:[%s633] sm:$0x1f] %vm435, 0.0
        %s635 = scalar_lea.vmem %s429, 88
        %v636 = vld [vmem:[%s635] sm:$0xf]
        %638 = vrot.lane.b32.xlu0 %v636, 1
        %v639 = vpop.permute.xlu0 %638
        %641 = vst.msk [vmem:[%s633 + $0x1] sm:$0xf] %vm442, %v639
        %s642 = scalar_lea.vmem [#allocation2], 184
        %643 = vst.msk [vmem:[%s642] sm:$0x1f] %vm435, 0.0
        %s644 = scalar_lea.vmem %s429, 92
        %v645 = vld [vmem:[%s644] sm:$0xf]
        %647 = vrot.lane.b32.xlu0 %v645, 1
        %v648 = vpop.permute.xlu0 %647
        %650 = vst.msk [vmem:[%s642 + $0x1] sm:$0xf] %vm442, %v648
        %s651 = scalar_lea.vmem [#allocation2], 192
        %652 = vst.msk [vmem:[%s651] sm:$0x1f] %vm435, 0.0
        %s653 = scalar_lea.vmem %s429, 96
        %v654 = vld [vmem:[%s653] sm:$0xf]
        %656 = vrot.lane.b32.xlu0 %v654, 1
        %v657 = vpop.permute.xlu0 %656
        %659 = vst.msk [vmem:[%s651 + $0x1] sm:$0xf] %vm442, %v657
        %s660 = scalar_lea.vmem [#allocation2], 200
        %661 = vst.msk [vmem:[%s660] sm:$0x1f] %vm435, 0.0
        %s662 = scalar_lea.vmem %s429, 100
        %v663 = vld [vmem:[%s662] sm:$0xf]
        %665 = vrot.lane.b32.xlu0 %v663, 1
        %v666 = vpop.permute.xlu0 %665
        %668 = vst.msk [vmem:[%s660 + $0x1] sm:$0xf] %vm442, %v666
        %s669 = scalar_lea.vmem [#allocation2], 208
        %670 = vst.msk [vmem:[%s669] sm:$0x1f] %vm435, 0.0
        %s671 = scalar_lea.vmem %s429, 104
        %v672 = vld [vmem:[%s671] sm:$0xf]
        %674 = vrot.lane.b32.xlu0 %v672, 1
        %v675 = vpop.permute.xlu0 %674
        %677 = vst.msk [vmem:[%s669 + $0x1] sm:$0xf] %vm442, %v675
        %s678 = scalar_lea.vmem [#allocation2], 216
        %679 = vst.msk [vmem:[%s678] sm:$0x1f] %vm435, 0.0
        %s680 = scalar_lea.vmem %s429, 108
        %v681 = vld [vmem:[%s680] sm:$0xf]
        %683 = vrot.lane.b32.xlu0 %v681, 1
        %v684 = vpop.permute.xlu0 %683
        %686 = vst.msk [vmem:[%s678 + $0x1] sm:$0xf] %vm442, %v684
        %s687 = scalar_lea.vmem [#allocation2], 224
        %688 = vst.msk [vmem:[%s687] sm:$0x1f] %vm435, 0.0
        %s689 = scalar_lea.vmem %s429, 112
        %v690 = vld [vmem:[%s689] sm:$0xf]
        %692 = vrot.lane.b32.xlu0 %v690, 1
        %v693 = vpop.permute.xlu0 %692
        %695 = vst.msk [vmem:[%s687 + $0x1] sm:$0xf] %vm442, %v693
        %s696 = scalar_lea.vmem [#allocation2], 232
        %697 = vst.msk [vmem:[%s696] sm:$0x1f] %vm435, 0.0
        %s698 = scalar_lea.vmem %s429, 116
        %v699 = vld [vmem:[%s698] sm:$0xf]
        %701 = vrot.lane.b32.xlu0 %v699, 1
        %v702 = vpop.permute.xlu0 %701
        %704 = vst.msk [vmem:[%s696 + $0x1] sm:$0xf] %vm442, %v702
        %s705 = scalar_lea.vmem [#allocation2], 240
        %706 = vst.msk [vmem:[%s705] sm:$0x1f] %vm435, 0.0
        %s707 = scalar_lea.vmem %s429, 120
        %v708 = vld [vmem:[%s707] sm:$0xf]
        %710 = vrot.lane.b32.xlu0 %v708, 1
        %v711 = vpop.permute.xlu0 %710
        %713 = vst.msk [vmem:[%s705 + $0x1] sm:$0xf] %vm442, %v711
        %s714 = scalar_lea.vmem [#allocation2], 248
        %715 = vst.msk [vmem:[%s714] sm:$0x1f] %vm435, 0.0
        %s716 = scalar_lea.vmem %s429, 124
        %v717 = vld [vmem:[%s716] sm:$0xf]
        %719 = vrot.lane.b32.xlu0 %v717, 1
        %v720 = vpop.permute.xlu0 %719
        %722 = vst.msk [vmem:[%s714 + $0x1] sm:$0xf] %vm442, %v720
        %s723 = scalar_lea.vmem [#allocation2], 256
        %724 = vst.msk [vmem:[%s723] sm:$0x1f] %vm435, 0.0
        %s725 = scalar_lea.vmem %s429, 128
        %v726 = vld [vmem:[%s725] sm:$0xf]
        %728 = vrot.lane.b32.xlu0 %v726, 1
        %v729 = vpop.permute.xlu0 %728
        %731 = vst.msk [vmem:[%s723 + $0x1] sm:$0xf] %vm442, %v729
        %s732 = scalar_lea.vmem [#allocation2], 264
        %733 = vst.msk [vmem:[%s732] sm:$0x1f] %vm435, 0.0
        %s734 = scalar_lea.vmem %s429, 132
        %v735 = vld [vmem:[%s734] sm:$0xf]
        %737 = vrot.lane.b32.xlu0 %v735, 1
        %v738 = vpop.permute.xlu0 %737
        %740 = vst.msk [vmem:[%s732 + $0x1] sm:$0xf] %vm442, %v738
        %s741 = scalar_lea.vmem [#allocation2], 272
        %742 = vst.msk [vmem:[%s741] sm:$0x1f] %vm435, 0.0
        %s743 = scalar_lea.vmem %s429, 136
        %v744 = vld [vmem:[%s743] sm:$0xf]
        %746 = vrot.lane.b32.xlu0 %v744, 1
        %v747 = vpop.permute.xlu0 %746
        %749 = vst.msk [vmem:[%s741 + $0x1] sm:$0xf] %vm442, %v747
        %s750 = scalar_lea.vmem [#allocation2], 280
        %751 = vst.msk [vmem:[%s750] sm:$0x1f] %vm435, 0.0
        %s752 = scalar_lea.vmem %s429, 140
        %v753 = vld [vmem:[%s752] sm:$0xf]
        %755 = vrot.lane.b32.xlu0 %v753, 1
        %v756 = vpop.permute.xlu0 %755
        %758 = vst.msk [vmem:[%s750 + $0x1] sm:$0xf] %vm442, %v756
        %s759 = scalar_lea.vmem [#allocation2], 288
        %760 = vst.msk [vmem:[%s759] sm:$0x1f] %vm435, 0.0
        %s761 = scalar_lea.vmem %s429, 144
        %v762 = vld [vmem:[%s761] sm:$0xf]
        %764 = vrot.lane.b32.xlu0 %v762, 1
        %v765 = vpop.permute.xlu0 %764
        %767 = vst.msk [vmem:[%s759 + $0x1] sm:$0xf] %vm442, %v765
        %s768 = scalar_lea.vmem [#allocation2], 296
        %769 = vst.msk [vmem:[%s768] sm:$0x1f] %vm435, 0.0
        %s770 = scalar_lea.vmem %s429, 148
        %v771 = vld [vmem:[%s770] sm:$0xf]
        %773 = vrot.lane.b32.xlu0 %v771, 1
        %v774 = vpop.permute.xlu0 %773
        %776 = vst.msk [vmem:[%s768 + $0x1] sm:$0xf] %vm442, %v774
        %s777 = scalar_lea.vmem [#allocation2], 304
        %778 = vst.msk [vmem:[%s777] sm:$0x1f] %vm435, 0.0
        %s779 = scalar_lea.vmem %s429, 152
        %v780 = vld [vmem:[%s779] sm:$0xf]
        %782 = vrot.lane.b32.xlu0 %v780, 1
        %v783 = vpop.permute.xlu0 %782
        %785 = vst.msk [vmem:[%s777 + $0x1] sm:$0xf] %vm442, %v783
        %s786 = scalar_lea.vmem [#allocation2], 312
        %787 = vst.msk [vmem:[%s786] sm:$0x1f] %vm435, 0.0
        %s788 = scalar_lea.vmem %s429, 156
        %v789 = vld [vmem:[%s788] sm:$0xf]
        %791 = vrot.lane.b32.xlu0 %v789, 1
        %v792 = vpop.permute.xlu0 %791
        %794 = vst.msk [vmem:[%s786 + $0x1] sm:$0xf] %vm442, %v792
        %s795 = scalar_lea.vmem [#allocation2], 320
        %796 = vst.msk [vmem:[%s795] sm:$0x1f] %vm435, 0.0
        %s797 = scalar_lea.vmem %s429, 160
        %v798 = vld [vmem:[%s797] sm:$0xf]
        %800 = vrot.lane.b32.xlu0 %v798, 1
        %v801 = vpop.permute.xlu0 %800
        %803 = vst.msk [vmem:[%s795 + $0x1] sm:$0xf] %vm442, %v801
        %s804 = scalar_lea.vmem [#allocation2], 328
        %805 = vst.msk [vmem:[%s804] sm:$0x1f] %vm435, 0.0
        %s806 = scalar_lea.vmem %s429, 164
        %v807 = vld [vmem:[%s806] sm:$0xf]
        %809 = vrot.lane.b32.xlu0 %v807, 1
        %v810 = vpop.permute.xlu0 %809
        %812 = vst.msk [vmem:[%s804 + $0x1] sm:$0xf] %vm442, %v810
        %s813 = scalar_lea.vmem [#allocation2], 336
        %814 = vst.msk [vmem:[%s813] sm:$0x1f] %vm435, 0.0
        %s815 = scalar_lea.vmem %s429, 168
        %v816 = vld [vmem:[%s815] sm:$0xf]
        %818 = vrot.lane.b32.xlu0 %v816, 1
        %v819 = vpop.permute.xlu0 %818
        %821 = vst.msk [vmem:[%s813 + $0x1] sm:$0xf] %vm442, %v819
        %s822 = scalar_lea.vmem [#allocation2], 344
        %823 = vst.msk [vmem:[%s822] sm:$0x1f] %vm435, 0.0
        %s824 = scalar_lea.vmem %s429, 172
        %v825 = vld [vmem:[%s824] sm:$0xf]
        %827 = vrot.lane.b32.xlu0 %v825, 1
        %v828 = vpop.permute.xlu0 %827
        %830 = vst.msk [vmem:[%s822 + $0x1] sm:$0xf] %vm442, %v828
        %s831 = scalar_lea.vmem [#allocation2], 352
        %832 = vst.msk [vmem:[%s831] sm:$0x1f] %vm435, 0.0
        %s833 = scalar_lea.vmem %s429, 176
        %v834 = vld [vmem:[%s833] sm:$0xf]
        %836 = vrot.lane.b32.xlu0 %v834, 1
        %v837 = vpop.permute.xlu0 %836
        %839 = vst.msk [vmem:[%s831 + $0x1] sm:$0xf] %vm442, %v837
        %s840 = scalar_lea.vmem [#allocation2], 360
        %841 = vst.msk [vmem:[%s840] sm:$0x1f] %vm435, 0.0
        %s842 = scalar_lea.vmem %s429, 180
        %v843 = vld [vmem:[%s842] sm:$0xf]
        %845 = vrot.lane.b32.xlu0 %v843, 1
        %v846 = vpop.permute.xlu0 %845
        %848 = vst.msk [vmem:[%s840 + $0x1] sm:$0xf] %vm442, %v846
        %s849 = scalar_lea.vmem [#allocation2], 368
        %850 = vst.msk [vmem:[%s849] sm:$0x1f] %vm435, 0.0
        %s851 = scalar_lea.vmem %s429, 184
        %v852 = vld [vmem:[%s851] sm:$0xf]
        %854 = vrot.lane.b32.xlu0 %v852, 1
        %v855 = vpop.permute.xlu0 %854
        %857 = vst.msk [vmem:[%s849 + $0x1] sm:$0xf] %vm442, %v855
        %s858 = scalar_lea.vmem [#allocation2], 376
        %859 = vst.msk [vmem:[%s858] sm:$0x1f] %vm435, 0.0
        %s860 = scalar_lea.vmem %s429, 188
        %v861 = vld [vmem:[%s860] sm:$0xf]
        %863 = vrot.lane.b32.xlu0 %v861, 1
        %v864 = vpop.permute.xlu0 %863
        %866 = vst.msk [vmem:[%s858 + $0x1] sm:$0xf] %vm442, %v864
        %s867 = scalar_lea.vmem [#allocation2], 384
        %868 = vst.msk [vmem:[%s867] sm:$0x1f] %vm435, 0.0
        %s869 = scalar_lea.vmem %s429, 192
        %v870 = vld [vmem:[%s869] sm:$0xf]
        %872 = vrot.lane.b32.xlu0 %v870, 1
        %v873 = vpop.permute.xlu0 %872
        %875 = vst.msk [vmem:[%s867 + $0x1] sm:$0xf] %vm442, %v873
        %s876 = scalar_lea.vmem [#allocation2], 392
        %877 = vst.msk [vmem:[%s876] sm:$0x1f] %vm435, 0.0
        %s878 = scalar_lea.vmem %s429, 196
        %v879 = vld [vmem:[%s878] sm:$0xf]
        %881 = vrot.lane.b32.xlu0 %v879, 1
        %v882 = vpop.permute.xlu0 %881
        %884 = vst.msk [vmem:[%s876 + $0x1] sm:$0xf] %vm442, %v882
        %s885 = scalar_lea.vmem [#allocation2], 400
        %886 = vst.msk [vmem:[%s885] sm:$0x1f] %vm435, 0.0
        %s887 = scalar_lea.vmem %s429, 200
        %v888 = vld [vmem:[%s887] sm:$0xf]
        %890 = vrot.lane.b32.xlu0 %v888, 1
        %v891 = vpop.permute.xlu0 %890
        %893 = vst.msk [vmem:[%s885 + $0x1] sm:$0xf] %vm442, %v891
        %s894 = scalar_lea.vmem [#allocation2], 408
        %895 = vst.msk [vmem:[%s894] sm:$0x1f] %vm435, 0.0
        %s896 = scalar_lea.vmem %s429, 204
        %v897 = vld [vmem:[%s896] sm:$0xf]
        %899 = vrot.lane.b32.xlu0 %v897, 1
        %v900 = vpop.permute.xlu0 %899
        %902 = vst.msk [vmem:[%s894 + $0x1] sm:$0xf] %vm442, %v900
        %s903 = scalar_lea.vmem [#allocation2], 416
        %904 = vst.msk [vmem:[%s903] sm:$0x1f] %vm435, 0.0
        %s905 = scalar_lea.vmem %s429, 208
        %v906 = vld [vmem:[%s905] sm:$0xf]
        %908 = vrot.lane.b32.xlu0 %v906, 1
        %v909 = vpop.permute.xlu0 %908
        %911 = vst.msk [vmem:[%s903 + $0x1] sm:$0xf] %vm442, %v909
        %s912 = scalar_lea.vmem [#allocation2], 424
        %913 = vst.msk [vmem:[%s912] sm:$0x1f] %vm435, 0.0
        %s914 = scalar_lea.vmem %s429, 212
        %v915 = vld [vmem:[%s914] sm:$0xf]
        %917 = vrot.lane.b32.xlu0 %v915, 1
        %v918 = vpop.permute.xlu0 %917
        %920 = vst.msk [vmem:[%s912 + $0x1] sm:$0xf] %vm442, %v918
        %s921 = scalar_lea.vmem [#allocation2], 432
        %922 = vst.msk [vmem:[%s921] sm:$0x1f] %vm435, 0.0
        %s923 = scalar_lea.vmem %s429, 216
        %v924 = vld [vmem:[%s923] sm:$0xf]
        %926 = vrot.lane.b32.xlu0 %v924, 1
        %v927 = vpop.permute.xlu0 %926
        %929 = vst.msk [vmem:[%s921 + $0x1] sm:$0xf] %vm442, %v927
        %s930 = scalar_lea.vmem [#allocation2], 440
        %931 = vst.msk [vmem:[%s930] sm:$0x1f] %vm435, 0.0
        %s932 = scalar_lea.vmem %s429, 220
        %v933 = vld [vmem:[%s932] sm:$0xf]
        %935 = vrot.lane.b32.xlu0 %v933, 1
        %v936 = vpop.permute.xlu0 %935
        %938 = vst.msk [vmem:[%s930 + $0x1] sm:$0xf] %vm442, %v936
        %s939 = scalar_lea.vmem [#allocation2], 448
        %940 = vst.msk [vmem:[%s939] sm:$0x1f] %vm435, 0.0
        %s941 = scalar_lea.vmem %s429, 224
        %v942 = vld [vmem:[%s941] sm:$0xf]
        %944 = vrot.lane.b32.xlu0 %v942, 1
        %v945 = vpop.permute.xlu0 %944
        %947 = vst.msk [vmem:[%s939 + $0x1] sm:$0xf] %vm442, %v945
        %s948 = scalar_lea.vmem [#allocation2], 456
        %949 = vst.msk [vmem:[%s948] sm:$0x1f] %vm435, 0.0
        %s950 = scalar_lea.vmem %s429, 228
        %v951 = vld [vmem:[%s950] sm:$0xf]
        %953 = vrot.lane.b32.xlu0 %v951, 1
        %v954 = vpop.permute.xlu0 %953
        %956 = vst.msk [vmem:[%s948 + $0x1] sm:$0xf] %vm442, %v954
        %s957 = scalar_lea.vmem [#allocation2], 464
        %958 = vst.msk [vmem:[%s957] sm:$0x1f] %vm435, 0.0
        %s959 = scalar_lea.vmem %s429, 232
        %v960 = vld [vmem:[%s959] sm:$0xf]
        %962 = vrot.lane.b32.xlu0 %v960, 1
        %v963 = vpop.permute.xlu0 %962
        %965 = vst.msk [vmem:[%s957 + $0x1] sm:$0xf] %vm442, %v963
        %s966 = scalar_lea.vmem [#allocation2], 472
        %967 = vst.msk [vmem:[%s966] sm:$0x1f] %vm435, 0.0
        %s968 = scalar_lea.vmem %s429, 236
        %v969 = vld [vmem:[%s968] sm:$0xf]
        %971 = vrot.lane.b32.xlu0 %v969, 1
        %v972 = vpop.permute.xlu0 %971
        %974 = vst.msk [vmem:[%s966 + $0x1] sm:$0xf] %vm442, %v972
        %s975 = scalar_lea.vmem [#allocation2], 480
        %976 = vst.msk [vmem:[%s975] sm:$0x1f] %vm435, 0.0
        %s977 = scalar_lea.vmem %s429, 240
        %v978 = vld [vmem:[%s977] sm:$0xf]
        %980 = vrot.lane.b32.xlu0 %v978, 1
        %v981 = vpop.permute.xlu0 %980
        %983 = vst.msk [vmem:[%s975 + $0x1] sm:$0xf] %vm442, %v981
        %s984 = scalar_lea.vmem [#allocation2], 488
        %985 = vst.msk [vmem:[%s984] sm:$0x1f] %vm435, 0.0
        %s986 = scalar_lea.vmem %s429, 244
        %v987 = vld [vmem:[%s986] sm:$0xf]
        %989 = vrot.lane.b32.xlu0 %v987, 1
        %v990 = vpop.permute.xlu0 %989
        %992 = vst.msk [vmem:[%s984 + $0x1] sm:$0xf] %vm442, %v990
        %s993 = scalar_lea.vmem [#allocation2], 496
        %994 = vst.msk [vmem:[%s993] sm:$0x1f] %vm435, 0.0
        %s995 = scalar_lea.vmem %s429, 248
        %v996 = vld [vmem:[%s995] sm:$0xf]
        %998 = vrot.lane.b32.xlu0 %v996, 1
        %v999 = vpop.permute.xlu0 %998
        %1001 = vst.msk [vmem:[%s993 + $0x1] sm:$0xf] %vm442, %v999
        %s1002 = scalar_lea.vmem [#allocation2], 504
        %1003 = vst.msk [vmem:[%s1002] sm:$0x1f] %vm435, 0.0
        %s1004 = scalar_lea.vmem %s429, 252
        %v1005 = vld [vmem:[%s1004] sm:$0xf]
        %1007 = vrot.lane.b32.xlu0 %v1005, 1
        %v1008 = vpop.permute.xlu0 %1007
        %1010 = vst.msk [vmem:[%s1002 + $0x1] sm:$0xf] %vm442, %v1008
        %s1011 = sld [smem:[#allocation4]]
        %v1012 = vld [vmem:[%s975] sm:$0xf]
        %v1013 = vstv %s1011
        %v1014 = vmul.f32 %v1013, %v1012
        %v1015 = vadd.f32 %v1014, 0.0
        %s1016 = sld [smem:[#allocation4 + $0x4]]
        %v1017 = vld [vmem:[%s867] sm:$0xf]
        %v1018 = vstv %s1016
        %v1019 = vmul.f32 %v1018, %v1017
        %1021 = vrot.lane.b32.xlu0 %v1019, 127
        %v1022 = vpop.permute.xlu0 %1021
        %v1024 = vadd.f32 %v1015, %v1022
        %s1025 = sld [smem:[#allocation4 + $0x8]]
        %v1026 = vld [vmem:[%s903] sm:$0xf]
        %v1027 = vstv %s1025
        %v1028 = vmul.f32 %v1027, %v1026
        %1030 = vrot.lane.b32.xlu0 %v1028, 127
        %v1031 = vpop.permute.xlu0 %1030
        %v1033 = vadd.f32 %v1024, %v1031
        %s1034 = sld [smem:[#allocation4 + $0xc]]
        %v1035 = vld [vmem:[%s543 + $0x1] sm:$0xf]
        %v1036 = vstv %s1034
        %v1037 = vmul.f32 %v1036, %v1035
        %v1038 = vadd.f32 %v1033, %v1037
        %s1039 = sld [smem:[#allocation4 + $0x10]]
        %v1040 = vld [vmem:[#allocation2 + $0x1] sm:$0xf]
        %v1041 = vstv %s1039
        %v1042 = vmul.f32 %v1041, %v1040
        %1044 = vrot.lane.b32.xlu0 %v1042, 127
        %v1045 = vpop.permute.xlu0 %1044
        %v1047 = vadd.f32 %v1038, %v1045
        %s1048 = sld [smem:[#allocation4 + $0x14]]
        %v1049 = vld [vmem:[%s471 + $0x1] sm:$0xf]
        %v1050 = vstv %s1048
        %v1051 = vmul.f32 %v1050, %v1049
        %1053 = vrot.lane.b32.xlu0 %v1051, 127
        %v1054 = vpop.permute.xlu0 %1053
        %v1056 = vadd.f32 %v1047, %v1054
        %s1057 = sld [smem:[#allocation4 + $0x18]]
        %v1058 = vld [vmem:[%s687 + $0x1] sm:$0xf]
        %v1059 = vstv %s1057
        %v1060 = vmul.f32 %v1059, %v1058
        %v1061 = vadd.f32 %v1056, %v1060
        %s1062 = sld [smem:[#allocation4 + $0x1c]]
        %v1063 = vld [vmem:[%s579 + $0x1] sm:$0xf]
        %v1064 = vstv %s1062
        %v1065 = vmul.f32 %v1064, %v1063
        %1067 = vrot.lane.b32.xlu0 %v1065, 127
        %v1068 = vpop.permute.xlu0 %1067
        %v1070 = vadd.f32 %v1061, %v1068
        %s1071 = sld [smem:[#allocation4 + $0x20]]
        %v1072 = vld [vmem:[%s615 + $0x1] sm:$0xf]
        %v1073 = vstv %s1071
        %v1074 = vmul.f32 %v1073, %v1072
        %1076 = vrot.lane.b32.xlu0 %v1074, 127
        %v1077 = vpop.permute.xlu0 %1076
        %v1079 = vadd.f32 %v1070, %v1077
        %s1080 = sld [smem:[#allocation6]]
        %v1081 = vstv %s1080
        %v1082 = vadd.f32 %v1079, %v1081
        %v1083 = vmax.f32 %v1082, 0.0
        %s1084 = sld [smem:[#allocation4 + $0x1]]
        %v1085 = vld [vmem:[%s984] sm:$0xf]
        %v1086 = vstv %s1084
        %v1087 = vmul.f32 %v1086, %v1085
        %v1088 = vadd.f32 %v1087, 0.0
        %s1089 = sld [smem:[#allocation4 + $0x5]]
        %v1090 = vld [vmem:[%s876] sm:$0xf]
        %v1091 = vstv %s1089
        %v1092 = vmul.f32 %v1091, %v1090
        %1094 = vrot.lane.b32.xlu0 %v1092, 127
        %v1095 = vpop.permute.xlu0 %1094
        %v1097 = vadd.f32 %v1088, %v1095
        %s1098 = sld [smem:[#allocation4 + $0x9]]
        %v1099 = vld [vmem:[%s912] sm:$0xf]
        %v1100 = vstv %s1098
        %v1101 = vmul.f32 %v1100, %v1099
        %1103 = vrot.lane.b32.xlu0 %v1101, 127
        %v1104 = vpop.permute.xlu0 %1103
        %v1106 = vadd.f32 %v1097, %v1104
        %s1107 = sld [smem:[#allocation4 + $0xd]]
        %v1108 = vld [vmem:[%s552 + $0x1] sm:$0xf]
        %v1109 = vstv %s1107
        %v1110 = vmul.f32 %v1109, %v1108
        %v1111 = vadd.f32 %v1106, %v1110
        %s1112 = sld [smem:[#allocation4 + $0x11]]
        %v1113 = vld [vmem:[%s444 + $0x1] sm:$0xf]
        %v1114 = vstv %s1112
        %v1115 = vmul.f32 %v1114, %v1113
        %1117 = vrot.lane.b32.xlu0 %v1115, 127
        %v1118 = vpop.permute.xlu0 %1117
        %v1120 = vadd.f32 %v1111, %v1118
        %s1121 = sld [smem:[#allocation4 + $0x15]]
        %v1122 = vld [vmem:[%s480 + $0x1] sm:$0xf]
        %v1123 = vstv %s1121
        %v1124 = vmul.f32 %v1123, %v1122
        %1126 = vrot.lane.b32.xlu0 %v1124, 127
        %v1127 = vpop.permute.xlu0 %1126
        %v1129 = vadd.f32 %v1120, %v1127
        %s1130 = sld [smem:[#allocation4 + $0x19]]
        %v1131 = vld [vmem:[%s696 + $0x1] sm:$0xf]
        %v1132 = vstv %s1130
        %v1133 = vmul.f32 %v1132, %v1131
        %v1134 = vadd.f32 %v1129, %v1133
        %s1135 = sld [smem:[#allocation4 + $0x1d]]
        %v1136 = vld [vmem:[%s588 + $0x1] sm:$0xf]
        %v1137 = vstv %s1135
        %v1138 = vmul.f32 %v1137, %v1136
        %1140 = vrot.lane.b32.xlu0 %v1138, 127
        %v1141 = vpop.permute.xlu0 %1140
        %v1143 = vadd.f32 %v1134, %v1141
        %s1144 = sld [smem:[#allocation4 + $0x21]]
        %v1145 = vld [vmem:[%s624 + $0x1] sm:$0xf]
        %v1146 = vstv %s1144
        %v1147 = vmul.f32 %v1146, %v1145
        %1149 = vrot.lane.b32.xlu0 %v1147, 127
        %v1150 = vpop.permute.xlu0 %1149
        %v1152 = vadd.f32 %v1143, %v1150
        %s1153 = sld [smem:[#allocation6 + $0x1]]
        %v1154 = vstv %s1153
        %v1155 = vadd.f32 %v1152, %v1154
        %v1156 = vmax.f32 %v1155, 0.0
        %s1157 = sld [smem:[#allocation4 + $0x2]]
        %v1158 = vld [vmem:[%s993] sm:$0xf]
        %v1159 = vstv %s1157
        %v1160 = vmul.f32 %v1159, %v1158
        %v1161 = vadd.f32 %v1160, 0.0
        %s1162 = sld [smem:[#allocation4 + $0x6]]
        %v1163 = vld [vmem:[%s885] sm:$0xf]
        %v1164 = vstv %s1162
        %v1165 = vmul.f32 %v1164, %v1163
        %1167 = vrot.lane.b32.xlu0 %v1165, 127
        %v1168 = vpop.permute.xlu0 %1167
        %v1170 = vadd.f32 %v1161, %v1168
        %s1171 = sld [smem:[#allocation4 + $0xa]]
        %v1172 = vld [vmem:[%s921] sm:$0xf]
        %v1173 = vstv %s1171
        %v1174 = vmul.f32 %v1173, %v1172
        %1176 = vrot.lane.b32.xlu0 %v1174, 127
        %v1177 = vpop.permute.xlu0 %1176
        %v1179 = vadd.f32 %v1170, %v1177
        %s1180 = sld [smem:[#allocation4 + $0xe]]
        %v1181 = vld [vmem:[%s561 + $0x1] sm:$0xf]
        %v1182 = vstv %s1180
        %v1183 = vmul.f32 %v1182, %v1181
        %v1184 = vadd.f32 %v1179, %v1183
        %s1185 = sld [smem:[#allocation4 + $0x12]]
        %v1186 = vld [vmem:[%s453 + $0x1] sm:$0xf]
        %v1187 = vstv %s1185
        %v1188 = vmul.f32 %v1187, %v1186
        %1190 = vrot.lane.b32.xlu0 %v1188, 127
        %v1191 = vpop.permute.xlu0 %1190
        %v1193 = vadd.f32 %v1184, %v1191
        %s1194 = sld [smem:[#allocation4 + $0x16]]
        %v1195 = vld [vmem:[%s489 + $0x1] sm:$0xf]
        %v1196 = vstv %s1194
        %v1197 = vmul.f32 %v1196, %v1195
        %1199 = vrot.lane.b32.xlu0 %v1197, 127
        %v1200 = vpop.permute.xlu0 %1199
        %v1202 = vadd.f32 %v1193, %v1200
        %s1203 = sld [smem:[#allocation4 + $0x1a]]
        %v1204 = vld [vmem:[%s705 + $0x1] sm:$0xf]
        %v1205 = vstv %s1203
        %v1206 = vmul.f32 %v1205, %v1204
        %v1207 = vadd.f32 %v1202, %v1206
        %s1208 = sld [smem:[#allocation4 + $0x1e]]
        %v1209 = vld [vmem:[%s597 + $0x1] sm:$0xf]
        %v1210 = vstv %s1208
        %v1211 = vmul.f32 %v1210, %v1209
        %1213 = vrot.lane.b32.xlu0 %v1211, 127
        %v1214 = vpop.permute.xlu0 %1213
        %v1216 = vadd.f32 %v1207, %v1214
        %s1217 = sld [smem:[#allocation4 + $0x22]]
        %v1218 = vld [vmem:[%s633 + $0x1] sm:$0xf]
        %v1219 = vstv %s1217
        %v1220 = vmul.f32 %v1219, %v1218
        %1222 = vrot.lane.b32.xlu0 %v1220, 127
        %v1223 = vpop.permute.xlu0 %1222
        %v1225 = vadd.f32 %v1216, %v1223
        %s1226 = sld [smem:[#allocation6 + $0x2]]
        %v1227 = vstv %s1226
        %v1228 = vadd.f32 %v1225, %v1227
        %v1229 = vmax.f32 %v1228, 0.0
        %s1230 = sld [smem:[#allocation4 + $0x3]]
        %v1231 = vld [vmem:[%s1002] sm:$0xf]
        %v1232 = vstv %s1230
        %v1233 = vmul.f32 %v1232, %v1231
        %v1234 = vadd.f32 %v1233, 0.0
        %s1235 = sld [smem:[#allocation4 + $0x7]]
        %v1236 = vld [vmem:[%s894] sm:$0xf]
        %v1237 = vstv %s1235
        %v1238 = vmul.f32 %v1237, %v1236
        %1240 = vrot.lane.b32.xlu0 %v1238, 127
        %v1241 = vpop.permute.xlu0 %1240
        %v1243 = vadd.f32 %v1234, %v1241
        %s1244 = sld [smem:[#allocation4 + $0xb]]
        %v1245 = vld [vmem:[%s930] sm:$0xf]
        %v1246 = vstv %s1244
        %v1247 = vmul.f32 %v1246, %v1245
        %1249 = vrot.lane.b32.xlu0 %v1247, 127
        %v1250 = vpop.permute.xlu0 %1249
        %v1252 = vadd.f32 %v1243, %v1250
        %s1253 = sld [smem:[#allocation4 + $0xf]]
        %v1254 = vld [vmem:[%s570 + $0x1] sm:$0xf]
        %v1255 = vstv %s1253
        %v1256 = vmul.f32 %v1255, %v1254
        %v1257 = vadd.f32 %v1252, %v1256
        %s1258 = sld [smem:[#allocation4 + $0x13]]
        %v1259 = vld [vmem:[%s462 + $0x1] sm:$0xf]
        %v1260 = vstv %s1258
        %v1261 = vmul.f32 %v1260, %v1259
        %1263 = vrot.lane.b32.xlu0 %v1261, 127
        %v1264 = vpop.permute.xlu0 %1263
        %v1266 = vadd.f32 %v1257, %v1264
        %s1267 = sld [smem:[#allocation4 + $0x17]]
        %v1268 = vld [vmem:[%s498 + $0x1] sm:$0xf]
        %v1269 = vstv %s1267
        %v1270 = vmul.f32 %v1269, %v1268
        %1272 = vrot.lane.b32.xlu0 %v1270, 127
        %v1273 = vpop.permute.xlu0 %1272
        %v1275 = vadd.f32 %v1266, %v1273
        %s1276 = sld [smem:[#allocation4 + $0x1b]]
        %v1277 = vld [vmem:[%s714 + $0x1] sm:$0xf]
        %v1278 = vstv %s1276
        %v1279 = vmul.f32 %v1278, %v1277
        %v1280 = vadd.f32 %v1275, %v1279
        %s1281 = sld [smem:[#allocation4 + $0x1f]]
        %v1282 = vld [vmem:[%s606 + $0x1] sm:$0xf]
        %v1283 = vstv %s1281
        %v1284 = vmul.f32 %v1283, %v1282
        %1286 = vrot.lane.b32.xlu0 %v1284, 127
        %v1287 = vpop.permute.xlu0 %1286
        %v1289 = vadd.f32 %v1280, %v1287
        %s1290 = sld [smem:[#allocation4 + $0x23]]
        %v1291 = vld [vmem:[%s642 + $0x1] sm:$0xf]
        %v1292 = vstv %s1290
        %v1293 = vmul.f32 %v1292, %v1291
        %1295 = vrot.lane.b32.xlu0 %v1293, 127
        %v1296 = vpop.permute.xlu0 %1295
        %v1298 = vadd.f32 %v1289, %v1296
        %s1299 = sld [smem:[#allocation6 + $0x3]]
        %v1300 = vstv %s1299
        %v1301 = vadd.f32 %v1298, %v1300
        %v1302 = vmax.f32 %v1301, 0.0
        %s1303 = sld [smem:[#allocation8]]
        %v1304 = vstv %s1303
        %v1305 = vmul.f32 %v1304, %v1083
        %v1306 = vadd.f32 %v1305, 0.0
        %s1307 = sld [smem:[#allocation8 + $0x4]]
        %v1308 = vstv %s1307
        %v1309 = vmul.f32 %v1308, %v1156
        %v1310 = vadd.f32 %v1306, %v1309
        %s1311 = sld [smem:[#allocation8 + $0x8]]
        %v1312 = vstv %s1311
        %v1313 = vmul.f32 %v1312, %v1229
        %v1314 = vadd.f32 %v1310, %v1313
        %s1315 = sld [smem:[#allocation8 + $0xc]]
        %v1316 = vstv %s1315
        %v1317 = vmul.f32 %v1316, %v1302
        %v1318 = vadd.f32 %v1314, %v1317
        %s1319 = sld [smem:[#allocation9]]
        %v1320 = vstv %s1319
        %v1321 = vadd.f32 %v1318, %v1320
        %v1322 = vmax.f32 %v1321, 0.0
        %1323 = vst.msk [vmem:[#allocation3] sm:$0x1f] %vm435, 0.0
        %1325 = vrot.lane.b32.xlu0 %v1322, 1
        %v1326 = vpop.permute.xlu0 %1325
        %1328 = vst.msk [vmem:[#allocation3 + $0x1] sm:$0xf] %vm442, %v1326
        %s1329 = sld [smem:[#allocation8 + $0x1]]
        %v1330 = vstv %s1329
        %v1331 = vmul.f32 %v1330, %v1083
        %v1332 = vadd.f32 %v1331, 0.0
        %s1333 = sld [smem:[#allocation8 + $0x5]]
        %v1334 = vstv %s1333
        %v1335 = vmul.f32 %v1334, %v1156
        %v1336 = vadd.f32 %v1332, %v1335
        %s1337 = sld [smem:[#allocation8 + $0x9]]
        %v1338 = vstv %s1337
        %v1339 = vmul.f32 %v1338, %v1229
        %v1340 = vadd.f32 %v1336, %v1339
        %s1341 = sld [smem:[#allocation8 + $0xd]]
        %v1342 = vstv %s1341
        %v1343 = vmul.f32 %v1342, %v1302
        %v1344 = vadd.f32 %v1340, %v1343
        %s1345 = sld [smem:[#allocation9 + $0x1]]
        %v1346 = vstv %s1345
        %v1347 = vadd.f32 %v1344, %v1346
        %v1348 = vmax.f32 %v1347, 0.0
        %s1349 = scalar_lea.vmem [#allocation3], 8
        %1350 = vst.msk [vmem:[%s1349] sm:$0x1f] %vm435, 0.0
        %1352 = vrot.lane.b32.xlu0 %v1348, 1
        %v1353 = vpop.permute.xlu0 %1352
        %1355 = vst.msk [vmem:[%s1349 + $0x1] sm:$0xf] %vm442, %v1353
        %s1356 = sld [smem:[#allocation8 + $0x2]]
        %v1357 = vstv %s1356
        %v1358 = vmul.f32 %v1357, %v1083
        %v1359 = vadd.f32 %v1358, 0.0
        %s1360 = sld [smem:[#allocation8 + $0x6]]
        %v1361 = vstv %s1360
        %v1362 = vmul.f32 %v1361, %v1156
        %v1363 = vadd.f32 %v1359, %v1362
        %s1364 = sld [smem:[#allocation8 + $0xa]]
        %v1365 = vstv %s1364
        %v1366 = vmul.f32 %v1365, %v1229
        %v1367 = vadd.f32 %v1363, %v1366
        %s1368 = sld [smem:[#allocation8 + $0xe]]
        %v1369 = vstv %s1368
        %v1370 = vmul.f32 %v1369, %v1302
        %v1371 = vadd.f32 %v1367, %v1370
        %s1372 = sld [smem:[#allocation9 + $0x2]]
        %v1373 = vstv %s1372
        %v1374 = vadd.f32 %v1371, %v1373
        %v1375 = vmax.f32 %v1374, 0.0
        %s1376 = scalar_lea.vmem [#allocation3], 16
        %1377 = vst.msk [vmem:[%s1376] sm:$0x1f] %vm435, 0.0
        %1379 = vrot.lane.b32.xlu0 %v1375, 1
        %v1380 = vpop.permute.xlu0 %1379
        %1382 = vst.msk [vmem:[%s1376 + $0x1] sm:$0xf] %vm442, %v1380
        %s1383 = sld [smem:[#allocation8 + $0x3]]
        %v1384 = vstv %s1383
        %v1385 = vmul.f32 %v1384, %v1083
        %v1386 = vadd.f32 %v1385, 0.0
        %s1387 = sld [smem:[#allocation8 + $0x7]]
        %v1388 = vstv %s1387
        %v1389 = vmul.f32 %v1388, %v1156
        %v1390 = vadd.f32 %v1386, %v1389
        %s1391 = sld [smem:[#allocation8 + $0xb]]
        %v1392 = vstv %s1391
        %v1393 = vmul.f32 %v1392, %v1229
        %v1394 = vadd.f32 %v1390, %v1393
        %s1395 = sld [smem:[#allocation8 + $0xf]]
        %v1396 = vstv %s1395
        %v1397 = vmul.f32 %v1396, %v1302
        %v1398 = vadd.f32 %v1394, %v1397
        %s1399 = sld [smem:[#allocation9 + $0x3]]
        %v1400 = vstv %s1399
        %v1401 = vadd.f32 %v1398, %v1400
        %v1402 = vmax.f32 %v1401, 0.0
        %s1403 = scalar_lea.vmem [#allocation3], 24
        %1404 = vst.msk [vmem:[%s1403] sm:$0x1f] %vm435, 0.0
        %1406 = vrot.lane.b32.xlu0 %v1402, 1
        %v1407 = vpop.permute.xlu0 %1406
        %1409 = vst.msk [vmem:[%s1403 + $0x1] sm:$0xf] %vm442, %v1407
        %s1410 = sld [smem:[#allocation4]]
        %v1411 = vld [vmem:[%s903] sm:$0xf]
        %v1412 = vstv %s1410
        %v1413 = vmul.f32 %v1412, %v1411
        %v1414 = vadd.f32 %v1413, 0.0
        %s1415 = sld [smem:[#allocation4 + $0x4]]
        %v1416 = vld [vmem:[%s939] sm:$0xf]
        %v1417 = vstv %s1415
        %v1418 = vmul.f32 %v1417, %v1416
        %v1419 = vadd.f32 %v1414, %v1418
        %s1420 = sld [smem:[#allocation4 + $0x8]]
        %v1421 = vld [vmem:[%s975] sm:$0xf]
        %v1422 = vstv %s1420
        %v1423 = vmul.f32 %v1422, %v1421
        %v1424 = vadd.f32 %v1419, %v1423
        %s1425 = sld [smem:[#allocation4 + $0xc]]
        %v1426 = vld [vmem:[%s471 + $0x1] sm:$0xf]
        %v1427 = vstv %s1425
        %v1428 = vmul.f32 %v1427, %v1426
        %v1429 = vadd.f32 %v1424, %v1428
        %s1430 = sld [smem:[#allocation4 + $0x10]]
        %v1431 = vld [vmem:[%s507 + $0x1] sm:$0xf]
        %v1432 = vstv %s1430
        %v1433 = vmul.f32 %v1432, %v1431
        %v1434 = vadd.f32 %v1429, %v1433
        %s1435 = sld [smem:[#allocation4 + $0x14]]
        %v1436 = vld [vmem:[%s543 + $0x1] sm:$0xf]
        %v1437 = vstv %s1435
        %v1438 = vmul.f32 %v1437, %v1436
        %v1439 = vadd.f32 %v1434, %v1438
        %s1440 = sld [smem:[#allocation4 + $0x18]]
        %v1441 = vld [vmem:[%s615 + $0x1] sm:$0xf]
        %v1442 = vstv %s1440
        %v1443 = vmul.f32 %v1442, %v1441
        %v1444 = vadd.f32 %v1439, %v1443
        %s1445 = sld [smem:[#allocation4 + $0x1c]]
        %v1446 = vld [vmem:[%s651 + $0x1] sm:$0xf]
        %v1447 = vstv %s1445
        %v1448 = vmul.f32 %v1447, %v1446
        %v1449 = vadd.f32 %v1444, %v1448
        %s1450 = sld [smem:[#allocation4 + $0x20]]
        %v1451 = vld [vmem:[%s687 + $0x1] sm:$0xf]
        %v1452 = vstv %s1450
        %v1453 = vmul.f32 %v1452, %v1451
        %v1454 = vadd.f32 %v1449, %v1453
        %s1455 = sld [smem:[#allocation6]]
        %v1456 = vstv %s1455
        %v1457 = vadd.f32 %v1454, %v1456
        %v1458 = vmax.f32 %v1457, 0.0
        %s1459 = sld [smem:[#allocation4 + $0x1]]
        %v1460 = vld [vmem:[%s912] sm:$0xf]
        %v1461 = vstv %s1459
        %v1462 = vmul.f32 %v1461, %v1460
        %v1463 = vadd.f32 %v1462, 0.0
        %s1464 = sld [smem:[#allocation4 + $0x5]]
        %v1465 = vld [vmem:[%s948] sm:$0xf]
        %v1466 = vstv %s1464
        %v1467 = vmul.f32 %v1466, %v1465
        %v1468 = vadd.f32 %v1463, %v1467
        %s1469 = sld [smem:[#allocation4 + $0x9]]
        %v1470 = vld [vmem:[%s984] sm:$0xf]
        %v1471 = vstv %s1469
        %v1472 = vmul.f32 %v1471, %v1470
        %v1473 = vadd.f32 %v1468, %v1472
        %s1474 = sld [smem:[#allocation4 + $0xd]]
        %v1475 = vld [vmem:[%s480 + $0x1] sm:$0xf]
        %v1476 = vstv %s1474
        %v1477 = vmul.f32 %v1476, %v1475
        %v1478 = vadd.f32 %v1473, %v1477
        %s1479 = sld [smem:[#allocation4 + $0x11]]
        %v1480 = vld [vmem:[%s516 + $0x1] sm:$0xf]
        %v1481 = vstv %s1479
        %v1482 = vmul.f32 %v1481, %v1480
        %v1483 = vadd.f32 %v1478, %v1482
        %s1484 = sld [smem:[#allocation4 + $0x15]]
        %v1485 = vld [vmem:[%s552 + $0x1] sm:$0xf]
        %v1486 = vstv %s1484
        %v1487 = vmul.f32 %v1486, %v1485
        %v1488 = vadd.f32 %v1483, %v1487
        %s1489 = sld [smem:[#allocation4 + $0x19]]
        %v1490 = vld [vmem:[%s624 + $0x1] sm:$0xf]
        %v1491 = vstv %s1489
        %v1492 = vmul.f32 %v1491, %v1490
        %v1493 = vadd.f32 %v1488, %v1492
        %s1494 = sld [smem:[#allocation4 + $0x1d]]
        %v1495 = vld [vmem:[%s660 + $0x1] sm:$0xf]
        %v1496 = vstv %s1494
        %v1497 = vmul.f32 %v1496, %v1495
        %v1498 = vadd.f32 %v1493, %v1497
        %s1499 = sld [smem:[#allocation4 + $0x21]]
        %v1500 = vld [vmem:[%s696 + $0x1] sm:$0xf]
        %v1501 = vstv %s1499
        %v1502 = vmul.f32 %v1501, %v1500
        %v1503 = vadd.f32 %v1498, %v1502
        %s1504 = sld [smem:[#allocation6 + $0x1]]
        %v1505 = vstv %s1504
        %v1506 = vadd.f32 %v1503, %v1505
        %v1507 = vmax.f32 %v1506, 0.0
        %s1508 = sld [smem:[#allocation4 + $0x2]]
        %v1509 = vld [vmem:[%s921] sm:$0xf]
        %v1510 = vstv %s1508
        %v1511 = vmul.f32 %v1510, %v1509
        %v1512 = vadd.f32 %v1511, 0.0
        %s1513 = sld [smem:[#allocation4 + $0x6]]
        %v1514 = vld [vmem:[%s957] sm:$0xf]
        %v1515 = vstv %s1513
        %v1516 = vmul.f32 %v1515, %v1514
        %v1517 = vadd.f32 %v1512, %v1516
        %s1518 = sld [smem:[#allocation4 + $0xa]]
        %v1519 = vld [vmem:[%s993] sm:$0xf]
        %v1520 = vstv %s1518
        %v1521 = vmul.f32 %v1520, %v1519
        %v1522 = vadd.f32 %v1517, %v1521
        %s1523 = sld [smem:[#allocation4 + $0xe]]
        %v1524 = vld [vmem:[%s489 + $0x1] sm:$0xf]
        %v1525 = vstv %s1523
        %v1526 = vmul.f32 %v1525, %v1524
        %v1527 = vadd.f32 %v1522, %v1526
        %s1528 = sld [smem:[#allocation4 + $0x12]]
        %v1529 = vld [vmem:[%s525 + $0x1] sm:$0xf]
        %v1530 = vstv %s1528
        %v1531 = vmul.f32 %v1530, %v1529
        %v1532 = vadd.f32 %v1527, %v1531
        %s1533 = sld [smem:[#allocation4 + $0x16]]
        %v1534 = vld [vmem:[%s561 + $0x1] sm:$0xf]
        %v1535 = vstv %s1533
        %v1536 = vmul.f32 %v1535, %v1534
        %v1537 = vadd.f32 %v1532, %v1536
        %s1538 = sld [smem:[#allocation4 + $0x1a]]
        %v1539 = vld [vmem:[%s633 + $0x1] sm:$0xf]
        %v1540 = vstv %s1538
        %v1541 = vmul.f32 %v1540, %v1539
        %v1542 = vadd.f32 %v1537, %v1541
        %s1543 = sld [smem:[#allocation4 + $0x1e]]
        %v1544 = vld [vmem:[%s669 + $0x1] sm:$0xf]
        %v1545 = vstv %s1543
        %v1546 = vmul.f32 %v1545, %v1544
        %v1547 = vadd.f32 %v1542, %v1546
        %s1548 = sld [smem:[#allocation4 + $0x22]]
        %v1549 = vld [vmem:[%s705 + $0x1] sm:$0xf]
        %v1550 = vstv %s1548
        %v1551 = vmul.f32 %v1550, %v1549
        %v1552 = vadd.f32 %v1547, %v1551
        %s1553 = sld [smem:[#allocation6 + $0x2]]
        %v1554 = vstv %s1553
        %v1555 = vadd.f32 %v1552, %v1554
        %v1556 = vmax.f32 %v1555, 0.0
        %s1557 = sld [smem:[#allocation4 + $0x3]]
        %v1558 = vld [vmem:[%s930] sm:$0xf]
        %v1559 = vstv %s1557
        %v1560 = vmul.f32 %v1559, %v1558
        %v1561 = vadd.f32 %v1560, 0.0
        %s1562 = sld [smem:[#allocation4 + $0x7]]
        %v1563 = vld [vmem:[%s966] sm:$0xf]
        %v1564 = vstv %s1562
        %v1565 = vmul.f32 %v1564, %v1563
        %v1566 = vadd.f32 %v1561, %v1565
        %s1567 = sld [smem:[#allocation4 + $0xb]]
        %v1568 = vld [vmem:[%s1002] sm:$0xf]
        %v1569 = vstv %s1567
        %v1570 = vmul.f32 %v1569, %v1568
        %v1571 = vadd.f32 %v1566, %v1570
        %s1572 = sld [smem:[#allocation4 + $0xf]]
        %v1573 = vld [vmem:[%s498 + $0x1] sm:$0xf]
        %v1574 = vstv %s1572
        %v1575 = vmul.f32 %v1574, %v1573
        %v1576 = vadd.f32 %v1571, %v1575
        %s1577 = sld [smem:[#allocation4 + $0x13]]
        %v1578 = vld [vmem:[%s534 + $0x1] sm:$0xf]
        %v1579 = vstv %s1577
        %v1580 = vmul.f32 %v1579, %v1578
        %v1581 = vadd.f32 %v1576, %v1580
        %s1582 = sld [smem:[#allocation4 + $0x17]]
        %v1583 = vld [vmem:[%s570 + $0x1] sm:$0xf]
        %v1584 = vstv %s1582
        %v1585 = vmul.f32 %v1584, %v1583
        %v1586 = vadd.f32 %v1581, %v1585
        %s1587 = sld [smem:[#allocation4 + $0x1b]]
        %v1588 = vld [vmem:[%s642 + $0x1] sm:$0xf]
        %v1589 = vstv %s1587
        %v1590 = vmul.f32 %v1589, %v1588
        %v1591 = vadd.f32 %v1586, %v1590
        %s1592 = sld [smem:[#allocation4 + $0x1f]]
        %v1593 = vld [vmem:[%s678 + $0x1] sm:$0xf]
        %v1594 = vstv %s1592
        %v1595 = vmul.f32 %v1594, %v1593
        %v1596 = vadd.f32 %v1591, %v1595
        %s1597 = sld [smem:[#allocation4 + $0x23]]
        %v1598 = vld [vmem:[%s714 + $0x1] sm:$0xf]
        %v1599 = vstv %s1597
        %v1600 = vmul.f32 %v1599, %v1598
        %v1601 = vadd.f32 %v1596, %v1600
        %s1602 = sld [smem:[#allocation6 + $0x3]]
        %v1603 = vstv %s1602
        %v1604 = vadd.f32 %v1601, %v1603
        %v1605 = vmax.f32 %v1604, 0.0
        %s1606 = sld [smem:[#allocation8]]
        %v1607 = vstv %s1606
        %v1608 = vmul.f32 %v1607, %v1458
        %v1609 = vadd.f32 %v1608, 0.0
        %s1610 = sld [smem:[#allocation8 + $0x4]]
        %v1611 = vstv %s1610
        %v1612 = vmul.f32 %v1611, %v1507
        %v1613 = vadd.f32 %v1609, %v1612
        %s1614 = sld [smem:[#allocation8 + $0x8]]
        %v1615 = vstv %s1614
        %v1616 = vmul.f32 %v1615, %v1556
        %v1617 = vadd.f32 %v1613, %v1616
        %s1618 = sld [smem:[#allocation8 + $0xc]]
        %v1619 = vstv %s1618
        %v1620 = vmul.f32 %v1619, %v1605
        %v1621 = vadd.f32 %v1617, %v1620
        %s1622 = sld [smem:[#allocation9]]
        %v1623 = vstv %s1622
        %v1624 = vadd.f32 %v1621, %v1623
        %v1625 = vmax.f32 %v1624, 0.0
        %s1626 = scalar_lea.vmem [#allocation3], 32
        %1627 = vst.msk [vmem:[%s1626] sm:$0x1f] %vm435, 0.0
        %1628 = vst.msk [vmem:[%s1626 + $0x1] sm:$0xf] %vm442, %v1625
        %s1629 = sld [smem:[#allocation8 + $0x1]]
        %v1630 = vstv %s1629
        %v1631 = vmul.f32 %v1630, %v1458
        %v1632 = vadd.f32 %v1631, 0.0
        %s1633 = sld [smem:[#allocation8 + $0x5]]
        %v1634 = vstv %s1633
        %v1635 = vmul.f32 %v1634, %v1507
        %v1636 = vadd.f32 %v1632, %v1635
        %s1637 = sld [smem:[#allocation8 + $0x9]]
        %v1638 = vstv %s1637
        %v1639 = vmul.f32 %v1638, %v1556
        %v1640 = vadd.f32 %v1636, %v1639
        %s1641 = sld [smem:[#allocation8 + $0xd]]
        %v1642 = vstv %s1641
        %v1643 = vmul.f32 %v1642, %v1605
        %v1644 = vadd.f32 %v1640, %v1643
        %s1645 = sld [smem:[#allocation9 + $0x1]]
        %v1646 = vstv %s1645
        %v1647 = vadd.f32 %v1644, %v1646
        %v1648 = vmax.f32 %v1647, 0.0
        %s1649 = scalar_lea.vmem [#allocation3], 40
        %1650 = vst.msk [vmem:[%s1649] sm:$0x1f] %vm435, 0.0
        %1651 = vst.msk [vmem:[%s1649 + $0x1] sm:$0xf] %vm442, %v1648
        %s1652 = sld [smem:[#allocation8 + $0x2]]
        %v1653 = vstv %s1652
        %v1654 = vmul.f32 %v1653, %v1458
        %v1655 = vadd.f32 %v1654, 0.0
        %s1656 = sld [smem:[#allocation8 + $0x6]]
        %v1657 = vstv %s1656
        %v1658 = vmul.f32 %v1657, %v1507
        %v1659 = vadd.f32 %v1655, %v1658
        %s1660 = sld [smem:[#allocation8 + $0xa]]
        %v1661 = vstv %s1660
        %v1662 = vmul.f32 %v1661, %v1556
        %v1663 = vadd.f32 %v1659, %v1662
        %s1664 = sld [smem:[#allocation8 + $0xe]]
        %v1665 = vstv %s1664
        %v1666 = vmul.f32 %v1665, %v1605
        %v1667 = vadd.f32 %v1663, %v1666
        %s1668 = sld [smem:[#allocation9 + $0x2]]
        %v1669 = vstv %s1668
        %v1670 = vadd.f32 %v1667, %v1669
        %v1671 = vmax.f32 %v1670, 0.0
        %s1672 = scalar_lea.vmem [#allocation3], 48
        %1673 = vst.msk [vmem:[%s1672] sm:$0x1f] %vm435, 0.0
        %1674 = vst.msk [vmem:[%s1672 + $0x1] sm:$0xf] %vm442, %v1671
        %s1675 = sld [smem:[#allocation8 + $0x3]]
        %v1676 = vstv %s1675
        %v1677 = vmul.f32 %v1676, %v1458
        %v1678 = vadd.f32 %v1677, 0.0
        %s1679 = sld [smem:[#allocation8 + $0x7]]
        %v1680 = vstv %s1679
        %v1681 = vmul.f32 %v1680, %v1507
        %v1682 = vadd.f32 %v1678, %v1681
        %s1683 = sld [smem:[#allocation8 + $0xb]]
        %v1684 = vstv %s1683
        %v1685 = vmul.f32 %v1684, %v1556
        %v1686 = vadd.f32 %v1682, %v1685
        %s1687 = sld [smem:[#allocation8 + $0xf]]
        %v1688 = vstv %s1687
        %v1689 = vmul.f32 %v1688, %v1605
        %v1690 = vadd.f32 %v1686, %v1689
        %s1691 = sld [smem:[#allocation9 + $0x3]]
        %v1692 = vstv %s1691
        %v1693 = vadd.f32 %v1690, %v1692
        %v1694 = vmax.f32 %v1693, 0.0
        %s1695 = scalar_lea.vmem [#allocation3], 56
        %1696 = vst.msk [vmem:[%s1695] sm:$0x1f] %vm435, 0.0
        %1697 = vst.msk [vmem:[%s1695 + $0x1] sm:$0xf] %vm442, %v1694
        %s1698 = sld [smem:[#allocation4]]
        %v1699 = vld [vmem:[%s687 + $0x1] sm:$0xf]
        %v1700 = vstv %s1698
        %v1701 = vmul.f32 %v1700, %v1699
        %v1702 = vadd.f32 %v1701, 0.0
        %s1703 = sld [smem:[#allocation4 + $0x4]]
        %v1704 = vld [vmem:[%s579 + $0x1] sm:$0xf]
        %v1705 = vstv %s1703
        %v1706 = vmul.f32 %v1705, %v1704
        %1708 = vrot.lane.b32.xlu0 %v1706, 127
        %v1709 = vpop.permute.xlu0 %1708
        %v1711 = vadd.f32 %v1702, %v1709
        %s1712 = sld [smem:[#allocation4 + $0x8]]
        %v1713 = vld [vmem:[%s615 + $0x1] sm:$0xf]
        %v1714 = vstv %s1712
        %v1715 = vmul.f32 %v1714, %v1713
        %1717 = vrot.lane.b32.xlu0 %v1715, 127
        %v1718 = vpop.permute.xlu0 %1717
        %v1720 = vadd.f32 %v1711, %v1718
        %s1721 = sld [smem:[#allocation4 + $0xc]]
        %v1722 = vld [vmem:[%s831 + $0x1] sm:$0xf]
        %v1723 = vstv %s1721
        %v1724 = vmul.f32 %v1723, %v1722
        %v1725 = vadd.f32 %v1720, %v1724
        %s1726 = sld [smem:[#allocation4 + $0x10]]
        %v1727 = vld [vmem:[%s723 + $0x1] sm:$0xf]
        %v1728 = vstv %s1726
        %v1729 = vmul.f32 %v1728, %v1727
        %1731 = vrot.lane.b32.xlu0 %v1729, 127
        %v1732 = vpop.permute.xlu0 %1731
        %v1734 = vadd.f32 %v1725, %v1732
        %s1735 = sld [smem:[#allocation4 + $0x14]]
        %v1736 = vld [vmem:[%s759 + $0x1] sm:$0xf]
        %v1737 = vstv %s1735
        %v1738 = vmul.f32 %v1737, %v1736
        %1740 = vrot.lane.b32.xlu0 %v1738, 127
        %v1741 = vpop.permute.xlu0 %1740
        %v1743 = vadd.f32 %v1734, %v1741
        %s1744 = sld [smem:[#allocation4 + $0x18]]
        %v1745 = vld [vmem:[%s975 + $0x1] sm:$0xf]
        %v1746 = vstv %s1744
        %v1747 = vmul.f32 %v1746, %v1745
        %v1748 = vadd.f32 %v1743, %v1747
        %s1749 = sld [smem:[#allocation4 + $0x1c]]
        %v1750 = vld [vmem:[%s867 + $0x1] sm:$0xf]
        %v1751 = vstv %s1749
        %v1752 = vmul.f32 %v1751, %v1750
        %1754 = vrot.lane.b32.xlu0 %v1752, 127
        %v1755 = vpop.permute.xlu0 %1754
        %v1757 = vadd.f32 %v1748, %v1755
        %s1758 = sld [smem:[#allocation4 + $0x20]]
        %v1759 = vld [vmem:[%s903 + $0x1] sm:$0xf]
        %v1760 = vstv %s1758
        %v1761 = vmul.f32 %v1760, %v1759
        %1763 = vrot.lane.b32.xlu0 %v1761, 127
        %v1764 = vpop.permute.xlu0 %1763
        %v1766 = vadd.f32 %v1757, %v1764
        %s1767 = sld [smem:[#allocation6]]
        %v1768 = vstv %s1767
        %v1769 = vadd.f32 %v1766, %v1768
        %v1770 = vmax.f32 %v1769, 0.0
        %s1771 = sld [smem:[#allocation4 + $0x1]]
        %v1772 = vld [vmem:[%s696 + $0x1] sm:$0xf]
        %v1773 = vstv %s1771
        %v1774 = vmul.f32 %v1773, %v1772
        %v1775 = vadd.f32 %v1774, 0.0
        %s1776 = sld [smem:[#allocation4 + $0x5]]
        %v1777 = vld [vmem:[%s588 + $0x1] sm:$0xf]
        %v1778 = vstv %s1776
        %v1779 = vmul.f32 %v1778, %v1777
        %1781 = vrot.lane.b32.xlu0 %v1779, 127
        %v1782 = vpop.permute.xlu0 %1781
        %v1784 = vadd.f32 %v1775, %v1782
        %s1785 = sld [smem:[#allocation4 + $0x9]]
        %v1786 = vld [vmem:[%s624 + $0x1] sm:$0xf]
        %v1787 = vstv %s1785
        %v1788 = vmul.f32 %v1787, %v1786
        %1790 = vrot.lane.b32.xlu0 %v1788, 127
        %v1791 = vpop.permute.xlu0 %1790
        %v1793 = vadd.f32 %v1784, %v1791
        %s1794 = sld [smem:[#allocation4 + $0xd]]
        %v1795 = vld [vmem:[%s840 + $0x1] sm:$0xf]
        %v1796 = vstv %s1794
        %v1797 = vmul.f32 %v1796, %v1795
        %v1798 = vadd.f32 %v1793, %v1797
        %s1799 = sld [smem:[#allocation4 + $0x11]]
        %v1800 = vld [vmem:[%s732 + $0x1] sm:$0xf]
        %v1801 = vstv %s1799
        %v1802 = vmul.f32 %v1801, %v1800
        %1804 = vrot.lane.b32.xlu0 %v1802, 127
        %v1805 = vpop.permute.xlu0 %1804
        %v1807 = vadd.f32 %v1798, %v1805
        %s1808 = sld [smem:[#allocation4 + $0x15]]
        %v1809 = vld [vmem:[%s768 + $0x1] sm:$0xf]
        %v1810 = vstv %s1808
        %v1811 = vmul.f32 %v1810, %v1809
        %1813 = vrot.lane.b32.xlu0 %v1811, 127
        %v1814 = vpop.permute.xlu0 %1813
        %v1816 = vadd.f32 %v1807, %v1814
        %s1817 = sld [smem:[#allocation4 + $0x19]]
        %v1818 = vld [vmem:[%s984 + $0x1] sm:$0xf]
        %v1819 = vstv %s1817
        %v1820 = vmul.f32 %v1819, %v1818
        %v1821 = vadd.f32 %v1816, %v1820
        %s1822 = sld [smem:[#allocation4 + $0x1d]]
        %v1823 = vld [vmem:[%s876 + $0x1] sm:$0xf]
        %v1824 = vstv %s1822
        %v1825 = vmul.f32 %v1824, %v1823
        %1827 = vrot.lane.b32.xlu0 %v1825, 127
        %v1828 = vpop.permute.xlu0 %1827
        %v1830 = vadd.f32 %v1821, %v1828
        %s1831 = sld [smem:[#allocation4 + $0x21]]
        %v1832 = vld [vmem:[%s912 + $0x1] sm:$0xf]
        %v1833 = vstv %s1831
        %v1834 = vmul.f32 %v1833, %v1832
        %1836 = vrot.lane.b32.xlu0 %v1834, 127
        %v1837 = vpop.permute.xlu0 %1836
        %v1839 = vadd.f32 %v1830, %v1837
        %s1840 = sld [smem:[#allocation6 + $0x1]]
        %v1841 = vstv %s1840
        %v1842 = vadd.f32 %v1839, %v1841
        %v1843 = vmax.f32 %v1842, 0.0
        %s1844 = sld [smem:[#allocation4 + $0x2]]
        %v1845 = vld [vmem:[%s705 + $0x1] sm:$0xf]
        %v1846 = vstv %s1844
        %v1847 = vmul.f32 %v1846, %v1845
        %v1848 = vadd.f32 %v1847, 0.0
        %s1849 = sld [smem:[#allocation4 + $0x6]]
        %v1850 = vld [vmem:[%s597 + $0x1] sm:$0xf]
        %v1851 = vstv %s1849
        %v1852 = vmul.f32 %v1851, %v1850
        %1854 = vrot.lane.b32.xlu0 %v1852, 127
        %v1855 = vpop.permute.xlu0 %1854
        %v1857 = vadd.f32 %v1848, %v1855
        %s1858 = sld [smem:[#allocation4 + $0xa]]
        %v1859 = vld [vmem:[%s633 + $0x1] sm:$0xf]
        %v1860 = vstv %s1858
        %v1861 = vmul.f32 %v1860, %v1859
        %1863 = vrot.lane.b32.xlu0 %v1861, 127
        %v1864 = vpop.permute.xlu0 %1863
        %v1866 = vadd.f32 %v1857, %v1864
        %s1867 = sld [smem:[#allocation4 + $0xe]]
        %v1868 = vld [vmem:[%s849 + $0x1] sm:$0xf]
        %v1869 = vstv %s1867
        %v1870 = vmul.f32 %v1869, %v1868
        %v1871 = vadd.f32 %v1866, %v1870
        %s1872 = sld [smem:[#allocation4 + $0x12]]
        %v1873 = vld [vmem:[%s741 + $0x1] sm:$0xf]
        %v1874 = vstv %s1872
        %v1875 = vmul.f32 %v1874, %v1873
        %1877 = vrot.lane.b32.xlu0 %v1875, 127
        %v1878 = vpop.permute.xlu0 %1877
        %v1880 = vadd.f32 %v1871, %v1878
        %s1881 = sld [smem:[#allocation4 + $0x16]]
        %v1882 = vld [vmem:[%s777 + $0x1] sm:$0xf]
        %v1883 = vstv %s1881
        %v1884 = vmul.f32 %v1883, %v1882
        %1886 = vrot.lane.b32.xlu0 %v1884, 127
        %v1887 = vpop.permute.xlu0 %1886
        %v1889 = vadd.f32 %v1880, %v1887
        %s1890 = sld [smem:[#allocation4 + $0x1a]]
        %v1891 = vld [vmem:[%s993 + $0x1] sm:$0xf]
        %v1892 = vstv %s1890
        %v1893 = vmul.f32 %v1892, %v1891
        %v1894 = vadd.f32 %v1889, %v1893
        %s1895 = sld [smem:[#allocation4 + $0x1e]]
        %v1896 = vld [vmem:[%s885 + $0x1] sm:$0xf]
        %v1897 = vstv %s1895
        %v1898 = vmul.f32 %v1897, %v1896
        %1900 = vrot.lane.b32.xlu0 %v1898, 127
        %v1901 = vpop.permute.xlu0 %1900
        %v1903 = vadd.f32 %v1894, %v1901
        %s1904 = sld [smem:[#allocation4 + $0x22]]
        %v1905 = vld [vmem:[%s921 + $0x1] sm:$0xf]
        %v1906 = vstv %s1904
        %v1907 = vmul.f32 %v1906, %v1905
        %1909 = vrot.lane.b32.xlu0 %v1907, 127
        %v1910 = vpop.permute.xlu0 %1909
        %v1912 = vadd.f32 %v1903, %v1910
        %s1913 = sld [smem:[#allocation6 + $0x2]]
        %v1914 = vstv %s1913
        %v1915 = vadd.f32 %v1912, %v1914
        %v1916 = vmax.f32 %v1915, 0.0
        %s1917 = sld [smem:[#allocation4 + $0x3]]
        %v1918 = vld [vmem:[%s714 + $0x1] sm:$0xf]
        %v1919 = vstv %s1917
        %v1920 = vmul.f32 %v1919, %v1918
        %v1921 = vadd.f32 %v1920, 0.0
        %s1922 = sld [smem:[#allocation4 + $0x7]]
        %v1923 = vld [vmem:[%s606 + $0x1] sm:$0xf]
        %v1924 = vstv %s1922
        %v1925 = vmul.f32 %v1924, %v1923
        %1927 = vrot.lane.b32.xlu0 %v1925, 127
        %v1928 = vpop.permute.xlu0 %1927
        %v1930 = vadd.f32 %v1921, %v1928
        %s1931 = sld [smem:[#allocation4 + $0xb]]
        %v1932 = vld [vmem:[%s642 + $0x1] sm:$0xf]
        %v1933 = vstv %s1931
        %v1934 = vmul.f32 %v1933, %v1932
        %1936 = vrot.lane.b32.xlu0 %v1934, 127
        %v1937 = vpop.permute.xlu0 %1936
        %v1939 = vadd.f32 %v1930, %v1937
        %s1940 = sld [smem:[#allocation4 + $0xf]]
        %v1941 = vld [vmem:[%s858 + $0x1] sm:$0xf]
        %v1942 = vstv %s1940
        %v1943 = vmul.f32 %v1942, %v1941
        %v1944 = vadd.f32 %v1939, %v1943
        %s1945 = sld [smem:[#allocation4 + $0x13]]
        %v1946 = vld [vmem:[%s750 + $0x1] sm:$0xf]
        %v1947 = vstv %s1945
        %v1948 = vmul.f32 %v1947, %v1946
        %1950 = vrot.lane.b32.xlu0 %v1948, 127
        %v1951 = vpop.permute.xlu0 %1950
        %v1953 = vadd.f32 %v1944, %v1951
        %s1954 = sld [smem:[#allocation4 + $0x17]]
        %v1955 = vld [vmem:[%s786 + $0x1] sm:$0xf]
        %v1956 = vstv %s1954
        %v1957 = vmul.f32 %v1956, %v1955
        %1959 = vrot.lane.b32.xlu0 %v1957, 127
        %v1960 = vpop.permute.xlu0 %1959
        %v1962 = vadd.f32 %v1953, %v1960
        %s1963 = sld [smem:[#allocation4 + $0x1b]]
        %v1964 = vld [vmem:[%s1002 + $0x1] sm:$0xf]
        %v1965 = vstv %s1963
        %v1966 = vmul.f32 %v1965, %v1964
        %v1967 = vadd.f32 %v1962, %v1966
        %s1968 = sld [smem:[#allocation4 + $0x1f]]
        %v1969 = vld [vmem:[%s894 + $0x1] sm:$0xf]
        %v1970 = vstv %s1968
        %v1971 = vmul.f32 %v1970, %v1969
        %1973 = vrot.lane.b32.xlu0 %v1971, 127
        %v1974 = vpop.permute.xlu0 %1973
        %v1976 = vadd.f32 %v1967, %v1974
        %s1977 = sld [smem:[#allocation4 + $0x23]]
        %v1978 = vld [vmem:[%s930 + $0x1] sm:$0xf]
        %v1979 = vstv %s1977
        %v1980 = vmul.f32 %v1979, %v1978
        %1982 = vrot.lane.b32.xlu0 %v1980, 127
        %v1983 = vpop.permute.xlu0 %1982
        %v1985 = vadd.f32 %v1976, %v1983
        %s1986 = sld [smem:[#allocation6 + $0x3]]
        %v1987 = vstv %s1986
        %v1988 = vadd.f32 %v1985, %v1987
        %v1989 = vmax.f32 %v1988, 0.0
        %s1990 = sld [smem:[#allocation8]]
        %v1991 = vstv %s1990
        %v1992 = vmul.f32 %v1991, %v1770
        %v1993 = vadd.f32 %v1992, 0.0
        %s1994 = sld [smem:[#allocation8 + $0x4]]
        %v1995 = vstv %s1994
        %v1996 = vmul.f32 %v1995, %v1843
        %v1997 = vadd.f32 %v1993, %v1996
        %s1998 = sld [smem:[#allocation8 + $0x8]]
        %v1999 = vstv %s1998
        %v2000 = vmul.f32 %v1999, %v1916
        %v2001 = vadd.f32 %v1997, %v2000
        %s2002 = sld [smem:[#allocation8 + $0xc]]
        %v2003 = vstv %s2002
        %v2004 = vmul.f32 %v2003, %v1989
        %v2005 = vadd.f32 %v2001, %v2004
        %s2006 = sld [smem:[#allocation9]]
        %v2007 = vstv %s2006
        %v2008 = vadd.f32 %v2005, %v2007
        %v2009 = vmax.f32 %v2008, 0.0
        %s2010 = scalar_lea.vmem [#allocation3], 64
        %2011 = vst.msk [vmem:[%s2010] sm:$0x1f] %vm435, 0.0
        %2013 = vrot.lane.b32.xlu0 %v2009, 1
        %v2014 = vpop.permute.xlu0 %2013
        %2016 = vst.msk [vmem:[%s2010 + $0x1] sm:$0xf] %vm442, %v2014
        %s2017 = sld [smem:[#allocation8 + $0x1]]
        %v2018 = vstv %s2017
        %v2019 = vmul.f32 %v2018, %v1770
        %v2020 = vadd.f32 %v2019, 0.0
        %s2021 = sld [smem:[#allocation8 + $0x5]]
        %v2022 = vstv %s2021
        %v2023 = vmul.f32 %v2022, %v1843
        %v2024 = vadd.f32 %v2020, %v2023
        %s2025 = sld [smem:[#allocation8 + $0x9]]
        %v2026 = vstv %s2025
        %v2027 = vmul.f32 %v2026, %v1916
        %v2028 = vadd.f32 %v2024, %v2027
        %s2029 = sld [smem:[#allocation8 + $0xd]]
        %v2030 = vstv %s2029
        %v2031 = vmul.f32 %v2030, %v1989
        %v2032 = vadd.f32 %v2028, %v2031
        %s2033 = sld [smem:[#allocation9 + $0x1]]
        %v2034 = vstv %s2033
        %v2035 = vadd.f32 %v2032, %v2034
        %v2036 = vmax.f32 %v2035, 0.0
        %s2037 = scalar_lea.vmem [#allocation3], 72
        %2038 = vst.msk [vmem:[%s2037] sm:$0x1f] %vm435, 0.0
        %2040 = vrot.lane.b32.xlu0 %v2036, 1
        %v2041 = vpop.permute.xlu0 %2040
        %2043 = vst.msk [vmem:[%s2037 + $0x1] sm:$0xf] %vm442, %v2041
        %s2044 = sld [smem:[#allocation8 + $0x2]]
        %v2045 = vstv %s2044
        %v2046 = vmul.f32 %v2045, %v1770
        %v2047 = vadd.f32 %v2046, 0.0
        %s2048 = sld [smem:[#allocation8 + $0x6]]
        %v2049 = vstv %s2048
        %v2050 = vmul.f32 %v2049, %v1843
        %v2051 = vadd.f32 %v2047, %v2050
        %s2052 = sld [smem:[#allocation8 + $0xa]]
        %v2053 = vstv %s2052
        %v2054 = vmul.f32 %v2053, %v1916
        %v2055 = vadd.f32 %v2051, %v2054
        %s2056 = sld [smem:[#allocation8 + $0xe]]
        %v2057 = vstv %s2056
        %v2058 = vmul.f32 %v2057, %v1989
        %v2059 = vadd.f32 %v2055, %v2058
        %s2060 = sld [smem:[#allocation9 + $0x2]]
        %v2061 = vstv %s2060
        %v2062 = vadd.f32 %v2059, %v2061
        %v2063 = vmax.f32 %v2062, 0.0
        %s2064 = scalar_lea.vmem [#allocation3], 80
        %2065 = vst.msk [vmem:[%s2064] sm:$0x1f] %vm435, 0.0
        %2067 = vrot.lane.b32.xlu0 %v2063, 1
        %v2068 = vpop.permute.xlu0 %2067
        %2070 = vst.msk [vmem:[%s2064 + $0x1] sm:$0xf] %vm442, %v2068
        %s2071 = sld [smem:[#allocation8 + $0x3]]
        %v2072 = vstv %s2071
        %v2073 = vmul.f32 %v2072, %v1770
        %v2074 = vadd.f32 %v2073, 0.0
        %s2075 = sld [smem:[#allocation8 + $0x7]]
        %v2076 = vstv %s2075
        %v2077 = vmul.f32 %v2076, %v1843
        %v2078 = vadd.f32 %v2074, %v2077
        %s2079 = sld [smem:[#allocation8 + $0xb]]
        %v2080 = vstv %s2079
        %v2081 = vmul.f32 %v2080, %v1916
        %v2082 = vadd.f32 %v2078, %v2081
        %s2083 = sld [smem:[#allocation8 + $0xf]]
        %v2084 = vstv %s2083
        %v2085 = vmul.f32 %v2084, %v1989
        %v2086 = vadd.f32 %v2082, %v2085
        %s2087 = sld [smem:[#allocation9 + $0x3]]
        %v2088 = vstv %s2087
        %v2089 = vadd.f32 %v2086, %v2088
        %v2090 = vmax.f32 %v2089, 0.0
        %s2091 = scalar_lea.vmem [#allocation3], 88
        %2092 = vst.msk [vmem:[%s2091] sm:$0x1f] %vm435, 0.0
        %2094 = vrot.lane.b32.xlu0 %v2090, 1
        %v2095 = vpop.permute.xlu0 %2094
        %2097 = vst.msk [vmem:[%s2091 + $0x1] sm:$0xf] %vm442, %v2095
        %s2098 = sld [smem:[#allocation4]]
        %v2099 = vld [vmem:[%s615 + $0x1] sm:$0xf]
        %v2100 = vstv %s2098
        %v2101 = vmul.f32 %v2100, %v2099
        %v2102 = vadd.f32 %v2101, 0.0
        %s2103 = sld [smem:[#allocation4 + $0x4]]
        %v2104 = vld [vmem:[%s651 + $0x1] sm:$0xf]
        %v2105 = vstv %s2103
        %v2106 = vmul.f32 %v2105, %v2104
        %v2107 = vadd.f32 %v2102, %v2106
        %s2108 = sld [smem:[#allocation4 + $0x8]]
        %v2109 = vld [vmem:[%s687 + $0x1] sm:$0xf]
        %v2110 = vstv %s2108
        %v2111 = vmul.f32 %v2110, %v2109
        %v2112 = vadd.f32 %v2107, %v2111
        %s2113 = sld [smem:[#allocation4 + $0xc]]
        %v2114 = vld [vmem:[%s759 + $0x1] sm:$0xf]
        %v2115 = vstv %s2113
        %v2116 = vmul.f32 %v2115, %v2114
        %v2117 = vadd.f32 %v2112, %v2116
        %s2118 = sld [smem:[#allocation4 + $0x10]]
        %v2119 = vld [vmem:[%s795 + $0x1] sm:$0xf]
        %v2120 = vstv %s2118
        %v2121 = vmul.f32 %v2120, %v2119
        %v2122 = vadd.f32 %v2117, %v2121
        %s2123 = sld [smem:[#allocation4 + $0x14]]
        %v2124 = vld [vmem:[%s831 + $0x1] sm:$0xf]
        %v2125 = vstv %s2123
        %v2126 = vmul.f32 %v2125, %v2124
        %v2127 = vadd.f32 %v2122, %v2126
        %s2128 = sld [smem:[#allocation4 + $0x18]]
        %v2129 = vld [vmem:[%s903 + $0x1] sm:$0xf]
        %v2130 = vstv %s2128
        %v2131 = vmul.f32 %v2130, %v2129
        %v2132 = vadd.f32 %v2127, %v2131
        %s2133 = sld [smem:[#allocation4 + $0x1c]]
        %v2134 = vld [vmem:[%s939 + $0x1] sm:$0xf]
        %v2135 = vstv %s2133
        %v2136 = vmul.f32 %v2135, %v2134
        %v2137 = vadd.f32 %v2132, %v2136
        %s2138 = sld [smem:[#allocation4 + $0x20]]
        %v2139 = vld [vmem:[%s975 + $0x1] sm:$0xf]
        %v2140 = vstv %s2138
        %v2141 = vmul.f32 %v2140, %v2139
        %v2142 = vadd.f32 %v2137, %v2141
        %s2143 = sld [smem:[#allocation6]]
        %v2144 = vstv %s2143
        %v2145 = vadd.f32 %v2142, %v2144
        %v2146 = vmax.f32 %v2145, 0.0
        %s2147 = sld [smem:[#allocation4 + $0x1]]
        %v2148 = vld [vmem:[%s624 + $0x1] sm:$0xf]
        %v2149 = vstv %s2147
        %v2150 = vmul.f32 %v2149, %v2148
        %v2151 = vadd.f32 %v2150, 0.0
        %s2152 = sld [smem:[#allocation4 + $0x5]]
        %v2153 = vld [vmem:[%s660 + $0x1] sm:$0xf]
        %v2154 = vstv %s2152
        %v2155 = vmul.f32 %v2154, %v2153
        %v2156 = vadd.f32 %v2151, %v2155
        %s2157 = sld [smem:[#allocation4 + $0x9]]
        %v2158 = vld [vmem:[%s696 + $0x1] sm:$0xf]
        %v2159 = vstv %s2157
        %v2160 = vmul.f32 %v2159, %v2158
        %v2161 = vadd.f32 %v2156, %v2160
        %s2162 = sld [smem:[#allocation4 + $0xd]]
        %v2163 = vld [vmem:[%s768 + $0x1] sm:$0xf]
        %v2164 = vstv %s2162
        %v2165 = vmul.f32 %v2164, %v2163
        %v2166 = vadd.f32 %v2161, %v2165
        %s2167 = sld [smem:[#allocation4 + $0x11]]
        %v2168 = vld [vmem:[%s804 + $0x1] sm:$0xf]
        %v2169 = vstv %s2167
        %v2170 = vmul.f32 %v2169, %v2168
        %v2171 = vadd.f32 %v2166, %v2170
        %s2172 = sld [smem:[#allocation4 + $0x15]]
        %v2173 = vld [vmem:[%s840 + $0x1] sm:$0xf]
        %v2174 = vstv %s2172
        %v2175 = vmul.f32 %v2174, %v2173
        %v2176 = vadd.f32 %v2171, %v2175
        %s2177 = sld [smem:[#allocation4 + $0x19]]
        %v2178 = vld [vmem:[%s912 + $0x1] sm:$0xf]
        %v2179 = vstv %s2177
        %v2180 = vmul.f32 %v2179, %v2178
        %v2181 = vadd.f32 %v2176, %v2180
        %s2182 = sld [smem:[#allocation4 + $0x1d]]
        %v2183 = vld [vmem:[%s948 + $0x1] sm:$0xf]
        %v2184 = vstv %s2182
        %v2185 = vmul.f32 %v2184, %v2183
        %v2186 = vadd.f32 %v2181, %v2185
        %s2187 = sld [smem:[#allocation4 + $0x21]]
        %v2188 = vld [vmem:[%s984 + $0x1] sm:$0xf]
        %v2189 = vstv %s2187
        %v2190 = vmul.f32 %v2189, %v2188
        %v2191 = vadd.f32 %v2186, %v2190
        %s2192 = sld [smem:[#allocation6 + $0x1]]
        %v2193 = vstv %s2192
        %v2194 = vadd.f32 %v2191, %v2193
        %v2195 = vmax.f32 %v2194, 0.0
        %s2196 = sld [smem:[#allocation4 + $0x2]]
        %v2197 = vld [vmem:[%s633 + $0x1] sm:$0xf]
        %v2198 = vstv %s2196
        %v2199 = vmul.f32 %v2198, %v2197
        %v2200 = vadd.f32 %v2199, 0.0
        %s2201 = sld [smem:[#allocation4 + $0x6]]
        %v2202 = vld [vmem:[%s669 + $0x1] sm:$0xf]
        %v2203 = vstv %s2201
        %v2204 = vmul.f32 %v2203, %v2202
        %v2205 = vadd.f32 %v2200, %v2204
        %s2206 = sld [smem:[#allocation4 + $0xa]]
        %v2207 = vld [vmem:[%s705 + $0x1] sm:$0xf]
        %v2208 = vstv %s2206
        %v2209 = vmul.f32 %v2208, %v2207
        %v2210 = vadd.f32 %v2205, %v2209
        %s2211 = sld [smem:[#allocation4 + $0xe]]
        %v2212 = vld [vmem:[%s777 + $0x1] sm:$0xf]
        %v2213 = vstv %s2211
        %v2214 = vmul.f32 %v2213, %v2212
        %v2215 = vadd.f32 %v2210, %v2214
        %s2216 = sld [smem:[#allocation4 + $0x12]]
        %v2217 = vld [vmem:[%s813 + $0x1] sm:$0xf]
        %v2218 = vstv %s2216
        %v2219 = vmul.f32 %v2218, %v2217
        %v2220 = vadd.f32 %v2215, %v2219
        %s2221 = sld [smem:[#allocation4 + $0x16]]
        %v2222 = vld [vmem:[%s849 + $0x1] sm:$0xf]
        %v2223 = vstv %s2221
        %v2224 = vmul.f32 %v2223, %v2222
        %v2225 = vadd.f32 %v2220, %v2224
        %s2226 = sld [smem:[#allocation4 + $0x1a]]
        %v2227 = vld [vmem:[%s921 + $0x1] sm:$0xf]
        %v2228 = vstv %s2226
        %v2229 = vmul.f32 %v2228, %v2227
        %v2230 = vadd.f32 %v2225, %v2229
        %s2231 = sld [smem:[#allocation4 + $0x1e]]
        %v2232 = vld [vmem:[%s957 + $0x1] sm:$0xf]
        %v2233 = vstv %s2231
        %v2234 = vmul.f32 %v2233, %v2232
        %v2235 = vadd.f32 %v2230, %v2234
        %s2236 = sld [smem:[#allocation4 + $0x22]]
        %v2237 = vld [vmem:[%s993 + $0x1] sm:$0xf]
        %v2238 = vstv %s2236
        %v2239 = vmul.f32 %v2238, %v2237
        %v2240 = vadd.f32 %v2235, %v2239
        %s2241 = sld [smem:[#allocation6 + $0x2]]
        %v2242 = vstv %s2241
        %v2243 = vadd.f32 %v2240, %v2242
        %v2244 = vmax.f32 %v2243, 0.0
        %s2245 = sld [smem:[#allocation4 + $0x3]]
        %v2246 = vld [vmem:[%s642 + $0x1] sm:$0xf]
        %v2247 = vstv %s2245
        %v2248 = vmul.f32 %v2247, %v2246
        %v2249 = vadd.f32 %v2248, 0.0
        %s2250 = sld [smem:[#allocation4 + $0x7]]
        %v2251 = vld [vmem:[%s678 + $0x1] sm:$0xf]
        %v2252 = vstv %s2250
        %v2253 = vmul.f32 %v2252, %v2251
        %v2254 = vadd.f32 %v2249, %v2253
        %s2255 = sld [smem:[#allocation4 + $0xb]]
        %v2256 = vld [vmem:[%s714 + $0x1] sm:$0xf]
        %v2257 = vstv %s2255
        %v2258 = vmul.f32 %v2257, %v2256
        %v2259 = vadd.f32 %v2254, %v2258
        %s2260 = sld [smem:[#allocation4 + $0xf]]
        %v2261 = vld [vmem:[%s786 + $0x1] sm:$0xf]
        %v2262 = vstv %s2260
        %v2263 = vmul.f32 %v2262, %v2261
        %v2264 = vadd.f32 %v2259, %v2263
        %s2265 = sld [smem:[#allocation4 + $0x13]]
        %v2266 = vld [vmem:[%s822 + $0x1] sm:$0xf]
        %v2267 = vstv %s2265
        %v2268 = vmul.f32 %v2267, %v2266
        %v2269 = vadd.f32 %v2264, %v2268
        %s2270 = sld [smem:[#allocation4 + $0x17]]
        %v2271 = vld [vmem:[%s858 + $0x1] sm:$0xf]
        %v2272 = vstv %s2270
        %v2273 = vmul.f32 %v2272, %v2271
        %v2274 = vadd.f32 %v2269, %v2273
        %s2275 = sld [smem:[#allocation4 + $0x1b]]
        %v2276 = vld [vmem:[%s930 + $0x1] sm:$0xf]
        %v2277 = vstv %s2275
        %v2278 = vmul.f32 %v2277, %v2276
        %v2279 = vadd.f32 %v2274, %v2278
        %s2280 = sld [smem:[#allocation4 + $0x1f]]
        %v2281 = vld [vmem:[%s966 + $0x1] sm:$0xf]
        %v2282 = vstv %s2280
        %v2283 = vmul.f32 %v2282, %v2281
        %v2284 = vadd.f32 %v2279, %v2283
        %s2285 = sld [smem:[#allocation4 + $0x23]]
        %v2286 = vld [vmem:[%s1002 + $0x1] sm:$0xf]
        %v2287 = vstv %s2285
        %v2288 = vmul.f32 %v2287, %v2286
        %v2289 = vadd.f32 %v2284, %v2288
        %s2290 = sld [smem:[#allocation6 + $0x3]]
        %v2291 = vstv %s2290
        %v2292 = vadd.f32 %v2289, %v2291
        %v2293 = vmax.f32 %v2292, 0.0
        %s2294 = sld [smem:[#allocation8]]
        %v2295 = vstv %s2294
        %v2296 = vmul.f32 %v2295, %v2146
        %v2297 = vadd.f32 %v2296, 0.0
        %s2298 = sld [smem:[#allocation8 + $0x4]]
        %v2299 = vstv %s2298
        %v2300 = vmul.f32 %v2299, %v2195
        %v2301 = vadd.f32 %v2297, %v2300
        %s2302 = sld [smem:[#allocation8 + $0x8]]
        %v2303 = vstv %s2302
        %v2304 = vmul.f32 %v2303, %v2244
        %v2305 = vadd.f32 %v2301, %v2304
        %s2306 = sld [smem:[#allocation8 + $0xc]]
        %v2307 = vstv %s2306
        %v2308 = vmul.f32 %v2307, %v2293
        %v2309 = vadd.f32 %v2305, %v2308
        %s2310 = sld [smem:[#allocation9]]
        %v2311 = vstv %s2310
        %v2312 = vadd.f32 %v2309, %v2311
        %v2313 = vmax.f32 %v2312, 0.0
        %s2314 = scalar_lea.vmem [#allocation3], 96
        %2315 = vst.msk [vmem:[%s2314] sm:$0x1f] %vm435, 0.0
        %2316 = vst.msk [vmem:[%s2314 + $0x1] sm:$0xf] %vm442, %v2313
        %s2317 = sld [smem:[#allocation8 + $0x1]]
        %v2318 = vstv %s2317
        %v2319 = vmul.f32 %v2318, %v2146
        %v2320 = vadd.f32 %v2319, 0.0
        %s2321 = sld [smem:[#allocation8 + $0x5]]
        %v2322 = vstv %s2321
        %v2323 = vmul.f32 %v2322, %v2195
        %v2324 = vadd.f32 %v2320, %v2323
        %s2325 = sld [smem:[#allocation8 + $0x9]]
        %v2326 = vstv %s2325
        %v2327 = vmul.f32 %v2326, %v2244
        %v2328 = vadd.f32 %v2324, %v2327
        %s2329 = sld [smem:[#allocation8 + $0xd]]
        %v2330 = vstv %s2329
        %v2331 = vmul.f32 %v2330, %v2293
        %v2332 = vadd.f32 %v2328, %v2331
        %s2333 = sld [smem:[#allocation9 + $0x1]]
        %v2334 = vstv %s2333
        %v2335 = vadd.f32 %v2332, %v2334
        %v2336 = vmax.f32 %v2335, 0.0
        %s2337 = scalar_lea.vmem [#allocation3], 104
        %2338 = vst.msk [vmem:[%s2337] sm:$0x1f] %vm435, 0.0
        %2339 = vst.msk [vmem:[%s2337 + $0x1] sm:$0xf] %vm442, %v2336
        %s2340 = sld [smem:[#allocation8 + $0x2]]
        %v2341 = vstv %s2340
        %v2342 = vmul.f32 %v2341, %v2146
        %v2343 = vadd.f32 %v2342, 0.0
        %s2344 = sld [smem:[#allocation8 + $0x6]]
        %v2345 = vstv %s2344
        %v2346 = vmul.f32 %v2345, %v2195
        %v2347 = vadd.f32 %v2343, %v2346
        %s2348 = sld [smem:[#allocation8 + $0xa]]
        %v2349 = vstv %s2348
        %v2350 = vmul.f32 %v2349, %v2244
        %v2351 = vadd.f32 %v2347, %v2350
        %s2352 = sld [smem:[#allocation8 + $0xe]]
        %v2353 = vstv %s2352
        %v2354 = vmul.f32 %v2353, %v2293
        %v2355 = vadd.f32 %v2351, %v2354
        %s2356 = sld [smem:[#allocation9 + $0x2]]
        %v2357 = vstv %s2356
        %v2358 = vadd.f32 %v2355, %v2357
        %v2359 = vmax.f32 %v2358, 0.0
        %s2360 = scalar_lea.vmem [#allocation3], 112
        %2361 = vst.msk [vmem:[%s2360] sm:$0x1f] %vm435, 0.0
        %2362 = vst.msk [vmem:[%s2360 + $0x1] sm:$0xf] %vm442, %v2359
        %s2363 = sld [smem:[#allocation8 + $0x3]]
        %v2364 = vstv %s2363
        %v2365 = vmul.f32 %v2364, %v2146
        %v2366 = vadd.f32 %v2365, 0.0
        %s2367 = sld [smem:[#allocation8 + $0x7]]
        %v2368 = vstv %s2367
        %v2369 = vmul.f32 %v2368, %v2195
        %v2370 = vadd.f32 %v2366, %v2369
        %s2371 = sld [smem:[#allocation8 + $0xb]]
        %v2372 = vstv %s2371
        %v2373 = vmul.f32 %v2372, %v2244
        %v2374 = vadd.f32 %v2370, %v2373
        %s2375 = sld [smem:[#allocation8 + $0xf]]
        %v2376 = vstv %s2375
        %v2377 = vmul.f32 %v2376, %v2293
        %v2378 = vadd.f32 %v2374, %v2377
        %s2379 = sld [smem:[#allocation9 + $0x3]]
        %v2380 = vstv %s2379
        %v2381 = vadd.f32 %v2378, %v2380
        %v2382 = vmax.f32 %v2381, 0.0
        %s2383 = scalar_lea.vmem [#allocation3], 120
        %2384 = vst.msk [vmem:[%s2383] sm:$0x1f] %vm435, 0.0
        %2385 = vst.msk [vmem:[%s2383 + $0x1] sm:$0xf] %vm442, %v2382
        %s2386 = sld [smem:[#allocation11]]
        %v2387 = vld [vmem:[%s2314] sm:$0xf]
        %v2388 = vstv %s2386
        %v2389 = vmul.f32 %v2388, %v2387
        %v2390 = vadd.f32 %v2389, 0.0
        %s2391 = sld [smem:[#allocation11 + $0x4]]
        %v2392 = vld [vmem:[%s2010] sm:$0xf]
        %v2393 = vstv %s2391
        %v2394 = vmul.f32 %v2393, %v2392
        %2396 = vrot.lane.b32.xlu0 %v2394, 127
        %v2397 = vpop.permute.xlu0 %2396
        %v2399 = vadd.f32 %v2390, %v2397
        %s2400 = sld [smem:[#allocation11 + $0x8]]
        %v2401 = vstv %s2400
        %v2402 = vmul.f32 %v2401, %v2387
        %2404 = vrot.lane.b32.xlu0 %v2402, 127
        %v2405 = vpop.permute.xlu0 %2404
        %v2407 = vadd.f32 %v2399, %v2405
        %s2408 = sld [smem:[#allocation11 + $0xc]]
        %v2409 = vld [vmem:[%s1626 + $0x1] sm:$0xf]
        %v2410 = vstv %s2408
        %v2411 = vmul.f32 %v2410, %v2409
        %v2412 = vadd.f32 %v2407, %v2411
        %s2413 = sld [smem:[#allocation11 + $0x10]]
        %v2414 = vld [vmem:[#allocation3 + $0x1] sm:$0xf]
        %v2415 = vstv %s2413
        %v2416 = vmul.f32 %v2415, %v2414
        %2418 = vrot.lane.b32.xlu0 %v2416, 127
        %v2419 = vpop.permute.xlu0 %2418
        %v2421 = vadd.f32 %v2412, %v2419
        %s2422 = sld [smem:[#allocation11 + $0x14]]
        %v2423 = vstv %s2422
        %v2424 = vmul.f32 %v2423, %v2409
        %2426 = vrot.lane.b32.xlu0 %v2424, 127
        %v2427 = vpop.permute.xlu0 %2426
        %v2429 = vadd.f32 %v2421, %v2427
        %s2430 = sld [smem:[#allocation11 + $0x18]]
        %v2431 = vld [vmem:[%s2314 + $0x1] sm:$0xf]
        %v2432 = vstv %s2430
        %v2433 = vmul.f32 %v2432, %v2431
        %v2434 = vadd.f32 %v2429, %v2433
        %s2435 = sld [smem:[#allocation11 + $0x1c]]
        %v2436 = vld [vmem:[%s2010 + $0x1] sm:$0xf]
        %v2437 = vstv %s2435
        %v2438 = vmul.f32 %v2437, %v2436
        %2440 = vrot.lane.b32.xlu0 %v2438, 127
        %v2441 = vpop.permute.xlu0 %2440
        %v2443 = vadd.f32 %v2434, %v2441
        %s2444 = sld [smem:[#allocation11 + $0x20]]
        %v2445 = vstv %s2444
        %v2446 = vmul.f32 %v2445, %v2431
        %2448 = vrot.lane.b32.xlu0 %v2446, 127
        %v2449 = vpop.permute.xlu0 %2448
        %v2451 = vadd.f32 %v2443, %v2449
        %s2452 = sld [smem:[#allocation12]]
        %v2453 = vstv %s2452
        %v2454 = vadd.f32 %v2451, %v2453
        %v2455 = vmax.f32 %v2454, 0.0
        %s2456 = sld [smem:[#allocation11 + $0x1]]
        %v2457 = vld [vmem:[%s2337] sm:$0xf]
        %v2458 = vstv %s2456
        %v2459 = vmul.f32 %v2458, %v2457
        %v2460 = vadd.f32 %v2459, 0.0
        %s2461 = sld [smem:[#allocation11 + $0x5]]
        %v2462 = vld [vmem:[%s2037] sm:$0xf]
        %v2463 = vstv %s2461
        %v2464 = vmul.f32 %v2463, %v2462
        %2466 = vrot.lane.b32.xlu0 %v2464, 127
        %v2467 = vpop.permute.xlu0 %2466
        %v2469 = vadd.f32 %v2460, %v2467
        %s2470 = sld [smem:[#allocation11 + $0x9]]
        %v2471 = vstv %s2470
        %v2472 = vmul.f32 %v2471, %v2457
        %2474 = vrot.lane.b32.xlu0 %v2472, 127
        %v2475 = vpop.permute.xlu0 %2474
        %v2477 = vadd.f32 %v2469, %v2475
        %s2478 = sld [smem:[#allocation11 + $0xd]]
        %v2479 = vld [vmem:[%s1649 + $0x1] sm:$0xf]
        %v2480 = vstv %s2478
        %v2481 = vmul.f32 %v2480, %v2479
        %v2482 = vadd.f32 %v2477, %v2481
        %s2483 = sld [smem:[#allocation11 + $0x11]]
        %v2484 = vld [vmem:[%s1349 + $0x1] sm:$0xf]
        %v2485 = vstv %s2483
        %v2486 = vmul.f32 %v2485, %v2484
        %2488 = vrot.lane.b32.xlu0 %v2486, 127
        %v2489 = vpop.permute.xlu0 %2488
        %v2491 = vadd.f32 %v2482, %v2489
        %s2492 = sld [smem:[#allocation11 + $0x15]]
        %v2493 = vstv %s2492
        %v2494 = vmul.f32 %v2493, %v2479
        %2496 = vrot.lane.b32.xlu0 %v2494, 127
        %v2497 = vpop.permute.xlu0 %2496
        %v2499 = vadd.f32 %v2491, %v2497
        %s2500 = sld [smem:[#allocation11 + $0x19]]
        %v2501 = vld [vmem:[%s2337 + $0x1] sm:$0xf]
        %v2502 = vstv %s2500
        %v2503 = vmul.f32 %v2502, %v2501
        %v2504 = vadd.f32 %v2499, %v2503
        %s2505 = sld [smem:[#allocation11 + $0x1d]]
        %v2506 = vld [vmem:[%s2037 + $0x1] sm:$0xf]
        %v2507 = vstv %s2505
        %v2508 = vmul.f32 %v2507, %v2506
        %2510 = vrot.lane.b32.xlu0 %v2508, 127
        %v2511 = vpop.permute.xlu0 %2510
        %v2513 = vadd.f32 %v2504, %v2511
        %s2514 = sld [smem:[#allocation11 + $0x21]]
        %v2515 = vstv %s2514
        %v2516 = vmul.f32 %v2515, %v2501
        %2518 = vrot.lane.b32.xlu0 %v2516, 127
        %v2519 = vpop.permute.xlu0 %2518
        %v2521 = vadd.f32 %v2513, %v2519
        %s2522 = sld [smem:[#allocation12 + $0x1]]
        %v2523 = vstv %s2522
        %v2524 = vadd.f32 %v2521, %v2523
        %v2525 = vmax.f32 %v2524, 0.0
        %s2526 = sld [smem:[#allocation11 + $0x2]]
        %v2527 = vld [vmem:[%s2360] sm:$0xf]
        %v2528 = vstv %s2526
        %v2529 = vmul.f32 %v2528, %v2527
        %v2530 = vadd.f32 %v2529, 0.0
        %s2531 = sld [smem:[#allocation11 + $0x6]]
        %v2532 = vld [vmem:[%s2064] sm:$0xf]
        %v2533 = vstv %s2531
        %v2534 = vmul.f32 %v2533, %v2532
        %2536 = vrot.lane.b32.xlu0 %v2534, 127
        %v2537 = vpop.permute.xlu0 %2536
        %v2539 = vadd.f32 %v2530, %v2537
        %s2540 = sld [smem:[#allocation11 + $0xa]]
        %v2541 = vstv %s2540
        %v2542 = vmul.f32 %v2541, %v2527
        %2544 = vrot.lane.b32.xlu0 %v2542, 127
        %v2545 = vpop.permute.xlu0 %2544
        %v2547 = vadd.f32 %v2539, %v2545
        %s2548 = sld [smem:[#allocation11 + $0xe]]
        %v2549 = vld [vmem:[%s1672 + $0x1] sm:$0xf]
        %v2550 = vstv %s2548
        %v2551 = vmul.f32 %v2550, %v2549
        %v2552 = vadd.f32 %v2547, %v2551
        %s2553 = sld [smem:[#allocation11 + $0x12]]
        %v2554 = vld [vmem:[%s1376 + $0x1] sm:$0xf]
        %v2555 = vstv %s2553
        %v2556 = vmul.f32 %v2555, %v2554
        %2558 = vrot.lane.b32.xlu0 %v2556, 127
        %v2559 = vpop.permute.xlu0 %2558
        %v2561 = vadd.f32 %v2552, %v2559
        %s2562 = sld [smem:[#allocation11 + $0x16]]
        %v2563 = vstv %s2562
        %v2564 = vmul.f32 %v2563, %v2549
        %2566 = vrot.lane.b32.xlu0 %v2564, 127
        %v2567 = vpop.permute.xlu0 %2566
        %v2569 = vadd.f32 %v2561, %v2567
        %s2570 = sld [smem:[#allocation11 + $0x1a]]
        %v2571 = vld [vmem:[%s2360 + $0x1] sm:$0xf]
        %v2572 = vstv %s2570
        %v2573 = vmul.f32 %v2572, %v2571
        %v2574 = vadd.f32 %v2569, %v2573
        %s2575 = sld [smem:[#allocation11 + $0x1e]]
        %v2576 = vld [vmem:[%s2064 + $0x1] sm:$0xf]
        %v2577 = vstv %s2575
        %v2578 = vmul.f32 %v2577, %v2576
        %2580 = vrot.lane.b32.xlu0 %v2578, 127
        %v2581 = vpop.permute.xlu0 %2580
        %v2583 = vadd.f32 %v2574, %v2581
        %s2584 = sld [smem:[#allocation11 + $0x22]]
        %v2585 = vstv %s2584
        %v2586 = vmul.f32 %v2585, %v2571
        %2588 = vrot.lane.b32.xlu0 %v2586, 127
        %v2589 = vpop.permute.xlu0 %2588
        %v2591 = vadd.f32 %v2583, %v2589
        %s2592 = sld [smem:[#allocation12 + $0x2]]
        %v2593 = vstv %s2592
        %v2594 = vadd.f32 %v2591, %v2593
        %v2595 = vmax.f32 %v2594, 0.0
        %s2596 = sld [smem:[#allocation11 + $0x3]]
        %v2597 = vld [vmem:[%s2383] sm:$0xf]
        %v2598 = vstv %s2596
        %v2599 = vmul.f32 %v2598, %v2597
        %v2600 = vadd.f32 %v2599, 0.0
        %s2601 = sld [smem:[#allocation11 + $0x7]]
        %v2602 = vld [vmem:[%s2091] sm:$0xf]
        %v2603 = vstv %s2601
        %v2604 = vmul.f32 %v2603, %v2602
        %2606 = vrot.lane.b32.xlu0 %v2604, 127
        %v2607 = vpop.permute.xlu0 %2606
        %v2609 = vadd.f32 %v2600, %v2607
        %s2610 = sld [smem:[#allocation11 + $0xb]]
        %v2611 = vstv %s2610
        %v2612 = vmul.f32 %v2611, %v2597
        %2614 = vrot.lane.b32.xlu0 %v2612, 127
        %v2615 = vpop.permute.xlu0 %2614
        %v2617 = vadd.f32 %v2609, %v2615
        %s2618 = sld [smem:[#allocation11 + $0xf]]
        %v2619 = vld [vmem:[%s1695 + $0x1] sm:$0xf]
        %v2620 = vstv %s2618
        %v2621 = vmul.f32 %v2620, %v2619
        %v2622 = vadd.f32 %v2617, %v2621
        %s2623 = sld [smem:[#allocation11 + $0x13]]
        %v2624 = vld [vmem:[%s1403 + $0x1] sm:$0xf]
        %v2625 = vstv %s2623
        %v2626 = vmul.f32 %v2625, %v2624
        %2628 = vrot.lane.b32.xlu0 %v2626, 127
        %v2629 = vpop.permute.xlu0 %2628
        %v2631 = vadd.f32 %v2622, %v2629
        %s2632 = sld [smem:[#allocation11 + $0x17]]
        %v2633 = vstv %s2632
        %v2634 = vmul.f32 %v2633, %v2619
        %2636 = vrot.lane.b32.xlu0 %v2634, 127
        %v2637 = vpop.permute.xlu0 %2636
        %v2639 = vadd.f32 %v2631, %v2637
        %s2640 = sld [smem:[#allocation11 + $0x1b]]
        %v2641 = vld [vmem:[%s2383 + $0x1] sm:$0xf]
        %v2642 = vstv %s2640
        %v2643 = vmul.f32 %v2642, %v2641
        %v2644 = vadd.f32 %v2639, %v2643
        %s2645 = sld [smem:[#allocation11 + $0x1f]]
        %v2646 = vld [vmem:[%s2091 + $0x1] sm:$0xf]
        %v2647 = vstv %s2645
        %v2648 = vmul.f32 %v2647, %v2646
        %2650 = vrot.lane.b32.xlu0 %v2648, 127
        %v2651 = vpop.permute.xlu0 %2650
        %v2653 = vadd.f32 %v2644, %v2651
        %s2654 = sld [smem:[#allocation11 + $0x23]]
        %v2655 = vstv %s2654
        %v2656 = vmul.f32 %v2655, %v2641
        %2658 = vrot.lane.b32.xlu0 %v2656, 127
        %v2659 = vpop.permute.xlu0 %2658
        %v2661 = vadd.f32 %v2653, %v2659
        %s2662 = sld [smem:[#allocation12 + $0x3]]
        %v2663 = vstv %s2662
        %v2664 = vadd.f32 %v2661, %v2663
        %v2665 = vmax.f32 %v2664, 0.0
        %s2666 = sld [smem:[#allocation14]]
        %v2667 = vstv %s2666
        %v2668 = vmul.f32 %v2667, %v2455
        %v2669 = vadd.f32 %v2668, 0.0
        %s2670 = sld [smem:[#allocation14 + $0x8]]
        %v2671 = vstv %s2670
        %v2672 = vmul.f32 %v2671, %v2525
        %v2673 = vadd.f32 %v2669, %v2672
        %s2674 = sld [smem:[#allocation14 + $0x10]]
        %v2675 = vstv %s2674
        %v2676 = vmul.f32 %v2675, %v2595
        %v2677 = vadd.f32 %v2673, %v2676
        %s2678 = sld [smem:[#allocation14 + $0x18]]
        %v2679 = vstv %s2678
        %v2680 = vmul.f32 %v2679, %v2665
        %v2681 = vadd.f32 %v2677, %v2680
        %s2682 = sld [smem:[#allocation15]]
        %v2683 = vstv %s2682
        %v2684 = vadd.f32 %v2681, %v2683
        %v2685 = vmax.f32 %v2684, 0.0
        %vm2686 = vcmask 27648
        %2687 = vst.msk [vmem:[%s434] sm:$0xf] %vm2686, %v2685
        %s2688 = sld [smem:[#allocation14 + $0x1]]
        %v2689 = vstv %s2688
        %v2690 = vmul.f32 %v2689, %v2455
        %v2691 = vadd.f32 %v2690, 0.0
        %s2692 = sld [smem:[#allocation14 + $0x9]]
        %v2693 = vstv %s2692
        %v2694 = vmul.f32 %v2693, %v2525
        %v2695 = vadd.f32 %v2691, %v2694
        %s2696 = sld [smem:[#allocation14 + $0x11]]
        %v2697 = vstv %s2696
        %v2698 = vmul.f32 %v2697, %v2595
        %v2699 = vadd.f32 %v2695, %v2698
        %s2700 = sld [smem:[#allocation14 + $0x19]]
        %v2701 = vstv %s2700
        %v2702 = vmul.f32 %v2701, %v2665
        %v2703 = vadd.f32 %v2699, %v2702
        %s2704 = sld [smem:[#allocation15 + $0x1]]
        %v2705 = vstv %s2704
        %v2706 = vadd.f32 %v2703, %v2705
        %v2707 = vmax.f32 %v2706, 0.0
        %s2708 = scalar_lea.vmem %s434, 4
        %2709 = vst.msk [vmem:[%s2708] sm:$0xf] %vm2686, %v2707
        %s2710 = sld [smem:[#allocation14 + $0x2]]
        %v2711 = vstv %s2710
        %v2712 = vmul.f32 %v2711, %v2455
        %v2713 = vadd.f32 %v2712, 0.0
        %s2714 = sld [smem:[#allocation14 + $0xa]]
        %v2715 = vstv %s2714
        %v2716 = vmul.f32 %v2715, %v2525
        %v2717 = vadd.f32 %v2713, %v2716
        %s2718 = sld [smem:[#allocation14 + $0x12]]
        %v2719 = vstv %s2718
        %v2720 = vmul.f32 %v2719, %v2595
        %v2721 = vadd.f32 %v2717, %v2720
        %s2722 = sld [smem:[#allocation14 + $0x1a]]
        %v2723 = vstv %s2722
        %v2724 = vmul.f32 %v2723, %v2665
        %v2725 = vadd.f32 %v2721, %v2724
        %s2726 = sld [smem:[#allocation15 + $0x2]]
        %v2727 = vstv %s2726
        %v2728 = vadd.f32 %v2725, %v2727
        %v2729 = vmax.f32 %v2728, 0.0
        %s2730 = scalar_lea.vmem %s434, 8
        %2731 = vst.msk [vmem:[%s2730] sm:$0xf] %vm2686, %v2729
        %s2732 = sld [smem:[#allocation14 + $0x3]]
        %v2733 = vstv %s2732
        %v2734 = vmul.f32 %v2733, %v2455
        %v2735 = vadd.f32 %v2734, 0.0
        %s2736 = sld [smem:[#allocation14 + $0xb]]
        %v2737 = vstv %s2736
        %v2738 = vmul.f32 %v2737, %v2525
        %v2739 = vadd.f32 %v2735, %v2738
        %s2740 = sld [smem:[#allocation14 + $0x13]]
        %v2741 = vstv %s2740
        %v2742 = vmul.f32 %v2741, %v2595
        %v2743 = vadd.f32 %v2739, %v2742
        %s2744 = sld [smem:[#allocation14 + $0x1b]]
        %v2745 = vstv %s2744
        %v2746 = vmul.f32 %v2745, %v2665
        %v2747 = vadd.f32 %v2743, %v2746
        %s2748 = sld [smem:[#allocation15 + $0x3]]
        %v2749 = vstv %s2748
        %v2750 = vadd.f32 %v2747, %v2749
        %v2751 = vmax.f32 %v2750, 0.0
        %s2752 = scalar_lea.vmem %s434, 12
        %2753 = vst.msk [vmem:[%s2752] sm:$0xf] %vm2686, %v2751
        %s2754 = sld [smem:[#allocation14 + $0x4]]
        %v2755 = vstv %s2754
        %v2756 = vmul.f32 %v2755, %v2455
        %v2757 = vadd.f32 %v2756, 0.0
        %s2758 = sld [smem:[#allocation14 + $0xc]]
        %v2759 = vstv %s2758
        %v2760 = vmul.f32 %v2759, %v2525
        %v2761 = vadd.f32 %v2757, %v2760
        %s2762 = sld [smem:[#allocation14 + $0x14]]
        %v2763 = vstv %s2762
        %v2764 = vmul.f32 %v2763, %v2595
        %v2765 = vadd.f32 %v2761, %v2764
        %s2766 = sld [smem:[#allocation14 + $0x1c]]
        %v2767 = vstv %s2766
        %v2768 = vmul.f32 %v2767, %v2665
        %v2769 = vadd.f32 %v2765, %v2768
        %s2770 = sld [smem:[#allocation15 + $0x4]]
        %v2771 = vstv %s2770
        %v2772 = vadd.f32 %v2769, %v2771
        %v2773 = vmax.f32 %v2772, 0.0
        %s2774 = scalar_lea.vmem %s434, 16
        %2775 = vst.msk [vmem:[%s2774] sm:$0xf] %vm2686, %v2773
        %s2776 = sld [smem:[#allocation14 + $0x5]]
        %v2777 = vstv %s2776
        %v2778 = vmul.f32 %v2777, %v2455
        %v2779 = vadd.f32 %v2778, 0.0
        %s2780 = sld [smem:[#allocation14 + $0xd]]
        %v2781 = vstv %s2780
        %v2782 = vmul.f32 %v2781, %v2525
        %v2783 = vadd.f32 %v2779, %v2782
        %s2784 = sld [smem:[#allocation14 + $0x15]]
        %v2785 = vstv %s2784
        %v2786 = vmul.f32 %v2785, %v2595
        %v2787 = vadd.f32 %v2783, %v2786
        %s2788 = sld [smem:[#allocation14 + $0x1d]]
        %v2789 = vstv %s2788
        %v2790 = vmul.f32 %v2789, %v2665
        %v2791 = vadd.f32 %v2787, %v2790
        %s2792 = sld [smem:[#allocation15 + $0x5]]
        %v2793 = vstv %s2792
        %v2794 = vadd.f32 %v2791, %v2793
        %v2795 = vmax.f32 %v2794, 0.0
        %s2796 = scalar_lea.vmem %s434, 20
        %2797 = vst.msk [vmem:[%s2796] sm:$0xf] %vm2686, %v2795
        %s2798 = sld [smem:[#allocation14 + $0x6]]
        %v2799 = vstv %s2798
        %v2800 = vmul.f32 %v2799, %v2455
        %v2801 = vadd.f32 %v2800, 0.0
        %s2802 = sld [smem:[#allocation14 + $0xe]]
        %v2803 = vstv %s2802
        %v2804 = vmul.f32 %v2803, %v2525
        %v2805 = vadd.f32 %v2801, %v2804
        %s2806 = sld [smem:[#allocation14 + $0x16]]
        %v2807 = vstv %s2806
        %v2808 = vmul.f32 %v2807, %v2595
        %v2809 = vadd.f32 %v2805, %v2808
        %s2810 = sld [smem:[#allocation14 + $0x1e]]
        %v2811 = vstv %s2810
        %v2812 = vmul.f32 %v2811, %v2665
        %v2813 = vadd.f32 %v2809, %v2812
        %s2814 = sld [smem:[#allocation15 + $0x6]]
        %v2815 = vstv %s2814
        %v2816 = vadd.f32 %v2813, %v2815
        %v2817 = vmax.f32 %v2816, 0.0
        %s2818 = scalar_lea.vmem %s434, 24
        %2819 = vst.msk [vmem:[%s2818] sm:$0xf] %vm2686, %v2817
        %s2820 = sld [smem:[#allocation14 + $0x7]]
        %v2821 = vstv %s2820
        %v2822 = vmul.f32 %v2821, %v2455
        %v2823 = vadd.f32 %v2822, 0.0
        %s2824 = sld [smem:[#allocation14 + $0xf]]
        %v2825 = vstv %s2824
        %v2826 = vmul.f32 %v2825, %v2525
        %v2827 = vadd.f32 %v2823, %v2826
        %s2828 = sld [smem:[#allocation14 + $0x17]]
        %v2829 = vstv %s2828
        %v2830 = vmul.f32 %v2829, %v2595
        %v2831 = vadd.f32 %v2827, %v2830
        %s2832 = sld [smem:[#allocation14 + $0x1f]]
        %v2833 = vstv %s2832
        %v2834 = vmul.f32 %v2833, %v2665
        %v2835 = vadd.f32 %v2831, %v2834
        %s2836 = sld [smem:[#allocation15 + $0x7]]
        %v2837 = vstv %s2836
        %v2838 = vadd.f32 %v2835, %v2837
        %v2839 = vmax.f32 %v2838, 0.0
        %s2840 = scalar_lea.vmem %s434, 28
        %2841 = vst.msk [vmem:[%s2840] sm:$0xf] %vm2686, %v2839
        %p2842 = scmp.lt.s32.totalorder %s25, 1
        %s2843 = scalar_select %p2842, %s25, 1
        %s2844 = smul.addr %s2843, 8
        %s2845 = smul.addr %s2844, 4
        %s2846 = scalar_lea.vmem %s9, %s2845
        // Predicated region
        $region89: #{_lambda_.1} parent=55 // pred_check
          %p2847 = pneg %p237
        $region90: #{_lambda_.1} parent=55 // pred_check_branch
          %2849 = sbr.rel (%p2847) target = $region92
        $region91: #{_lambda_.1} parent=55 // pred_region
          _
        $region92: #{_lambda_.1} parent=55 // pred_fallthru
          _
      $region56: #{_lambda_.1} parent=5 // pred_fallthru
        _
      %p2850 = scmp.le.s32.totalorder 2, %s20
      // Predicated region
      $region93: #{_lambda_.1} parent=5 // pred_check
        %p2851 = pneg %p2850
      $region94: #{_lambda_.1} parent=5 // pred_check_branch
        %2853 = sbr.rel (%p2851) target = $region96
      $region95: #{_lambda_.1} parent=5 // pred_region
        %s2854 = ssub.s32 %s20, 2
        // Predicated region
        $region97: #{_lambda_.1} parent=95 // pred_check
          %p2855 = pneg %p243
        $region98: #{_lambda_.1} parent=95 // pred_check_branch
          %2857 = sbr.rel (%p2855) target = $region100
        $region99: #{_lambda_.1} parent=95 // pred_region
          %p2858 = scmp.lt.s32.totalorder %s26, 1
          %s2859 = scalar_select %p2858, %s26, 1
          %s2860 = smul.addr %s2859, 8
          %s2861 = smul.addr %s2860, 4
          %s2862 = scalar_lea.vmem %s9, %s2861
        $region100: #{_lambda_.1} parent=95 // pred_fallthru
          _
      $region96: #{_lambda_.1} parent=5 // pred_fallthru
        _
    $region6: #{_lambda_.1} parent=1 // loop_footer
      %s24 = sadd.s32 1, %s20
    $region7: #{_lambda_.1} parent=1 // loop_footer_branch
      %19 = sbr.rel target = $region3
    $region8: #{_lambda_.1} parent=1 // loop_exit
      _
    %2863 = vsyncpa [#allocation5], 1
    %s2864 = scalar_lea.sflag [#allocation5], 1
    %2865 = vsyncpa %s2864, 1
    %2866 = vsyncpa [#allocation7], 1
    %2867 = vsyncpa [#allocation10], 1
    %2868 = vsyncpa [#allocation13], 1
    %2869 = vsyncpa [#allocation16], 1

</llo_original>
